<compile_context>
chip_gen: v7x
topology: tpu7x:2x2x1
jax: 0.10.0
libtpu: 0.0.40
codegen_flags: <defaults>
</compile_context>

<pallas_src>
import functools

import numpy as np
import jax
import jax.numpy as jnp
from jax import lax
from jax.experimental import pallas as pl
from jax.experimental.pallas import tpu as pltpu


def _round_up(x, m):
    return ((x + m - 1) // m) * m


# ---------------------------------------------------------------------------
# Fused RRDB kernel (batch_tile images per grid step, lane-packed)
# ---------------------------------------------------------------------------
def _rrdb_kernel(x_ref, w_ref, b_ref, m_ref, o_ref, bank_ref, *,
                 filters, H, W, lanes, n_blocks, n_convs, residual_scale):
    """x_ref:    (1, F, lanes)   input feature maps, lanes = batch_tile*H*W
       w_ref:    (15, F, Kw)     packed bf16 weights (group-major columns)
       b_ref:    (15, F, 1)      f32 biases
       m_ref:    (9, lanes)      0/1 boundary mask per 3x3 tap (tiled per image)
       o_ref:    (1, F, lanes)   output feature maps
       bank_ref: (KB, lanes) bf16 VMEM scratch; group g (g-th tensor of the dense
                 concat) occupies rows [g*9F, (g+1)*9F), tap-major within group.
                 Conv i only reads rows [0, (i+1)*9F) -> every row read has already
                 been written this step, so the bank needs no initialization."""
    F = filters
    G = 9 * F                                   # bank rows per concat group

    def fill(t, group):
        # Write the 9 tap-shifted + boundary-masked copies of t (F, lanes).
        base = group * G
        for kh in range(3):
            for kw in range(3):
                dy, dx = kh - 1, kw - 1
                s = dy * W + dx                 # flat pixel shift
                tap = kh * 3 + kw
                if s == 0:
                    shifted = t                 # center tap: no shift / mask
                else:
                    # shifted[:, p] = t[:, p + s] (cyclic); the mask zeroes the
                    # wrapped / out-of-image (pad=1) contributions, including
                    # pixels that would cross into the neighbouring lane-packed
                    # image (those are exactly the out-of-image taps).
                    rolled = pltpu.roll(t, shift=(lanes - s) % lanes, axis=1)
                    shifted = rolled * m_ref[tap:tap + 1, :]
                row = base + tap * F
                bank_ref[row:row + F, :] = shifted.astype(bank_ref.dtype)

    x0 = x_ref[0].astype(jnp.float32)           # (F, lanes)
    y = x0
    conv = 0
    for _ in range(n_blocks):                   # 3 DenseResidualBlocks
        feat = y
        fill(y, 0)                              # block input -> group 0
        out = None
        for i in range(n_convs):                # 5 convs, dense concatenation
            ksz = (i + 1) * G                   # only already-written rows
            w = w_ref[conv][:, :ksz]            # (F, ksz) bf16
            acc = jnp.dot(w, bank_ref[0:ksz, :],
                          preferred_element_type=jnp.float32)   # (F, lanes) f32
            acc = acc + b_ref[conv]             # (F, 1) bias broadcast (VPU)
            if i < n_convs - 1:
                out = jnp.maximum(acc, 0.0)     # ReLU on first 4 convs
                fill(out, i + 1)                # becomes group i+1 of the concat
            else:
                out = acc                       # conv5: no ReLU
            conv += 1
        y = out * residual_scale + feat         # dense-block residual scaling
    o_ref[0] = (y * residual_scale + x0).astype(o_ref.dtype)    # outer residual


# ---------------------------------------------------------------------------
# Wrapper
# ---------------------------------------------------------------------------
def rrdb_pallas(x_nchw, w_packed, b_packed, masks, *, filters, residual_scale,
                batch_tile=2):
    """x_nchw: (N, C=filters, H, W) float32 — PyTorch layout."""
    N, C, H, W = x_nchw.shape
    assert C == filters
    HW = H * W

    bt = max(1, min(batch_tile, N))
    while N % bt:                                # static: shapes are Python ints
        bt -= 1
    NB = N // bt
    lanes = bt * HW
    assert lanes % 128 == 0, "demo kernel assumes lane-dense batch_tile*H*W"

    # Lane-dense slab: (NB, C, bt*HW) — images of a tile packed along lanes.
    x_slab = (x_nchw.reshape(NB, bt, C, HW)
                    .transpose(0, 2, 1, 3)
                    .reshape(NB, C, lanes))
    masks_t = jnp.tile(masks, (1, bt))           # (9, lanes)

    n_conv = w_packed.shape[0]
    KB = _round_up(5 * 9 * filters, 16)          # bank rows (bf16 sublane tile)

    kern = functools.partial(
        _rrdb_kernel, filters=filters, H=H, W=W, lanes=lanes,
        n_blocks=3, n_convs=n_conv // 3, residual_scale=residual_scale)

    out = pl.pallas_call(
        kern,
        out_shape=jax.ShapeDtypeStruct((NB, C, lanes), x_nchw.dtype),
        grid=(NB,),
        in_specs=[
            pl.BlockSpec((1, C, lanes), lambda n: (n, 0, 0)),
            pl.BlockSpec(w_packed.shape, lambda n: (0, 0, 0)),   # grid-invariant
            pl.BlockSpec(b_packed.shape, lambda n: (0, 0, 0)),   # grid-invariant
            pl.BlockSpec(masks_t.shape, lambda n: (0, 0)),       # grid-invariant
        ],
        out_specs=pl.BlockSpec((1, C, lanes), lambda n: (n, 0, 0)),
        scratch_shapes=[pltpu.VMEM((KB, lanes), jnp.bfloat16)],
        compiler_params=pltpu.CompilerParams(
            dimension_semantics=("parallel",)),
    )(x_slab, w_packed, b_packed, masks_t)

    return (out.reshape(NB, C, bt, HW)
               .transpose(0, 2, 1, 3)
               .reshape(N, C, H, W))


def build_tap_masks(H, W):
    """(9, H*W) 0/1 masks: mask[tap, p] == 1 iff output pixel p has a valid
    (in-image) input for 3x3 tap (kh, kw) with pad=1."""
    m = np.zeros((9, H, W), np.float32)
    for kh in range(3):
        for kw in range(3):
            dy, dx = kh - 1, kw - 1
            m[kh * 3 + kw,
              max(0, -dy):H - max(0, dy),
              max(0, -dx):W - max(0, dx)] = 1.0
    return jnp.asarray(m.reshape(9, H * W))


def pack_rrdb_weights(params, filters):
    """Pack 15 conv weights (PyTorch OIHW) into bf16 (15, F, Kw) with group-major
    columns: column g*(9F) + tap*F + r holds w[co, ci=g*F+r, kh, kw] (zero for
    groups this conv does not consume).  Biases stay f32 as (15, F, 1)."""
    F = filters
    G = 9 * F
    Kw = _round_up(5 * G, 128)                   # lane-aligned weight loads
    ws, bs = [], []
    for block in params:
        for i, (w, b) in enumerate(block):
            ngrp = i + 1
            wt = jnp.transpose(w, (0, 2, 3, 1)).reshape(F, 9, ngrp, F)  # co,tap,g,r
            wt = jnp.transpose(wt, (0, 2, 1, 3)).reshape(F, ngrp * G)   # co, g*G+tap*F+r
            wt = jnp.pad(wt, ((0, 0), (0, Kw - ngrp * G)))
            ws.append(wt)
            bs.append(b.reshape(F, 1))
    return (jnp.stack(ws).astype(jnp.bfloat16),   # (15, F, Kw) bf16
            jnp.stack(bs).astype(jnp.float32))    # (15, F, 1)  f32


def init_rrdb_params(key, filters):
    """Deterministic synthetic weights, PyTorch Conv2d layout (Cout, Cin, 3, 3)."""
    params = []
    for _ in range(3):
        block = []
        for i in range(5):
            key, kw, kb = jax.random.split(key, 3)
            cin = filters * (i + 1)
            w = 0.05 * jax.random.normal(kw, (filters, cin, 3, 3), jnp.float32)
            b = 0.01 * jax.random.normal(kb, (filters,), jnp.float32)
            block.append((w, b))
        params.append(block)
    return params


# ---------------------------------------------------------------------------
# Pure-JAX reference (matches the PyTorch module) for a sanity check
# ---------------------------------------------------------------------------
def rrdb_reference(x, params, residual_scale):
    def conv(inp, w, b):
        y = lax.conv_general_dilated(
            inp, w, window_strides=(1, 1), padding=((1, 1), (1, 1)),
            dimension_numbers=('NCHW', 'OIHW', 'NCHW'))
        return y + b[None, :, None, None]

    y = x
    for block in params:
        feat = y
        inputs = y
        out = None
        for i, (w, b) in enumerate(block):
            out = conv(inputs, w, b)
            if i < 4:
                out = jax.nn.relu(out)
            inputs = jnp.concatenate([inputs, out], axis=1)
        y = out * residual_scale + feat
    return y * residual_scale + x


if __name__ == "__main__":
    filters = 4
    residual_scale = 0.2
    H = W = 16
    N = 4          # batch; 2 images are lane-packed per grid step -> grid=(2,)

    key = jax.random.PRNGKey(0)
    key, kx = jax.random.split(key)
    # PyTorch-style input: [batch, filters, height, width]
    x = jax.random.normal(kx, (N, filters, H, W), jnp.float32)

    params = init_rrdb_params(key, filters)
    w_packed, b_packed = pack_rrdb_weights(params, filters)
    masks = build_tap_masks(H, W)

    fn = jax.jit(functools.partial(rrdb_pallas, filters=filters,
                                   residual_scale=residual_scale,
                                   batch_tile=2))
    out = fn(x, w_packed, b_packed, masks)
    jax.block_until_ready(out)

    assert out.shape == x.shape and out.dtype == x.dtype
    ref = rrdb_reference(x, params, residual_scale)
    err = float(jnp.max(jnp.abs(out - ref)))
    # bf16 MXU operands (f32 accumulation) introduce ~1e-3..1e-2 deviation.
    assert err < 3e-2, f"mismatch vs reference: max abs err = {err}"
    print("KERNEL_OK")
</pallas_src>

<mosaic_0001>
module attributes {stable_mosaic.version = 11 : i64} {
  func.func @_rrdb_kernel(%arg0: i32, %arg1: memref<1x4x512xf32, #tpu.memory_space<vmem>>, %arg2: memref<15x4x256xbf16, #tpu.memory_space<vmem>>, %arg3: memref<15x4x1xf32, #tpu.memory_space<vmem>>, %arg4: memref<9x512xf32, #tpu.memory_space<vmem>>, %arg5: memref<1x4x512xf32, #tpu.memory_space<vmem>>, %arg6: memref<192x512xbf16, #tpu.memory_space<vmem>>) attributes {dimension_semantics = [#tpu.dimension_semantics<parallel>], iteration_bounds = array<i64: 2>, scalar_prefetch = 0 : i64, scratch_operands = 1 : i64, tpu.core_type = #tpu.core_type<tc>, window_params = [{transform_indices = @transform_0, window_bounds = array<i64: 1, 4, 512>}, {pipeline_mode = #tpu.pipeline_mode<synchronous>, transform_indices = @transform_1, window_bounds = array<i64: 15, 4, 256>}, {pipeline_mode = #tpu.pipeline_mode<synchronous>, transform_indices = @transform_2, window_bounds = array<i64: 15, 4, 1>}, {pipeline_mode = #tpu.pipeline_mode<synchronous>, transform_indices = @transform_3, window_bounds = array<i64: 9, 512>}, {transform_indices = @transform_4, window_bounds = array<i64: 1, 4, 512>}]} {
    %c0 = arith.constant 0 : index
    %c0_0 = arith.constant 0 : index
    %c0_1 = arith.constant 0 : index
    %0 = vector.load %arg1[%c0, %c0_0, %c0_1] : memref<1x4x512xf32, #tpu.memory_space<vmem>>, vector<1x4x512xf32>
    %1 = vector.shape_cast %0 : vector<1x4x512xf32> to vector<4x512xf32>
    %c17_i32 = arith.constant 17 : i32
    %2 = tpu.dynamic_rotate %1 by %c17_i32 dim 1 : vector<4x512xf32>, i32 -> vector<4x512xf32>
    %c0_2 = arith.constant 0 : index
    %c0_3 = arith.constant 0 : index
    %3 = vector.load %arg4[%c0_2, %c0_3] : memref<9x512xf32, #tpu.memory_space<vmem>>, vector<1x512xf32>
    %4 = vector.broadcast %3 : vector<1x512xf32> to vector<4x512xf32>
    %5 = arith.mulf %2, %4 : vector<4x512xf32>
    %6 = arith.truncf %5 : vector<4x512xf32> to vector<4x512xbf16>
    %c0_4 = arith.constant 0 : index
    %c0_5 = arith.constant 0 : index
    %7 = vector.load %arg6[%c0_4, %c0_5] : memref<192x512xbf16, #tpu.memory_space<vmem>>, vector<4x512xbf16>
    tpu.vector_store %arg6[%c0_4, %c0_5], %6 {strides = array<i32>} : memref<192x512xbf16, #tpu.memory_space<vmem>>, vector<4x512xbf16>,
    %c16_i32 = arith.constant 16 : i32
    %8 = tpu.dynamic_rotate %1 by %c16_i32 dim 1 : vector<4x512xf32>, i32 -> vector<4x512xf32>
    %c1 = arith.constant 1 : index
    %c0_6 = arith.constant 0 : index
    %9 = vector.load %arg4[%c1, %c0_6] : memref<9x512xf32, #tpu.memory_space<vmem>>, vector<1x512xf32>
    %10 = vector.broadcast %9 : vector<1x512xf32> to vector<4x512xf32>
    %11 = arith.mulf %8, %10 : vector<4x512xf32>
    %12 = arith.truncf %11 : vector<4x512xf32> to vector<4x512xbf16>
    %c4 = arith.constant 4 : index
    %c0_7 = arith.constant 0 : index
    %13 = vector.load %arg6[%c4, %c0_7] : memref<192x512xbf16, #tpu.memory_space<vmem>>, vector<4x512xbf16>
    tpu.vector_store %arg6[%c4, %c0_7], %12 {strides = array<i32>} : memref<192x512xbf16, #tpu.memory_space<vmem>>, vector<4x512xbf16>,
    %c15_i32 = arith.constant 15 : i32
    %14 = tpu.dynamic_rotate %1 by %c15_i32 dim 1 : vector<4x512xf32>, i32 -> vector<4x512xf32>
    %c2 = arith.constant 2 : index
    %c0_8 = arith.constant 0 : index
    %15 = vector.load %arg4[%c2, %c0_8] : memref<9x512xf32, #tpu.memory_space<vmem>>, vector<1x512xf32>
    %16 = vector.broadcast %15 : vector<1x512xf32> to vector<4x512xf32>
    %17 = arith.mulf %14, %16 : vector<4x512xf32>
    %18 = arith.truncf %17 : vector<4x512xf32> to vector<4x512xbf16>
    %c8 = arith.constant 8 : index
    %c0_9 = arith.constant 0 : index
    %19 = vector.load %arg6[%c8, %c0_9] : memref<192x512xbf16, #tpu.memory_space<vmem>>, vector<4x512xbf16>
    tpu.vector_store %arg6[%c8, %c0_9], %18 {strides = array<i32>} : memref<192x512xbf16, #tpu.memory_space<vmem>>, vector<4x512xbf16>,
    %c1_i32 = arith.constant 1 : i32
    %20 = tpu.dynamic_rotate %1 by %c1_i32 dim 1 : vector<4x512xf32>, i32 -> vector<4x512xf32>
    %c3 = arith.constant 3 : index
    %c0_10 = arith.constant 0 : index
    %21 = vector.load %arg4[%c3, %c0_10] : memref<9x512xf32, #tpu.memory_space<vmem>>, vector<1x512xf32>
    %22 = vector.broadcast %21 : vector<1x512xf32> to vector<4x512xf32>
    %23 = arith.mulf %20, %22 : vector<4x512xf32>
    %24 = arith.truncf %23 : vector<4x512xf32> to vector<4x512xbf16>
    %c12 = arith.constant 12 : index
    %c0_11 = arith.constant 0 : index
    %25 = vector.load %arg6[%c12, %c0_11] : memref<192x512xbf16, #tpu.memory_space<vmem>>, vector<4x512xbf16>
    tpu.vector_store %arg6[%c12, %c0_11], %24 {strides = array<i32>} : memref<192x512xbf16, #tpu.memory_space<vmem>>, vector<4x512xbf16>,
    %26 = arith.truncf %1 : vector<4x512xf32> to vector<4x512xbf16>
    %c16 = arith.constant 16 : index
    %c0_12 = arith.constant 0 : index
    %27 = vector.load %arg6[%c16, %c0_12] : memref<192x512xbf16, #tpu.memory_space<vmem>>, vector<4x512xbf16>
    tpu.vector_store %arg6[%c16, %c0_12], %26 {strides = array<i32>} : memref<192x512xbf16, #tpu.memory_space<vmem>>, vector<4x512xbf16>,
    %c511_i32 = arith.constant 511 : i32
    %28 = tpu.dynamic_rotate %1 by %c511_i32 dim 1 : vector<4x512xf32>, i32 -> vector<4x512xf32>
    %c5 = arith.constant 5 : index
    %c0_13 = arith.constant 0 : index
    %29 = vector.load %arg4[%c5, %c0_13] : memref<9x512xf32, #tpu.memory_space<vmem>>, vector<1x512xf32>
    %30 = vector.broadcast %29 : vector<1x512xf32> to vector<4x512xf32>
    %31 = arith.mulf %28, %30 : vector<4x512xf32>
    %32 = arith.truncf %31 : vector<4x512xf32> to vector<4x512xbf16>
    %c20 = arith.constant 20 : index
    %c0_14 = arith.constant 0 : index
    %33 = vector.load %arg6[%c20, %c0_14] : memref<192x512xbf16, #tpu.memory_space<vmem>>, vector<4x512xbf16>
    tpu.vector_store %arg6[%c20, %c0_14], %32 {strides = array<i32>} : memref<192x512xbf16, #tpu.memory_space<vmem>>, vector<4x512xbf16>,
    %c497_i32 = arith.constant 497 : i32
    %34 = tpu.dynamic_rotate %1 by %c497_i32 dim 1 : vector<4x512xf32>, i32 -> vector<4x512xf32>
    %c6 = arith.constant 6 : index
    %c0_15 = arith.constant 0 : index
    %35 = vector.load %arg4[%c6, %c0_15] : memref<9x512xf32, #tpu.memory_space<vmem>>, vector<1x512xf32>
    %36 = vector.broadcast %35 : vector<1x512xf32> to vector<4x512xf32>
    %37 = arith.mulf %34, %36 : vector<4x512xf32>
    %38 = arith.truncf %37 : vector<4x512xf32> to vector<4x512xbf16>
    %c24 = arith.constant 24 : index
    %c0_16 = arith.constant 0 : index
    %39 = vector.load %arg6[%c24, %c0_16] : memref<192x512xbf16, #tpu.memory_space<vmem>>, vector<4x512xbf16>
    tpu.vector_store %arg6[%c24, %c0_16], %38 {strides = array<i32>} : memref<192x512xbf16, #tpu.memory_space<vmem>>, vector<4x512xbf16>,
    %c496_i32 = arith.constant 496 : i32
    %40 = tpu.dynamic_rotate %1 by %c496_i32 dim 1 : vector<4x512xf32>, i32 -> vector<4x512xf32>
    %c7 = arith.constant 7 : index
    %c0_17 = arith.constant 0 : index
    %41 = vector.load %arg4[%c7, %c0_17] : memref<9x512xf32, #tpu.memory_space<vmem>>, vector<1x512xf32>
    %42 = vector.broadcast %41 : vector<1x512xf32> to vector<4x512xf32>
    %43 = arith.mulf %40, %42 : vector<4x512xf32>
    %44 = arith.truncf %43 : vector<4x512xf32> to vector<4x512xbf16>
    %c28 = arith.constant 28 : index
    %c0_18 = arith.constant 0 : index
    %45 = vector.load %arg6[%c28, %c0_18] : memref<192x512xbf16, #tpu.memory_space<vmem>>, vector<4x512xbf16>
    tpu.vector_store %arg6[%c28, %c0_18], %44 {strides = array<i32>} : memref<192x512xbf16, #tpu.memory_space<vmem>>, vector<4x512xbf16>,
    %c495_i32 = arith.constant 495 : i32
    %46 = tpu.dynamic_rotate %1 by %c495_i32 dim 1 : vector<4x512xf32>, i32 -> vector<4x512xf32>
    %c8_19 = arith.constant 8 : index
    %c0_20 = arith.constant 0 : index
    %47 = vector.load %arg4[%c8_19, %c0_20] : memref<9x512xf32, #tpu.memory_space<vmem>>, vector<1x512xf32>
    %48 = vector.broadcast %47 : vector<1x512xf32> to vector<4x512xf32>
    %49 = arith.mulf %46, %48 : vector<4x512xf32>
    %50 = arith.truncf %49 : vector<4x512xf32> to vector<4x512xbf16>
    %c32 = arith.constant 32 : index
    %c0_21 = arith.constant 0 : index
    %51 = vector.load %arg6[%c32, %c0_21] : memref<192x512xbf16, #tpu.memory_space<vmem>>, vector<4x512xbf16>
    tpu.vector_store %arg6[%c32, %c0_21], %50 {strides = array<i32>} : memref<192x512xbf16, #tpu.memory_space<vmem>>, vector<4x512xbf16>,
    %c0_22 = arith.constant 0 : index
    %c0_23 = arith.constant 0 : index
    %c0_24 = arith.constant 0 : index
    %52 = vector.load %arg2[%c0_22, %c0_23, %c0_24] : memref<15x4x256xbf16, #tpu.memory_space<vmem>>, vector<1x4x256xbf16>
    %53 = vector.shape_cast %52 : vector<1x4x256xbf16> to vector<4x256xbf16>
    %54 = vector.extract_strided_slice %53 {offsets = [0, 0], sizes = [4, 36], strides = [1, 1]} : vector<4x256xbf16> to vector<4x36xbf16>
    %c0_25 = arith.constant 0 : index
    %c0_26 = arith.constant 0 : index
    %55 = vector.load %arg6[%c0_25, %c0_26] : memref<192x512xbf16, #tpu.memory_space<vmem>>, vector<36x512xbf16>
    %cst = arith.constant dense<0.000000e+00> : vector<4x512xf32>
    %56 = tpu.matmul %54, %55, %cst {dimension_numbers = #tpu.dot_dimension_numbers<[1], [0], [0], [1], [0, 0, 1, 1], [], []>} : vector<4x36xbf16>, vector<36x512xbf16>, vector<4x512xf32> -> vector<4x512xf32>
    %c0_27 = arith.constant 0 : index
    %c0_28 = arith.constant 0 : index
    %c0_29 = arith.constant 0 : index
    %57 = vector.load %arg3[%c0_27, %c0_28, %c0_29] : memref<15x4x1xf32, #tpu.memory_space<vmem>>, vector<1x4x1xf32>
    %58 = vector.shape_cast %57 : vector<1x4x1xf32> to vector<4x1xf32>
    %59 = vector.broadcast %58 : vector<4x1xf32> to vector<4x512xf32>
    %60 = arith.addf %56, %59 : vector<4x512xf32>
    %cst_30 = arith.constant 0.000000e+00 : f32
    %61 = vector.broadcast %cst_30 : f32 to vector<4x512xf32>
    %62 = arith.maximumf %60, %61 : vector<4x512xf32>
    %c17_i32_31 = arith.constant 17 : i32
    %63 = tpu.dynamic_rotate %62 by %c17_i32_31 dim 1 : vector<4x512xf32>, i32 -> vector<4x512xf32>
    %c0_32 = arith.constant 0 : index
    %c0_33 = arith.constant 0 : index
    %64 = vector.load %arg4[%c0_32, %c0_33] : memref<9x512xf32, #tpu.memory_space<vmem>>, vector<1x512xf32>
    %65 = vector.broadcast %64 : vector<1x512xf32> to vector<4x512xf32>
    %66 = arith.mulf %63, %65 : vector<4x512xf32>
    %67 = arith.truncf %66 : vector<4x512xf32> to vector<4x512xbf16>
    %c36 = arith.constant 36 : index
    %c0_34 = arith.constant 0 : index
    %68 = vector.load %arg6[%c36, %c0_34] : memref<192x512xbf16, #tpu.memory_space<vmem>>, vector<4x512xbf16>
    tpu.vector_store %arg6[%c36, %c0_34], %67 {strides = array<i32>} : memref<192x512xbf16, #tpu.memory_space<vmem>>, vector<4x512xbf16>,
    %c16_i32_35 = arith.constant 16 : i32
    %69 = tpu.dynamic_rotate %62 by %c16_i32_35 dim 1 : vector<4x512xf32>, i32 -> vector<4x512xf32>
    %c1_36 = arith.constant 1 : index
    %c0_37 = arith.constant 0 : index
    %70 = vector.load %arg4[%c1_36, %c0_37] : memref<9x512xf32, #tpu.memory_space<vmem>>, vector<1x512xf32>
    %71 = vector.broadcast %70 : vector<1x512xf32> to vector<4x512xf32>
    %72 = arith.mulf %69, %71 : vector<4x512xf32>
    %73 = arith.truncf %72 : vector<4x512xf32> to vector<4x512xbf16>
    %c40 = arith.constant 40 : index
    %c0_38 = arith.constant 0 : index
    %74 = vector.load %arg6[%c40, %c0_38] : memref<192x512xbf16, #tpu.memory_space<vmem>>, vector<4x512xbf16>
    tpu.vector_store %arg6[%c40, %c0_38], %73 {strides = array<i32>} : memref<192x512xbf16, #tpu.memory_space<vmem>>, vector<4x512xbf16>,
    %c15_i32_39 = arith.constant 15 : i32
    %75 = tpu.dynamic_rotate %62 by %c15_i32_39 dim 1 : vector<4x512xf32>, i32 -> vector<4x512xf32>
    %c2_40 = arith.constant 2 : index
    %c0_41 = arith.constant 0 : index
    %76 = vector.load %arg4[%c2_40, %c0_41] : memref<9x512xf32, #tpu.memory_space<vmem>>, vector<1x512xf32>
    %77 = vector.broadcast %76 : vector<1x512xf32> to vector<4x512xf32>
    %78 = arith.mulf %75, %77 : vector<4x512xf32>
    %79 = arith.truncf %78 : vector<4x512xf32> to vector<4x512xbf16>
    %c44 = arith.constant 44 : index
    %c0_42 = arith.constant 0 : index
    %80 = vector.load %arg6[%c44, %c0_42] : memref<192x512xbf16, #tpu.memory_space<vmem>>, vector<4x512xbf16>
    tpu.vector_store %arg6[%c44, %c0_42], %79 {strides = array<i32>} : memref<192x512xbf16, #tpu.memory_space<vmem>>, vector<4x512xbf16>,
    %c1_i32_43 = arith.constant 1 : i32
    %81 = tpu.dynamic_rotate %62 by %c1_i32_43 dim 1 : vector<4x512xf32>, i32 -> vector<4x512xf32>
    %c3_44 = arith.constant 3 : index
    %c0_45 = arith.constant 0 : index
    %82 = vector.load %arg4[%c3_44, %c0_45] : memref<9x512xf32, #tpu.memory_space<vmem>>, vector<1x512xf32>
    %83 = vector.broadcast %82 : vector<1x512xf32> to vector<4x512xf32>
    %84 = arith.mulf %81, %83 : vector<4x512xf32>
    %85 = arith.truncf %84 : vector<4x512xf32> to vector<4x512xbf16>
    %c48 = arith.constant 48 : index
    %c0_46 = arith.constant 0 : index
    %86 = vector.load %arg6[%c48, %c0_46] : memref<192x512xbf16, #tpu.memory_space<vmem>>, vector<4x512xbf16>
    tpu.vector_store %arg6[%c48, %c0_46], %85 {strides = array<i32>} : memref<192x512xbf16, #tpu.memory_space<vmem>>, vector<4x512xbf16>,
    %87 = arith.truncf %62 : vector<4x512xf32> to vector<4x512xbf16>
    %c52 = arith.constant 52 : index
    %c0_47 = arith.constant 0 : index
    %88 = vector.load %arg6[%c52, %c0_47] : memref<192x512xbf16, #tpu.memory_space<vmem>>, vector<4x512xbf16>
    tpu.vector_store %arg6[%c52, %c0_47], %87 {strides = array<i32>} : memref<192x512xbf16, #tpu.memory_space<vmem>>, vector<4x512xbf16>,
    %c511_i32_48 = arith.constant 511 : i32
    %89 = tpu.dynamic_rotate %62 by %c511_i32_48 dim 1 : vector<4x512xf32>, i32 -> vector<4x512xf32>
    %c5_49 = arith.constant 5 : index
    %c0_50 = arith.constant 0 : index
    %90 = vector.load %arg4[%c5_49, %c0_50] : memref<9x512xf32, #tpu.memory_space<vmem>>, vector<1x512xf32>
    %91 = vector.broadcast %90 : vector<1x512xf32> to vector<4x512xf32>
    %92 = arith.mulf %89, %91 : vector<4x512xf32>
    %93 = arith.truncf %92 : vector<4x512xf32> to vector<4x512xbf16>
    %c56 = arith.constant 56 : index
    %c0_51 = arith.constant 0 : index
    %94 = vector.load %arg6[%c56, %c0_51] : memref<192x512xbf16, #tpu.memory_space<vmem>>, vector<4x512xbf16>
    tpu.vector_store %arg6[%c56, %c0_51], %93 {strides = array<i32>} : memref<192x512xbf16, #tpu.memory_space<vmem>>, vector<4x512xbf16>,
    %c497_i32_52 = arith.constant 497 : i32
    %95 = tpu.dynamic_rotate %62 by %c497_i32_52 dim 1 : vector<4x512xf32>, i32 -> vector<4x512xf32>
    %c6_53 = arith.constant 6 : index
    %c0_54 = arith.constant 0 : index
    %96 = vector.load %arg4[%c6_53, %c0_54] : memref<9x512xf32, #tpu.memory_space<vmem>>, vector<1x512xf32>
    %97 = vector.broadcast %96 : vector<1x512xf32> to vector<4x512xf32>
    %98 = arith.mulf %95, %97 : vector<4x512xf32>
    %99 = arith.truncf %98 : vector<4x512xf32> to vector<4x512xbf16>
    %c60 = arith.constant 60 : index
    %c0_55 = arith.constant 0 : index
    %100 = vector.load %arg6[%c60, %c0_55] : memref<192x512xbf16, #tpu.memory_space<vmem>>, vector<4x512xbf16>
    tpu.vector_store %arg6[%c60, %c0_55], %99 {strides = array<i32>} : memref<192x512xbf16, #tpu.memory_space<vmem>>, vector<4x512xbf16>,
    %c496_i32_56 = arith.constant 496 : i32
    %101 = tpu.dynamic_rotate %62 by %c496_i32_56 dim 1 : vector<4x512xf32>, i32 -> vector<4x512xf32>
    %c7_57 = arith.constant 7 : index
    %c0_58 = arith.constant 0 : index
    %102 = vector.load %arg4[%c7_57, %c0_58] : memref<9x512xf32, #tpu.memory_space<vmem>>, vector<1x512xf32>
    %103 = vector.broadcast %102 : vector<1x512xf32> to vector<4x512xf32>
    %104 = arith.mulf %101, %103 : vector<4x512xf32>
    %105 = arith.truncf %104 : vector<4x512xf32> to vector<4x512xbf16>
    %c64 = arith.constant 64 : index
    %c0_59 = arith.constant 0 : index
    %106 = vector.load %arg6[%c64, %c0_59] : memref<192x512xbf16, #tpu.memory_space<vmem>>, vector<4x512xbf16>
    tpu.vector_store %arg6[%c64, %c0_59], %105 {strides = array<i32>} : memref<192x512xbf16, #tpu.memory_space<vmem>>, vector<4x512xbf16>,
    %c495_i32_60 = arith.constant 495 : i32
    %107 = tpu.dynamic_rotate %62 by %c495_i32_60 dim 1 : vector<4x512xf32>, i32 -> vector<4x512xf32>
    %c8_61 = arith.constant 8 : index
    %c0_62 = arith.constant 0 : index
    %108 = vector.load %arg4[%c8_61, %c0_62] : memref<9x512xf32, #tpu.memory_space<vmem>>, vector<1x512xf32>
    %109 = vector.broadcast %108 : vector<1x512xf32> to vector<4x512xf32>
    %110 = arith.mulf %107, %109 : vector<4x512xf32>
    %111 = arith.truncf %110 : vector<4x512xf32> to vector<4x512xbf16>
    %c68 = arith.constant 68 : index
    %c0_63 = arith.constant 0 : index
    %112 = vector.load %arg6[%c68, %c0_63] : memref<192x512xbf16, #tpu.memory_space<vmem>>, vector<4x512xbf16>
    tpu.vector_store %arg6[%c68, %c0_63], %111 {strides = array<i32>} : memref<192x512xbf16, #tpu.memory_space<vmem>>, vector<4x512xbf16>,
    %c1_64 = arith.constant 1 : index
    %c0_65 = arith.constant 0 : index
    %c0_66 = arith.constant 0 : index
    %113 = vector.load %arg2[%c1_64, %c0_65, %c0_66] : memref<15x4x256xbf16, #tpu.memory_space<vmem>>, vector<1x4x256xbf16>
    %114 = vector.shape_cast %113 : vector<1x4x256xbf16> to vector<4x256xbf16>
    %115 = vector.extract_strided_slice %114 {offsets = [0, 0], sizes = [4, 72], strides = [1, 1]} : vector<4x256xbf16> to vector<4x72xbf16>
    %c0_67 = arith.constant 0 : index
    %c0_68 = arith.constant 0 : index
    %116 = vector.load %arg6[%c0_67, %c0_68] : memref<192x512xbf16, #tpu.memory_space<vmem>>, vector<72x512xbf16>
    %cst_69 = arith.constant dense<0.000000e+00> : vector<4x512xf32>
    %117 = tpu.matmul %115, %116, %cst_69 {dimension_numbers = #tpu.dot_dimension_numbers<[1], [0], [0], [1], [0, 0, 1, 1], [], []>} : vector<4x72xbf16>, vector<72x512xbf16>, vector<4x512xf32> -> vector<4x512xf32>
    %c1_70 = arith.constant 1 : index
    %c0_71 = arith.constant 0 : index
    %c0_72 = arith.constant 0 : index
    %118 = vector.load %arg3[%c1_70, %c0_71, %c0_72] : memref<15x4x1xf32, #tpu.memory_space<vmem>>, vector<1x4x1xf32>
    %119 = vector.shape_cast %118 : vector<1x4x1xf32> to vector<4x1xf32>
    %120 = vector.broadcast %119 : vector<4x1xf32> to vector<4x512xf32>
    %121 = arith.addf %117, %120 : vector<4x512xf32>
    %cst_73 = arith.constant 0.000000e+00 : f32
    %122 = vector.broadcast %cst_73 : f32 to vector<4x512xf32>
    %123 = arith.maximumf %121, %122 : vector<4x512xf32>
    %c17_i32_74 = arith.constant 17 : i32
    %124 = tpu.dynamic_rotate %123 by %c17_i32_74 dim 1 : vector<4x512xf32>, i32 -> vector<4x512xf32>
    %c0_75 = arith.constant 0 : index
    %c0_76 = arith.constant 0 : index
    %125 = vector.load %arg4[%c0_75, %c0_76] : memref<9x512xf32, #tpu.memory_space<vmem>>, vector<1x512xf32>
    %126 = vector.broadcast %125 : vector<1x512xf32> to vector<4x512xf32>
    %127 = arith.mulf %124, %126 : vector<4x512xf32>
    %128 = arith.truncf %127 : vector<4x512xf32> to vector<4x512xbf16>
    %c72 = arith.constant 72 : index
    %c0_77 = arith.constant 0 : index
    %129 = vector.load %arg6[%c72, %c0_77] : memref<192x512xbf16, #tpu.memory_space<vmem>>, vector<4x512xbf16>
    tpu.vector_store %arg6[%c72, %c0_77], %128 {strides = array<i32>} : memref<192x512xbf16, #tpu.memory_space<vmem>>, vector<4x512xbf16>,
    %c16_i32_78 = arith.constant 16 : i32
    %130 = tpu.dynamic_rotate %123 by %c16_i32_78 dim 1 : vector<4x512xf32>, i32 -> vector<4x512xf32>
    %c1_79 = arith.constant 1 : index
    %c0_80 = arith.constant 0 : index
    %131 = vector.load %arg4[%c1_79, %c0_80] : memref<9x512xf32, #tpu.memory_space<vmem>>, vector<1x512xf32>
    %132 = vector.broadcast %131 : vector<1x512xf32> to vector<4x512xf32>
    %133 = arith.mulf %130, %132 : vector<4x512xf32>
    %134 = arith.truncf %133 : vector<4x512xf32> to vector<4x512xbf16>
    %c76 = arith.constant 76 : index
    %c0_81 = arith.constant 0 : index
    %135 = vector.load %arg6[%c76, %c0_81] : memref<192x512xbf16, #tpu.memory_space<vmem>>, vector<4x512xbf16>
    tpu.vector_store %arg6[%c76, %c0_81], %134 {strides = array<i32>} : memref<192x512xbf16, #tpu.memory_space<vmem>>, vector<4x512xbf16>,
    %c15_i32_82 = arith.constant 15 : i32
    %136 = tpu.dynamic_rotate %123 by %c15_i32_82 dim 1 : vector<4x512xf32>, i32 -> vector<4x512xf32>
    %c2_83 = arith.constant 2 : index
    %c0_84 = arith.constant 0 : index
    %137 = vector.load %arg4[%c2_83, %c0_84] : memref<9x512xf32, #tpu.memory_space<vmem>>, vector<1x512xf32>
    %138 = vector.broadcast %137 : vector<1x512xf32> to vector<4x512xf32>
    %139 = arith.mulf %136, %138 : vector<4x512xf32>
    %140 = arith.truncf %139 : vector<4x512xf32> to vector<4x512xbf16>
    %c80 = arith.constant 80 : index
    %c0_85 = arith.constant 0 : index
    %141 = vector.load %arg6[%c80, %c0_85] : memref<192x512xbf16, #tpu.memory_space<vmem>>, vector<4x512xbf16>
    tpu.vector_store %arg6[%c80, %c0_85], %140 {strides = array<i32>} : memref<192x512xbf16, #tpu.memory_space<vmem>>, vector<4x512xbf16>,
    %c1_i32_86 = arith.constant 1 : i32
    %142 = tpu.dynamic_rotate %123 by %c1_i32_86 dim 1 : vector<4x512xf32>, i32 -> vector<4x512xf32>
    %c3_87 = arith.constant 3 : index
    %c0_88 = arith.constant 0 : index
    %143 = vector.load %arg4[%c3_87, %c0_88] : memref<9x512xf32, #tpu.memory_space<vmem>>, vector<1x512xf32>
    %144 = vector.broadcast %143 : vector<1x512xf32> to vector<4x512xf32>
    %145 = arith.mulf %142, %144 : vector<4x512xf32>
    %146 = arith.truncf %145 : vector<4x512xf32> to vector<4x512xbf16>
    %c84 = arith.constant 84 : index
    %c0_89 = arith.constant 0 : index
    %147 = vector.load %arg6[%c84, %c0_89] : memref<192x512xbf16, #tpu.memory_space<vmem>>, vector<4x512xbf16>
    tpu.vector_store %arg6[%c84, %c0_89], %146 {strides = array<i32>} : memref<192x512xbf16, #tpu.memory_space<vmem>>, vector<4x512xbf16>,
    %148 = arith.truncf %123 : vector<4x512xf32> to vector<4x512xbf16>
    %c88 = arith.constant 88 : index
    %c0_90 = arith.constant 0 : index
    %149 = vector.load %arg6[%c88, %c0_90] : memref<192x512xbf16, #tpu.memory_space<vmem>>, vector<4x512xbf16>
    tpu.vector_store %arg6[%c88, %c0_90], %148 {strides = array<i32>} : memref<192x512xbf16, #tpu.memory_space<vmem>>, vector<4x512xbf16>,
    %c511_i32_91 = arith.constant 511 : i32
    %150 = tpu.dynamic_rotate %123 by %c511_i32_91 dim 1 : vector<4x512xf32>, i32 -> vector<4x512xf32>
    %c5_92 = arith.constant 5 : index
    %c0_93 = arith.constant 0 : index
    %151 = vector.load %arg4[%c5_92, %c0_93] : memref<9x512xf32, #tpu.memory_space<vmem>>, vector<1x512xf32>
    %152 = vector.broadcast %151 : vector<1x512xf32> to vector<4x512xf32>
    %153 = arith.mulf %150, %152 : vector<4x512xf32>
    %154 = arith.truncf %153 : vector<4x512xf32> to vector<4x512xbf16>
    %c92 = arith.constant 92 : index
    %c0_94 = arith.constant 0 : index
    %155 = vector.load %arg6[%c92, %c0_94] : memref<192x512xbf16, #tpu.memory_space<vmem>>, vector<4x512xbf16>
    tpu.vector_store %arg6[%c92, %c0_94], %154 {strides = array<i32>} : memref<192x512xbf16, #tpu.memory_space<vmem>>, vector<4x512xbf16>,
    %c497_i32_95 = arith.constant 497 : i32
    %156 = tpu.dynamic_rotate %123 by %c497_i32_95 dim 1 : vector<4x512xf32>, i32 -> vector<4x512xf32>
    %c6_96 = arith.constant 6 : index
    %c0_97 = arith.constant 0 : index
    %157 = vector.load %arg4[%c6_96, %c0_97] : memref<9x512xf32, #tpu.memory_space<vmem>>, vector<1x512xf32>
    %158 = vector.broadcast %157 : vector<1x512xf32> to vector<4x512xf32>
    %159 = arith.mulf %156, %158 : vector<4x512xf32>
    %160 = arith.truncf %159 : vector<4x512xf32> to vector<4x512xbf16>
    %c96 = arith.constant 96 : index
    %c0_98 = arith.constant 0 : index
    %161 = vector.load %arg6[%c96, %c0_98] : memref<192x512xbf16, #tpu.memory_space<vmem>>, vector<4x512xbf16>
    tpu.vector_store %arg6[%c96, %c0_98], %160 {strides = array<i32>} : memref<192x512xbf16, #tpu.memory_space<vmem>>, vector<4x512xbf16>,
    %c496_i32_99 = arith.constant 496 : i32
    %162 = tpu.dynamic_rotate %123 by %c496_i32_99 dim 1 : vector<4x512xf32>, i32 -> vector<4x512xf32>
    %c7_100 = arith.constant 7 : index
    %c0_101 = arith.constant 0 : index
    %163 = vector.load %arg4[%c7_100, %c0_101] : memref<9x512xf32, #tpu.memory_space<vmem>>, vector<1x512xf32>
    %164 = vector.broadcast %163 : vector<1x512xf32> to vector<4x512xf32>
    %165 = arith.mulf %162, %164 : vector<4x512xf32>
    %166 = arith.truncf %165 : vector<4x512xf32> to vector<4x512xbf16>
    %c100 = arith.constant 100 : index
    %c0_102 = arith.constant 0 : index
    %167 = vector.load %arg6[%c100, %c0_102] : memref<192x512xbf16, #tpu.memory_space<vmem>>, vector<4x512xbf16>
    tpu.vector_store %arg6[%c100, %c0_102], %166 {strides = array<i32>} : memref<192x512xbf16, #tpu.memory_space<vmem>>, vector<4x512xbf16>,
    %c495_i32_103 = arith.constant 495 : i32
    %168 = tpu.dynamic_rotate %123 by %c495_i32_103 dim 1 : vector<4x512xf32>, i32 -> vector<4x512xf32>
    %c8_104 = arith.constant 8 : index
    %c0_105 = arith.constant 0 : index
    %169 = vector.load %arg4[%c8_104, %c0_105] : memref<9x512xf32, #tpu.memory_space<vmem>>, vector<1x512xf32>
    %170 = vector.broadcast %169 : vector<1x512xf32> to vector<4x512xf32>
    %171 = arith.mulf %168, %170 : vector<4x512xf32>
    %172 = arith.truncf %171 : vector<4x512xf32> to vector<4x512xbf16>
    %c104 = arith.constant 104 : index
    %c0_106 = arith.constant 0 : index
    %173 = vector.load %arg6[%c104, %c0_106] : memref<192x512xbf16, #tpu.memory_space<vmem>>, vector<4x512xbf16>
    tpu.vector_store %arg6[%c104, %c0_106], %172 {strides = array<i32>} : memref<192x512xbf16, #tpu.memory_space<vmem>>, vector<4x512xbf16>,
    %c2_107 = arith.constant 2 : index
    %c0_108 = arith.constant 0 : index
    %c0_109 = arith.constant 0 : index
    %174 = vector.load %arg2[%c2_107, %c0_108, %c0_109] : memref<15x4x256xbf16, #tpu.memory_space<vmem>>, vector<1x4x256xbf16>
    %175 = vector.shape_cast %174 : vector<1x4x256xbf16> to vector<4x256xbf16>
    %176 = vector.extract_strided_slice %175 {offsets = [0, 0], sizes = [4, 108], strides = [1, 1]} : vector<4x256xbf16> to vector<4x108xbf16>
    %c0_110 = arith.constant 0 : index
    %c0_111 = arith.constant 0 : index
    %177 = vector.load %arg6[%c0_110, %c0_111] : memref<192x512xbf16, #tpu.memory_space<vmem>>, vector<108x512xbf16>
    %cst_112 = arith.constant dense<0.000000e+00> : vector<4x512xf32>
    %178 = tpu.matmul %176, %177, %cst_112 {dimension_numbers = #tpu.dot_dimension_numbers<[1], [0], [0], [1], [0, 0, 1, 1], [], []>} : vector<4x108xbf16>, vector<108x512xbf16>, vector<4x512xf32> -> vector<4x512xf32>
    %c2_113 = arith.constant 2 : index
    %c0_114 = arith.constant 0 : index
    %c0_115 = arith.constant 0 : index
    %179 = vector.load %arg3[%c2_113, %c0_114, %c0_115] : memref<15x4x1xf32, #tpu.memory_space<vmem>>, vector<1x4x1xf32>
    %180 = vector.shape_cast %179 : vector<1x4x1xf32> to vector<4x1xf32>
    %181 = vector.broadcast %180 : vector<4x1xf32> to vector<4x512xf32>
    %182 = arith.addf %178, %181 : vector<4x512xf32>
    %cst_116 = arith.constant 0.000000e+00 : f32
    %183 = vector.broadcast %cst_116 : f32 to vector<4x512xf32>
    %184 = arith.maximumf %182, %183 : vector<4x512xf32>
    %c17_i32_117 = arith.constant 17 : i32
    %185 = tpu.dynamic_rotate %184 by %c17_i32_117 dim 1 : vector<4x512xf32>, i32 -> vector<4x512xf32>
    %c0_118 = arith.constant 0 : index
    %c0_119 = arith.constant 0 : index
    %186 = vector.load %arg4[%c0_118, %c0_119] : memref<9x512xf32, #tpu.memory_space<vmem>>, vector<1x512xf32>
    %187 = vector.broadcast %186 : vector<1x512xf32> to vector<4x512xf32>
    %188 = arith.mulf %185, %187 : vector<4x512xf32>
    %189 = arith.truncf %188 : vector<4x512xf32> to vector<4x512xbf16>
    %c108 = arith.constant 108 : index
    %c0_120 = arith.constant 0 : index
    %190 = vector.load %arg6[%c108, %c0_120] : memref<192x512xbf16, #tpu.memory_space<vmem>>, vector<4x512xbf16>
    tpu.vector_store %arg6[%c108, %c0_120], %189 {strides = array<i32>} : memref<192x512xbf16, #tpu.memory_space<vmem>>, vector<4x512xbf16>,
    %c16_i32_121 = arith.constant 16 : i32
    %191 = tpu.dynamic_rotate %184 by %c16_i32_121 dim 1 : vector<4x512xf32>, i32 -> vector<4x512xf32>
    %c1_122 = arith.constant 1 : index
    %c0_123 = arith.constant 0 : index
    %192 = vector.load %arg4[%c1_122, %c0_123] : memref<9x512xf32, #tpu.memory_space<vmem>>, vector<1x512xf32>
    %193 = vector.broadcast %192 : vector<1x512xf32> to vector<4x512xf32>
    %194 = arith.mulf %191, %193 : vector<4x512xf32>
    %195 = arith.truncf %194 : vector<4x512xf32> to vector<4x512xbf16>
    %c112 = arith.constant 112 : index
    %c0_124 = arith.constant 0 : index
    %196 = vector.load %arg6[%c112, %c0_124] : memref<192x512xbf16, #tpu.memory_space<vmem>>, vector<4x512xbf16>
    tpu.vector_store %arg6[%c112, %c0_124], %195 {strides = array<i32>} : memref<192x512xbf16, #tpu.memory_space<vmem>>, vector<4x512xbf16>,
    %c15_i32_125 = arith.constant 15 : i32
    %197 = tpu.dynamic_rotate %184 by %c15_i32_125 dim 1 : vector<4x512xf32>, i32 -> vector<4x512xf32>
    %c2_126 = arith.constant 2 : index
    %c0_127 = arith.constant 0 : index
    %198 = vector.load %arg4[%c2_126, %c0_127] : memref<9x512xf32, #tpu.memory_space<vmem>>, vector<1x512xf32>
    %199 = vector.broadcast %198 : vector<1x512xf32> to vector<4x512xf32>
    %200 = arith.mulf %197, %199 : vector<4x512xf32>
    %201 = arith.truncf %200 : vector<4x512xf32> to vector<4x512xbf16>
    %c116 = arith.constant 116 : index
    %c0_128 = arith.constant 0 : index
    %202 = vector.load %arg6[%c116, %c0_128] : memref<192x512xbf16, #tpu.memory_space<vmem>>, vector<4x512xbf16>
    tpu.vector_store %arg6[%c116, %c0_128], %201 {strides = array<i32>} : memref<192x512xbf16, #tpu.memory_space<vmem>>, vector<4x512xbf16>,
    %c1_i32_129 = arith.constant 1 : i32
    %203 = tpu.dynamic_rotate %184 by %c1_i32_129 dim 1 : vector<4x512xf32>, i32 -> vector<4x512xf32>
    %c3_130 = arith.constant 3 : index
    %c0_131 = arith.constant 0 : index
    %204 = vector.load %arg4[%c3_130, %c0_131] : memref<9x512xf32, #tpu.memory_space<vmem>>, vector<1x512xf32>
    %205 = vector.broadcast %204 : vector<1x512xf32> to vector<4x512xf32>
    %206 = arith.mulf %203, %205 : vector<4x512xf32>
    %207 = arith.truncf %206 : vector<4x512xf32> to vector<4x512xbf16>
    %c120 = arith.constant 120 : index
    %c0_132 = arith.constant 0 : index
    %208 = vector.load %arg6[%c120, %c0_132] : memref<192x512xbf16, #tpu.memory_space<vmem>>, vector<4x512xbf16>
    tpu.vector_store %arg6[%c120, %c0_132], %207 {strides = array<i32>} : memref<192x512xbf16, #tpu.memory_space<vmem>>, vector<4x512xbf16>,
    %209 = arith.truncf %184 : vector<4x512xf32> to vector<4x512xbf16>
    %c124 = arith.constant 124 : index
    %c0_133 = arith.constant 0 : index
    %210 = vector.load %arg6[%c124, %c0_133] : memref<192x512xbf16, #tpu.memory_space<vmem>>, vector<4x512xbf16>
    tpu.vector_store %arg6[%c124, %c0_133], %209 {strides = array<i32>} : memref<192x512xbf16, #tpu.memory_space<vmem>>, vector<4x512xbf16>,
    %c511_i32_134 = arith.constant 511 : i32
    %211 = tpu.dynamic_rotate %184 by %c511_i32_134 dim 1 : vector<4x512xf32>, i32 -> vector<4x512xf32>
    %c5_135 = arith.constant 5 : index
    %c0_136 = arith.constant 0 : index
    %212 = vector.load %arg4[%c5_135, %c0_136] : memref<9x512xf32, #tpu.memory_space<vmem>>, vector<1x512xf32>
    %213 = vector.broadcast %212 : vector<1x512xf32> to vector<4x512xf32>
    %214 = arith.mulf %211, %213 : vector<4x512xf32>
    %215 = arith.truncf %214 : vector<4x512xf32> to vector<4x512xbf16>
    %c128 = arith.constant 128 : index
    %c0_137 = arith.constant 0 : index
    %216 = vector.load %arg6[%c128, %c0_137] : memref<192x512xbf16, #tpu.memory_space<vmem>>, vector<4x512xbf16>
    tpu.vector_store %arg6[%c128, %c0_137], %215 {strides = array<i32>} : memref<192x512xbf16, #tpu.memory_space<vmem>>, vector<4x512xbf16>,
    %c497_i32_138 = arith.constant 497 : i32
    %217 = tpu.dynamic_rotate %184 by %c497_i32_138 dim 1 : vector<4x512xf32>, i32 -> vector<4x512xf32>
    %c6_139 = arith.constant 6 : index
    %c0_140 = arith.constant 0 : index
    %218 = vector.load %arg4[%c6_139, %c0_140] : memref<9x512xf32, #tpu.memory_space<vmem>>, vector<1x512xf32>
    %219 = vector.broadcast %218 : vector<1x512xf32> to vector<4x512xf32>
    %220 = arith.mulf %217, %219 : vector<4x512xf32>
    %221 = arith.truncf %220 : vector<4x512xf32> to vector<4x512xbf16>
    %c132 = arith.constant 132 : index
    %c0_141 = arith.constant 0 : index
    %222 = vector.load %arg6[%c132, %c0_141] : memref<192x512xbf16, #tpu.memory_space<vmem>>, vector<4x512xbf16>
    tpu.vector_store %arg6[%c132, %c0_141], %221 {strides = array<i32>} : memref<192x512xbf16, #tpu.memory_space<vmem>>, vector<4x512xbf16>,
    %c496_i32_142 = arith.constant 496 : i32
    %223 = tpu.dynamic_rotate %184 by %c496_i32_142 dim 1 : vector<4x512xf32>, i32 -> vector<4x512xf32>
    %c7_143 = arith.constant 7 : index
    %c0_144 = arith.constant 0 : index
    %224 = vector.load %arg4[%c7_143, %c0_144] : memref<9x512xf32, #tpu.memory_space<vmem>>, vector<1x512xf32>
    %225 = vector.broadcast %224 : vector<1x512xf32> to vector<4x512xf32>
    %226 = arith.mulf %223, %225 : vector<4x512xf32>
    %227 = arith.truncf %226 : vector<4x512xf32> to vector<4x512xbf16>
    %c136 = arith.constant 136 : index
    %c0_145 = arith.constant 0 : index
    %228 = vector.load %arg6[%c136, %c0_145] : memref<192x512xbf16, #tpu.memory_space<vmem>>, vector<4x512xbf16>
    tpu.vector_store %arg6[%c136, %c0_145], %227 {strides = array<i32>} : memref<192x512xbf16, #tpu.memory_space<vmem>>, vector<4x512xbf16>,
    %c495_i32_146 = arith.constant 495 : i32
    %229 = tpu.dynamic_rotate %184 by %c495_i32_146 dim 1 : vector<4x512xf32>, i32 -> vector<4x512xf32>
    %c8_147 = arith.constant 8 : index
    %c0_148 = arith.constant 0 : index
    %230 = vector.load %arg4[%c8_147, %c0_148] : memref<9x512xf32, #tpu.memory_space<vmem>>, vector<1x512xf32>
    %231 = vector.broadcast %230 : vector<1x512xf32> to vector<4x512xf32>
    %232 = arith.mulf %229, %231 : vector<4x512xf32>
    %233 = arith.truncf %232 : vector<4x512xf32> to vector<4x512xbf16>
    %c140 = arith.constant 140 : index
    %c0_149 = arith.constant 0 : index
    %234 = vector.load %arg6[%c140, %c0_149] : memref<192x512xbf16, #tpu.memory_space<vmem>>, vector<4x512xbf16>
    tpu.vector_store %arg6[%c140, %c0_149], %233 {strides = array<i32>} : memref<192x512xbf16, #tpu.memory_space<vmem>>, vector<4x512xbf16>,
    %c3_150 = arith.constant 3 : index
    %c0_151 = arith.constant 0 : index
    %c0_152 = arith.constant 0 : index
    %235 = vector.load %arg2[%c3_150, %c0_151, %c0_152] : memref<15x4x256xbf16, #tpu.memory_space<vmem>>, vector<1x4x256xbf16>
    %236 = vector.shape_cast %235 : vector<1x4x256xbf16> to vector<4x256xbf16>
    %237 = vector.extract_strided_slice %236 {offsets = [0, 0], sizes = [4, 144], strides = [1, 1]} : vector<4x256xbf16> to vector<4x144xbf16>
    %c0_153 = arith.constant 0 : index
    %c0_154 = arith.constant 0 : index
    %238 = vector.load %arg6[%c0_153, %c0_154] : memref<192x512xbf16, #tpu.memory_space<vmem>>, vector<144x512xbf16>
    %cst_155 = arith.constant dense<0.000000e+00> : vector<4x512xf32>
    %239 = tpu.matmul %237, %238, %cst_155 {dimension_numbers = #tpu.dot_dimension_numbers<[1], [0], [0], [1], [0, 0, 1, 1], [], []>} : vector<4x144xbf16>, vector<144x512xbf16>, vector<4x512xf32> -> vector<4x512xf32>
    %c3_156 = arith.constant 3 : index
    %c0_157 = arith.constant 0 : index
    %c0_158 = arith.constant 0 : index
    %240 = vector.load %arg3[%c3_156, %c0_157, %c0_158] : memref<15x4x1xf32, #tpu.memory_space<vmem>>, vector<1x4x1xf32>
    %241 = vector.shape_cast %240 : vector<1x4x1xf32> to vector<4x1xf32>
    %242 = vector.broadcast %241 : vector<4x1xf32> to vector<4x512xf32>
    %243 = arith.addf %239, %242 : vector<4x512xf32>
    %cst_159 = arith.constant 0.000000e+00 : f32
    %244 = vector.broadcast %cst_159 : f32 to vector<4x512xf32>
    %245 = arith.maximumf %243, %244 : vector<4x512xf32>
    %c17_i32_160 = arith.constant 17 : i32
    %246 = tpu.dynamic_rotate %245 by %c17_i32_160 dim 1 : vector<4x512xf32>, i32 -> vector<4x512xf32>
    %c0_161 = arith.constant 0 : index
    %c0_162 = arith.constant 0 : index
    %247 = vector.load %arg4[%c0_161, %c0_162] : memref<9x512xf32, #tpu.memory_space<vmem>>, vector<1x512xf32>
    %248 = vector.broadcast %247 : vector<1x512xf32> to vector<4x512xf32>
    %249 = arith.mulf %246, %248 : vector<4x512xf32>
    %250 = arith.truncf %249 : vector<4x512xf32> to vector<4x512xbf16>
    %c144 = arith.constant 144 : index
    %c0_163 = arith.constant 0 : index
    %251 = vector.load %arg6[%c144, %c0_163] : memref<192x512xbf16, #tpu.memory_space<vmem>>, vector<4x512xbf16>
    tpu.vector_store %arg6[%c144, %c0_163], %250 {strides = array<i32>} : memref<192x512xbf16, #tpu.memory_space<vmem>>, vector<4x512xbf16>,
    %c16_i32_164 = arith.constant 16 : i32
    %252 = tpu.dynamic_rotate %245 by %c16_i32_164 dim 1 : vector<4x512xf32>, i32 -> vector<4x512xf32>
    %c1_165 = arith.constant 1 : index
    %c0_166 = arith.constant 0 : index
    %253 = vector.load %arg4[%c1_165, %c0_166] : memref<9x512xf32, #tpu.memory_space<vmem>>, vector<1x512xf32>
    %254 = vector.broadcast %253 : vector<1x512xf32> to vector<4x512xf32>
    %255 = arith.mulf %252, %254 : vector<4x512xf32>
    %256 = arith.truncf %255 : vector<4x512xf32> to vector<4x512xbf16>
    %c148 = arith.constant 148 : index
    %c0_167 = arith.constant 0 : index
    %257 = vector.load %arg6[%c148, %c0_167] : memref<192x512xbf16, #tpu.memory_space<vmem>>, vector<4x512xbf16>
    tpu.vector_store %arg6[%c148, %c0_167], %256 {strides = array<i32>} : memref<192x512xbf16, #tpu.memory_space<vmem>>, vector<4x512xbf16>,
    %c15_i32_168 = arith.constant 15 : i32
    %258 = tpu.dynamic_rotate %245 by %c15_i32_168 dim 1 : vector<4x512xf32>, i32 -> vector<4x512xf32>
    %c2_169 = arith.constant 2 : index
    %c0_170 = arith.constant 0 : index
    %259 = vector.load %arg4[%c2_169, %c0_170] : memref<9x512xf32, #tpu.memory_space<vmem>>, vector<1x512xf32>
    %260 = vector.broadcast %259 : vector<1x512xf32> to vector<4x512xf32>
    %261 = arith.mulf %258, %260 : vector<4x512xf32>
    %262 = arith.truncf %261 : vector<4x512xf32> to vector<4x512xbf16>
    %c152 = arith.constant 152 : index
    %c0_171 = arith.constant 0 : index
    %263 = vector.load %arg6[%c152, %c0_171] : memref<192x512xbf16, #tpu.memory_space<vmem>>, vector<4x512xbf16>
    tpu.vector_store %arg6[%c152, %c0_171], %262 {strides = array<i32>} : memref<192x512xbf16, #tpu.memory_space<vmem>>, vector<4x512xbf16>,
    %c1_i32_172 = arith.constant 1 : i32
    %264 = tpu.dynamic_rotate %245 by %c1_i32_172 dim 1 : vector<4x512xf32>, i32 -> vector<4x512xf32>
    %c3_173 = arith.constant 3 : index
    %c0_174 = arith.constant 0 : index
    %265 = vector.load %arg4[%c3_173, %c0_174] : memref<9x512xf32, #tpu.memory_space<vmem>>, vector<1x512xf32>
    %266 = vector.broadcast %265 : vector<1x512xf32> to vector<4x512xf32>
    %267 = arith.mulf %264, %266 : vector<4x512xf32>
    %268 = arith.truncf %267 : vector<4x512xf32> to vector<4x512xbf16>
    %c156 = arith.constant 156 : index
    %c0_175 = arith.constant 0 : index
    %269 = vector.load %arg6[%c156, %c0_175] : memref<192x512xbf16, #tpu.memory_space<vmem>>, vector<4x512xbf16>
    tpu.vector_store %arg6[%c156, %c0_175], %268 {strides = array<i32>} : memref<192x512xbf16, #tpu.memory_space<vmem>>, vector<4x512xbf16>,
    %270 = arith.truncf %245 : vector<4x512xf32> to vector<4x512xbf16>
    %c160 = arith.constant 160 : index
    %c0_176 = arith.constant 0 : index
    %271 = vector.load %arg6[%c160, %c0_176] : memref<192x512xbf16, #tpu.memory_space<vmem>>, vector<4x512xbf16>
    tpu.vector_store %arg6[%c160, %c0_176], %270 {strides = array<i32>} : memref<192x512xbf16, #tpu.memory_space<vmem>>, vector<4x512xbf16>,
    %c511_i32_177 = arith.constant 511 : i32
    %272 = tpu.dynamic_rotate %245 by %c511_i32_177 dim 1 : vector<4x512xf32>, i32 -> vector<4x512xf32>
    %c5_178 = arith.constant 5 : index
    %c0_179 = arith.constant 0 : index
    %273 = vector.load %arg4[%c5_178, %c0_179] : memref<9x512xf32, #tpu.memory_space<vmem>>, vector<1x512xf32>
    %274 = vector.broadcast %273 : vector<1x512xf32> to vector<4x512xf32>
    %275 = arith.mulf %272, %274 : vector<4x512xf32>
    %276 = arith.truncf %275 : vector<4x512xf32> to vector<4x512xbf16>
    %c164 = arith.constant 164 : index
    %c0_180 = arith.constant 0 : index
    %277 = vector.load %arg6[%c164, %c0_180] : memref<192x512xbf16, #tpu.memory_space<vmem>>, vector<4x512xbf16>
    tpu.vector_store %arg6[%c164, %c0_180], %276 {strides = array<i32>} : memref<192x512xbf16, #tpu.memory_space<vmem>>, vector<4x512xbf16>,
    %c497_i32_181 = arith.constant 497 : i32
    %278 = tpu.dynamic_rotate %245 by %c497_i32_181 dim 1 : vector<4x512xf32>, i32 -> vector<4x512xf32>
    %c6_182 = arith.constant 6 : index
    %c0_183 = arith.constant 0 : index
    %279 = vector.load %arg4[%c6_182, %c0_183] : memref<9x512xf32, #tpu.memory_space<vmem>>, vector<1x512xf32>
    %280 = vector.broadcast %279 : vector<1x512xf32> to vector<4x512xf32>
    %281 = arith.mulf %278, %280 : vector<4x512xf32>
    %282 = arith.truncf %281 : vector<4x512xf32> to vector<4x512xbf16>
    %c168 = arith.constant 168 : index
    %c0_184 = arith.constant 0 : index
    %283 = vector.load %arg6[%c168, %c0_184] : memref<192x512xbf16, #tpu.memory_space<vmem>>, vector<4x512xbf16>
    tpu.vector_store %arg6[%c168, %c0_184], %282 {strides = array<i32>} : memref<192x512xbf16, #tpu.memory_space<vmem>>, vector<4x512xbf16>,
    %c496_i32_185 = arith.constant 496 : i32
    %284 = tpu.dynamic_rotate %245 by %c496_i32_185 dim 1 : vector<4x512xf32>, i32 -> vector<4x512xf32>
    %c7_186 = arith.constant 7 : index
    %c0_187 = arith.constant 0 : index
    %285 = vector.load %arg4[%c7_186, %c0_187] : memref<9x512xf32, #tpu.memory_space<vmem>>, vector<1x512xf32>
    %286 = vector.broadcast %285 : vector<1x512xf32> to vector<4x512xf32>
    %287 = arith.mulf %284, %286 : vector<4x512xf32>
    %288 = arith.truncf %287 : vector<4x512xf32> to vector<4x512xbf16>
    %c172 = arith.constant 172 : index
    %c0_188 = arith.constant 0 : index
    %289 = vector.load %arg6[%c172, %c0_188] : memref<192x512xbf16, #tpu.memory_space<vmem>>, vector<4x512xbf16>
    tpu.vector_store %arg6[%c172, %c0_188], %288 {strides = array<i32>} : memref<192x512xbf16, #tpu.memory_space<vmem>>, vector<4x512xbf16>,
    %c495_i32_189 = arith.constant 495 : i32
    %290 = tpu.dynamic_rotate %245 by %c495_i32_189 dim 1 : vector<4x512xf32>, i32 -> vector<4x512xf32>
    %c8_190 = arith.constant 8 : index
    %c0_191 = arith.constant 0 : index
    %291 = vector.load %arg4[%c8_190, %c0_191] : memref<9x512xf32, #tpu.memory_space<vmem>>, vector<1x512xf32>
    %292 = vector.broadcast %291 : vector<1x512xf32> to vector<4x512xf32>
    %293 = arith.mulf %290, %292 : vector<4x512xf32>
    %294 = arith.truncf %293 : vector<4x512xf32> to vector<4x512xbf16>
    %c176 = arith.constant 176 : index
    %c0_192 = arith.constant 0 : index
    %295 = vector.load %arg6[%c176, %c0_192] : memref<192x512xbf16, #tpu.memory_space<vmem>>, vector<4x512xbf16>
    tpu.vector_store %arg6[%c176, %c0_192], %294 {strides = array<i32>} : memref<192x512xbf16, #tpu.memory_space<vmem>>, vector<4x512xbf16>,
    %c4_193 = arith.constant 4 : index
    %c0_194 = arith.constant 0 : index
    %c0_195 = arith.constant 0 : index
    %296 = vector.load %arg2[%c4_193, %c0_194, %c0_195] : memref<15x4x256xbf16, #tpu.memory_space<vmem>>, vector<1x4x256xbf16>
    %297 = vector.shape_cast %296 : vector<1x4x256xbf16> to vector<4x256xbf16>
    %298 = vector.extract_strided_slice %297 {offsets = [0, 0], sizes = [4, 180], strides = [1, 1]} : vector<4x256xbf16> to vector<4x180xbf16>
    %c0_196 = arith.constant 0 : index
    %c0_197 = arith.constant 0 : index
    %299 = vector.load %arg6[%c0_196, %c0_197] : memref<192x512xbf16, #tpu.memory_space<vmem>>, vector<180x512xbf16>
    %cst_198 = arith.constant dense<0.000000e+00> : vector<4x512xf32>
    %300 = tpu.matmul %298, %299, %cst_198 {dimension_numbers = #tpu.dot_dimension_numbers<[1], [0], [0], [1], [0, 0, 1, 1], [], []>} : vector<4x180xbf16>, vector<180x512xbf16>, vector<4x512xf32> -> vector<4x512xf32>
    %c4_199 = arith.constant 4 : index
    %c0_200 = arith.constant 0 : index
    %c0_201 = arith.constant 0 : index
    %301 = vector.load %arg3[%c4_199, %c0_200, %c0_201] : memref<15x4x1xf32, #tpu.memory_space<vmem>>, vector<1x4x1xf32>
    %302 = vector.shape_cast %301 : vector<1x4x1xf32> to vector<4x1xf32>
    %303 = vector.broadcast %302 : vector<4x1xf32> to vector<4x512xf32>
    %304 = arith.addf %300, %303 : vector<4x512xf32>
    %cst_202 = arith.constant 2.000000e-01 : f32
    %305 = vector.broadcast %cst_202 : f32 to vector<4x512xf32>
    %306 = arith.mulf %304, %305 : vector<4x512xf32>
    %307 = arith.addf %306, %1 : vector<4x512xf32>
    %c17_i32_203 = arith.constant 17 : i32
    %308 = tpu.dynamic_rotate %307 by %c17_i32_203 dim 1 : vector<4x512xf32>, i32 -> vector<4x512xf32>
    %c0_204 = arith.constant 0 : index
    %c0_205 = arith.constant 0 : index
    %309 = vector.load %arg4[%c0_204, %c0_205] : memref<9x512xf32, #tpu.memory_space<vmem>>, vector<1x512xf32>
    %310 = vector.broadcast %309 : vector<1x512xf32> to vector<4x512xf32>
    %311 = arith.mulf %308, %310 : vector<4x512xf32>
    %312 = arith.truncf %311 : vector<4x512xf32> to vector<4x512xbf16>
    %c0_206 = arith.constant 0 : index
    %c0_207 = arith.constant 0 : index
    %313 = vector.load %arg6[%c0_206, %c0_207] : memref<192x512xbf16, #tpu.memory_space<vmem>>, vector<4x512xbf16>
    tpu.vector_store %arg6[%c0_206, %c0_207], %312 {strides = array<i32>} : memref<192x512xbf16, #tpu.memory_space<vmem>>, vector<4x512xbf16>,
    %c16_i32_208 = arith.constant 16 : i32
    %314 = tpu.dynamic_rotate %307 by %c16_i32_208 dim 1 : vector<4x512xf32>, i32 -> vector<4x512xf32>
    %c1_209 = arith.constant 1 : index
    %c0_210 = arith.constant 0 : index
    %315 = vector.load %arg4[%c1_209, %c0_210] : memref<9x512xf32, #tpu.memory_space<vmem>>, vector<1x512xf32>
    %316 = vector.broadcast %315 : vector<1x512xf32> to vector<4x512xf32>
    %317 = arith.mulf %314, %316 : vector<4x512xf32>
    %318 = arith.truncf %317 : vector<4x512xf32> to vector<4x512xbf16>
    %c4_211 = arith.constant 4 : index
    %c0_212 = arith.constant 0 : index
    %319 = vector.load %arg6[%c4_211, %c0_212] : memref<192x512xbf16, #tpu.memory_space<vmem>>, vector<4x512xbf16>
    tpu.vector_store %arg6[%c4_211, %c0_212], %318 {strides = array<i32>} : memref<192x512xbf16, #tpu.memory_space<vmem>>, vector<4x512xbf16>,
    %c15_i32_213 = arith.constant 15 : i32
    %320 = tpu.dynamic_rotate %307 by %c15_i32_213 dim 1 : vector<4x512xf32>, i32 -> vector<4x512xf32>
    %c2_214 = arith.constant 2 : index
    %c0_215 = arith.constant 0 : index
    %321 = vector.load %arg4[%c2_214, %c0_215] : memref<9x512xf32, #tpu.memory_space<vmem>>, vector<1x512xf32>
    %322 = vector.broadcast %321 : vector<1x512xf32> to vector<4x512xf32>
    %323 = arith.mulf %320, %322 : vector<4x512xf32>
    %324 = arith.truncf %323 : vector<4x512xf32> to vector<4x512xbf16>
    %c8_216 = arith.constant 8 : index
    %c0_217 = arith.constant 0 : index
    %325 = vector.load %arg6[%c8_216, %c0_217] : memref<192x512xbf16, #tpu.memory_space<vmem>>, vector<4x512xbf16>
    tpu.vector_store %arg6[%c8_216, %c0_217], %324 {strides = array<i32>} : memref<192x512xbf16, #tpu.memory_space<vmem>>, vector<4x512xbf16>,
    %c1_i32_218 = arith.constant 1 : i32
    %326 = tpu.dynamic_rotate %307 by %c1_i32_218 dim 1 : vector<4x512xf32>, i32 -> vector<4x512xf32>
    %c3_219 = arith.constant 3 : index
    %c0_220 = arith.constant 0 : index
    %327 = vector.load %arg4[%c3_219, %c0_220] : memref<9x512xf32, #tpu.memory_space<vmem>>, vector<1x512xf32>
    %328 = vector.broadcast %327 : vector<1x512xf32> to vector<4x512xf32>
    %329 = arith.mulf %326, %328 : vector<4x512xf32>
    %330 = arith.truncf %329 : vector<4x512xf32> to vector<4x512xbf16>
    %c12_221 = arith.constant 12 : index
    %c0_222 = arith.constant 0 : index
    %331 = vector.load %arg6[%c12_221, %c0_222] : memref<192x512xbf16, #tpu.memory_space<vmem>>, vector<4x512xbf16>
    tpu.vector_store %arg6[%c12_221, %c0_222], %330 {strides = array<i32>} : memref<192x512xbf16, #tpu.memory_space<vmem>>, vector<4x512xbf16>,
    %332 = arith.truncf %307 : vector<4x512xf32> to vector<4x512xbf16>
    %c16_223 = arith.constant 16 : index
    %c0_224 = arith.constant 0 : index
    %333 = vector.load %arg6[%c16_223, %c0_224] : memref<192x512xbf16, #tpu.memory_space<vmem>>, vector<4x512xbf16>
    tpu.vector_store %arg6[%c16_223, %c0_224], %332 {strides = array<i32>} : memref<192x512xbf16, #tpu.memory_space<vmem>>, vector<4x512xbf16>,
    %c511_i32_225 = arith.constant 511 : i32
    %334 = tpu.dynamic_rotate %307 by %c511_i32_225 dim 1 : vector<4x512xf32>, i32 -> vector<4x512xf32>
    %c5_226 = arith.constant 5 : index
    %c0_227 = arith.constant 0 : index
    %335 = vector.load %arg4[%c5_226, %c0_227] : memref<9x512xf32, #tpu.memory_space<vmem>>, vector<1x512xf32>
    %336 = vector.broadcast %335 : vector<1x512xf32> to vector<4x512xf32>
    %337 = arith.mulf %334, %336 : vector<4x512xf32>
    %338 = arith.truncf %337 : vector<4x512xf32> to vector<4x512xbf16>
    %c20_228 = arith.constant 20 : index
    %c0_229 = arith.constant 0 : index
    %339 = vector.load %arg6[%c20_228, %c0_229] : memref<192x512xbf16, #tpu.memory_space<vmem>>, vector<4x512xbf16>
    tpu.vector_store %arg6[%c20_228, %c0_229], %338 {strides = array<i32>} : memref<192x512xbf16, #tpu.memory_space<vmem>>, vector<4x512xbf16>,
    %c497_i32_230 = arith.constant 497 : i32
    %340 = tpu.dynamic_rotate %307 by %c497_i32_230 dim 1 : vector<4x512xf32>, i32 -> vector<4x512xf32>
    %c6_231 = arith.constant 6 : index
    %c0_232 = arith.constant 0 : index
    %341 = vector.load %arg4[%c6_231, %c0_232] : memref<9x512xf32, #tpu.memory_space<vmem>>, vector<1x512xf32>
    %342 = vector.broadcast %341 : vector<1x512xf32> to vector<4x512xf32>
    %343 = arith.mulf %340, %342 : vector<4x512xf32>
    %344 = arith.truncf %343 : vector<4x512xf32> to vector<4x512xbf16>
    %c24_233 = arith.constant 24 : index
    %c0_234 = arith.constant 0 : index
    %345 = vector.load %arg6[%c24_233, %c0_234] : memref<192x512xbf16, #tpu.memory_space<vmem>>, vector<4x512xbf16>
    tpu.vector_store %arg6[%c24_233, %c0_234], %344 {strides = array<i32>} : memref<192x512xbf16, #tpu.memory_space<vmem>>, vector<4x512xbf16>,
    %c496_i32_235 = arith.constant 496 : i32
    %346 = tpu.dynamic_rotate %307 by %c496_i32_235 dim 1 : vector<4x512xf32>, i32 -> vector<4x512xf32>
    %c7_236 = arith.constant 7 : index
    %c0_237 = arith.constant 0 : index
    %347 = vector.load %arg4[%c7_236, %c0_237] : memref<9x512xf32, #tpu.memory_space<vmem>>, vector<1x512xf32>
    %348 = vector.broadcast %347 : vector<1x512xf32> to vector<4x512xf32>
    %349 = arith.mulf %346, %348 : vector<4x512xf32>
    %350 = arith.truncf %349 : vector<4x512xf32> to vector<4x512xbf16>
    %c28_238 = arith.constant 28 : index
    %c0_239 = arith.constant 0 : index
    %351 = vector.load %arg6[%c28_238, %c0_239] : memref<192x512xbf16, #tpu.memory_space<vmem>>, vector<4x512xbf16>
    tpu.vector_store %arg6[%c28_238, %c0_239], %350 {strides = array<i32>} : memref<192x512xbf16, #tpu.memory_space<vmem>>, vector<4x512xbf16>,
    %c495_i32_240 = arith.constant 495 : i32
    %352 = tpu.dynamic_rotate %307 by %c495_i32_240 dim 1 : vector<4x512xf32>, i32 -> vector<4x512xf32>
    %c8_241 = arith.constant 8 : index
    %c0_242 = arith.constant 0 : index
    %353 = vector.load %arg4[%c8_241, %c0_242] : memref<9x512xf32, #tpu.memory_space<vmem>>, vector<1x512xf32>
    %354 = vector.broadcast %353 : vector<1x512xf32> to vector<4x512xf32>
    %355 = arith.mulf %352, %354 : vector<4x512xf32>
    %356 = arith.truncf %355 : vector<4x512xf32> to vector<4x512xbf16>
    %c32_243 = arith.constant 32 : index
    %c0_244 = arith.constant 0 : index
    %357 = vector.load %arg6[%c32_243, %c0_244] : memref<192x512xbf16, #tpu.memory_space<vmem>>, vector<4x512xbf16>
    tpu.vector_store %arg6[%c32_243, %c0_244], %356 {strides = array<i32>} : memref<192x512xbf16, #tpu.memory_space<vmem>>, vector<4x512xbf16>,
    %c5_245 = arith.constant 5 : index
    %c0_246 = arith.constant 0 : index
    %c0_247 = arith.constant 0 : index
    %358 = vector.load %arg2[%c5_245, %c0_246, %c0_247] : memref<15x4x256xbf16, #tpu.memory_space<vmem>>, vector<1x4x256xbf16>
    %359 = vector.shape_cast %358 : vector<1x4x256xbf16> to vector<4x256xbf16>
    %360 = vector.extract_strided_slice %359 {offsets = [0, 0], sizes = [4, 36], strides = [1, 1]} : vector<4x256xbf16> to vector<4x36xbf16>
    %c0_248 = arith.constant 0 : index
    %c0_249 = arith.constant 0 : index
    %361 = vector.load %arg6[%c0_248, %c0_249] : memref<192x512xbf16, #tpu.memory_space<vmem>>, vector<36x512xbf16>
    %cst_250 = arith.constant dense<0.000000e+00> : vector<4x512xf32>
    %362 = tpu.matmul %360, %361, %cst_250 {dimension_numbers = #tpu.dot_dimension_numbers<[1], [0], [0], [1], [0, 0, 1, 1], [], []>} : vector<4x36xbf16>, vector<36x512xbf16>, vector<4x512xf32> -> vector<4x512xf32>
    %c5_251 = arith.constant 5 : index
    %c0_252 = arith.constant 0 : index
    %c0_253 = arith.constant 0 : index
    %363 = vector.load %arg3[%c5_251, %c0_252, %c0_253] : memref<15x4x1xf32, #tpu.memory_space<vmem>>, vector<1x4x1xf32>
    %364 = vector.shape_cast %363 : vector<1x4x1xf32> to vector<4x1xf32>
    %365 = vector.broadcast %364 : vector<4x1xf32> to vector<4x512xf32>
    %366 = arith.addf %362, %365 : vector<4x512xf32>
    %cst_254 = arith.constant 0.000000e+00 : f32
    %367 = vector.broadcast %cst_254 : f32 to vector<4x512xf32>
    %368 = arith.maximumf %366, %367 : vector<4x512xf32>
    %c17_i32_255 = arith.constant 17 : i32
    %369 = tpu.dynamic_rotate %368 by %c17_i32_255 dim 1 : vector<4x512xf32>, i32 -> vector<4x512xf32>
    %c0_256 = arith.constant 0 : index
    %c0_257 = arith.constant 0 : index
    %370 = vector.load %arg4[%c0_256, %c0_257] : memref<9x512xf32, #tpu.memory_space<vmem>>, vector<1x512xf32>
    %371 = vector.broadcast %370 : vector<1x512xf32> to vector<4x512xf32>
    %372 = arith.mulf %369, %371 : vector<4x512xf32>
    %373 = arith.truncf %372 : vector<4x512xf32> to vector<4x512xbf16>
    %c36_258 = arith.constant 36 : index
    %c0_259 = arith.constant 0 : index
    %374 = vector.load %arg6[%c36_258, %c0_259] : memref<192x512xbf16, #tpu.memory_space<vmem>>, vector<4x512xbf16>
    tpu.vector_store %arg6[%c36_258, %c0_259], %373 {strides = array<i32>} : memref<192x512xbf16, #tpu.memory_space<vmem>>, vector<4x512xbf16>,
    %c16_i32_260 = arith.constant 16 : i32
    %375 = tpu.dynamic_rotate %368 by %c16_i32_260 dim 1 : vector<4x512xf32>, i32 -> vector<4x512xf32>
    %c1_261 = arith.constant 1 : index
    %c0_262 = arith.constant 0 : index
    %376 = vector.load %arg4[%c1_261, %c0_262] : memref<9x512xf32, #tpu.memory_space<vmem>>, vector<1x512xf32>
    %377 = vector.broadcast %376 : vector<1x512xf32> to vector<4x512xf32>
    %378 = arith.mulf %375, %377 : vector<4x512xf32>
    %379 = arith.truncf %378 : vector<4x512xf32> to vector<4x512xbf16>
    %c40_263 = arith.constant 40 : index
    %c0_264 = arith.constant 0 : index
    %380 = vector.load %arg6[%c40_263, %c0_264] : memref<192x512xbf16, #tpu.memory_space<vmem>>, vector<4x512xbf16>
    tpu.vector_store %arg6[%c40_263, %c0_264], %379 {strides = array<i32>} : memref<192x512xbf16, #tpu.memory_space<vmem>>, vector<4x512xbf16>,
    %c15_i32_265 = arith.constant 15 : i32
    %381 = tpu.dynamic_rotate %368 by %c15_i32_265 dim 1 : vector<4x512xf32>, i32 -> vector<4x512xf32>
    %c2_266 = arith.constant 2 : index
    %c0_267 = arith.constant 0 : index
    %382 = vector.load %arg4[%c2_266, %c0_267] : memref<9x512xf32, #tpu.memory_space<vmem>>, vector<1x512xf32>
    %383 = vector.broadcast %382 : vector<1x512xf32> to vector<4x512xf32>
    %384 = arith.mulf %381, %383 : vector<4x512xf32>
    %385 = arith.truncf %384 : vector<4x512xf32> to vector<4x512xbf16>
    %c44_268 = arith.constant 44 : index
    %c0_269 = arith.constant 0 : index
    %386 = vector.load %arg6[%c44_268, %c0_269] : memref<192x512xbf16, #tpu.memory_space<vmem>>, vector<4x512xbf16>
    tpu.vector_store %arg6[%c44_268, %c0_269], %385 {strides = array<i32>} : memref<192x512xbf16, #tpu.memory_space<vmem>>, vector<4x512xbf16>,
    %c1_i32_270 = arith.constant 1 : i32
    %387 = tpu.dynamic_rotate %368 by %c1_i32_270 dim 1 : vector<4x512xf32>, i32 -> vector<4x512xf32>
    %c3_271 = arith.constant 3 : index
    %c0_272 = arith.constant 0 : index
    %388 = vector.load %arg4[%c3_271, %c0_272] : memref<9x512xf32, #tpu.memory_space<vmem>>, vector<1x512xf32>
    %389 = vector.broadcast %388 : vector<1x512xf32> to vector<4x512xf32>
    %390 = arith.mulf %387, %389 : vector<4x512xf32>
    %391 = arith.truncf %390 : vector<4x512xf32> to vector<4x512xbf16>
    %c48_273 = arith.constant 48 : index
    %c0_274 = arith.constant 0 : index
    %392 = vector.load %arg6[%c48_273, %c0_274] : memref<192x512xbf16, #tpu.memory_space<vmem>>, vector<4x512xbf16>
    tpu.vector_store %arg6[%c48_273, %c0_274], %391 {strides = array<i32>} : memref<192x512xbf16, #tpu.memory_space<vmem>>, vector<4x512xbf16>,
    %393 = arith.truncf %368 : vector<4x512xf32> to vector<4x512xbf16>
    %c52_275 = arith.constant 52 : index
    %c0_276 = arith.constant 0 : index
    %394 = vector.load %arg6[%c52_275, %c0_276] : memref<192x512xbf16, #tpu.memory_space<vmem>>, vector<4x512xbf16>
    tpu.vector_store %arg6[%c52_275, %c0_276], %393 {strides = array<i32>} : memref<192x512xbf16, #tpu.memory_space<vmem>>, vector<4x512xbf16>,
    %c511_i32_277 = arith.constant 511 : i32
    %395 = tpu.dynamic_rotate %368 by %c511_i32_277 dim 1 : vector<4x512xf32>, i32 -> vector<4x512xf32>
    %c5_278 = arith.constant 5 : index
    %c0_279 = arith.constant 0 : index
    %396 = vector.load %arg4[%c5_278, %c0_279] : memref<9x512xf32, #tpu.memory_space<vmem>>, vector<1x512xf32>
    %397 = vector.broadcast %396 : vector<1x512xf32> to vector<4x512xf32>
    %398 = arith.mulf %395, %397 : vector<4x512xf32>
    %399 = arith.truncf %398 : vector<4x512xf32> to vector<4x512xbf16>
    %c56_280 = arith.constant 56 : index
    %c0_281 = arith.constant 0 : index
    %400 = vector.load %arg6[%c56_280, %c0_281] : memref<192x512xbf16, #tpu.memory_space<vmem>>, vector<4x512xbf16>
    tpu.vector_store %arg6[%c56_280, %c0_281], %399 {strides = array<i32>} : memref<192x512xbf16, #tpu.memory_space<vmem>>, vector<4x512xbf16>,
    %c497_i32_282 = arith.constant 497 : i32
    %401 = tpu.dynamic_rotate %368 by %c497_i32_282 dim 1 : vector<4x512xf32>, i32 -> vector<4x512xf32>
    %c6_283 = arith.constant 6 : index
    %c0_284 = arith.constant 0 : index
    %402 = vector.load %arg4[%c6_283, %c0_284] : memref<9x512xf32, #tpu.memory_space<vmem>>, vector<1x512xf32>
    %403 = vector.broadcast %402 : vector<1x512xf32> to vector<4x512xf32>
    %404 = arith.mulf %401, %403 : vector<4x512xf32>
    %405 = arith.truncf %404 : vector<4x512xf32> to vector<4x512xbf16>
    %c60_285 = arith.constant 60 : index
    %c0_286 = arith.constant 0 : index
    %406 = vector.load %arg6[%c60_285, %c0_286] : memref<192x512xbf16, #tpu.memory_space<vmem>>, vector<4x512xbf16>
    tpu.vector_store %arg6[%c60_285, %c0_286], %405 {strides = array<i32>} : memref<192x512xbf16, #tpu.memory_space<vmem>>, vector<4x512xbf16>,
    %c496_i32_287 = arith.constant 496 : i32
    %407 = tpu.dynamic_rotate %368 by %c496_i32_287 dim 1 : vector<4x512xf32>, i32 -> vector<4x512xf32>
    %c7_288 = arith.constant 7 : index
    %c0_289 = arith.constant 0 : index
    %408 = vector.load %arg4[%c7_288, %c0_289] : memref<9x512xf32, #tpu.memory_space<vmem>>, vector<1x512xf32>
    %409 = vector.broadcast %408 : vector<1x512xf32> to vector<4x512xf32>
    %410 = arith.mulf %407, %409 : vector<4x512xf32>
    %411 = arith.truncf %410 : vector<4x512xf32> to vector<4x512xbf16>
    %c64_290 = arith.constant 64 : index
    %c0_291 = arith.constant 0 : index
    %412 = vector.load %arg6[%c64_290, %c0_291] : memref<192x512xbf16, #tpu.memory_space<vmem>>, vector<4x512xbf16>
    tpu.vector_store %arg6[%c64_290, %c0_291], %411 {strides = array<i32>} : memref<192x512xbf16, #tpu.memory_space<vmem>>, vector<4x512xbf16>,
    %c495_i32_292 = arith.constant 495 : i32
    %413 = tpu.dynamic_rotate %368 by %c495_i32_292 dim 1 : vector<4x512xf32>, i32 -> vector<4x512xf32>
    %c8_293 = arith.constant 8 : index
    %c0_294 = arith.constant 0 : index
    %414 = vector.load %arg4[%c8_293, %c0_294] : memref<9x512xf32, #tpu.memory_space<vmem>>, vector<1x512xf32>
    %415 = vector.broadcast %414 : vector<1x512xf32> to vector<4x512xf32>
    %416 = arith.mulf %413, %415 : vector<4x512xf32>
    %417 = arith.truncf %416 : vector<4x512xf32> to vector<4x512xbf16>
    %c68_295 = arith.constant 68 : index
    %c0_296 = arith.constant 0 : index
    %418 = vector.load %arg6[%c68_295, %c0_296] : memref<192x512xbf16, #tpu.memory_space<vmem>>, vector<4x512xbf16>
    tpu.vector_store %arg6[%c68_295, %c0_296], %417 {strides = array<i32>} : memref<192x512xbf16, #tpu.memory_space<vmem>>, vector<4x512xbf16>,
    %c6_297 = arith.constant 6 : index
    %c0_298 = arith.constant 0 : index
    %c0_299 = arith.constant 0 : index
    %419 = vector.load %arg2[%c6_297, %c0_298, %c0_299] : memref<15x4x256xbf16, #tpu.memory_space<vmem>>, vector<1x4x256xbf16>
    %420 = vector.shape_cast %419 : vector<1x4x256xbf16> to vector<4x256xbf16>
    %421 = vector.extract_strided_slice %420 {offsets = [0, 0], sizes = [4, 72], strides = [1, 1]} : vector<4x256xbf16> to vector<4x72xbf16>
    %c0_300 = arith.constant 0 : index
    %c0_301 = arith.constant 0 : index
    %422 = vector.load %arg6[%c0_300, %c0_301] : memref<192x512xbf16, #tpu.memory_space<vmem>>, vector<72x512xbf16>
    %cst_302 = arith.constant dense<0.000000e+00> : vector<4x512xf32>
    %423 = tpu.matmul %421, %422, %cst_302 {dimension_numbers = #tpu.dot_dimension_numbers<[1], [0], [0], [1], [0, 0, 1, 1], [], []>} : vector<4x72xbf16>, vector<72x512xbf16>, vector<4x512xf32> -> vector<4x512xf32>
    %c6_303 = arith.constant 6 : index
    %c0_304 = arith.constant 0 : index
    %c0_305 = arith.constant 0 : index
    %424 = vector.load %arg3[%c6_303, %c0_304, %c0_305] : memref<15x4x1xf32, #tpu.memory_space<vmem>>, vector<1x4x1xf32>
    %425 = vector.shape_cast %424 : vector<1x4x1xf32> to vector<4x1xf32>
    %426 = vector.broadcast %425 : vector<4x1xf32> to vector<4x512xf32>
    %427 = arith.addf %423, %426 : vector<4x512xf32>
    %cst_306 = arith.constant 0.000000e+00 : f32
    %428 = vector.broadcast %cst_306 : f32 to vector<4x512xf32>
    %429 = arith.maximumf %427, %428 : vector<4x512xf32>
    %c17_i32_307 = arith.constant 17 : i32
    %430 = tpu.dynamic_rotate %429 by %c17_i32_307 dim 1 : vector<4x512xf32>, i32 -> vector<4x512xf32>
    %c0_308 = arith.constant 0 : index
    %c0_309 = arith.constant 0 : index
    %431 = vector.load %arg4[%c0_308, %c0_309] : memref<9x512xf32, #tpu.memory_space<vmem>>, vector<1x512xf32>
    %432 = vector.broadcast %431 : vector<1x512xf32> to vector<4x512xf32>
    %433 = arith.mulf %430, %432 : vector<4x512xf32>
    %434 = arith.truncf %433 : vector<4x512xf32> to vector<4x512xbf16>
    %c72_310 = arith.constant 72 : index
    %c0_311 = arith.constant 0 : index
    %435 = vector.load %arg6[%c72_310, %c0_311] : memref<192x512xbf16, #tpu.memory_space<vmem>>, vector<4x512xbf16>
    tpu.vector_store %arg6[%c72_310, %c0_311], %434 {strides = array<i32>} : memref<192x512xbf16, #tpu.memory_space<vmem>>, vector<4x512xbf16>,
    %c16_i32_312 = arith.constant 16 : i32
    %436 = tpu.dynamic_rotate %429 by %c16_i32_312 dim 1 : vector<4x512xf32>, i32 -> vector<4x512xf32>
    %c1_313 = arith.constant 1 : index
    %c0_314 = arith.constant 0 : index
    %437 = vector.load %arg4[%c1_313, %c0_314] : memref<9x512xf32, #tpu.memory_space<vmem>>, vector<1x512xf32>
    %438 = vector.broadcast %437 : vector<1x512xf32> to vector<4x512xf32>
    %439 = arith.mulf %436, %438 : vector<4x512xf32>
    %440 = arith.truncf %439 : vector<4x512xf32> to vector<4x512xbf16>
    %c76_315 = arith.constant 76 : index
    %c0_316 = arith.constant 0 : index
    %441 = vector.load %arg6[%c76_315, %c0_316] : memref<192x512xbf16, #tpu.memory_space<vmem>>, vector<4x512xbf16>
    tpu.vector_store %arg6[%c76_315, %c0_316], %440 {strides = array<i32>} : memref<192x512xbf16, #tpu.memory_space<vmem>>, vector<4x512xbf16>,
    %c15_i32_317 = arith.constant 15 : i32
    %442 = tpu.dynamic_rotate %429 by %c15_i32_317 dim 1 : vector<4x512xf32>, i32 -> vector<4x512xf32>
    %c2_318 = arith.constant 2 : index
    %c0_319 = arith.constant 0 : index
    %443 = vector.load %arg4[%c2_318, %c0_319] : memref<9x512xf32, #tpu.memory_space<vmem>>, vector<1x512xf32>
    %444 = vector.broadcast %443 : vector<1x512xf32> to vector<4x512xf32>
    %445 = arith.mulf %442, %444 : vector<4x512xf32>
    %446 = arith.truncf %445 : vector<4x512xf32> to vector<4x512xbf16>
    %c80_320 = arith.constant 80 : index
    %c0_321 = arith.constant 0 : index
    %447 = vector.load %arg6[%c80_320, %c0_321] : memref<192x512xbf16, #tpu.memory_space<vmem>>, vector<4x512xbf16>
    tpu.vector_store %arg6[%c80_320, %c0_321], %446 {strides = array<i32>} : memref<192x512xbf16, #tpu.memory_space<vmem>>, vector<4x512xbf16>,
    %c1_i32_322 = arith.constant 1 : i32
    %448 = tpu.dynamic_rotate %429 by %c1_i32_322 dim 1 : vector<4x512xf32>, i32 -> vector<4x512xf32>
    %c3_323 = arith.constant 3 : index
    %c0_324 = arith.constant 0 : index
    %449 = vector.load %arg4[%c3_323, %c0_324] : memref<9x512xf32, #tpu.memory_space<vmem>>, vector<1x512xf32>
    %450 = vector.broadcast %449 : vector<1x512xf32> to vector<4x512xf32>
    %451 = arith.mulf %448, %450 : vector<4x512xf32>
    %452 = arith.truncf %451 : vector<4x512xf32> to vector<4x512xbf16>
    %c84_325 = arith.constant 84 : index
    %c0_326 = arith.constant 0 : index
    %453 = vector.load %arg6[%c84_325, %c0_326] : memref<192x512xbf16, #tpu.memory_space<vmem>>, vector<4x512xbf16>
    tpu.vector_store %arg6[%c84_325, %c0_326], %452 {strides = array<i32>} : memref<192x512xbf16, #tpu.memory_space<vmem>>, vector<4x512xbf16>,
    %454 = arith.truncf %429 : vector<4x512xf32> to vector<4x512xbf16>
    %c88_327 = arith.constant 88 : index
    %c0_328 = arith.constant 0 : index
    %455 = vector.load %arg6[%c88_327, %c0_328] : memref<192x512xbf16, #tpu.memory_space<vmem>>, vector<4x512xbf16>
    tpu.vector_store %arg6[%c88_327, %c0_328], %454 {strides = array<i32>} : memref<192x512xbf16, #tpu.memory_space<vmem>>, vector<4x512xbf16>,
    %c511_i32_329 = arith.constant 511 : i32
    %456 = tpu.dynamic_rotate %429 by %c511_i32_329 dim 1 : vector<4x512xf32>, i32 -> vector<4x512xf32>
    %c5_330 = arith.constant 5 : index
    %c0_331 = arith.constant 0 : index
    %457 = vector.load %arg4[%c5_330, %c0_331] : memref<9x512xf32, #tpu.memory_space<vmem>>, vector<1x512xf32>
    %458 = vector.broadcast %457 : vector<1x512xf32> to vector<4x512xf32>
    %459 = arith.mulf %456, %458 : vector<4x512xf32>
    %460 = arith.truncf %459 : vector<4x512xf32> to vector<4x512xbf16>
    %c92_332 = arith.constant 92 : index
    %c0_333 = arith.constant 0 : index
    %461 = vector.load %arg6[%c92_332, %c0_333] : memref<192x512xbf16, #tpu.memory_space<vmem>>, vector<4x512xbf16>
    tpu.vector_store %arg6[%c92_332, %c0_333], %460 {strides = array<i32>} : memref<192x512xbf16, #tpu.memory_space<vmem>>, vector<4x512xbf16>,
    %c497_i32_334 = arith.constant 497 : i32
    %462 = tpu.dynamic_rotate %429 by %c497_i32_334 dim 1 : vector<4x512xf32>, i32 -> vector<4x512xf32>
    %c6_335 = arith.constant 6 : index
    %c0_336 = arith.constant 0 : index
    %463 = vector.load %arg4[%c6_335, %c0_336] : memref<9x512xf32, #tpu.memory_space<vmem>>, vector<1x512xf32>
    %464 = vector.broadcast %463 : vector<1x512xf32> to vector<4x512xf32>
    %465 = arith.mulf %462, %464 : vector<4x512xf32>
    %466 = arith.truncf %465 : vector<4x512xf32> to vector<4x512xbf16>
    %c96_337 = arith.constant 96 : index
    %c0_338 = arith.constant 0 : index
    %467 = vector.load %arg6[%c96_337, %c0_338] : memref<192x512xbf16, #tpu.memory_space<vmem>>, vector<4x512xbf16>
    tpu.vector_store %arg6[%c96_337, %c0_338], %466 {strides = array<i32>} : memref<192x512xbf16, #tpu.memory_space<vmem>>, vector<4x512xbf16>,
    %c496_i32_339 = arith.constant 496 : i32
    %468 = tpu.dynamic_rotate %429 by %c496_i32_339 dim 1 : vector<4x512xf32>, i32 -> vector<4x512xf32>
    %c7_340 = arith.constant 7 : index
    %c0_341 = arith.constant 0 : index
    %469 = vector.load %arg4[%c7_340, %c0_341] : memref<9x512xf32, #tpu.memory_space<vmem>>, vector<1x512xf32>
    %470 = vector.broadcast %469 : vector<1x512xf32> to vector<4x512xf32>
    %471 = arith.mulf %468, %470 : vector<4x512xf32>
    %472 = arith.truncf %471 : vector<4x512xf32> to vector<4x512xbf16>
    %c100_342 = arith.constant 100 : index
    %c0_343 = arith.constant 0 : index
    %473 = vector.load %arg6[%c100_342, %c0_343] : memref<192x512xbf16, #tpu.memory_space<vmem>>, vector<4x512xbf16>
    tpu.vector_store %arg6[%c100_342, %c0_343], %472 {strides = array<i32>} : memref<192x512xbf16, #tpu.memory_space<vmem>>, vector<4x512xbf16>,
    %c495_i32_344 = arith.constant 495 : i32
    %474 = tpu.dynamic_rotate %429 by %c495_i32_344 dim 1 : vector<4x512xf32>, i32 -> vector<4x512xf32>
    %c8_345 = arith.constant 8 : index
    %c0_346 = arith.constant 0 : index
    %475 = vector.load %arg4[%c8_345, %c0_346] : memref<9x512xf32, #tpu.memory_space<vmem>>, vector<1x512xf32>
    %476 = vector.broadcast %475 : vector<1x512xf32> to vector<4x512xf32>
    %477 = arith.mulf %474, %476 : vector<4x512xf32>
    %478 = arith.truncf %477 : vector<4x512xf32> to vector<4x512xbf16>
    %c104_347 = arith.constant 104 : index
    %c0_348 = arith.constant 0 : index
    %479 = vector.load %arg6[%c104_347, %c0_348] : memref<192x512xbf16, #tpu.memory_space<vmem>>, vector<4x512xbf16>
    tpu.vector_store %arg6[%c104_347, %c0_348], %478 {strides = array<i32>} : memref<192x512xbf16, #tpu.memory_space<vmem>>, vector<4x512xbf16>,
    %c7_349 = arith.constant 7 : index
    %c0_350 = arith.constant 0 : index
    %c0_351 = arith.constant 0 : index
    %480 = vector.load %arg2[%c7_349, %c0_350, %c0_351] : memref<15x4x256xbf16, #tpu.memory_space<vmem>>, vector<1x4x256xbf16>
    %481 = vector.shape_cast %480 : vector<1x4x256xbf16> to vector<4x256xbf16>
    %482 = vector.extract_strided_slice %481 {offsets = [0, 0], sizes = [4, 108], strides = [1, 1]} : vector<4x256xbf16> to vector<4x108xbf16>
    %c0_352 = arith.constant 0 : index
    %c0_353 = arith.constant 0 : index
    %483 = vector.load %arg6[%c0_352, %c0_353] : memref<192x512xbf16, #tpu.memory_space<vmem>>, vector<108x512xbf16>
    %cst_354 = arith.constant dense<0.000000e+00> : vector<4x512xf32>
    %484 = tpu.matmul %482, %483, %cst_354 {dimension_numbers = #tpu.dot_dimension_numbers<[1], [0], [0], [1], [0, 0, 1, 1], [], []>} : vector<4x108xbf16>, vector<108x512xbf16>, vector<4x512xf32> -> vector<4x512xf32>
    %c7_355 = arith.constant 7 : index
    %c0_356 = arith.constant 0 : index
    %c0_357 = arith.constant 0 : index
    %485 = vector.load %arg3[%c7_355, %c0_356, %c0_357] : memref<15x4x1xf32, #tpu.memory_space<vmem>>, vector<1x4x1xf32>
    %486 = vector.shape_cast %485 : vector<1x4x1xf32> to vector<4x1xf32>
    %487 = vector.broadcast %486 : vector<4x1xf32> to vector<4x512xf32>
    %488 = arith.addf %484, %487 : vector<4x512xf32>
    %cst_358 = arith.constant 0.000000e+00 : f32
    %489 = vector.broadcast %cst_358 : f32 to vector<4x512xf32>
    %490 = arith.maximumf %488, %489 : vector<4x512xf32>
    %c17_i32_359 = arith.constant 17 : i32
    %491 = tpu.dynamic_rotate %490 by %c17_i32_359 dim 1 : vector<4x512xf32>, i32 -> vector<4x512xf32>
    %c0_360 = arith.constant 0 : index
    %c0_361 = arith.constant 0 : index
    %492 = vector.load %arg4[%c0_360, %c0_361] : memref<9x512xf32, #tpu.memory_space<vmem>>, vector<1x512xf32>
    %493 = vector.broadcast %492 : vector<1x512xf32> to vector<4x512xf32>
    %494 = arith.mulf %491, %493 : vector<4x512xf32>
    %495 = arith.truncf %494 : vector<4x512xf32> to vector<4x512xbf16>
    %c108_362 = arith.constant 108 : index
    %c0_363 = arith.constant 0 : index
    %496 = vector.load %arg6[%c108_362, %c0_363] : memref<192x512xbf16, #tpu.memory_space<vmem>>, vector<4x512xbf16>
    tpu.vector_store %arg6[%c108_362, %c0_363], %495 {strides = array<i32>} : memref<192x512xbf16, #tpu.memory_space<vmem>>, vector<4x512xbf16>,
    %c16_i32_364 = arith.constant 16 : i32
    %497 = tpu.dynamic_rotate %490 by %c16_i32_364 dim 1 : vector<4x512xf32>, i32 -> vector<4x512xf32>
    %c1_365 = arith.constant 1 : index
    %c0_366 = arith.constant 0 : index
    %498 = vector.load %arg4[%c1_365, %c0_366] : memref<9x512xf32, #tpu.memory_space<vmem>>, vector<1x512xf32>
    %499 = vector.broadcast %498 : vector<1x512xf32> to vector<4x512xf32>
    %500 = arith.mulf %497, %499 : vector<4x512xf32>
    %501 = arith.truncf %500 : vector<4x512xf32> to vector<4x512xbf16>
    %c112_367 = arith.constant 112 : index
    %c0_368 = arith.constant 0 : index
    %502 = vector.load %arg6[%c112_367, %c0_368] : memref<192x512xbf16, #tpu.memory_space<vmem>>, vector<4x512xbf16>
    tpu.vector_store %arg6[%c112_367, %c0_368], %501 {strides = array<i32>} : memref<192x512xbf16, #tpu.memory_space<vmem>>, vector<4x512xbf16>,
    %c15_i32_369 = arith.constant 15 : i32
    %503 = tpu.dynamic_rotate %490 by %c15_i32_369 dim 1 : vector<4x512xf32>, i32 -> vector<4x512xf32>
    %c2_370 = arith.constant 2 : index
    %c0_371 = arith.constant 0 : index
    %504 = vector.load %arg4[%c2_370, %c0_371] : memref<9x512xf32, #tpu.memory_space<vmem>>, vector<1x512xf32>
    %505 = vector.broadcast %504 : vector<1x512xf32> to vector<4x512xf32>
    %506 = arith.mulf %503, %505 : vector<4x512xf32>
    %507 = arith.truncf %506 : vector<4x512xf32> to vector<4x512xbf16>
    %c116_372 = arith.constant 116 : index
    %c0_373 = arith.constant 0 : index
    %508 = vector.load %arg6[%c116_372, %c0_373] : memref<192x512xbf16, #tpu.memory_space<vmem>>, vector<4x512xbf16>
    tpu.vector_store %arg6[%c116_372, %c0_373], %507 {strides = array<i32>} : memref<192x512xbf16, #tpu.memory_space<vmem>>, vector<4x512xbf16>,
    %c1_i32_374 = arith.constant 1 : i32
    %509 = tpu.dynamic_rotate %490 by %c1_i32_374 dim 1 : vector<4x512xf32>, i32 -> vector<4x512xf32>
    %c3_375 = arith.constant 3 : index
    %c0_376 = arith.constant 0 : index
    %510 = vector.load %arg4[%c3_375, %c0_376] : memref<9x512xf32, #tpu.memory_space<vmem>>, vector<1x512xf32>
    %511 = vector.broadcast %510 : vector<1x512xf32> to vector<4x512xf32>
    %512 = arith.mulf %509, %511 : vector<4x512xf32>
    %513 = arith.truncf %512 : vector<4x512xf32> to vector<4x512xbf16>
    %c120_377 = arith.constant 120 : index
    %c0_378 = arith.constant 0 : index
    %514 = vector.load %arg6[%c120_377, %c0_378] : memref<192x512xbf16, #tpu.memory_space<vmem>>, vector<4x512xbf16>
    tpu.vector_store %arg6[%c120_377, %c0_378], %513 {strides = array<i32>} : memref<192x512xbf16, #tpu.memory_space<vmem>>, vector<4x512xbf16>,
    %515 = arith.truncf %490 : vector<4x512xf32> to vector<4x512xbf16>
    %c124_379 = arith.constant 124 : index
    %c0_380 = arith.constant 0 : index
    %516 = vector.load %arg6[%c124_379, %c0_380] : memref<192x512xbf16, #tpu.memory_space<vmem>>, vector<4x512xbf16>
    tpu.vector_store %arg6[%c124_379, %c0_380], %515 {strides = array<i32>} : memref<192x512xbf16, #tpu.memory_space<vmem>>, vector<4x512xbf16>,
    %c511_i32_381 = arith.constant 511 : i32
    %517 = tpu.dynamic_rotate %490 by %c511_i32_381 dim 1 : vector<4x512xf32>, i32 -> vector<4x512xf32>
    %c5_382 = arith.constant 5 : index
    %c0_383 = arith.constant 0 : index
    %518 = vector.load %arg4[%c5_382, %c0_383] : memref<9x512xf32, #tpu.memory_space<vmem>>, vector<1x512xf32>
    %519 = vector.broadcast %518 : vector<1x512xf32> to vector<4x512xf32>
    %520 = arith.mulf %517, %519 : vector<4x512xf32>
    %521 = arith.truncf %520 : vector<4x512xf32> to vector<4x512xbf16>
    %c128_384 = arith.constant 128 : index
    %c0_385 = arith.constant 0 : index
    %522 = vector.load %arg6[%c128_384, %c0_385] : memref<192x512xbf16, #tpu.memory_space<vmem>>, vector<4x512xbf16>
    tpu.vector_store %arg6[%c128_384, %c0_385], %521 {strides = array<i32>} : memref<192x512xbf16, #tpu.memory_space<vmem>>, vector<4x512xbf16>,
    %c497_i32_386 = arith.constant 497 : i32
    %523 = tpu.dynamic_rotate %490 by %c497_i32_386 dim 1 : vector<4x512xf32>, i32 -> vector<4x512xf32>
    %c6_387 = arith.constant 6 : index
    %c0_388 = arith.constant 0 : index
    %524 = vector.load %arg4[%c6_387, %c0_388] : memref<9x512xf32, #tpu.memory_space<vmem>>, vector<1x512xf32>
    %525 = vector.broadcast %524 : vector<1x512xf32> to vector<4x512xf32>
    %526 = arith.mulf %523, %525 : vector<4x512xf32>
    %527 = arith.truncf %526 : vector<4x512xf32> to vector<4x512xbf16>
    %c132_389 = arith.constant 132 : index
    %c0_390 = arith.constant 0 : index
    %528 = vector.load %arg6[%c132_389, %c0_390] : memref<192x512xbf16, #tpu.memory_space<vmem>>, vector<4x512xbf16>
    tpu.vector_store %arg6[%c132_389, %c0_390], %527 {strides = array<i32>} : memref<192x512xbf16, #tpu.memory_space<vmem>>, vector<4x512xbf16>,
    %c496_i32_391 = arith.constant 496 : i32
    %529 = tpu.dynamic_rotate %490 by %c496_i32_391 dim 1 : vector<4x512xf32>, i32 -> vector<4x512xf32>
    %c7_392 = arith.constant 7 : index
    %c0_393 = arith.constant 0 : index
    %530 = vector.load %arg4[%c7_392, %c0_393] : memref<9x512xf32, #tpu.memory_space<vmem>>, vector<1x512xf32>
    %531 = vector.broadcast %530 : vector<1x512xf32> to vector<4x512xf32>
    %532 = arith.mulf %529, %531 : vector<4x512xf32>
    %533 = arith.truncf %532 : vector<4x512xf32> to vector<4x512xbf16>
    %c136_394 = arith.constant 136 : index
    %c0_395 = arith.constant 0 : index
    %534 = vector.load %arg6[%c136_394, %c0_395] : memref<192x512xbf16, #tpu.memory_space<vmem>>, vector<4x512xbf16>
    tpu.vector_store %arg6[%c136_394, %c0_395], %533 {strides = array<i32>} : memref<192x512xbf16, #tpu.memory_space<vmem>>, vector<4x512xbf16>,
    %c495_i32_396 = arith.constant 495 : i32
    %535 = tpu.dynamic_rotate %490 by %c495_i32_396 dim 1 : vector<4x512xf32>, i32 -> vector<4x512xf32>
    %c8_397 = arith.constant 8 : index
    %c0_398 = arith.constant 0 : index
    %536 = vector.load %arg4[%c8_397, %c0_398] : memref<9x512xf32, #tpu.memory_space<vmem>>, vector<1x512xf32>
    %537 = vector.broadcast %536 : vector<1x512xf32> to vector<4x512xf32>
    %538 = arith.mulf %535, %537 : vector<4x512xf32>
    %539 = arith.truncf %538 : vector<4x512xf32> to vector<4x512xbf16>
    %c140_399 = arith.constant 140 : index
    %c0_400 = arith.constant 0 : index
    %540 = vector.load %arg6[%c140_399, %c0_400] : memref<192x512xbf16, #tpu.memory_space<vmem>>, vector<4x512xbf16>
    tpu.vector_store %arg6[%c140_399, %c0_400], %539 {strides = array<i32>} : memref<192x512xbf16, #tpu.memory_space<vmem>>, vector<4x512xbf16>,
    %c8_401 = arith.constant 8 : index
    %c0_402 = arith.constant 0 : index
    %c0_403 = arith.constant 0 : index
    %541 = vector.load %arg2[%c8_401, %c0_402, %c0_403] : memref<15x4x256xbf16, #tpu.memory_space<vmem>>, vector<1x4x256xbf16>
    %542 = vector.shape_cast %541 : vector<1x4x256xbf16> to vector<4x256xbf16>
    %543 = vector.extract_strided_slice %542 {offsets = [0, 0], sizes = [4, 144], strides = [1, 1]} : vector<4x256xbf16> to vector<4x144xbf16>
    %c0_404 = arith.constant 0 : index
    %c0_405 = arith.constant 0 : index
    %544 = vector.load %arg6[%c0_404, %c0_405] : memref<192x512xbf16, #tpu.memory_space<vmem>>, vector<144x512xbf16>
    %cst_406 = arith.constant dense<0.000000e+00> : vector<4x512xf32>
    %545 = tpu.matmul %543, %544, %cst_406 {dimension_numbers = #tpu.dot_dimension_numbers<[1], [0], [0], [1], [0, 0, 1, 1], [], []>} : vector<4x144xbf16>, vector<144x512xbf16>, vector<4x512xf32> -> vector<4x512xf32>
    %c8_407 = arith.constant 8 : index
    %c0_408 = arith.constant 0 : index
    %c0_409 = arith.constant 0 : index
    %546 = vector.load %arg3[%c8_407, %c0_408, %c0_409] : memref<15x4x1xf32, #tpu.memory_space<vmem>>, vector<1x4x1xf32>
    %547 = vector.shape_cast %546 : vector<1x4x1xf32> to vector<4x1xf32>
    %548 = vector.broadcast %547 : vector<4x1xf32> to vector<4x512xf32>
    %549 = arith.addf %545, %548 : vector<4x512xf32>
    %cst_410 = arith.constant 0.000000e+00 : f32
    %550 = vector.broadcast %cst_410 : f32 to vector<4x512xf32>
    %551 = arith.maximumf %549, %550 : vector<4x512xf32>
    %c17_i32_411 = arith.constant 17 : i32
    %552 = tpu.dynamic_rotate %551 by %c17_i32_411 dim 1 : vector<4x512xf32>, i32 -> vector<4x512xf32>
    %c0_412 = arith.constant 0 : index
    %c0_413 = arith.constant 0 : index
    %553 = vector.load %arg4[%c0_412, %c0_413] : memref<9x512xf32, #tpu.memory_space<vmem>>, vector<1x512xf32>
    %554 = vector.broadcast %553 : vector<1x512xf32> to vector<4x512xf32>
    %555 = arith.mulf %552, %554 : vector<4x512xf32>
    %556 = arith.truncf %555 : vector<4x512xf32> to vector<4x512xbf16>
    %c144_414 = arith.constant 144 : index
    %c0_415 = arith.constant 0 : index
    %557 = vector.load %arg6[%c144_414, %c0_415] : memref<192x512xbf16, #tpu.memory_space<vmem>>, vector<4x512xbf16>
    tpu.vector_store %arg6[%c144_414, %c0_415], %556 {strides = array<i32>} : memref<192x512xbf16, #tpu.memory_space<vmem>>, vector<4x512xbf16>,
    %c16_i32_416 = arith.constant 16 : i32
    %558 = tpu.dynamic_rotate %551 by %c16_i32_416 dim 1 : vector<4x512xf32>, i32 -> vector<4x512xf32>
    %c1_417 = arith.constant 1 : index
    %c0_418 = arith.constant 0 : index
    %559 = vector.load %arg4[%c1_417, %c0_418] : memref<9x512xf32, #tpu.memory_space<vmem>>, vector<1x512xf32>
    %560 = vector.broadcast %559 : vector<1x512xf32> to vector<4x512xf32>
    %561 = arith.mulf %558, %560 : vector<4x512xf32>
    %562 = arith.truncf %561 : vector<4x512xf32> to vector<4x512xbf16>
    %c148_419 = arith.constant 148 : index
    %c0_420 = arith.constant 0 : index
    %563 = vector.load %arg6[%c148_419, %c0_420] : memref<192x512xbf16, #tpu.memory_space<vmem>>, vector<4x512xbf16>
    tpu.vector_store %arg6[%c148_419, %c0_420], %562 {strides = array<i32>} : memref<192x512xbf16, #tpu.memory_space<vmem>>, vector<4x512xbf16>,
    %c15_i32_421 = arith.constant 15 : i32
    %564 = tpu.dynamic_rotate %551 by %c15_i32_421 dim 1 : vector<4x512xf32>, i32 -> vector<4x512xf32>
    %c2_422 = arith.constant 2 : index
    %c0_423 = arith.constant 0 : index
    %565 = vector.load %arg4[%c2_422, %c0_423] : memref<9x512xf32, #tpu.memory_space<vmem>>, vector<1x512xf32>
    %566 = vector.broadcast %565 : vector<1x512xf32> to vector<4x512xf32>
    %567 = arith.mulf %564, %566 : vector<4x512xf32>
    %568 = arith.truncf %567 : vector<4x512xf32> to vector<4x512xbf16>
    %c152_424 = arith.constant 152 : index
    %c0_425 = arith.constant 0 : index
    %569 = vector.load %arg6[%c152_424, %c0_425] : memref<192x512xbf16, #tpu.memory_space<vmem>>, vector<4x512xbf16>
    tpu.vector_store %arg6[%c152_424, %c0_425], %568 {strides = array<i32>} : memref<192x512xbf16, #tpu.memory_space<vmem>>, vector<4x512xbf16>,
    %c1_i32_426 = arith.constant 1 : i32
    %570 = tpu.dynamic_rotate %551 by %c1_i32_426 dim 1 : vector<4x512xf32>, i32 -> vector<4x512xf32>
    %c3_427 = arith.constant 3 : index
    %c0_428 = arith.constant 0 : index
    %571 = vector.load %arg4[%c3_427, %c0_428] : memref<9x512xf32, #tpu.memory_space<vmem>>, vector<1x512xf32>
    %572 = vector.broadcast %571 : vector<1x512xf32> to vector<4x512xf32>
    %573 = arith.mulf %570, %572 : vector<4x512xf32>
    %574 = arith.truncf %573 : vector<4x512xf32> to vector<4x512xbf16>
    %c156_429 = arith.constant 156 : index
    %c0_430 = arith.constant 0 : index
    %575 = vector.load %arg6[%c156_429, %c0_430] : memref<192x512xbf16, #tpu.memory_space<vmem>>, vector<4x512xbf16>
    tpu.vector_store %arg6[%c156_429, %c0_430], %574 {strides = array<i32>} : memref<192x512xbf16, #tpu.memory_space<vmem>>, vector<4x512xbf16>,
    %576 = arith.truncf %551 : vector<4x512xf32> to vector<4x512xbf16>
    %c160_431 = arith.constant 160 : index
    %c0_432 = arith.constant 0 : index
    %577 = vector.load %arg6[%c160_431, %c0_432] : memref<192x512xbf16, #tpu.memory_space<vmem>>, vector<4x512xbf16>
    tpu.vector_store %arg6[%c160_431, %c0_432], %576 {strides = array<i32>} : memref<192x512xbf16, #tpu.memory_space<vmem>>, vector<4x512xbf16>,
    %c511_i32_433 = arith.constant 511 : i32
    %578 = tpu.dynamic_rotate %551 by %c511_i32_433 dim 1 : vector<4x512xf32>, i32 -> vector<4x512xf32>
    %c5_434 = arith.constant 5 : index
    %c0_435 = arith.constant 0 : index
    %579 = vector.load %arg4[%c5_434, %c0_435] : memref<9x512xf32, #tpu.memory_space<vmem>>, vector<1x512xf32>
    %580 = vector.broadcast %579 : vector<1x512xf32> to vector<4x512xf32>
    %581 = arith.mulf %578, %580 : vector<4x512xf32>
    %582 = arith.truncf %581 : vector<4x512xf32> to vector<4x512xbf16>
    %c164_436 = arith.constant 164 : index
    %c0_437 = arith.constant 0 : index
    %583 = vector.load %arg6[%c164_436, %c0_437] : memref<192x512xbf16, #tpu.memory_space<vmem>>, vector<4x512xbf16>
    tpu.vector_store %arg6[%c164_436, %c0_437], %582 {strides = array<i32>} : memref<192x512xbf16, #tpu.memory_space<vmem>>, vector<4x512xbf16>,
    %c497_i32_438 = arith.constant 497 : i32
    %584 = tpu.dynamic_rotate %551 by %c497_i32_438 dim 1 : vector<4x512xf32>, i32 -> vector<4x512xf32>
    %c6_439 = arith.constant 6 : index
    %c0_440 = arith.constant 0 : index
    %585 = vector.load %arg4[%c6_439, %c0_440] : memref<9x512xf32, #tpu.memory_space<vmem>>, vector<1x512xf32>
    %586 = vector.broadcast %585 : vector<1x512xf32> to vector<4x512xf32>
    %587 = arith.mulf %584, %586 : vector<4x512xf32>
    %588 = arith.truncf %587 : vector<4x512xf32> to vector<4x512xbf16>
    %c168_441 = arith.constant 168 : index
    %c0_442 = arith.constant 0 : index
    %589 = vector.load %arg6[%c168_441, %c0_442] : memref<192x512xbf16, #tpu.memory_space<vmem>>, vector<4x512xbf16>
    tpu.vector_store %arg6[%c168_441, %c0_442], %588 {strides = array<i32>} : memref<192x512xbf16, #tpu.memory_space<vmem>>, vector<4x512xbf16>,
    %c496_i32_443 = arith.constant 496 : i32
    %590 = tpu.dynamic_rotate %551 by %c496_i32_443 dim 1 : vector<4x512xf32>, i32 -> vector<4x512xf32>
    %c7_444 = arith.constant 7 : index
    %c0_445 = arith.constant 0 : index
    %591 = vector.load %arg4[%c7_444, %c0_445] : memref<9x512xf32, #tpu.memory_space<vmem>>, vector<1x512xf32>
    %592 = vector.broadcast %591 : vector<1x512xf32> to vector<4x512xf32>
    %593 = arith.mulf %590, %592 : vector<4x512xf32>
    %594 = arith.truncf %593 : vector<4x512xf32> to vector<4x512xbf16>
    %c172_446 = arith.constant 172 : index
    %c0_447 = arith.constant 0 : index
    %595 = vector.load %arg6[%c172_446, %c0_447] : memref<192x512xbf16, #tpu.memory_space<vmem>>, vector<4x512xbf16>
    tpu.vector_store %arg6[%c172_446, %c0_447], %594 {strides = array<i32>} : memref<192x512xbf16, #tpu.memory_space<vmem>>, vector<4x512xbf16>,
    %c495_i32_448 = arith.constant 495 : i32
    %596 = tpu.dynamic_rotate %551 by %c495_i32_448 dim 1 : vector<4x512xf32>, i32 -> vector<4x512xf32>
    %c8_449 = arith.constant 8 : index
    %c0_450 = arith.constant 0 : index
    %597 = vector.load %arg4[%c8_449, %c0_450] : memref<9x512xf32, #tpu.memory_space<vmem>>, vector<1x512xf32>
    %598 = vector.broadcast %597 : vector<1x512xf32> to vector<4x512xf32>
    %599 = arith.mulf %596, %598 : vector<4x512xf32>
    %600 = arith.truncf %599 : vector<4x512xf32> to vector<4x512xbf16>
    %c176_451 = arith.constant 176 : index
    %c0_452 = arith.constant 0 : index
    %601 = vector.load %arg6[%c176_451, %c0_452] : memref<192x512xbf16, #tpu.memory_space<vmem>>, vector<4x512xbf16>
    tpu.vector_store %arg6[%c176_451, %c0_452], %600 {strides = array<i32>} : memref<192x512xbf16, #tpu.memory_space<vmem>>, vector<4x512xbf16>,
    %c9 = arith.constant 9 : index
    %c0_453 = arith.constant 0 : index
    %c0_454 = arith.constant 0 : index
    %602 = vector.load %arg2[%c9, %c0_453, %c0_454] : memref<15x4x256xbf16, #tpu.memory_space<vmem>>, vector<1x4x256xbf16>
    %603 = vector.shape_cast %602 : vector<1x4x256xbf16> to vector<4x256xbf16>
    %604 = vector.extract_strided_slice %603 {offsets = [0, 0], sizes = [4, 180], strides = [1, 1]} : vector<4x256xbf16> to vector<4x180xbf16>
    %c0_455 = arith.constant 0 : index
    %c0_456 = arith.constant 0 : index
    %605 = vector.load %arg6[%c0_455, %c0_456] : memref<192x512xbf16, #tpu.memory_space<vmem>>, vector<180x512xbf16>
    %cst_457 = arith.constant dense<0.000000e+00> : vector<4x512xf32>
    %606 = tpu.matmul %604, %605, %cst_457 {dimension_numbers = #tpu.dot_dimension_numbers<[1], [0], [0], [1], [0, 0, 1, 1], [], []>} : vector<4x180xbf16>, vector<180x512xbf16>, vector<4x512xf32> -> vector<4x512xf32>
    %c9_458 = arith.constant 9 : index
    %c0_459 = arith.constant 0 : index
    %c0_460 = arith.constant 0 : index
    %607 = vector.load %arg3[%c9_458, %c0_459, %c0_460] : memref<15x4x1xf32, #tpu.memory_space<vmem>>, vector<1x4x1xf32>
    %608 = vector.shape_cast %607 : vector<1x4x1xf32> to vector<4x1xf32>
    %609 = vector.broadcast %608 : vector<4x1xf32> to vector<4x512xf32>
    %610 = arith.addf %606, %609 : vector<4x512xf32>
    %cst_461 = arith.constant 2.000000e-01 : f32
    %611 = vector.broadcast %cst_461 : f32 to vector<4x512xf32>
    %612 = arith.mulf %610, %611 : vector<4x512xf32>
    %613 = arith.addf %612, %307 : vector<4x512xf32>
    %c17_i32_462 = arith.constant 17 : i32
    %614 = tpu.dynamic_rotate %613 by %c17_i32_462 dim 1 : vector<4x512xf32>, i32 -> vector<4x512xf32>
    %c0_463 = arith.constant 0 : index
    %c0_464 = arith.constant 0 : index
    %615 = vector.load %arg4[%c0_463, %c0_464] : memref<9x512xf32, #tpu.memory_space<vmem>>, vector<1x512xf32>
    %616 = vector.broadcast %615 : vector<1x512xf32> to vector<4x512xf32>
    %617 = arith.mulf %614, %616 : vector<4x512xf32>
    %618 = arith.truncf %617 : vector<4x512xf32> to vector<4x512xbf16>
    %c0_465 = arith.constant 0 : index
    %c0_466 = arith.constant 0 : index
    %619 = vector.load %arg6[%c0_465, %c0_466] : memref<192x512xbf16, #tpu.memory_space<vmem>>, vector<4x512xbf16>
    tpu.vector_store %arg6[%c0_465, %c0_466], %618 {strides = array<i32>} : memref<192x512xbf16, #tpu.memory_space<vmem>>, vector<4x512xbf16>,
    %c16_i32_467 = arith.constant 16 : i32
    %620 = tpu.dynamic_rotate %613 by %c16_i32_467 dim 1 : vector<4x512xf32>, i32 -> vector<4x512xf32>
    %c1_468 = arith.constant 1 : index
    %c0_469 = arith.constant 0 : index
    %621 = vector.load %arg4[%c1_468, %c0_469] : memref<9x512xf32, #tpu.memory_space<vmem>>, vector<1x512xf32>
    %622 = vector.broadcast %621 : vector<1x512xf32> to vector<4x512xf32>
    %623 = arith.mulf %620, %622 : vector<4x512xf32>
    %624 = arith.truncf %623 : vector<4x512xf32> to vector<4x512xbf16>
    %c4_470 = arith.constant 4 : index
    %c0_471 = arith.constant 0 : index
    %625 = vector.load %arg6[%c4_470, %c0_471] : memref<192x512xbf16, #tpu.memory_space<vmem>>, vector<4x512xbf16>
    tpu.vector_store %arg6[%c4_470, %c0_471], %624 {strides = array<i32>} : memref<192x512xbf16, #tpu.memory_space<vmem>>, vector<4x512xbf16>,
    %c15_i32_472 = arith.constant 15 : i32
    %626 = tpu.dynamic_rotate %613 by %c15_i32_472 dim 1 : vector<4x512xf32>, i32 -> vector<4x512xf32>
    %c2_473 = arith.constant 2 : index
    %c0_474 = arith.constant 0 : index
    %627 = vector.load %arg4[%c2_473, %c0_474] : memref<9x512xf32, #tpu.memory_space<vmem>>, vector<1x512xf32>
    %628 = vector.broadcast %627 : vector<1x512xf32> to vector<4x512xf32>
    %629 = arith.mulf %626, %628 : vector<4x512xf32>
    %630 = arith.truncf %629 : vector<4x512xf32> to vector<4x512xbf16>
    %c8_475 = arith.constant 8 : index
    %c0_476 = arith.constant 0 : index
    %631 = vector.load %arg6[%c8_475, %c0_476] : memref<192x512xbf16, #tpu.memory_space<vmem>>, vector<4x512xbf16>
    tpu.vector_store %arg6[%c8_475, %c0_476], %630 {strides = array<i32>} : memref<192x512xbf16, #tpu.memory_space<vmem>>, vector<4x512xbf16>,
    %c1_i32_477 = arith.constant 1 : i32
    %632 = tpu.dynamic_rotate %613 by %c1_i32_477 dim 1 : vector<4x512xf32>, i32 -> vector<4x512xf32>
    %c3_478 = arith.constant 3 : index
    %c0_479 = arith.constant 0 : index
    %633 = vector.load %arg4[%c3_478, %c0_479] : memref<9x512xf32, #tpu.memory_space<vmem>>, vector<1x512xf32>
    %634 = vector.broadcast %633 : vector<1x512xf32> to vector<4x512xf32>
    %635 = arith.mulf %632, %634 : vector<4x512xf32>
    %636 = arith.truncf %635 : vector<4x512xf32> to vector<4x512xbf16>
    %c12_480 = arith.constant 12 : index
    %c0_481 = arith.constant 0 : index
    %637 = vector.load %arg6[%c12_480, %c0_481] : memref<192x512xbf16, #tpu.memory_space<vmem>>, vector<4x512xbf16>
    tpu.vector_store %arg6[%c12_480, %c0_481], %636 {strides = array<i32>} : memref<192x512xbf16, #tpu.memory_space<vmem>>, vector<4x512xbf16>,
    %638 = arith.truncf %613 : vector<4x512xf32> to vector<4x512xbf16>
    %c16_482 = arith.constant 16 : index
    %c0_483 = arith.constant 0 : index
    %639 = vector.load %arg6[%c16_482, %c0_483] : memref<192x512xbf16, #tpu.memory_space<vmem>>, vector<4x512xbf16>
    tpu.vector_store %arg6[%c16_482, %c0_483], %638 {strides = array<i32>} : memref<192x512xbf16, #tpu.memory_space<vmem>>, vector<4x512xbf16>,
    %c511_i32_484 = arith.constant 511 : i32
    %640 = tpu.dynamic_rotate %613 by %c511_i32_484 dim 1 : vector<4x512xf32>, i32 -> vector<4x512xf32>
    %c5_485 = arith.constant 5 : index
    %c0_486 = arith.constant 0 : index
    %641 = vector.load %arg4[%c5_485, %c0_486] : memref<9x512xf32, #tpu.memory_space<vmem>>, vector<1x512xf32>
    %642 = vector.broadcast %641 : vector<1x512xf32> to vector<4x512xf32>
    %643 = arith.mulf %640, %642 : vector<4x512xf32>
    %644 = arith.truncf %643 : vector<4x512xf32> to vector<4x512xbf16>
    %c20_487 = arith.constant 20 : index
    %c0_488 = arith.constant 0 : index
    %645 = vector.load %arg6[%c20_487, %c0_488] : memref<192x512xbf16, #tpu.memory_space<vmem>>, vector<4x512xbf16>
    tpu.vector_store %arg6[%c20_487, %c0_488], %644 {strides = array<i32>} : memref<192x512xbf16, #tpu.memory_space<vmem>>, vector<4x512xbf16>,
    %c497_i32_489 = arith.constant 497 : i32
    %646 = tpu.dynamic_rotate %613 by %c497_i32_489 dim 1 : vector<4x512xf32>, i32 -> vector<4x512xf32>
    %c6_490 = arith.constant 6 : index
    %c0_491 = arith.constant 0 : index
    %647 = vector.load %arg4[%c6_490, %c0_491] : memref<9x512xf32, #tpu.memory_space<vmem>>, vector<1x512xf32>
    %648 = vector.broadcast %647 : vector<1x512xf32> to vector<4x512xf32>
    %649 = arith.mulf %646, %648 : vector<4x512xf32>
    %650 = arith.truncf %649 : vector<4x512xf32> to vector<4x512xbf16>
    %c24_492 = arith.constant 24 : index
    %c0_493 = arith.constant 0 : index
    %651 = vector.load %arg6[%c24_492, %c0_493] : memref<192x512xbf16, #tpu.memory_space<vmem>>, vector<4x512xbf16>
    tpu.vector_store %arg6[%c24_492, %c0_493], %650 {strides = array<i32>} : memref<192x512xbf16, #tpu.memory_space<vmem>>, vector<4x512xbf16>,
    %c496_i32_494 = arith.constant 496 : i32
    %652 = tpu.dynamic_rotate %613 by %c496_i32_494 dim 1 : vector<4x512xf32>, i32 -> vector<4x512xf32>
    %c7_495 = arith.constant 7 : index
    %c0_496 = arith.constant 0 : index
    %653 = vector.load %arg4[%c7_495, %c0_496] : memref<9x512xf32, #tpu.memory_space<vmem>>, vector<1x512xf32>
    %654 = vector.broadcast %653 : vector<1x512xf32> to vector<4x512xf32>
    %655 = arith.mulf %652, %654 : vector<4x512xf32>
    %656 = arith.truncf %655 : vector<4x512xf32> to vector<4x512xbf16>
    %c28_497 = arith.constant 28 : index
    %c0_498 = arith.constant 0 : index
    %657 = vector.load %arg6[%c28_497, %c0_498] : memref<192x512xbf16, #tpu.memory_space<vmem>>, vector<4x512xbf16>
    tpu.vector_store %arg6[%c28_497, %c0_498], %656 {strides = array<i32>} : memref<192x512xbf16, #tpu.memory_space<vmem>>, vector<4x512xbf16>,
    %c495_i32_499 = arith.constant 495 : i32
    %658 = tpu.dynamic_rotate %613 by %c495_i32_499 dim 1 : vector<4x512xf32>, i32 -> vector<4x512xf32>
    %c8_500 = arith.constant 8 : index
    %c0_501 = arith.constant 0 : index
    %659 = vector.load %arg4[%c8_500, %c0_501] : memref<9x512xf32, #tpu.memory_space<vmem>>, vector<1x512xf32>
    %660 = vector.broadcast %659 : vector<1x512xf32> to vector<4x512xf32>
    %661 = arith.mulf %658, %660 : vector<4x512xf32>
    %662 = arith.truncf %661 : vector<4x512xf32> to vector<4x512xbf16>
    %c32_502 = arith.constant 32 : index
    %c0_503 = arith.constant 0 : index
    %663 = vector.load %arg6[%c32_502, %c0_503] : memref<192x512xbf16, #tpu.memory_space<vmem>>, vector<4x512xbf16>
    tpu.vector_store %arg6[%c32_502, %c0_503], %662 {strides = array<i32>} : memref<192x512xbf16, #tpu.memory_space<vmem>>, vector<4x512xbf16>,
    %c10 = arith.constant 10 : index
    %c0_504 = arith.constant 0 : index
    %c0_505 = arith.constant 0 : index
    %664 = vector.load %arg2[%c10, %c0_504, %c0_505] : memref<15x4x256xbf16, #tpu.memory_space<vmem>>, vector<1x4x256xbf16>
    %665 = vector.shape_cast %664 : vector<1x4x256xbf16> to vector<4x256xbf16>
    %666 = vector.extract_strided_slice %665 {offsets = [0, 0], sizes = [4, 36], strides = [1, 1]} : vector<4x256xbf16> to vector<4x36xbf16>
    %c0_506 = arith.constant 0 : index
    %c0_507 = arith.constant 0 : index
    %667 = vector.load %arg6[%c0_506, %c0_507] : memref<192x512xbf16, #tpu.memory_space<vmem>>, vector<36x512xbf16>
    %cst_508 = arith.constant dense<0.000000e+00> : vector<4x512xf32>
    %668 = tpu.matmul %666, %667, %cst_508 {dimension_numbers = #tpu.dot_dimension_numbers<[1], [0], [0], [1], [0, 0, 1, 1], [], []>} : vector<4x36xbf16>, vector<36x512xbf16>, vector<4x512xf32> -> vector<4x512xf32>
    %c10_509 = arith.constant 10 : index
    %c0_510 = arith.constant 0 : index
    %c0_511 = arith.constant 0 : index
    %669 = vector.load %arg3[%c10_509, %c0_510, %c0_511] : memref<15x4x1xf32, #tpu.memory_space<vmem>>, vector<1x4x1xf32>
    %670 = vector.shape_cast %669 : vector<1x4x1xf32> to vector<4x1xf32>
    %671 = vector.broadcast %670 : vector<4x1xf32> to vector<4x512xf32>
    %672 = arith.addf %668, %671 : vector<4x512xf32>
    %cst_512 = arith.constant 0.000000e+00 : f32
    %673 = vector.broadcast %cst_512 : f32 to vector<4x512xf32>
    %674 = arith.maximumf %672, %673 : vector<4x512xf32>
    %c17_i32_513 = arith.constant 17 : i32
    %675 = tpu.dynamic_rotate %674 by %c17_i32_513 dim 1 : vector<4x512xf32>, i32 -> vector<4x512xf32>
    %c0_514 = arith.constant 0 : index
    %c0_515 = arith.constant 0 : index
    %676 = vector.load %arg4[%c0_514, %c0_515] : memref<9x512xf32, #tpu.memory_space<vmem>>, vector<1x512xf32>
    %677 = vector.broadcast %676 : vector<1x512xf32> to vector<4x512xf32>
    %678 = arith.mulf %675, %677 : vector<4x512xf32>
    %679 = arith.truncf %678 : vector<4x512xf32> to vector<4x512xbf16>
    %c36_516 = arith.constant 36 : index
    %c0_517 = arith.constant 0 : index
    %680 = vector.load %arg6[%c36_516, %c0_517] : memref<192x512xbf16, #tpu.memory_space<vmem>>, vector<4x512xbf16>
    tpu.vector_store %arg6[%c36_516, %c0_517], %679 {strides = array<i32>} : memref<192x512xbf16, #tpu.memory_space<vmem>>, vector<4x512xbf16>,
    %c16_i32_518 = arith.constant 16 : i32
    %681 = tpu.dynamic_rotate %674 by %c16_i32_518 dim 1 : vector<4x512xf32>, i32 -> vector<4x512xf32>
    %c1_519 = arith.constant 1 : index
    %c0_520 = arith.constant 0 : index
    %682 = vector.load %arg4[%c1_519, %c0_520] : memref<9x512xf32, #tpu.memory_space<vmem>>, vector<1x512xf32>
    %683 = vector.broadcast %682 : vector<1x512xf32> to vector<4x512xf32>
    %684 = arith.mulf %681, %683 : vector<4x512xf32>
    %685 = arith.truncf %684 : vector<4x512xf32> to vector<4x512xbf16>
    %c40_521 = arith.constant 40 : index
    %c0_522 = arith.constant 0 : index
    %686 = vector.load %arg6[%c40_521, %c0_522] : memref<192x512xbf16, #tpu.memory_space<vmem>>, vector<4x512xbf16>
    tpu.vector_store %arg6[%c40_521, %c0_522], %685 {strides = array<i32>} : memref<192x512xbf16, #tpu.memory_space<vmem>>, vector<4x512xbf16>,
    %c15_i32_523 = arith.constant 15 : i32
    %687 = tpu.dynamic_rotate %674 by %c15_i32_523 dim 1 : vector<4x512xf32>, i32 -> vector<4x512xf32>
    %c2_524 = arith.constant 2 : index
    %c0_525 = arith.constant 0 : index
    %688 = vector.load %arg4[%c2_524, %c0_525] : memref<9x512xf32, #tpu.memory_space<vmem>>, vector<1x512xf32>
    %689 = vector.broadcast %688 : vector<1x512xf32> to vector<4x512xf32>
    %690 = arith.mulf %687, %689 : vector<4x512xf32>
    %691 = arith.truncf %690 : vector<4x512xf32> to vector<4x512xbf16>
    %c44_526 = arith.constant 44 : index
    %c0_527 = arith.constant 0 : index
    %692 = vector.load %arg6[%c44_526, %c0_527] : memref<192x512xbf16, #tpu.memory_space<vmem>>, vector<4x512xbf16>
    tpu.vector_store %arg6[%c44_526, %c0_527], %691 {strides = array<i32>} : memref<192x512xbf16, #tpu.memory_space<vmem>>, vector<4x512xbf16>,
    %c1_i32_528 = arith.constant 1 : i32
    %693 = tpu.dynamic_rotate %674 by %c1_i32_528 dim 1 : vector<4x512xf32>, i32 -> vector<4x512xf32>
    %c3_529 = arith.constant 3 : index
    %c0_530 = arith.constant 0 : index
    %694 = vector.load %arg4[%c3_529, %c0_530] : memref<9x512xf32, #tpu.memory_space<vmem>>, vector<1x512xf32>
    %695 = vector.broadcast %694 : vector<1x512xf32> to vector<4x512xf32>
    %696 = arith.mulf %693, %695 : vector<4x512xf32>
    %697 = arith.truncf %696 : vector<4x512xf32> to vector<4x512xbf16>
    %c48_531 = arith.constant 48 : index
    %c0_532 = arith.constant 0 : index
    %698 = vector.load %arg6[%c48_531, %c0_532] : memref<192x512xbf16, #tpu.memory_space<vmem>>, vector<4x512xbf16>
    tpu.vector_store %arg6[%c48_531, %c0_532], %697 {strides = array<i32>} : memref<192x512xbf16, #tpu.memory_space<vmem>>, vector<4x512xbf16>,
    %699 = arith.truncf %674 : vector<4x512xf32> to vector<4x512xbf16>
    %c52_533 = arith.constant 52 : index
    %c0_534 = arith.constant 0 : index
    %700 = vector.load %arg6[%c52_533, %c0_534] : memref<192x512xbf16, #tpu.memory_space<vmem>>, vector<4x512xbf16>
    tpu.vector_store %arg6[%c52_533, %c0_534], %699 {strides = array<i32>} : memref<192x512xbf16, #tpu.memory_space<vmem>>, vector<4x512xbf16>,
    %c511_i32_535 = arith.constant 511 : i32
    %701 = tpu.dynamic_rotate %674 by %c511_i32_535 dim 1 : vector<4x512xf32>, i32 -> vector<4x512xf32>
    %c5_536 = arith.constant 5 : index
    %c0_537 = arith.constant 0 : index
    %702 = vector.load %arg4[%c5_536, %c0_537] : memref<9x512xf32, #tpu.memory_space<vmem>>, vector<1x512xf32>
    %703 = vector.broadcast %702 : vector<1x512xf32> to vector<4x512xf32>
    %704 = arith.mulf %701, %703 : vector<4x512xf32>
    %705 = arith.truncf %704 : vector<4x512xf32> to vector<4x512xbf16>
    %c56_538 = arith.constant 56 : index
    %c0_539 = arith.constant 0 : index
    %706 = vector.load %arg6[%c56_538, %c0_539] : memref<192x512xbf16, #tpu.memory_space<vmem>>, vector<4x512xbf16>
    tpu.vector_store %arg6[%c56_538, %c0_539], %705 {strides = array<i32>} : memref<192x512xbf16, #tpu.memory_space<vmem>>, vector<4x512xbf16>,
    %c497_i32_540 = arith.constant 497 : i32
    %707 = tpu.dynamic_rotate %674 by %c497_i32_540 dim 1 : vector<4x512xf32>, i32 -> vector<4x512xf32>
    %c6_541 = arith.constant 6 : index
    %c0_542 = arith.constant 0 : index
    %708 = vector.load %arg4[%c6_541, %c0_542] : memref<9x512xf32, #tpu.memory_space<vmem>>, vector<1x512xf32>
    %709 = vector.broadcast %708 : vector<1x512xf32> to vector<4x512xf32>
    %710 = arith.mulf %707, %709 : vector<4x512xf32>
    %711 = arith.truncf %710 : vector<4x512xf32> to vector<4x512xbf16>
    %c60_543 = arith.constant 60 : index
    %c0_544 = arith.constant 0 : index
    %712 = vector.load %arg6[%c60_543, %c0_544] : memref<192x512xbf16, #tpu.memory_space<vmem>>, vector<4x512xbf16>
    tpu.vector_store %arg6[%c60_543, %c0_544], %711 {strides = array<i32>} : memref<192x512xbf16, #tpu.memory_space<vmem>>, vector<4x512xbf16>,
    %c496_i32_545 = arith.constant 496 : i32
    %713 = tpu.dynamic_rotate %674 by %c496_i32_545 dim 1 : vector<4x512xf32>, i32 -> vector<4x512xf32>
    %c7_546 = arith.constant 7 : index
    %c0_547 = arith.constant 0 : index
    %714 = vector.load %arg4[%c7_546, %c0_547] : memref<9x512xf32, #tpu.memory_space<vmem>>, vector<1x512xf32>
    %715 = vector.broadcast %714 : vector<1x512xf32> to vector<4x512xf32>
    %716 = arith.mulf %713, %715 : vector<4x512xf32>
    %717 = arith.truncf %716 : vector<4x512xf32> to vector<4x512xbf16>
    %c64_548 = arith.constant 64 : index
    %c0_549 = arith.constant 0 : index
    %718 = vector.load %arg6[%c64_548, %c0_549] : memref<192x512xbf16, #tpu.memory_space<vmem>>, vector<4x512xbf16>
    tpu.vector_store %arg6[%c64_548, %c0_549], %717 {strides = array<i32>} : memref<192x512xbf16, #tpu.memory_space<vmem>>, vector<4x512xbf16>,
    %c495_i32_550 = arith.constant 495 : i32
    %719 = tpu.dynamic_rotate %674 by %c495_i32_550 dim 1 : vector<4x512xf32>, i32 -> vector<4x512xf32>
    %c8_551 = arith.constant 8 : index
    %c0_552 = arith.constant 0 : index
    %720 = vector.load %arg4[%c8_551, %c0_552] : memref<9x512xf32, #tpu.memory_space<vmem>>, vector<1x512xf32>
    %721 = vector.broadcast %720 : vector<1x512xf32> to vector<4x512xf32>
    %722 = arith.mulf %719, %721 : vector<4x512xf32>
    %723 = arith.truncf %722 : vector<4x512xf32> to vector<4x512xbf16>
    %c68_553 = arith.constant 68 : index
    %c0_554 = arith.constant 0 : index
    %724 = vector.load %arg6[%c68_553, %c0_554] : memref<192x512xbf16, #tpu.memory_space<vmem>>, vector<4x512xbf16>
    tpu.vector_store %arg6[%c68_553, %c0_554], %723 {strides = array<i32>} : memref<192x512xbf16, #tpu.memory_space<vmem>>, vector<4x512xbf16>,
    %c11 = arith.constant 11 : index
    %c0_555 = arith.constant 0 : index
    %c0_556 = arith.constant 0 : index
    %725 = vector.load %arg2[%c11, %c0_555, %c0_556] : memref<15x4x256xbf16, #tpu.memory_space<vmem>>, vector<1x4x256xbf16>
    %726 = vector.shape_cast %725 : vector<1x4x256xbf16> to vector<4x256xbf16>
    %727 = vector.extract_strided_slice %726 {offsets = [0, 0], sizes = [4, 72], strides = [1, 1]} : vector<4x256xbf16> to vector<4x72xbf16>
    %c0_557 = arith.constant 0 : index
    %c0_558 = arith.constant 0 : index
    %728 = vector.load %arg6[%c0_557, %c0_558] : memref<192x512xbf16, #tpu.memory_space<vmem>>, vector<72x512xbf16>
    %cst_559 = arith.constant dense<0.000000e+00> : vector<4x512xf32>
    %729 = tpu.matmul %727, %728, %cst_559 {dimension_numbers = #tpu.dot_dimension_numbers<[1], [0], [0], [1], [0, 0, 1, 1], [], []>} : vector<4x72xbf16>, vector<72x512xbf16>, vector<4x512xf32> -> vector<4x512xf32>
    %c11_560 = arith.constant 11 : index
    %c0_561 = arith.constant 0 : index
    %c0_562 = arith.constant 0 : index
    %730 = vector.load %arg3[%c11_560, %c0_561, %c0_562] : memref<15x4x1xf32, #tpu.memory_space<vmem>>, vector<1x4x1xf32>
    %731 = vector.shape_cast %730 : vector<1x4x1xf32> to vector<4x1xf32>
    %732 = vector.broadcast %731 : vector<4x1xf32> to vector<4x512xf32>
    %733 = arith.addf %729, %732 : vector<4x512xf32>
    %cst_563 = arith.constant 0.000000e+00 : f32
    %734 = vector.broadcast %cst_563 : f32 to vector<4x512xf32>
    %735 = arith.maximumf %733, %734 : vector<4x512xf32>
    %c17_i32_564 = arith.constant 17 : i32
    %736 = tpu.dynamic_rotate %735 by %c17_i32_564 dim 1 : vector<4x512xf32>, i32 -> vector<4x512xf32>
    %c0_565 = arith.constant 0 : index
    %c0_566 = arith.constant 0 : index
    %737 = vector.load %arg4[%c0_565, %c0_566] : memref<9x512xf32, #tpu.memory_space<vmem>>, vector<1x512xf32>
    %738 = vector.broadcast %737 : vector<1x512xf32> to vector<4x512xf32>
    %739 = arith.mulf %736, %738 : vector<4x512xf32>
    %740 = arith.truncf %739 : vector<4x512xf32> to vector<4x512xbf16>
    %c72_567 = arith.constant 72 : index
    %c0_568 = arith.constant 0 : index
    %741 = vector.load %arg6[%c72_567, %c0_568] : memref<192x512xbf16, #tpu.memory_space<vmem>>, vector<4x512xbf16>
    tpu.vector_store %arg6[%c72_567, %c0_568], %740 {strides = array<i32>} : memref<192x512xbf16, #tpu.memory_space<vmem>>, vector<4x512xbf16>,
    %c16_i32_569 = arith.constant 16 : i32
    %742 = tpu.dynamic_rotate %735 by %c16_i32_569 dim 1 : vector<4x512xf32>, i32 -> vector<4x512xf32>
    %c1_570 = arith.constant 1 : index
    %c0_571 = arith.constant 0 : index
    %743 = vector.load %arg4[%c1_570, %c0_571] : memref<9x512xf32, #tpu.memory_space<vmem>>, vector<1x512xf32>
    %744 = vector.broadcast %743 : vector<1x512xf32> to vector<4x512xf32>
    %745 = arith.mulf %742, %744 : vector<4x512xf32>
    %746 = arith.truncf %745 : vector<4x512xf32> to vector<4x512xbf16>
    %c76_572 = arith.constant 76 : index
    %c0_573 = arith.constant 0 : index
    %747 = vector.load %arg6[%c76_572, %c0_573] : memref<192x512xbf16, #tpu.memory_space<vmem>>, vector<4x512xbf16>
    tpu.vector_store %arg6[%c76_572, %c0_573], %746 {strides = array<i32>} : memref<192x512xbf16, #tpu.memory_space<vmem>>, vector<4x512xbf16>,
    %c15_i32_574 = arith.constant 15 : i32
    %748 = tpu.dynamic_rotate %735 by %c15_i32_574 dim 1 : vector<4x512xf32>, i32 -> vector<4x512xf32>
    %c2_575 = arith.constant 2 : index
    %c0_576 = arith.constant 0 : index
    %749 = vector.load %arg4[%c2_575, %c0_576] : memref<9x512xf32, #tpu.memory_space<vmem>>, vector<1x512xf32>
    %750 = vector.broadcast %749 : vector<1x512xf32> to vector<4x512xf32>
    %751 = arith.mulf %748, %750 : vector<4x512xf32>
    %752 = arith.truncf %751 : vector<4x512xf32> to vector<4x512xbf16>
    %c80_577 = arith.constant 80 : index
    %c0_578 = arith.constant 0 : index
    %753 = vector.load %arg6[%c80_577, %c0_578] : memref<192x512xbf16, #tpu.memory_space<vmem>>, vector<4x512xbf16>
    tpu.vector_store %arg6[%c80_577, %c0_578], %752 {strides = array<i32>} : memref<192x512xbf16, #tpu.memory_space<vmem>>, vector<4x512xbf16>,
    %c1_i32_579 = arith.constant 1 : i32
    %754 = tpu.dynamic_rotate %735 by %c1_i32_579 dim 1 : vector<4x512xf32>, i32 -> vector<4x512xf32>
    %c3_580 = arith.constant 3 : index
    %c0_581 = arith.constant 0 : index
    %755 = vector.load %arg4[%c3_580, %c0_581] : memref<9x512xf32, #tpu.memory_space<vmem>>, vector<1x512xf32>
    %756 = vector.broadcast %755 : vector<1x512xf32> to vector<4x512xf32>
    %757 = arith.mulf %754, %756 : vector<4x512xf32>
    %758 = arith.truncf %757 : vector<4x512xf32> to vector<4x512xbf16>
    %c84_582 = arith.constant 84 : index
    %c0_583 = arith.constant 0 : index
    %759 = vector.load %arg6[%c84_582, %c0_583] : memref<192x512xbf16, #tpu.memory_space<vmem>>, vector<4x512xbf16>
    tpu.vector_store %arg6[%c84_582, %c0_583], %758 {strides = array<i32>} : memref<192x512xbf16, #tpu.memory_space<vmem>>, vector<4x512xbf16>,
    %760 = arith.truncf %735 : vector<4x512xf32> to vector<4x512xbf16>
    %c88_584 = arith.constant 88 : index
    %c0_585 = arith.constant 0 : index
    %761 = vector.load %arg6[%c88_584, %c0_585] : memref<192x512xbf16, #tpu.memory_space<vmem>>, vector<4x512xbf16>
    tpu.vector_store %arg6[%c88_584, %c0_585], %760 {strides = array<i32>} : memref<192x512xbf16, #tpu.memory_space<vmem>>, vector<4x512xbf16>,
    %c511_i32_586 = arith.constant 511 : i32
    %762 = tpu.dynamic_rotate %735 by %c511_i32_586 dim 1 : vector<4x512xf32>, i32 -> vector<4x512xf32>
    %c5_587 = arith.constant 5 : index
    %c0_588 = arith.constant 0 : index
    %763 = vector.load %arg4[%c5_587, %c0_588] : memref<9x512xf32, #tpu.memory_space<vmem>>, vector<1x512xf32>
    %764 = vector.broadcast %763 : vector<1x512xf32> to vector<4x512xf32>
    %765 = arith.mulf %762, %764 : vector<4x512xf32>
    %766 = arith.truncf %765 : vector<4x512xf32> to vector<4x512xbf16>
    %c92_589 = arith.constant 92 : index
    %c0_590 = arith.constant 0 : index
    %767 = vector.load %arg6[%c92_589, %c0_590] : memref<192x512xbf16, #tpu.memory_space<vmem>>, vector<4x512xbf16>
    tpu.vector_store %arg6[%c92_589, %c0_590], %766 {strides = array<i32>} : memref<192x512xbf16, #tpu.memory_space<vmem>>, vector<4x512xbf16>,
    %c497_i32_591 = arith.constant 497 : i32
    %768 = tpu.dynamic_rotate %735 by %c497_i32_591 dim 1 : vector<4x512xf32>, i32 -> vector<4x512xf32>
    %c6_592 = arith.constant 6 : index
    %c0_593 = arith.constant 0 : index
    %769 = vector.load %arg4[%c6_592, %c0_593] : memref<9x512xf32, #tpu.memory_space<vmem>>, vector<1x512xf32>
    %770 = vector.broadcast %769 : vector<1x512xf32> to vector<4x512xf32>
    %771 = arith.mulf %768, %770 : vector<4x512xf32>
    %772 = arith.truncf %771 : vector<4x512xf32> to vector<4x512xbf16>
    %c96_594 = arith.constant 96 : index
    %c0_595 = arith.constant 0 : index
    %773 = vector.load %arg6[%c96_594, %c0_595] : memref<192x512xbf16, #tpu.memory_space<vmem>>, vector<4x512xbf16>
    tpu.vector_store %arg6[%c96_594, %c0_595], %772 {strides = array<i32>} : memref<192x512xbf16, #tpu.memory_space<vmem>>, vector<4x512xbf16>,
    %c496_i32_596 = arith.constant 496 : i32
    %774 = tpu.dynamic_rotate %735 by %c496_i32_596 dim 1 : vector<4x512xf32>, i32 -> vector<4x512xf32>
    %c7_597 = arith.constant 7 : index
    %c0_598 = arith.constant 0 : index
    %775 = vector.load %arg4[%c7_597, %c0_598] : memref<9x512xf32, #tpu.memory_space<vmem>>, vector<1x512xf32>
    %776 = vector.broadcast %775 : vector<1x512xf32> to vector<4x512xf32>
    %777 = arith.mulf %774, %776 : vector<4x512xf32>
    %778 = arith.truncf %777 : vector<4x512xf32> to vector<4x512xbf16>
    %c100_599 = arith.constant 100 : index
    %c0_600 = arith.constant 0 : index
    %779 = vector.load %arg6[%c100_599, %c0_600] : memref<192x512xbf16, #tpu.memory_space<vmem>>, vector<4x512xbf16>
    tpu.vector_store %arg6[%c100_599, %c0_600], %778 {strides = array<i32>} : memref<192x512xbf16, #tpu.memory_space<vmem>>, vector<4x512xbf16>,
    %c495_i32_601 = arith.constant 495 : i32
    %780 = tpu.dynamic_rotate %735 by %c495_i32_601 dim 1 : vector<4x512xf32>, i32 -> vector<4x512xf32>
    %c8_602 = arith.constant 8 : index
    %c0_603 = arith.constant 0 : index
    %781 = vector.load %arg4[%c8_602, %c0_603] : memref<9x512xf32, #tpu.memory_space<vmem>>, vector<1x512xf32>
    %782 = vector.broadcast %781 : vector<1x512xf32> to vector<4x512xf32>
    %783 = arith.mulf %780, %782 : vector<4x512xf32>
    %784 = arith.truncf %783 : vector<4x512xf32> to vector<4x512xbf16>
    %c104_604 = arith.constant 104 : index
    %c0_605 = arith.constant 0 : index
    %785 = vector.load %arg6[%c104_604, %c0_605] : memref<192x512xbf16, #tpu.memory_space<vmem>>, vector<4x512xbf16>
    tpu.vector_store %arg6[%c104_604, %c0_605], %784 {strides = array<i32>} : memref<192x512xbf16, #tpu.memory_space<vmem>>, vector<4x512xbf16>,
    %c12_606 = arith.constant 12 : index
    %c0_607 = arith.constant 0 : index
    %c0_608 = arith.constant 0 : index
    %786 = vector.load %arg2[%c12_606, %c0_607, %c0_608] : memref<15x4x256xbf16, #tpu.memory_space<vmem>>, vector<1x4x256xbf16>
    %787 = vector.shape_cast %786 : vector<1x4x256xbf16> to vector<4x256xbf16>
    %788 = vector.extract_strided_slice %787 {offsets = [0, 0], sizes = [4, 108], strides = [1, 1]} : vector<4x256xbf16> to vector<4x108xbf16>
    %c0_609 = arith.constant 0 : index
    %c0_610 = arith.constant 0 : index
    %789 = vector.load %arg6[%c0_609, %c0_610] : memref<192x512xbf16, #tpu.memory_space<vmem>>, vector<108x512xbf16>
    %cst_611 = arith.constant dense<0.000000e+00> : vector<4x512xf32>
    %790 = tpu.matmul %788, %789, %cst_611 {dimension_numbers = #tpu.dot_dimension_numbers<[1], [0], [0], [1], [0, 0, 1, 1], [], []>} : vector<4x108xbf16>, vector<108x512xbf16>, vector<4x512xf32> -> vector<4x512xf32>
    %c12_612 = arith.constant 12 : index
    %c0_613 = arith.constant 0 : index
    %c0_614 = arith.constant 0 : index
    %791 = vector.load %arg3[%c12_612, %c0_613, %c0_614] : memref<15x4x1xf32, #tpu.memory_space<vmem>>, vector<1x4x1xf32>
    %792 = vector.shape_cast %791 : vector<1x4x1xf32> to vector<4x1xf32>
    %793 = vector.broadcast %792 : vector<4x1xf32> to vector<4x512xf32>
    %794 = arith.addf %790, %793 : vector<4x512xf32>
    %cst_615 = arith.constant 0.000000e+00 : f32
    %795 = vector.broadcast %cst_615 : f32 to vector<4x512xf32>
    %796 = arith.maximumf %794, %795 : vector<4x512xf32>
    %c17_i32_616 = arith.constant 17 : i32
    %797 = tpu.dynamic_rotate %796 by %c17_i32_616 dim 1 : vector<4x512xf32>, i32 -> vector<4x512xf32>
    %c0_617 = arith.constant 0 : index
    %c0_618 = arith.constant 0 : index
    %798 = vector.load %arg4[%c0_617, %c0_618] : memref<9x512xf32, #tpu.memory_space<vmem>>, vector<1x512xf32>
    %799 = vector.broadcast %798 : vector<1x512xf32> to vector<4x512xf32>
    %800 = arith.mulf %797, %799 : vector<4x512xf32>
    %801 = arith.truncf %800 : vector<4x512xf32> to vector<4x512xbf16>
    %c108_619 = arith.constant 108 : index
    %c0_620 = arith.constant 0 : index
    %802 = vector.load %arg6[%c108_619, %c0_620] : memref<192x512xbf16, #tpu.memory_space<vmem>>, vector<4x512xbf16>
    tpu.vector_store %arg6[%c108_619, %c0_620], %801 {strides = array<i32>} : memref<192x512xbf16, #tpu.memory_space<vmem>>, vector<4x512xbf16>,
    %c16_i32_621 = arith.constant 16 : i32
    %803 = tpu.dynamic_rotate %796 by %c16_i32_621 dim 1 : vector<4x512xf32>, i32 -> vector<4x512xf32>
    %c1_622 = arith.constant 1 : index
    %c0_623 = arith.constant 0 : index
    %804 = vector.load %arg4[%c1_622, %c0_623] : memref<9x512xf32, #tpu.memory_space<vmem>>, vector<1x512xf32>
    %805 = vector.broadcast %804 : vector<1x512xf32> to vector<4x512xf32>
    %806 = arith.mulf %803, %805 : vector<4x512xf32>
    %807 = arith.truncf %806 : vector<4x512xf32> to vector<4x512xbf16>
    %c112_624 = arith.constant 112 : index
    %c0_625 = arith.constant 0 : index
    %808 = vector.load %arg6[%c112_624, %c0_625] : memref<192x512xbf16, #tpu.memory_space<vmem>>, vector<4x512xbf16>
    tpu.vector_store %arg6[%c112_624, %c0_625], %807 {strides = array<i32>} : memref<192x512xbf16, #tpu.memory_space<vmem>>, vector<4x512xbf16>,
    %c15_i32_626 = arith.constant 15 : i32
    %809 = tpu.dynamic_rotate %796 by %c15_i32_626 dim 1 : vector<4x512xf32>, i32 -> vector<4x512xf32>
    %c2_627 = arith.constant 2 : index
    %c0_628 = arith.constant 0 : index
    %810 = vector.load %arg4[%c2_627, %c0_628] : memref<9x512xf32, #tpu.memory_space<vmem>>, vector<1x512xf32>
    %811 = vector.broadcast %810 : vector<1x512xf32> to vector<4x512xf32>
    %812 = arith.mulf %809, %811 : vector<4x512xf32>
    %813 = arith.truncf %812 : vector<4x512xf32> to vector<4x512xbf16>
    %c116_629 = arith.constant 116 : index
    %c0_630 = arith.constant 0 : index
    %814 = vector.load %arg6[%c116_629, %c0_630] : memref<192x512xbf16, #tpu.memory_space<vmem>>, vector<4x512xbf16>
    tpu.vector_store %arg6[%c116_629, %c0_630], %813 {strides = array<i32>} : memref<192x512xbf16, #tpu.memory_space<vmem>>, vector<4x512xbf16>,
    %c1_i32_631 = arith.constant 1 : i32
    %815 = tpu.dynamic_rotate %796 by %c1_i32_631 dim 1 : vector<4x512xf32>, i32 -> vector<4x512xf32>
    %c3_632 = arith.constant 3 : index
    %c0_633 = arith.constant 0 : index
    %816 = vector.load %arg4[%c3_632, %c0_633] : memref<9x512xf32, #tpu.memory_space<vmem>>, vector<1x512xf32>
    %817 = vector.broadcast %816 : vector<1x512xf32> to vector<4x512xf32>
    %818 = arith.mulf %815, %817 : vector<4x512xf32>
    %819 = arith.truncf %818 : vector<4x512xf32> to vector<4x512xbf16>
    %c120_634 = arith.constant 120 : index
    %c0_635 = arith.constant 0 : index
    %820 = vector.load %arg6[%c120_634, %c0_635] : memref<192x512xbf16, #tpu.memory_space<vmem>>, vector<4x512xbf16>
    tpu.vector_store %arg6[%c120_634, %c0_635], %819 {strides = array<i32>} : memref<192x512xbf16, #tpu.memory_space<vmem>>, vector<4x512xbf16>,
    %821 = arith.truncf %796 : vector<4x512xf32> to vector<4x512xbf16>
    %c124_636 = arith.constant 124 : index
    %c0_637 = arith.constant 0 : index
    %822 = vector.load %arg6[%c124_636, %c0_637] : memref<192x512xbf16, #tpu.memory_space<vmem>>, vector<4x512xbf16>
    tpu.vector_store %arg6[%c124_636, %c0_637], %821 {strides = array<i32>} : memref<192x512xbf16, #tpu.memory_space<vmem>>, vector<4x512xbf16>,
    %c511_i32_638 = arith.constant 511 : i32
    %823 = tpu.dynamic_rotate %796 by %c511_i32_638 dim 1 : vector<4x512xf32>, i32 -> vector<4x512xf32>
    %c5_639 = arith.constant 5 : index
    %c0_640 = arith.constant 0 : index
    %824 = vector.load %arg4[%c5_639, %c0_640] : memref<9x512xf32, #tpu.memory_space<vmem>>, vector<1x512xf32>
    %825 = vector.broadcast %824 : vector<1x512xf32> to vector<4x512xf32>
    %826 = arith.mulf %823, %825 : vector<4x512xf32>
    %827 = arith.truncf %826 : vector<4x512xf32> to vector<4x512xbf16>
    %c128_641 = arith.constant 128 : index
    %c0_642 = arith.constant 0 : index
    %828 = vector.load %arg6[%c128_641, %c0_642] : memref<192x512xbf16, #tpu.memory_space<vmem>>, vector<4x512xbf16>
    tpu.vector_store %arg6[%c128_641, %c0_642], %827 {strides = array<i32>} : memref<192x512xbf16, #tpu.memory_space<vmem>>, vector<4x512xbf16>,
    %c497_i32_643 = arith.constant 497 : i32
    %829 = tpu.dynamic_rotate %796 by %c497_i32_643 dim 1 : vector<4x512xf32>, i32 -> vector<4x512xf32>
    %c6_644 = arith.constant 6 : index
    %c0_645 = arith.constant 0 : index
    %830 = vector.load %arg4[%c6_644, %c0_645] : memref<9x512xf32, #tpu.memory_space<vmem>>, vector<1x512xf32>
    %831 = vector.broadcast %830 : vector<1x512xf32> to vector<4x512xf32>
    %832 = arith.mulf %829, %831 : vector<4x512xf32>
    %833 = arith.truncf %832 : vector<4x512xf32> to vector<4x512xbf16>
    %c132_646 = arith.constant 132 : index
    %c0_647 = arith.constant 0 : index
    %834 = vector.load %arg6[%c132_646, %c0_647] : memref<192x512xbf16, #tpu.memory_space<vmem>>, vector<4x512xbf16>
    tpu.vector_store %arg6[%c132_646, %c0_647], %833 {strides = array<i32>} : memref<192x512xbf16, #tpu.memory_space<vmem>>, vector<4x512xbf16>,
    %c496_i32_648 = arith.constant 496 : i32
    %835 = tpu.dynamic_rotate %796 by %c496_i32_648 dim 1 : vector<4x512xf32>, i32 -> vector<4x512xf32>
    %c7_649 = arith.constant 7 : index
    %c0_650 = arith.constant 0 : index
    %836 = vector.load %arg4[%c7_649, %c0_650] : memref<9x512xf32, #tpu.memory_space<vmem>>, vector<1x512xf32>
    %837 = vector.broadcast %836 : vector<1x512xf32> to vector<4x512xf32>
    %838 = arith.mulf %835, %837 : vector<4x512xf32>
    %839 = arith.truncf %838 : vector<4x512xf32> to vector<4x512xbf16>
    %c136_651 = arith.constant 136 : index
    %c0_652 = arith.constant 0 : index
    %840 = vector.load %arg6[%c136_651, %c0_652] : memref<192x512xbf16, #tpu.memory_space<vmem>>, vector<4x512xbf16>
    tpu.vector_store %arg6[%c136_651, %c0_652], %839 {strides = array<i32>} : memref<192x512xbf16, #tpu.memory_space<vmem>>, vector<4x512xbf16>,
    %c495_i32_653 = arith.constant 495 : i32
    %841 = tpu.dynamic_rotate %796 by %c495_i32_653 dim 1 : vector<4x512xf32>, i32 -> vector<4x512xf32>
    %c8_654 = arith.constant 8 : index
    %c0_655 = arith.constant 0 : index
    %842 = vector.load %arg4[%c8_654, %c0_655] : memref<9x512xf32, #tpu.memory_space<vmem>>, vector<1x512xf32>
    %843 = vector.broadcast %842 : vector<1x512xf32> to vector<4x512xf32>
    %844 = arith.mulf %841, %843 : vector<4x512xf32>
    %845 = arith.truncf %844 : vector<4x512xf32> to vector<4x512xbf16>
    %c140_656 = arith.constant 140 : index
    %c0_657 = arith.constant 0 : index
    %846 = vector.load %arg6[%c140_656, %c0_657] : memref<192x512xbf16, #tpu.memory_space<vmem>>, vector<4x512xbf16>
    tpu.vector_store %arg6[%c140_656, %c0_657], %845 {strides = array<i32>} : memref<192x512xbf16, #tpu.memory_space<vmem>>, vector<4x512xbf16>,
    %c13 = arith.constant 13 : index
    %c0_658 = arith.constant 0 : index
    %c0_659 = arith.constant 0 : index
    %847 = vector.load %arg2[%c13, %c0_658, %c0_659] : memref<15x4x256xbf16, #tpu.memory_space<vmem>>, vector<1x4x256xbf16>
    %848 = vector.shape_cast %847 : vector<1x4x256xbf16> to vector<4x256xbf16>
    %849 = vector.extract_strided_slice %848 {offsets = [0, 0], sizes = [4, 144], strides = [1, 1]} : vector<4x256xbf16> to vector<4x144xbf16>
    %c0_660 = arith.constant 0 : index
    %c0_661 = arith.constant 0 : index
    %850 = vector.load %arg6[%c0_660, %c0_661] : memref<192x512xbf16, #tpu.memory_space<vmem>>, vector<144x512xbf16>
    %cst_662 = arith.constant dense<0.000000e+00> : vector<4x512xf32>
    %851 = tpu.matmul %849, %850, %cst_662 {dimension_numbers = #tpu.dot_dimension_numbers<[1], [0], [0], [1], [0, 0, 1, 1], [], []>} : vector<4x144xbf16>, vector<144x512xbf16>, vector<4x512xf32> -> vector<4x512xf32>
    %c13_663 = arith.constant 13 : index
    %c0_664 = arith.constant 0 : index
    %c0_665 = arith.constant 0 : index
    %852 = vector.load %arg3[%c13_663, %c0_664, %c0_665] : memref<15x4x1xf32, #tpu.memory_space<vmem>>, vector<1x4x1xf32>
    %853 = vector.shape_cast %852 : vector<1x4x1xf32> to vector<4x1xf32>
    %854 = vector.broadcast %853 : vector<4x1xf32> to vector<4x512xf32>
    %855 = arith.addf %851, %854 : vector<4x512xf32>
    %cst_666 = arith.constant 0.000000e+00 : f32
    %856 = vector.broadcast %cst_666 : f32 to vector<4x512xf32>
    %857 = arith.maximumf %855, %856 : vector<4x512xf32>
    %c17_i32_667 = arith.constant 17 : i32
    %858 = tpu.dynamic_rotate %857 by %c17_i32_667 dim 1 : vector<4x512xf32>, i32 -> vector<4x512xf32>
    %c0_668 = arith.constant 0 : index
    %c0_669 = arith.constant 0 : index
    %859 = vector.load %arg4[%c0_668, %c0_669] : memref<9x512xf32, #tpu.memory_space<vmem>>, vector<1x512xf32>
    %860 = vector.broadcast %859 : vector<1x512xf32> to vector<4x512xf32>
    %861 = arith.mulf %858, %860 : vector<4x512xf32>
    %862 = arith.truncf %861 : vector<4x512xf32> to vector<4x512xbf16>
    %c144_670 = arith.constant 144 : index
    %c0_671 = arith.constant 0 : index
    %863 = vector.load %arg6[%c144_670, %c0_671] : memref<192x512xbf16, #tpu.memory_space<vmem>>, vector<4x512xbf16>
    tpu.vector_store %arg6[%c144_670, %c0_671], %862 {strides = array<i32>} : memref<192x512xbf16, #tpu.memory_space<vmem>>, vector<4x512xbf16>,
    %c16_i32_672 = arith.constant 16 : i32
    %864 = tpu.dynamic_rotate %857 by %c16_i32_672 dim 1 : vector<4x512xf32>, i32 -> vector<4x512xf32>
    %c1_673 = arith.constant 1 : index
    %c0_674 = arith.constant 0 : index
    %865 = vector.load %arg4[%c1_673, %c0_674] : memref<9x512xf32, #tpu.memory_space<vmem>>, vector<1x512xf32>
    %866 = vector.broadcast %865 : vector<1x512xf32> to vector<4x512xf32>
    %867 = arith.mulf %864, %866 : vector<4x512xf32>
    %868 = arith.truncf %867 : vector<4x512xf32> to vector<4x512xbf16>
    %c148_675 = arith.constant 148 : index
    %c0_676 = arith.constant 0 : index
    %869 = vector.load %arg6[%c148_675, %c0_676] : memref<192x512xbf16, #tpu.memory_space<vmem>>, vector<4x512xbf16>
    tpu.vector_store %arg6[%c148_675, %c0_676], %868 {strides = array<i32>} : memref<192x512xbf16, #tpu.memory_space<vmem>>, vector<4x512xbf16>,
    %c15_i32_677 = arith.constant 15 : i32
    %870 = tpu.dynamic_rotate %857 by %c15_i32_677 dim 1 : vector<4x512xf32>, i32 -> vector<4x512xf32>
    %c2_678 = arith.constant 2 : index
    %c0_679 = arith.constant 0 : index
    %871 = vector.load %arg4[%c2_678, %c0_679] : memref<9x512xf32, #tpu.memory_space<vmem>>, vector<1x512xf32>
    %872 = vector.broadcast %871 : vector<1x512xf32> to vector<4x512xf32>
    %873 = arith.mulf %870, %872 : vector<4x512xf32>
    %874 = arith.truncf %873 : vector<4x512xf32> to vector<4x512xbf16>
    %c152_680 = arith.constant 152 : index
    %c0_681 = arith.constant 0 : index
    %875 = vector.load %arg6[%c152_680, %c0_681] : memref<192x512xbf16, #tpu.memory_space<vmem>>, vector<4x512xbf16>
    tpu.vector_store %arg6[%c152_680, %c0_681], %874 {strides = array<i32>} : memref<192x512xbf16, #tpu.memory_space<vmem>>, vector<4x512xbf16>,
    %c1_i32_682 = arith.constant 1 : i32
    %876 = tpu.dynamic_rotate %857 by %c1_i32_682 dim 1 : vector<4x512xf32>, i32 -> vector<4x512xf32>
    %c3_683 = arith.constant 3 : index
    %c0_684 = arith.constant 0 : index
    %877 = vector.load %arg4[%c3_683, %c0_684] : memref<9x512xf32, #tpu.memory_space<vmem>>, vector<1x512xf32>
    %878 = vector.broadcast %877 : vector<1x512xf32> to vector<4x512xf32>
    %879 = arith.mulf %876, %878 : vector<4x512xf32>
    %880 = arith.truncf %879 : vector<4x512xf32> to vector<4x512xbf16>
    %c156_685 = arith.constant 156 : index
    %c0_686 = arith.constant 0 : index
    %881 = vector.load %arg6[%c156_685, %c0_686] : memref<192x512xbf16, #tpu.memory_space<vmem>>, vector<4x512xbf16>
    tpu.vector_store %arg6[%c156_685, %c0_686], %880 {strides = array<i32>} : memref<192x512xbf16, #tpu.memory_space<vmem>>, vector<4x512xbf16>,
    %882 = arith.truncf %857 : vector<4x512xf32> to vector<4x512xbf16>
    %c160_687 = arith.constant 160 : index
    %c0_688 = arith.constant 0 : index
    %883 = vector.load %arg6[%c160_687, %c0_688] : memref<192x512xbf16, #tpu.memory_space<vmem>>, vector<4x512xbf16>
    tpu.vector_store %arg6[%c160_687, %c0_688], %882 {strides = array<i32>} : memref<192x512xbf16, #tpu.memory_space<vmem>>, vector<4x512xbf16>,
    %c511_i32_689 = arith.constant 511 : i32
    %884 = tpu.dynamic_rotate %857 by %c511_i32_689 dim 1 : vector<4x512xf32>, i32 -> vector<4x512xf32>
    %c5_690 = arith.constant 5 : index
    %c0_691 = arith.constant 0 : index
    %885 = vector.load %arg4[%c5_690, %c0_691] : memref<9x512xf32, #tpu.memory_space<vmem>>, vector<1x512xf32>
    %886 = vector.broadcast %885 : vector<1x512xf32> to vector<4x512xf32>
    %887 = arith.mulf %884, %886 : vector<4x512xf32>
    %888 = arith.truncf %887 : vector<4x512xf32> to vector<4x512xbf16>
    %c164_692 = arith.constant 164 : index
    %c0_693 = arith.constant 0 : index
    %889 = vector.load %arg6[%c164_692, %c0_693] : memref<192x512xbf16, #tpu.memory_space<vmem>>, vector<4x512xbf16>
    tpu.vector_store %arg6[%c164_692, %c0_693], %888 {strides = array<i32>} : memref<192x512xbf16, #tpu.memory_space<vmem>>, vector<4x512xbf16>,
    %c497_i32_694 = arith.constant 497 : i32
    %890 = tpu.dynamic_rotate %857 by %c497_i32_694 dim 1 : vector<4x512xf32>, i32 -> vector<4x512xf32>
    %c6_695 = arith.constant 6 : index
    %c0_696 = arith.constant 0 : index
    %891 = vector.load %arg4[%c6_695, %c0_696] : memref<9x512xf32, #tpu.memory_space<vmem>>, vector<1x512xf32>
    %892 = vector.broadcast %891 : vector<1x512xf32> to vector<4x512xf32>
    %893 = arith.mulf %890, %892 : vector<4x512xf32>
    %894 = arith.truncf %893 : vector<4x512xf32> to vector<4x512xbf16>
    %c168_697 = arith.constant 168 : index
    %c0_698 = arith.constant 0 : index
    %895 = vector.load %arg6[%c168_697, %c0_698] : memref<192x512xbf16, #tpu.memory_space<vmem>>, vector<4x512xbf16>
    tpu.vector_store %arg6[%c168_697, %c0_698], %894 {strides = array<i32>} : memref<192x512xbf16, #tpu.memory_space<vmem>>, vector<4x512xbf16>,
    %c496_i32_699 = arith.constant 496 : i32
    %896 = tpu.dynamic_rotate %857 by %c496_i32_699 dim 1 : vector<4x512xf32>, i32 -> vector<4x512xf32>
    %c7_700 = arith.constant 7 : index
    %c0_701 = arith.constant 0 : index
    %897 = vector.load %arg4[%c7_700, %c0_701] : memref<9x512xf32, #tpu.memory_space<vmem>>, vector<1x512xf32>
    %898 = vector.broadcast %897 : vector<1x512xf32> to vector<4x512xf32>
    %899 = arith.mulf %896, %898 : vector<4x512xf32>
    %900 = arith.truncf %899 : vector<4x512xf32> to vector<4x512xbf16>
    %c172_702 = arith.constant 172 : index
    %c0_703 = arith.constant 0 : index
    %901 = vector.load %arg6[%c172_702, %c0_703] : memref<192x512xbf16, #tpu.memory_space<vmem>>, vector<4x512xbf16>
    tpu.vector_store %arg6[%c172_702, %c0_703], %900 {strides = array<i32>} : memref<192x512xbf16, #tpu.memory_space<vmem>>, vector<4x512xbf16>,
    %c495_i32_704 = arith.constant 495 : i32
    %902 = tpu.dynamic_rotate %857 by %c495_i32_704 dim 1 : vector<4x512xf32>, i32 -> vector<4x512xf32>
    %c8_705 = arith.constant 8 : index
    %c0_706 = arith.constant 0 : index
    %903 = vector.load %arg4[%c8_705, %c0_706] : memref<9x512xf32, #tpu.memory_space<vmem>>, vector<1x512xf32>
    %904 = vector.broadcast %903 : vector<1x512xf32> to vector<4x512xf32>
    %905 = arith.mulf %902, %904 : vector<4x512xf32>
    %906 = arith.truncf %905 : vector<4x512xf32> to vector<4x512xbf16>
    %c176_707 = arith.constant 176 : index
    %c0_708 = arith.constant 0 : index
    %907 = vector.load %arg6[%c176_707, %c0_708] : memref<192x512xbf16, #tpu.memory_space<vmem>>, vector<4x512xbf16>
    tpu.vector_store %arg6[%c176_707, %c0_708], %906 {strides = array<i32>} : memref<192x512xbf16, #tpu.memory_space<vmem>>, vector<4x512xbf16>,
    %c14 = arith.constant 14 : index
    %c0_709 = arith.constant 0 : index
    %c0_710 = arith.constant 0 : index
    %908 = vector.load %arg2[%c14, %c0_709, %c0_710] : memref<15x4x256xbf16, #tpu.memory_space<vmem>>, vector<1x4x256xbf16>
    %909 = vector.shape_cast %908 : vector<1x4x256xbf16> to vector<4x256xbf16>
    %910 = vector.extract_strided_slice %909 {offsets = [0, 0], sizes = [4, 180], strides = [1, 1]} : vector<4x256xbf16> to vector<4x180xbf16>
    %c0_711 = arith.constant 0 : index
    %c0_712 = arith.constant 0 : index
    %911 = vector.load %arg6[%c0_711, %c0_712] : memref<192x512xbf16, #tpu.memory_space<vmem>>, vector<180x512xbf16>
    %cst_713 = arith.constant dense<0.000000e+00> : vector<4x512xf32>
    %912 = tpu.matmul %910, %911, %cst_713 {dimension_numbers = #tpu.dot_dimension_numbers<[1], [0], [0], [1], [0, 0, 1, 1], [], []>} : vector<4x180xbf16>, vector<180x512xbf16>, vector<4x512xf32> -> vector<4x512xf32>
    %c14_714 = arith.constant 14 : index
    %c0_715 = arith.constant 0 : index
    %c0_716 = arith.constant 0 : index
    %913 = vector.load %arg3[%c14_714, %c0_715, %c0_716] : memref<15x4x1xf32, #tpu.memory_space<vmem>>, vector<1x4x1xf32>
    %914 = vector.shape_cast %913 : vector<1x4x1xf32> to vector<4x1xf32>
    %915 = vector.broadcast %914 : vector<4x1xf32> to vector<4x512xf32>
    %916 = arith.addf %912, %915 : vector<4x512xf32>
    %cst_717 = arith.constant 2.000000e-01 : f32
    %917 = vector.broadcast %cst_717 : f32 to vector<4x512xf32>
    %918 = arith.mulf %916, %917 : vector<4x512xf32>
    %919 = arith.addf %918, %613 : vector<4x512xf32>
    %cst_718 = arith.constant 2.000000e-01 : f32
    %920 = vector.broadcast %cst_718 : f32 to vector<4x512xf32>
    %921 = arith.mulf %919, %920 : vector<4x512xf32>
    %922 = arith.addf %921, %1 : vector<4x512xf32>
    %c0_719 = arith.constant 0 : index
    %c0_720 = arith.constant 0 : index
    %c0_721 = arith.constant 0 : index
    %923 = vector.load %arg5[%c0_719, %c0_720, %c0_721] : memref<1x4x512xf32, #tpu.memory_space<vmem>>, vector<1x4x512xf32>
    %924 = vector.shape_cast %923 : vector<1x4x512xf32> to vector<4x512xf32>
    %925 = vector.shape_cast %922 : vector<4x512xf32> to vector<1x4x512xf32>
    tpu.vector_store %arg5[%c0_719, %c0_720, %c0_721], %925 {strides = array<i32>} : memref<1x4x512xf32, #tpu.memory_space<vmem>>, vector<1x4x512xf32>,
    return
  }
  func.func @transform_0(%arg0: i32) -> (i32, i32, i32) {
    %c0_i32 = arith.constant 0 : i32
    %c0_i32_0 = arith.constant 0 : i32
    %c0_i32_1 = arith.constant 0 : i32
    return %arg0, %c0_i32, %c0_i32_0 : i32, i32, i32
  }
  func.func @transform_1(%arg0: i32) -> (i32, i32, i32) {
    %c0_i32 = arith.constant 0 : i32
    %c0_i32_0 = arith.constant 0 : i32
    %c0_i32_1 = arith.constant 0 : i32
    %c0_i32_2 = arith.constant 0 : i32
    return %c0_i32, %c0_i32_0, %c0_i32_1 : i32, i32, i32
  }
  func.func @transform_2(%arg0: i32) -> (i32, i32, i32) {
    %c0_i32 = arith.constant 0 : i32
    %c0_i32_0 = arith.constant 0 : i32
    %c0_i32_1 = arith.constant 0 : i32
    %c0_i32_2 = arith.constant 0 : i32
    return %c0_i32, %c0_i32_0, %c0_i32_1 : i32, i32, i32
  }
  func.func @transform_3(%arg0: i32) -> (i32, i32) {
    %c0_i32 = arith.constant 0 : i32
    %c0_i32_0 = arith.constant 0 : i32
    %c0_i32_1 = arith.constant 0 : i32
    return %c0_i32, %c0_i32_0 : i32, i32
  }
  func.func @transform_4(%arg0: i32) -> (i32, i32, i32) {
    %c0_i32 = arith.constant 0 : i32
    %c0_i32_0 = arith.constant 0 : i32
    %c0_i32_1 = arith.constant 0 : i32
    return %arg0, %c0_i32, %c0_i32_0 : i32, i32, i32
  }
}

</mosaic_0001>

<llo_original>
// kernel: rrdb_pallas.1
$region0: #{rrdb_pallas.1}
  #allocation0 [shape = 'u32[]', space=smem, size = 0x4, offset = 0x4, fixed_abs, tag = 'smem constant byte address 0x4 - core index']
  #allocation1 [shape = 'u32[144,128]{1,0:T(1,128)}', space=vmem, size = 0x12000, scoped, tag = 'internal scratch']
  #allocation2 [shape = 'bf16[192,512]{1,0:T(16,128)(2,1)}', space=vmem, size = 0x30000, scoped, tag = 'scratch operand']
  %s0 = inlined_call_operand.vmem [shape: f32[2,4,512], index: 0, kind: input, shape index: {}]
  %s1 = inlined_call_operand.vmem [shape: bf16[15,4,256], index: 1, kind: input, shape index: {}]
  %s2 = inlined_call_operand.vmem [shape: f32[15,4,1], index: 2, kind: input, shape index: {}]
  %s3 = inlined_call_operand.vmem [shape: f32[9,512], index: 3, kind: input, shape index: {}]
  %s4 = inlined_call_operand.vmem [shape: f32[2,4,512], index: 4, kind: output, shape index: {}]
  %s5 = sld [smem:[#allocation0]]
  $region49: #{rrdb_pallas.1} parent=0
    _
  %s7 = ssub.s32 1, %s5
  %s8 = scalar_select 0, %s7, %s5
  loop: start=0, step=1, limit=4
  $region2: #{rrdb_pallas.1} parent=0 // loop_pre_header
    _
  $region3: #{rrdb_pallas.1} parent=0 // loop_header
    %s10 = sphi 0, %s14
    %p11 = scmp.ge.s32.totalorder %s10, 4
    %s20 = sphi 0, %s22
    %s23 = sphi 0, %s20
    %s24 = sphi 0, %s23
    %s40 = sphi 0, %s24
    %s44 = sphi 0, %s44
    %s46 = sphi 0, %s44
    %s47 = sphi 0, %s46
    %s61 = sphi 0, %s47
    %s65 = sphi 0, %s65
    %s67 = sphi 0, %s65
    %s68 = sphi 0, %s67
    %s82 = sphi 0, %s68
    %s86 = sphi 0, %s86
    %s88 = sphi 0, %s86
    %s89 = sphi 0, %s88
    %s103 = sphi 0, %s89
    %s109 = sphi 0, %s111
    %s112 = sphi 0, %s109
    %s113 = sphi 0, %s112
    %s129 = sphi 0, %s113
  $region4: #{rrdb_pallas.1} parent=0 // loop_header_branch
    %13 = sbr.rel (%p11) target = $region8
  $region5: #{rrdb_pallas.1} parent=0 // loop_body
    %s15 = ssub.s32 %s10, 1
    %s16 = ssub.s32 %s10, 2
    %s17 = sadd.s32 %s10, 1
    %s18 = ssub.s32 %s10, %s17
    %p19 = scmp.eq.s32.totalorder %s18, 0
    %s21 = sadd.s32 %s20, 1
    %s22 = scalar_select %p19, %s20, %s21
    %p25 = pneg %p19
    %p26 = scmp.eq.s32.totalorder %s10, 1
    %p27 = por %p25, %p26
    %p28 = scmp.ne.s32.totalorder %s20, %s23
    %p29 = scmp.eq.s32.totalorder %s10, 0
    %p30 = por %p28, %p29
    %p31 = scmp.ne.s32.totalorder %s20, %s23
    %p32 = scmp.eq.s32.totalorder %s15, 1
    %p33 = por %p31, %p32
    %p34 = scmp.ne.s32.totalorder %s23, %s24
    %p35 = scmp.eq.s32.totalorder %s15, 0
    %p36 = por %p34, %p35
    %p37 = scmp.ne.s32.totalorder %s23, %s24
    %p38 = scmp.eq.s32.totalorder %s16, 1
    %p39 = por %p37, %p38
    %p41 = scmp.ne.s32.totalorder %s24, %s40
    %p42 = scmp.eq.s32.totalorder %s16, 0
    %p43 = por %p41, %p42
    %s45 = sadd.s32 %s44, 1
    %p48 = scmp.eq.s32.totalorder %s10, 1
    %p49 = scmp.ne.s32.totalorder %s44, %s46
    %p50 = scmp.eq.s32.totalorder %s10, 0
    %p51 = por %p49, %p50
    %p52 = scmp.ne.s32.totalorder %s44, %s46
    %p53 = scmp.eq.s32.totalorder %s15, 1
    %p54 = por %p52, %p53
    %p55 = scmp.ne.s32.totalorder %s46, %s47
    %p56 = scmp.eq.s32.totalorder %s15, 0
    %p57 = por %p55, %p56
    %p58 = scmp.ne.s32.totalorder %s46, %s47
    %p59 = scmp.eq.s32.totalorder %s16, 1
    %p60 = por %p58, %p59
    %p62 = scmp.ne.s32.totalorder %s47, %s61
    %p63 = scmp.eq.s32.totalorder %s16, 0
    %p64 = por %p62, %p63
    %s66 = sadd.s32 %s65, 1
    %p69 = scmp.eq.s32.totalorder %s10, 1
    %p70 = scmp.ne.s32.totalorder %s65, %s67
    %p71 = scmp.eq.s32.totalorder %s10, 0
    %p72 = por %p70, %p71
    %p73 = scmp.ne.s32.totalorder %s65, %s67
    %p74 = scmp.eq.s32.totalorder %s15, 1
    %p75 = por %p73, %p74
    %p76 = scmp.ne.s32.totalorder %s67, %s68
    %p77 = scmp.eq.s32.totalorder %s15, 0
    %p78 = por %p76, %p77
    %p79 = scmp.ne.s32.totalorder %s67, %s68
    %p80 = scmp.eq.s32.totalorder %s16, 1
    %p81 = por %p79, %p80
    %p83 = scmp.ne.s32.totalorder %s68, %s82
    %p84 = scmp.eq.s32.totalorder %s16, 0
    %p85 = por %p83, %p84
    %s87 = sadd.s32 %s86, 1
    %p90 = scmp.eq.s32.totalorder %s10, 1
    %p91 = scmp.ne.s32.totalorder %s86, %s88
    %p92 = scmp.eq.s32.totalorder %s10, 0
    %p93 = por %p91, %p92
    %p94 = scmp.ne.s32.totalorder %s86, %s88
    %p95 = scmp.eq.s32.totalorder %s15, 1
    %p96 = por %p94, %p95
    %p97 = scmp.ne.s32.totalorder %s88, %s89
    %p98 = scmp.eq.s32.totalorder %s15, 0
    %p99 = por %p97, %p98
    %p100 = scmp.ne.s32.totalorder %s88, %s89
    %p101 = scmp.eq.s32.totalorder %s16, 1
    %p102 = por %p100, %p101
    %p104 = scmp.ne.s32.totalorder %s89, %s103
    %p105 = scmp.eq.s32.totalorder %s16, 0
    %p106 = por %p104, %p105
    %s107 = ssub.s32 %s10, %s17
    %p108 = scmp.eq.s32.totalorder %s107, 0
    %s110 = sadd.s32 %s109, 1
    %s111 = scalar_select %p108, %s109, %s110
    %p114 = pneg %p108
    %p115 = scmp.eq.s32.totalorder %s10, 1
    %p116 = por %p114, %p115
    %p117 = scmp.ne.s32.totalorder %s109, %s112
    %p118 = scmp.eq.s32.totalorder %s10, 0
    %p119 = por %p117, %p118
    %p120 = scmp.ne.s32.totalorder %s109, %s112
    %p121 = scmp.eq.s32.totalorder %s15, 1
    %p122 = por %p120, %p121
    %p123 = scmp.ne.s32.totalorder %s112, %s113
    %p124 = scmp.eq.s32.totalorder %s15, 0
    %p125 = por %p123, %p124
    %p126 = scmp.ne.s32.totalorder %s112, %s113
    %p127 = scmp.eq.s32.totalorder %s16, 1
    %p128 = por %p126, %p127
    %p130 = scmp.ne.s32.totalorder %s113, %s129
    %p131 = scmp.eq.s32.totalorder %s16, 0
    %p132 = por %p130, %p131
    %p133 = scmp.le.s32.totalorder 1, %s10
    %p134 = scmp.lt.s32.totalorder %s10, 3
    %p135 = pnand %p133, %p134
    %p136 = pneg %p135
    // Predicated region
    $region9: #{rrdb_pallas.1} parent=5 // pred_check
      _
    $region10: #{rrdb_pallas.1} parent=5 // pred_check_branch
      %138 = sbr.rel (%p135) target = $region12
    $region11: #{rrdb_pallas.1} parent=5 // pred_region
      %s139 = ssub.s32 %s10, 1
      // Predicated region
      $region13: #{rrdb_pallas.1} parent=11 // pred_check
        %p140 = pneg %p57
      $region14: #{rrdb_pallas.1} parent=11 // pred_check_branch
        %142 = sbr.rel (%p140) target = $region16
      $region15: #{rrdb_pallas.1} parent=11 // pred_region
        _
      $region16: #{rrdb_pallas.1} parent=11 // pred_fallthru
        _
      // Predicated region
      $region17: #{rrdb_pallas.1} parent=11 // pred_check
        %p143 = pneg %p78
      $region18: #{rrdb_pallas.1} parent=11 // pred_check_branch
        %145 = sbr.rel (%p143) target = $region20
      $region19: #{rrdb_pallas.1} parent=11 // pred_region
        _
      $region20: #{rrdb_pallas.1} parent=11 // pred_fallthru
        _
      // Predicated region
      $region21: #{rrdb_pallas.1} parent=11 // pred_check
        %p146 = pneg %p99
      $region22: #{rrdb_pallas.1} parent=11 // pred_check_branch
        %148 = sbr.rel (%p146) target = $region24
      $region23: #{rrdb_pallas.1} parent=11 // pred_region
        _
      $region24: #{rrdb_pallas.1} parent=11 // pred_fallthru
        _
    $region12: #{rrdb_pallas.1} parent=5 // pred_fallthru
      _
    %p149 = scmp.lt.s32.totalorder %s10, 2
    // Predicated region
    $region25: #{rrdb_pallas.1} parent=5 // pred_check
      %p150 = pneg %p149
    $region26: #{rrdb_pallas.1} parent=5 // pred_check_branch
      %152 = sbr.rel (%p150) target = $region28
    $region27: #{rrdb_pallas.1} parent=5 // pred_region
      // Predicated region
      $region29: #{rrdb_pallas.1} parent=27 // pred_check
        %p153 = pneg %p30
      $region30: #{rrdb_pallas.1} parent=27 // pred_check_branch
        %155 = sbr.rel (%p153) target = $region32
      $region31: #{rrdb_pallas.1} parent=27 // pred_region
        %p156 = scmp.lt.s32.totalorder %s10, 1
        %s157 = scalar_select %p156, %s10, 1
        %s158 = smul.addr %s157, 4
        %s159 = smul.addr %s158, 4
        %s160 = scalar_lea.vmem %s0, %s159
      $region32: #{rrdb_pallas.1} parent=27 // pred_fallthru
        _
    $region28: #{rrdb_pallas.1} parent=5 // pred_fallthru
      _
    %p161 = scmp.le.s32.totalorder 1, %s10
    %p162 = scmp.lt.s32.totalorder %s10, 3
    %p163 = pnand %p161, %p162
    %p164 = pneg %p163
    // Predicated region
    $region33: #{rrdb_pallas.1} parent=5 // pred_check
      _
    $region34: #{rrdb_pallas.1} parent=5 // pred_check_branch
      %166 = sbr.rel (%p163) target = $region36
    $region35: #{rrdb_pallas.1} parent=5 // pred_region
      %s167 = ssub.s32 %s10, 1
      %p168 = scmp.lt.s32.totalorder %s15, 1
      %s169 = scalar_select %p168, %s15, 1
      %s170 = smul.addr %s169, 4
      %s171 = smul.addr %s170, 4
      %s172 = scalar_lea.vmem %s0, %s171
      %p173 = pneg %p36
      %p174 = pneg %p33
      %p175 = pneg %p57
      %p176 = pneg %p54
      %p177 = pneg %p78
      %p178 = pneg %p75
      %p179 = pneg %p99
      %p180 = pneg %p96
      %p181 = pneg %p125
      %p182 = pneg %p122
      %p183 = scmp.lt.s32.totalorder %s15, 1
      %s184 = scalar_select %p183, %s15, 1
      %s185 = smul.addr %s184, 4
      %s186 = smul.addr %s185, 4
      %s187 = scalar_lea.vmem %s4, %s186
      %p188 = scmp.lt.s32.totalorder %s15, 1
      %s189 = scalar_select %p188, %s15, 1
      %s190 = smul.addr %s189, 4
      %s191 = smul.addr %s190, 4
      %s192 = scalar_lea.vmem %s0, %s191
      %p193 = scmp.lt.s32.totalorder %s15, 1
      %s194 = scalar_select %p193, %s15, 1
      %s195 = smul.addr %s194, 4
      %s196 = smul.addr %s195, 4
      %s197 = scalar_lea.vmem %s4, %s196
      %v199 = vld [vmem:[%s192] sm:$0xff]
      %v200 = vld [vmem:[%s192 + $0x8] sm:$0xff]
      %v203 = vcombine.high %v199, %v199
      %v204 = vcombine.high %v200, %v200
      %207 = vrot.lane.b32.xlu0 %v199, 17
      %v208 = vpop.permute.xlu0 %207
      %209 = vrot.lane.b32.xlu0 %v203, 17
      %v210 = vpop.permute.xlu0 %209
      %211 = vrot.lane.b32.xlu0 %v200, 17
      %v212 = vpop.permute.xlu0 %211
      %213 = vrot.lane.b32.xlu0 %v204, 17
      %v214 = vpop.permute.xlu0 %213
      %v215 = vlaneseq
      %v216 = vand.u32 %v215, 127
      %vm217 = vcmp.lt.s32.totalorder %v216, 17
      %v218 = vsel %vm217, %v212, %v214
      %v219 = vsel %vm217, %v210, %v212
      %v220 = vsel %vm217, %v208, %v210
      %v221 = vsel %vm217, %v214, %v208
      %v222 = vld [vmem:[%s3] ss:$8 sm:$0xf]
      %v224 = vlaneseq
      %v225 = vshrl.u32 %v224, 7
      %v226 = vsub.s32 0, %v225
      %v227 = vrot.slane %v222, %v226
      %v228 = vlaneseq
      %v229 = vshrl.u32 %v228, 7
      %v230 = vsub.s32 1, %v229
      %v231 = vrot.slane %v222, %v230
      %v232 = vlaneseq
      %v233 = vshrl.u32 %v232, 7
      %v234 = vsub.s32 2, %v233
      %v235 = vrot.slane %v222, %v234
      %v236 = vlaneseq
      %v237 = vshrl.u32 %v236, 7
      %v238 = vsub.s32 3, %v237
      %v239 = vrot.slane %v222, %v238
      %v244 = vmul.f32 %v221, %v227
      %v245 = vmul.f32 %v220, %v231
      %v246 = vmul.f32 %v219, %v235
      %v247 = vmul.f32 %v218, %v239
      %v248 = vpack.c.bf16 %v244, %v244
      %v249 = vpack.c.bf16 %v245, %v245
      %v250 = vpack.c.bf16 %v246, %v246
      %v251 = vpack.c.bf16 %v247, %v247
      %252 = vst [vmem:[#allocation2] sm:$0x3] %v248
      %253 = vst [vmem:[#allocation2 + $0x8] sm:$0x3] %v249
      %254 = vst [vmem:[#allocation2 + $0x10] sm:$0x3] %v250
      %255 = vst [vmem:[#allocation2 + $0x18] sm:$0x3] %v251
      %256 = vrot.lane.b32.xlu0 %v199, 16
      %v257 = vpop.permute.xlu0 %256
      %258 = vrot.lane.b32.xlu0 %v203, 16
      %v259 = vpop.permute.xlu0 %258
      %260 = vrot.lane.b32.xlu0 %v200, 16
      %v261 = vpop.permute.xlu0 %260
      %262 = vrot.lane.b32.xlu0 %v204, 16
      %v263 = vpop.permute.xlu0 %262
      %vm264 = vcmp.lt.s32.totalorder %v216, 16
      %v265 = vsel %vm264, %v261, %v263
      %v266 = vsel %vm264, %v259, %v261
      %v267 = vsel %vm264, %v257, %v259
      %v268 = vsel %vm264, %v263, %v257
      %s269 = scalar_lea.vmem %s3, 1
      %v270 = vld [vmem:[%s269] ss:$8 sm:$0xf]
      %v272 = vlaneseq
      %v273 = vshrl.u32 %v272, 7
      %v274 = vsub.s32 0, %v273
      %v275 = vrot.slane %v270, %v274
      %v276 = vlaneseq
      %v277 = vshrl.u32 %v276, 7
      %v278 = vsub.s32 1, %v277
      %v279 = vrot.slane %v270, %v278
      %v280 = vlaneseq
      %v281 = vshrl.u32 %v280, 7
      %v282 = vsub.s32 2, %v281
      %v283 = vrot.slane %v270, %v282
      %v284 = vlaneseq
      %v285 = vshrl.u32 %v284, 7
      %v286 = vsub.s32 3, %v285
      %v287 = vrot.slane %v270, %v286
      %v292 = vmul.f32 %v268, %v275
      %v293 = vmul.f32 %v267, %v279
      %v294 = vmul.f32 %v266, %v283
      %v295 = vmul.f32 %v265, %v287
      %v296 = vpack.c.bf16 %v292, %v292
      %v297 = vpack.c.bf16 %v293, %v293
      %v298 = vpack.c.bf16 %v294, %v294
      %v299 = vpack.c.bf16 %v295, %v295
      %v304 = vrot.slane %v296, 6
      %v305 = vrot.slane %v297, 6
      %v306 = vrot.slane %v298, 6
      %v307 = vrot.slane %v299, 6
      %312 = vst [vmem:[#allocation2] sm:$0xc] %v304
      %313 = vst [vmem:[#allocation2 + $0x8] sm:$0xc] %v305
      %314 = vst [vmem:[#allocation2 + $0x10] sm:$0xc] %v306
      %315 = vst [vmem:[#allocation2 + $0x18] sm:$0xc] %v307
      %316 = vrot.lane.b32.xlu0 %v199, 15
      %v317 = vpop.permute.xlu0 %316
      %318 = vrot.lane.b32.xlu0 %v203, 15
      %v319 = vpop.permute.xlu0 %318
      %320 = vrot.lane.b32.xlu0 %v200, 15
      %v321 = vpop.permute.xlu0 %320
      %322 = vrot.lane.b32.xlu0 %v204, 15
      %v323 = vpop.permute.xlu0 %322
      %vm324 = vcmp.lt.s32.totalorder %v216, 15
      %v325 = vsel %vm324, %v321, %v323
      %v326 = vsel %vm324, %v319, %v321
      %v327 = vsel %vm324, %v317, %v319
      %v328 = vsel %vm324, %v323, %v317
      %s329 = scalar_lea.vmem %s3, 2
      %v330 = vld [vmem:[%s329] ss:$8 sm:$0xf]
      %v332 = vlaneseq
      %v333 = vshrl.u32 %v332, 7
      %v334 = vsub.s32 0, %v333
      %v335 = vrot.slane %v330, %v334
      %v336 = vlaneseq
      %v337 = vshrl.u32 %v336, 7
      %v338 = vsub.s32 1, %v337
      %v339 = vrot.slane %v330, %v338
      %v340 = vlaneseq
      %v341 = vshrl.u32 %v340, 7
      %v342 = vsub.s32 2, %v341
      %v343 = vrot.slane %v330, %v342
      %v344 = vlaneseq
      %v345 = vshrl.u32 %v344, 7
      %v346 = vsub.s32 3, %v345
      %v347 = vrot.slane %v330, %v346
      %v352 = vmul.f32 %v328, %v335
      %v353 = vmul.f32 %v327, %v339
      %v354 = vmul.f32 %v326, %v343
      %v355 = vmul.f32 %v325, %v347
      %v356 = vpack.c.bf16 %v352, %v352
      %v357 = vpack.c.bf16 %v353, %v353
      %v358 = vpack.c.bf16 %v354, %v354
      %v359 = vpack.c.bf16 %v355, %v355
      %v364 = vrot.slane %v356, 4
      %v365 = vrot.slane %v357, 4
      %v366 = vrot.slane %v358, 4
      %v367 = vrot.slane %v359, 4
      %372 = vst [vmem:[#allocation2] sm:$0x30] %v364
      %373 = vst [vmem:[#allocation2 + $0x8] sm:$0x30] %v365
      %374 = vst [vmem:[#allocation2 + $0x10] sm:$0x30] %v366
      %375 = vst [vmem:[#allocation2 + $0x18] sm:$0x30] %v367
      %376 = vrot.lane.b32.xlu0 %v199, 1
      %v377 = vpop.permute.xlu0 %376
      %378 = vrot.lane.b32.xlu0 %v203, 1
      %v379 = vpop.permute.xlu0 %378
      %380 = vrot.lane.b32.xlu0 %v200, 1
      %v381 = vpop.permute.xlu0 %380
      %382 = vrot.lane.b32.xlu0 %v204, 1
      %v383 = vpop.permute.xlu0 %382
      %vm384 = vcmp.lt.s32.totalorder %v216, 1
      %v385 = vsel %vm384, %v381, %v383
      %v386 = vsel %vm384, %v379, %v381
      %v387 = vsel %vm384, %v377, %v379
      %v388 = vsel %vm384, %v383, %v377
      %s389 = scalar_lea.vmem %s3, 3
      %v390 = vld [vmem:[%s389] ss:$8 sm:$0xf]
      %v392 = vlaneseq
      %v393 = vshrl.u32 %v392, 7
      %v394 = vsub.s32 0, %v393
      %v395 = vrot.slane %v390, %v394
      %v396 = vlaneseq
      %v397 = vshrl.u32 %v396, 7
      %v398 = vsub.s32 1, %v397
      %v399 = vrot.slane %v390, %v398
      %v400 = vlaneseq
      %v401 = vshrl.u32 %v400, 7
      %v402 = vsub.s32 2, %v401
      %v403 = vrot.slane %v390, %v402
      %v404 = vlaneseq
      %v405 = vshrl.u32 %v404, 7
      %v406 = vsub.s32 3, %v405
      %v407 = vrot.slane %v390, %v406
      %v412 = vmul.f32 %v388, %v395
      %v413 = vmul.f32 %v387, %v399
      %v414 = vmul.f32 %v386, %v403
      %v415 = vmul.f32 %v385, %v407
      %v416 = vpack.c.bf16 %v412, %v412
      %v417 = vpack.c.bf16 %v413, %v413
      %v418 = vpack.c.bf16 %v414, %v414
      %v419 = vpack.c.bf16 %v415, %v415
      %v424 = vrot.slane %v416, 2
      %v425 = vrot.slane %v417, 2
      %v426 = vrot.slane %v418, 2
      %v427 = vrot.slane %v419, 2
      %432 = vst [vmem:[#allocation2] sm:$0xc0] %v424
      %433 = vst [vmem:[#allocation2 + $0x8] sm:$0xc0] %v425
      %434 = vst [vmem:[#allocation2 + $0x10] sm:$0xc0] %v426
      %435 = vst [vmem:[#allocation2 + $0x18] sm:$0xc0] %v427
      %v436 = vpack.c.bf16 %v199, %v199
      %v437 = vpack.c.bf16 %v203, %v203
      %v438 = vpack.c.bf16 %v200, %v200
      %v439 = vpack.c.bf16 %v204, %v204
      %440 = vst [vmem:[#allocation2 + $0x20] sm:$0x3] %v436
      %441 = vst [vmem:[#allocation2 + $0x28] sm:$0x3] %v437
      %442 = vst [vmem:[#allocation2 + $0x30] sm:$0x3] %v438
      %443 = vst [vmem:[#allocation2 + $0x38] sm:$0x3] %v439
      %444 = vrot.lane.b32.xlu0 %v199, 127
      %v445 = vpop.permute.xlu0 %444
      %446 = vrot.lane.b32.xlu0 %v203, 127
      %v447 = vpop.permute.xlu0 %446
      %448 = vrot.lane.b32.xlu0 %v200, 127
      %v449 = vpop.permute.xlu0 %448
      %450 = vrot.lane.b32.xlu0 %v204, 127
      %v451 = vpop.permute.xlu0 %450
      %vm452 = vcmp.lt.s32.totalorder %v216, 127
      %v453 = vsel %vm452, %v449, %v451
      %v454 = vsel %vm452, %v447, %v449
      %v455 = vsel %vm452, %v445, %v447
      %v456 = vsel %vm452, %v451, %v445
      %s457 = scalar_lea.vmem %s3, 5
      %v458 = vld [vmem:[%s457] ss:$8 sm:$0xf]
      %v460 = vlaneseq
      %v461 = vshrl.u32 %v460, 7
      %v462 = vsub.s32 0, %v461
      %v463 = vrot.slane %v458, %v462
      %v464 = vlaneseq
      %v465 = vshrl.u32 %v464, 7
      %v466 = vsub.s32 1, %v465
      %v467 = vrot.slane %v458, %v466
      %v468 = vlaneseq
      %v469 = vshrl.u32 %v468, 7
      %v470 = vsub.s32 2, %v469
      %v471 = vrot.slane %v458, %v470
      %v472 = vlaneseq
      %v473 = vshrl.u32 %v472, 7
      %v474 = vsub.s32 3, %v473
      %v475 = vrot.slane %v458, %v474
      %v480 = vmul.f32 %v455, %v463
      %v481 = vmul.f32 %v454, %v467
      %v482 = vmul.f32 %v453, %v471
      %v483 = vmul.f32 %v456, %v475
      %v484 = vpack.c.bf16 %v480, %v480
      %v485 = vpack.c.bf16 %v481, %v481
      %v486 = vpack.c.bf16 %v482, %v482
      %v487 = vpack.c.bf16 %v483, %v483
      %v492 = vrot.slane %v484, 6
      %v493 = vrot.slane %v485, 6
      %v494 = vrot.slane %v486, 6
      %v495 = vrot.slane %v487, 6
      %500 = vst [vmem:[#allocation2 + $0x20] sm:$0xc] %v492
      %501 = vst [vmem:[#allocation2 + $0x28] sm:$0xc] %v493
      %502 = vst [vmem:[#allocation2 + $0x30] sm:$0xc] %v494
      %503 = vst [vmem:[#allocation2 + $0x38] sm:$0xc] %v495
      %504 = vrot.lane.b32.xlu0 %v199, 113
      %v505 = vpop.permute.xlu0 %504
      %506 = vrot.lane.b32.xlu0 %v203, 113
      %v507 = vpop.permute.xlu0 %506
      %508 = vrot.lane.b32.xlu0 %v200, 113
      %v509 = vpop.permute.xlu0 %508
      %510 = vrot.lane.b32.xlu0 %v204, 113
      %v511 = vpop.permute.xlu0 %510
      %vm512 = vcmp.lt.s32.totalorder %v216, 113
      %v513 = vsel %vm512, %v509, %v511
      %v514 = vsel %vm512, %v507, %v509
      %v515 = vsel %vm512, %v505, %v507
      %v516 = vsel %vm512, %v511, %v505
      %s517 = scalar_lea.vmem %s3, 6
      %v518 = vld [vmem:[%s517] ss:$8 sm:$0xf]
      %v520 = vlaneseq
      %v521 = vshrl.u32 %v520, 7
      %v522 = vsub.s32 0, %v521
      %v523 = vrot.slane %v518, %v522
      %v524 = vlaneseq
      %v525 = vshrl.u32 %v524, 7
      %v526 = vsub.s32 1, %v525
      %v527 = vrot.slane %v518, %v526
      %v528 = vlaneseq
      %v529 = vshrl.u32 %v528, 7
      %v530 = vsub.s32 2, %v529
      %v531 = vrot.slane %v518, %v530
      %v532 = vlaneseq
      %v533 = vshrl.u32 %v532, 7
      %v534 = vsub.s32 3, %v533
      %v535 = vrot.slane %v518, %v534
      %v540 = vmul.f32 %v515, %v523
      %v541 = vmul.f32 %v514, %v527
      %v542 = vmul.f32 %v513, %v531
      %v543 = vmul.f32 %v516, %v535
      %v544 = vpack.c.bf16 %v540, %v540
      %v545 = vpack.c.bf16 %v541, %v541
      %v546 = vpack.c.bf16 %v542, %v542
      %v547 = vpack.c.bf16 %v543, %v543
      %v552 = vrot.slane %v544, 4
      %v553 = vrot.slane %v545, 4
      %v554 = vrot.slane %v546, 4
      %v555 = vrot.slane %v547, 4
      %560 = vst [vmem:[#allocation2 + $0x20] sm:$0x30] %v552
      %561 = vst [vmem:[#allocation2 + $0x28] sm:$0x30] %v553
      %562 = vst [vmem:[#allocation2 + $0x30] sm:$0x30] %v554
      %563 = vst [vmem:[#allocation2 + $0x38] sm:$0x30] %v555
      %564 = vrot.lane.b32.xlu0 %v199, 112
      %v565 = vpop.permute.xlu0 %564
      %566 = vrot.lane.b32.xlu0 %v203, 112
      %v567 = vpop.permute.xlu0 %566
      %568 = vrot.lane.b32.xlu0 %v200, 112
      %v569 = vpop.permute.xlu0 %568
      %570 = vrot.lane.b32.xlu0 %v204, 112
      %v571 = vpop.permute.xlu0 %570
      %vm572 = vcmp.lt.s32.totalorder %v216, 112
      %v573 = vsel %vm572, %v569, %v571
      %v574 = vsel %vm572, %v567, %v569
      %v575 = vsel %vm572, %v565, %v567
      %v576 = vsel %vm572, %v571, %v565
      %s577 = scalar_lea.vmem %s3, 7
      %v578 = vld [vmem:[%s577] ss:$8 sm:$0xf]
      %v580 = vlaneseq
      %v581 = vshrl.u32 %v580, 7
      %v582 = vsub.s32 0, %v581
      %v583 = vrot.slane %v578, %v582
      %v584 = vlaneseq
      %v585 = vshrl.u32 %v584, 7
      %v586 = vsub.s32 1, %v585
      %v587 = vrot.slane %v578, %v586
      %v588 = vlaneseq
      %v589 = vshrl.u32 %v588, 7
      %v590 = vsub.s32 2, %v589
      %v591 = vrot.slane %v578, %v590
      %v592 = vlaneseq
      %v593 = vshrl.u32 %v592, 7
      %v594 = vsub.s32 3, %v593
      %v595 = vrot.slane %v578, %v594
      %v600 = vmul.f32 %v575, %v583
      %v601 = vmul.f32 %v574, %v587
      %v602 = vmul.f32 %v573, %v591
      %v603 = vmul.f32 %v576, %v595
      %v604 = vpack.c.bf16 %v600, %v600
      %v605 = vpack.c.bf16 %v601, %v601
      %v606 = vpack.c.bf16 %v602, %v602
      %v607 = vpack.c.bf16 %v603, %v603
      %v612 = vrot.slane %v604, 2
      %v613 = vrot.slane %v605, 2
      %v614 = vrot.slane %v606, 2
      %v615 = vrot.slane %v607, 2
      %620 = vst [vmem:[#allocation2 + $0x20] sm:$0xc0] %v612
      %621 = vst [vmem:[#allocation2 + $0x28] sm:$0xc0] %v613
      %622 = vst [vmem:[#allocation2 + $0x30] sm:$0xc0] %v614
      %623 = vst [vmem:[#allocation2 + $0x38] sm:$0xc0] %v615
      %624 = vrot.lane.b32.xlu0 %v199, 111
      %v625 = vpop.permute.xlu0 %624
      %626 = vrot.lane.b32.xlu0 %v203, 111
      %v627 = vpop.permute.xlu0 %626
      %628 = vrot.lane.b32.xlu0 %v200, 111
      %v629 = vpop.permute.xlu0 %628
      %630 = vrot.lane.b32.xlu0 %v204, 111
      %v631 = vpop.permute.xlu0 %630
      %vm632 = vcmp.lt.s32.totalorder %v216, 111
      %v633 = vsel %vm632, %v629, %v631
      %v634 = vsel %vm632, %v627, %v629
      %v635 = vsel %vm632, %v625, %v627
      %v636 = vsel %vm632, %v631, %v625
      %s637 = scalar_lea.vmem %s3, 32
      %v638 = vld [vmem:[%s637] ss:$8 sm:$0xf]
      %v640 = vlaneseq
      %v641 = vshrl.u32 %v640, 7
      %v642 = vsub.s32 0, %v641
      %v643 = vrot.slane %v638, %v642
      %v644 = vlaneseq
      %v645 = vshrl.u32 %v644, 7
      %v646 = vsub.s32 1, %v645
      %v647 = vrot.slane %v638, %v646
      %v648 = vlaneseq
      %v649 = vshrl.u32 %v648, 7
      %v650 = vsub.s32 2, %v649
      %v651 = vrot.slane %v638, %v650
      %v652 = vlaneseq
      %v653 = vshrl.u32 %v652, 7
      %v654 = vsub.s32 3, %v653
      %v655 = vrot.slane %v638, %v654
      %v660 = vmul.f32 %v635, %v643
      %v661 = vmul.f32 %v634, %v647
      %v662 = vmul.f32 %v633, %v651
      %v663 = vmul.f32 %v636, %v655
      %v664 = vpack.c.bf16 %v660, %v660
      %v665 = vpack.c.bf16 %v661, %v661
      %v666 = vpack.c.bf16 %v662, %v662
      %v667 = vpack.c.bf16 %v663, %v663
      %668 = vst [vmem:[#allocation2 + $0x40] sm:$0x3] %v664
      %669 = vst [vmem:[#allocation2 + $0x48] sm:$0x3] %v665
      %670 = vst [vmem:[#allocation2 + $0x50] sm:$0x3] %v666
      %671 = vst [vmem:[#allocation2 + $0x58] sm:$0x3] %v667
      %v672 = vld [vmem:[%s1] sm:$0xf]
      %v673 = vld [vmem:[#allocation2] sm:$0xff]
      %v674 = vld [vmem:[#allocation2 + $0x8] sm:$0xff]
      %v675 = vld [vmem:[#allocation2 + $0x10] sm:$0xff]
      %v676 = vld [vmem:[#allocation2 + $0x18] sm:$0xff]
      %v677 = vld [vmem:[#allocation2 + $0x20] sm:$0xff]
      %v678 = vld [vmem:[#allocation2 + $0x28] sm:$0xff]
      %v679 = vld [vmem:[#allocation2 + $0x30] sm:$0xff]
      %v680 = vld [vmem:[#allocation2 + $0x38] sm:$0xff]
      %v681 = vld [vmem:[#allocation2 + $0x40] sm:$0x3]
      %v682 = vld [vmem:[#allocation2 + $0x48] sm:$0x3]
      %v683 = vld [vmem:[#allocation2 + $0x50] sm:$0x3]
      %v684 = vld [vmem:[#allocation2 + $0x58] sm:$0x3]
      %v685 = vld [vmem:[%s2] sm:$0xf]
      %687 = vset.pattern.permute.xlu0 0
      %688 = vperm.xlu0 %687, %v685
      %v689 = vpop.permute.xlu0 %688
      %vm691 = vcmask 293888
      %v693 = vsel %vm691, %v672, 0
      %vm695 = vcmask 1041408
      %v697 = vsel %vm695, %v681, 0
      %v700 = vsel %vm695, %v682, 0
      %v703 = vsel %vm695, %v683, 0
      %v706 = vsel %vm695, %v684, 0
      %708 = vmatprep.subr.bf16.mxu0 %v674
      %709 = vmatpush1.bf16.msra.mxu0 %v673
      %710 = vmatprep.subr.bf16.mxu0 %v678
      %711 = vmatpush1.bf16.msra.mxu0 %v677
      %712 = vmatprep.subr.bf16.mxu0 %v700
      %713 = vmatpush1.bf16.msra.mxu0 %v697
      %714 = vmatprep.subr.bf16.mxu0 0
      %715 = vmatpush1.bf16.msra.mxu0 0
      %716 = vmatprep.subr.bf16.mxu0 0
      %717 = vmatpush1.bf16.msra.mxu0 0
      %718 = vmatprep.subr.bf16.mxu0 0
      %719 = vmatpush1.bf16.msra.mxu0 0
      %720 = vmatprep.subr.bf16.mxu0 0
      %721 = vmatpush1.bf16.msra.mxu0 0
      %722 = vmatprep.subr.bf16.mxu0 0
      %723 = vmatpush1.bf16.msra.mxu0 0
      %724 = vmatprep.subr.bf16.mxu0 0
      %725 = vmatpush1.bf16.msra.mxu0 0
      %726 = vmatprep.subr.bf16.mxu0 0
      %727 = vmatpush1.bf16.msra.mxu0 0
      %728 = vmatprep.subr.bf16.mxu0 0
      %729 = vmatpush1.bf16.msra.mxu0 0
      %730 = vmatprep.subr.bf16.mxu0 0
      %731 = vmatpush1.bf16.msra.mxu0 0
      %732 = vmatprep.subr.bf16.mxu0 0
      %733 = vmatpush1.bf16.msra.mxu0 0
      %734 = vmatprep.subr.bf16.mxu0 0
      %735 = vmatpush1.bf16.msra.mxu0 0
      %736 = vmatprep.subr.bf16.mxu0 0
      %737 = vmatpush1.bf16.msra.mxu0 0
      %738 = vmatprep.subr.bf16.mxu0 0
      %739 = vmatpush1.bf16.msra.mxu0 0
      %740 = vmatprep.mubr.bf16.mxu0 0
      %741 = vmatmul.mubr.bf16.gmra.mrb[0].mxu0 %v693
      %v742 = vpop.f32.mrb[0].mxu0
      %v743 = vadd.f32 %v689, %v742
      %v744 = vpop.f32.mrb[0].mxu0
      %v745 = vadd.f32 %v689, %v744
      %v746 = vpop.f32.mrb[0].mxu0
      %v747 = vpop.f32.mrb[0].mxu0
      %748 = vdwg.mxu0
      %749 = vmatprep.subr.bf16.mxu0 %v676
      %750 = vmatpush1.bf16.msra.mxu0 %v675
      %751 = vmatprep.subr.bf16.mxu0 %v680
      %752 = vmatpush1.bf16.msra.mxu0 %v679
      %753 = vmatprep.subr.bf16.mxu0 %v706
      %754 = vmatpush1.bf16.msra.mxu0 %v703
      %755 = vmatprep.subr.bf16.mxu0 0
      %756 = vmatpush1.bf16.msra.mxu0 0
      %757 = vmatprep.subr.bf16.mxu0 0
      %758 = vmatpush1.bf16.msra.mxu0 0
      %759 = vmatprep.subr.bf16.mxu0 0
      %760 = vmatpush1.bf16.msra.mxu0 0
      %761 = vmatprep.subr.bf16.mxu0 0
      %762 = vmatpush1.bf16.msra.mxu0 0
      %763 = vmatprep.subr.bf16.mxu0 0
      %764 = vmatpush1.bf16.msra.mxu0 0
      %765 = vmatprep.subr.bf16.mxu0 0
      %766 = vmatpush1.bf16.msra.mxu0 0
      %767 = vmatprep.subr.bf16.mxu0 0
      %768 = vmatpush1.bf16.msra.mxu0 0
      %769 = vmatprep.subr.bf16.mxu0 0
      %770 = vmatpush1.bf16.msra.mxu0 0
      %771 = vmatprep.subr.bf16.mxu0 0
      %772 = vmatpush1.bf16.msra.mxu0 0
      %773 = vmatprep.subr.bf16.mxu0 0
      %774 = vmatpush1.bf16.msra.mxu0 0
      %775 = vmatprep.subr.bf16.mxu0 0
      %776 = vmatpush1.bf16.msra.mxu0 0
      %777 = vmatprep.subr.bf16.mxu0 0
      %778 = vmatpush1.bf16.msra.mxu0 0
      %779 = vmatprep.subr.bf16.mxu0 0
      %780 = vmatpush1.bf16.msra.mxu0 0
      %781 = vmatprep.mubr.bf16.mxu0 0
      %782 = vmatmul.mubr.bf16.gmra.mrb[0].mxu0 %v693
      %v783 = vpop.f32.mrb[0].mxu0
      %v784 = vadd.f32 %v689, %v783
      %v785 = vpop.f32.mrb[0].mxu0
      %v786 = vadd.f32 %v689, %v785
      %v787 = vpop.f32.mrb[0].mxu0
      %v788 = vpop.f32.mrb[0].mxu0
      %789 = vdwg.mxu0
      %v790 = vmax.f32 %v743, 0.0
      %v791 = vmax.f32 %v745, 0.0
      %v792 = vmax.f32 %v784, 0.0
      %v793 = vmax.f32 %v786, 0.0
      %794 = vrot.lane.b32.xlu0 %v790, 17
      %v795 = vpop.permute.xlu0 %794
      %796 = vrot.lane.b32.xlu0 %v791, 17
      %v797 = vpop.permute.xlu0 %796
      %798 = vrot.lane.b32.xlu0 %v792, 17
      %v799 = vpop.permute.xlu0 %798
      %800 = vrot.lane.b32.xlu0 %v793, 17
      %v801 = vpop.permute.xlu0 %800
      %v802 = vsel %vm217, %v799, %v801
      %v803 = vsel %vm217, %v797, %v799
      %v804 = vsel %vm217, %v795, %v797
      %v805 = vsel %vm217, %v801, %v795
      %v806 = vld [vmem:[%s3] ss:$8 sm:$0xf]
      %v808 = vlaneseq
      %v809 = vshrl.u32 %v808, 7
      %v810 = vsub.s32 0, %v809
      %v811 = vrot.slane %v806, %v810
      %v812 = vlaneseq
      %v813 = vshrl.u32 %v812, 7
      %v814 = vsub.s32 1, %v813
      %v815 = vrot.slane %v806, %v814
      %v816 = vlaneseq
      %v817 = vshrl.u32 %v816, 7
      %v818 = vsub.s32 2, %v817
      %v819 = vrot.slane %v806, %v818
      %v820 = vlaneseq
      %v821 = vshrl.u32 %v820, 7
      %v822 = vsub.s32 3, %v821
      %v823 = vrot.slane %v806, %v822
      %v828 = vmul.f32 %v805, %v811
      %v829 = vmul.f32 %v804, %v815
      %v830 = vmul.f32 %v803, %v819
      %v831 = vmul.f32 %v802, %v823
      %v832 = vpack.c.bf16 %v828, %v828
      %v833 = vpack.c.bf16 %v829, %v829
      %v834 = vpack.c.bf16 %v830, %v830
      %v835 = vpack.c.bf16 %v831, %v831
      %v840 = vrot.slane %v832, 6
      %v841 = vrot.slane %v833, 6
      %v842 = vrot.slane %v834, 6
      %v843 = vrot.slane %v835, 6
      %848 = vst [vmem:[#allocation2 + $0x40] sm:$0xc] %v840
      %849 = vst [vmem:[#allocation2 + $0x48] sm:$0xc] %v841
      %850 = vst [vmem:[#allocation2 + $0x50] sm:$0xc] %v842
      %851 = vst [vmem:[#allocation2 + $0x58] sm:$0xc] %v843
      %852 = vrot.lane.b32.xlu0 %v790, 16
      %v853 = vpop.permute.xlu0 %852
      %854 = vrot.lane.b32.xlu0 %v791, 16
      %v855 = vpop.permute.xlu0 %854
      %856 = vrot.lane.b32.xlu0 %v792, 16
      %v857 = vpop.permute.xlu0 %856
      %858 = vrot.lane.b32.xlu0 %v793, 16
      %v859 = vpop.permute.xlu0 %858
      %v860 = vsel %vm264, %v857, %v859
      %v861 = vsel %vm264, %v855, %v857
      %v862 = vsel %vm264, %v853, %v855
      %v863 = vsel %vm264, %v859, %v853
      %v864 = vld [vmem:[%s269] ss:$8 sm:$0xf]
      %v866 = vlaneseq
      %v867 = vshrl.u32 %v866, 7
      %v868 = vsub.s32 0, %v867
      %v869 = vrot.slane %v864, %v868
      %v870 = vlaneseq
      %v871 = vshrl.u32 %v870, 7
      %v872 = vsub.s32 1, %v871
      %v873 = vrot.slane %v864, %v872
      %v874 = vlaneseq
      %v875 = vshrl.u32 %v874, 7
      %v876 = vsub.s32 2, %v875
      %v877 = vrot.slane %v864, %v876
      %v878 = vlaneseq
      %v879 = vshrl.u32 %v878, 7
      %v880 = vsub.s32 3, %v879
      %v881 = vrot.slane %v864, %v880
      %v886 = vmul.f32 %v863, %v869
      %v887 = vmul.f32 %v862, %v873
      %v888 = vmul.f32 %v861, %v877
      %v889 = vmul.f32 %v860, %v881
      %v890 = vpack.c.bf16 %v886, %v886
      %v891 = vpack.c.bf16 %v887, %v887
      %v892 = vpack.c.bf16 %v888, %v888
      %v893 = vpack.c.bf16 %v889, %v889
      %v898 = vrot.slane %v890, 4
      %v899 = vrot.slane %v891, 4
      %v900 = vrot.slane %v892, 4
      %v901 = vrot.slane %v893, 4
      %906 = vst [vmem:[#allocation2 + $0x40] sm:$0x30] %v898
      %907 = vst [vmem:[#allocation2 + $0x48] sm:$0x30] %v899
      %908 = vst [vmem:[#allocation2 + $0x50] sm:$0x30] %v900
      %909 = vst [vmem:[#allocation2 + $0x58] sm:$0x30] %v901
      %910 = vrot.lane.b32.xlu0 %v790, 15
      %v911 = vpop.permute.xlu0 %910
      %912 = vrot.lane.b32.xlu0 %v791, 15
      %v913 = vpop.permute.xlu0 %912
      %914 = vrot.lane.b32.xlu0 %v792, 15
      %v915 = vpop.permute.xlu0 %914
      %916 = vrot.lane.b32.xlu0 %v793, 15
      %v917 = vpop.permute.xlu0 %916
      %v918 = vsel %vm324, %v915, %v917
      %v919 = vsel %vm324, %v913, %v915
      %v920 = vsel %vm324, %v911, %v913
      %v921 = vsel %vm324, %v917, %v911
      %v922 = vld [vmem:[%s329] ss:$8 sm:$0xf]
      %v924 = vlaneseq
      %v925 = vshrl.u32 %v924, 7
      %v926 = vsub.s32 0, %v925
      %v927 = vrot.slane %v922, %v926
      %v928 = vlaneseq
      %v929 = vshrl.u32 %v928, 7
      %v930 = vsub.s32 1, %v929
      %v931 = vrot.slane %v922, %v930
      %v932 = vlaneseq
      %v933 = vshrl.u32 %v932, 7
      %v934 = vsub.s32 2, %v933
      %v935 = vrot.slane %v922, %v934
      %v936 = vlaneseq
      %v937 = vshrl.u32 %v936, 7
      %v938 = vsub.s32 3, %v937
      %v939 = vrot.slane %v922, %v938
      %v944 = vmul.f32 %v921, %v927
      %v945 = vmul.f32 %v920, %v931
      %v946 = vmul.f32 %v919, %v935
      %v947 = vmul.f32 %v918, %v939
      %v948 = vpack.c.bf16 %v944, %v944
      %v949 = vpack.c.bf16 %v945, %v945
      %v950 = vpack.c.bf16 %v946, %v946
      %v951 = vpack.c.bf16 %v947, %v947
      %v956 = vrot.slane %v948, 2
      %v957 = vrot.slane %v949, 2
      %v958 = vrot.slane %v950, 2
      %v959 = vrot.slane %v951, 2
      %964 = vst [vmem:[#allocation2 + $0x40] sm:$0xc0] %v956
      %965 = vst [vmem:[#allocation2 + $0x48] sm:$0xc0] %v957
      %966 = vst [vmem:[#allocation2 + $0x50] sm:$0xc0] %v958
      %967 = vst [vmem:[#allocation2 + $0x58] sm:$0xc0] %v959
      %968 = vrot.lane.b32.xlu0 %v790, 1
      %v969 = vpop.permute.xlu0 %968
      %970 = vrot.lane.b32.xlu0 %v791, 1
      %v971 = vpop.permute.xlu0 %970
      %972 = vrot.lane.b32.xlu0 %v792, 1
      %v973 = vpop.permute.xlu0 %972
      %974 = vrot.lane.b32.xlu0 %v793, 1
      %v975 = vpop.permute.xlu0 %974
      %v976 = vsel %vm384, %v973, %v975
      %v977 = vsel %vm384, %v971, %v973
      %v978 = vsel %vm384, %v969, %v971
      %v979 = vsel %vm384, %v975, %v969
      %v980 = vld [vmem:[%s389] ss:$8 sm:$0xf]
      %v982 = vlaneseq
      %v983 = vshrl.u32 %v982, 7
      %v984 = vsub.s32 0, %v983
      %v985 = vrot.slane %v980, %v984
      %v986 = vlaneseq
      %v987 = vshrl.u32 %v986, 7
      %v988 = vsub.s32 1, %v987
      %v989 = vrot.slane %v980, %v988
      %v990 = vlaneseq
      %v991 = vshrl.u32 %v990, 7
      %v992 = vsub.s32 2, %v991
      %v993 = vrot.slane %v980, %v992
      %v994 = vlaneseq
      %v995 = vshrl.u32 %v994, 7
      %v996 = vsub.s32 3, %v995
      %v997 = vrot.slane %v980, %v996
      %v1002 = vmul.f32 %v979, %v985
      %v1003 = vmul.f32 %v978, %v989
      %v1004 = vmul.f32 %v977, %v993
      %v1005 = vmul.f32 %v976, %v997
      %v1006 = vpack.c.bf16 %v1002, %v1002
      %v1007 = vpack.c.bf16 %v1003, %v1003
      %v1008 = vpack.c.bf16 %v1004, %v1004
      %v1009 = vpack.c.bf16 %v1005, %v1005
      %1010 = vst [vmem:[#allocation2 + $0x60] sm:$0x3] %v1006
      %1011 = vst [vmem:[#allocation2 + $0x68] sm:$0x3] %v1007
      %1012 = vst [vmem:[#allocation2 + $0x70] sm:$0x3] %v1008
      %1013 = vst [vmem:[#allocation2 + $0x78] sm:$0x3] %v1009
      %v1014 = vpack.c.bf16 %v790, %v790
      %v1015 = vpack.c.bf16 %v791, %v791
      %v1016 = vpack.c.bf16 %v792, %v792
      %v1017 = vpack.c.bf16 %v793, %v793
      %v1022 = vrot.slane %v1014, 6
      %v1023 = vrot.slane %v1015, 6
      %v1024 = vrot.slane %v1016, 6
      %v1025 = vrot.slane %v1017, 6
      %1030 = vst [vmem:[#allocation2 + $0x60] sm:$0xc] %v1022
      %1031 = vst [vmem:[#allocation2 + $0x68] sm:$0xc] %v1023
      %1032 = vst [vmem:[#allocation2 + $0x70] sm:$0xc] %v1024
      %1033 = vst [vmem:[#allocation2 + $0x78] sm:$0xc] %v1025
      %1034 = vrot.lane.b32.xlu0 %v790, 127
      %v1035 = vpop.permute.xlu0 %1034
      %1036 = vrot.lane.b32.xlu0 %v791, 127
      %v1037 = vpop.permute.xlu0 %1036
      %1038 = vrot.lane.b32.xlu0 %v792, 127
      %v1039 = vpop.permute.xlu0 %1038
      %1040 = vrot.lane.b32.xlu0 %v793, 127
      %v1041 = vpop.permute.xlu0 %1040
      %v1042 = vsel %vm452, %v1039, %v1041
      %v1043 = vsel %vm452, %v1037, %v1039
      %v1044 = vsel %vm452, %v1035, %v1037
      %v1045 = vsel %vm452, %v1041, %v1035
      %v1046 = vld [vmem:[%s457] ss:$8 sm:$0xf]
      %v1048 = vlaneseq
      %v1049 = vshrl.u32 %v1048, 7
      %v1050 = vsub.s32 0, %v1049
      %v1051 = vrot.slane %v1046, %v1050
      %v1052 = vlaneseq
      %v1053 = vshrl.u32 %v1052, 7
      %v1054 = vsub.s32 1, %v1053
      %v1055 = vrot.slane %v1046, %v1054
      %v1056 = vlaneseq
      %v1057 = vshrl.u32 %v1056, 7
      %v1058 = vsub.s32 2, %v1057
      %v1059 = vrot.slane %v1046, %v1058
      %v1060 = vlaneseq
      %v1061 = vshrl.u32 %v1060, 7
      %v1062 = vsub.s32 3, %v1061
      %v1063 = vrot.slane %v1046, %v1062
      %v1068 = vmul.f32 %v1044, %v1051
      %v1069 = vmul.f32 %v1043, %v1055
      %v1070 = vmul.f32 %v1042, %v1059
      %v1071 = vmul.f32 %v1045, %v1063
      %v1072 = vpack.c.bf16 %v1068, %v1068
      %v1073 = vpack.c.bf16 %v1069, %v1069
      %v1074 = vpack.c.bf16 %v1070, %v1070
      %v1075 = vpack.c.bf16 %v1071, %v1071
      %v1080 = vrot.slane %v1072, 4
      %v1081 = vrot.slane %v1073, 4
      %v1082 = vrot.slane %v1074, 4
      %v1083 = vrot.slane %v1075, 4
      %1088 = vst [vmem:[#allocation2 + $0x60] sm:$0x30] %v1080
      %1089 = vst [vmem:[#allocation2 + $0x68] sm:$0x30] %v1081
      %1090 = vst [vmem:[#allocation2 + $0x70] sm:$0x30] %v1082
      %1091 = vst [vmem:[#allocation2 + $0x78] sm:$0x30] %v1083
      %1092 = vrot.lane.b32.xlu0 %v790, 113
      %v1093 = vpop.permute.xlu0 %1092
      %1094 = vrot.lane.b32.xlu0 %v791, 113
      %v1095 = vpop.permute.xlu0 %1094
      %1096 = vrot.lane.b32.xlu0 %v792, 113
      %v1097 = vpop.permute.xlu0 %1096
      %1098 = vrot.lane.b32.xlu0 %v793, 113
      %v1099 = vpop.permute.xlu0 %1098
      %v1100 = vsel %vm512, %v1097, %v1099
      %v1101 = vsel %vm512, %v1095, %v1097
      %v1102 = vsel %vm512, %v1093, %v1095
      %v1103 = vsel %vm512, %v1099, %v1093
      %v1104 = vld [vmem:[%s517] ss:$8 sm:$0xf]
      %v1106 = vlaneseq
      %v1107 = vshrl.u32 %v1106, 7
      %v1108 = vsub.s32 0, %v1107
      %v1109 = vrot.slane %v1104, %v1108
      %v1110 = vlaneseq
      %v1111 = vshrl.u32 %v1110, 7
      %v1112 = vsub.s32 1, %v1111
      %v1113 = vrot.slane %v1104, %v1112
      %v1114 = vlaneseq
      %v1115 = vshrl.u32 %v1114, 7
      %v1116 = vsub.s32 2, %v1115
      %v1117 = vrot.slane %v1104, %v1116
      %v1118 = vlaneseq
      %v1119 = vshrl.u32 %v1118, 7
      %v1120 = vsub.s32 3, %v1119
      %v1121 = vrot.slane %v1104, %v1120
      %v1126 = vmul.f32 %v1102, %v1109
      %v1127 = vmul.f32 %v1101, %v1113
      %v1128 = vmul.f32 %v1100, %v1117
      %v1129 = vmul.f32 %v1103, %v1121
      %v1130 = vpack.c.bf16 %v1126, %v1126
      %v1131 = vpack.c.bf16 %v1127, %v1127
      %v1132 = vpack.c.bf16 %v1128, %v1128
      %v1133 = vpack.c.bf16 %v1129, %v1129
      %v1138 = vrot.slane %v1130, 2
      %v1139 = vrot.slane %v1131, 2
      %v1140 = vrot.slane %v1132, 2
      %v1141 = vrot.slane %v1133, 2
      %1146 = vst [vmem:[#allocation2 + $0x60] sm:$0xc0] %v1138
      %1147 = vst [vmem:[#allocation2 + $0x68] sm:$0xc0] %v1139
      %1148 = vst [vmem:[#allocation2 + $0x70] sm:$0xc0] %v1140
      %1149 = vst [vmem:[#allocation2 + $0x78] sm:$0xc0] %v1141
      %1150 = vrot.lane.b32.xlu0 %v790, 112
      %v1151 = vpop.permute.xlu0 %1150
      %1152 = vrot.lane.b32.xlu0 %v791, 112
      %v1153 = vpop.permute.xlu0 %1152
      %1154 = vrot.lane.b32.xlu0 %v792, 112
      %v1155 = vpop.permute.xlu0 %1154
      %1156 = vrot.lane.b32.xlu0 %v793, 112
      %v1157 = vpop.permute.xlu0 %1156
      %v1158 = vsel %vm572, %v1155, %v1157
      %v1159 = vsel %vm572, %v1153, %v1155
      %v1160 = vsel %vm572, %v1151, %v1153
      %v1161 = vsel %vm572, %v1157, %v1151
      %v1162 = vld [vmem:[%s577] ss:$8 sm:$0xf]
      %v1164 = vlaneseq
      %v1165 = vshrl.u32 %v1164, 7
      %v1166 = vsub.s32 0, %v1165
      %v1167 = vrot.slane %v1162, %v1166
      %v1168 = vlaneseq
      %v1169 = vshrl.u32 %v1168, 7
      %v1170 = vsub.s32 1, %v1169
      %v1171 = vrot.slane %v1162, %v1170
      %v1172 = vlaneseq
      %v1173 = vshrl.u32 %v1172, 7
      %v1174 = vsub.s32 2, %v1173
      %v1175 = vrot.slane %v1162, %v1174
      %v1176 = vlaneseq
      %v1177 = vshrl.u32 %v1176, 7
      %v1178 = vsub.s32 3, %v1177
      %v1179 = vrot.slane %v1162, %v1178
      %v1184 = vmul.f32 %v1160, %v1167
      %v1185 = vmul.f32 %v1159, %v1171
      %v1186 = vmul.f32 %v1158, %v1175
      %v1187 = vmul.f32 %v1161, %v1179
      %v1188 = vpack.c.bf16 %v1184, %v1184
      %v1189 = vpack.c.bf16 %v1185, %v1185
      %v1190 = vpack.c.bf16 %v1186, %v1186
      %v1191 = vpack.c.bf16 %v1187, %v1187
      %1192 = vst [vmem:[#allocation2 + $0x80] sm:$0x3] %v1188
      %1193 = vst [vmem:[#allocation2 + $0x88] sm:$0x3] %v1189
      %1194 = vst [vmem:[#allocation2 + $0x90] sm:$0x3] %v1190
      %1195 = vst [vmem:[#allocation2 + $0x98] sm:$0x3] %v1191
      %1196 = vrot.lane.b32.xlu0 %v790, 111
      %v1197 = vpop.permute.xlu0 %1196
      %1198 = vrot.lane.b32.xlu0 %v791, 111
      %v1199 = vpop.permute.xlu0 %1198
      %1200 = vrot.lane.b32.xlu0 %v792, 111
      %v1201 = vpop.permute.xlu0 %1200
      %1202 = vrot.lane.b32.xlu0 %v793, 111
      %v1203 = vpop.permute.xlu0 %1202
      %v1204 = vsel %vm632, %v1201, %v1203
      %v1205 = vsel %vm632, %v1199, %v1201
      %v1206 = vsel %vm632, %v1197, %v1199
      %v1207 = vsel %vm632, %v1203, %v1197
      %v1208 = vld [vmem:[%s637] ss:$8 sm:$0xf]
      %v1210 = vlaneseq
      %v1211 = vshrl.u32 %v1210, 7
      %v1212 = vsub.s32 0, %v1211
      %v1213 = vrot.slane %v1208, %v1212
      %v1214 = vlaneseq
      %v1215 = vshrl.u32 %v1214, 7
      %v1216 = vsub.s32 1, %v1215
      %v1217 = vrot.slane %v1208, %v1216
      %v1218 = vlaneseq
      %v1219 = vshrl.u32 %v1218, 7
      %v1220 = vsub.s32 2, %v1219
      %v1221 = vrot.slane %v1208, %v1220
      %v1222 = vlaneseq
      %v1223 = vshrl.u32 %v1222, 7
      %v1224 = vsub.s32 3, %v1223
      %v1225 = vrot.slane %v1208, %v1224
      %v1230 = vmul.f32 %v1206, %v1213
      %v1231 = vmul.f32 %v1205, %v1217
      %v1232 = vmul.f32 %v1204, %v1221
      %v1233 = vmul.f32 %v1207, %v1225
      %v1234 = vpack.c.bf16 %v1230, %v1230
      %v1235 = vpack.c.bf16 %v1231, %v1231
      %v1236 = vpack.c.bf16 %v1232, %v1232
      %v1237 = vpack.c.bf16 %v1233, %v1233
      %v1242 = vrot.slane %v1234, 6
      %v1243 = vrot.slane %v1235, 6
      %v1244 = vrot.slane %v1236, 6
      %v1245 = vrot.slane %v1237, 6
      %1250 = vst [vmem:[#allocation2 + $0x80] sm:$0xc] %v1242
      %1251 = vst [vmem:[#allocation2 + $0x88] sm:$0xc] %v1243
      %1252 = vst [vmem:[#allocation2 + $0x90] sm:$0xc] %v1244
      %1253 = vst [vmem:[#allocation2 + $0x98] sm:$0xc] %v1245
      %s1254 = scalar_lea.vmem %s1, 4
      %v1255 = vld [vmem:[%s1254] sm:$0xf]
      %v1256 = vld [vmem:[#allocation2] sm:$0xff]
      %v1257 = vld [vmem:[#allocation2 + $0x8] sm:$0xff]
      %v1258 = vld [vmem:[#allocation2 + $0x10] sm:$0xff]
      %v1259 = vld [vmem:[#allocation2 + $0x18] sm:$0xff]
      %v1260 = vld [vmem:[#allocation2 + $0x20] sm:$0xff]
      %v1261 = vld [vmem:[#allocation2 + $0x28] sm:$0xff]
      %v1262 = vld [vmem:[#allocation2 + $0x30] sm:$0xff]
      %v1263 = vld [vmem:[#allocation2 + $0x38] sm:$0xff]
      %v1264 = vld [vmem:[#allocation2 + $0x40] sm:$0xff]
      %v1265 = vld [vmem:[#allocation2 + $0x48] sm:$0xff]
      %v1266 = vld [vmem:[#allocation2 + $0x50] sm:$0xff]
      %v1267 = vld [vmem:[#allocation2 + $0x58] sm:$0xff]
      %v1268 = vld [vmem:[#allocation2 + $0x60] sm:$0xff]
      %v1269 = vld [vmem:[#allocation2 + $0x68] sm:$0xff]
      %v1270 = vld [vmem:[#allocation2 + $0x70] sm:$0xff]
      %v1271 = vld [vmem:[#allocation2 + $0x78] sm:$0xff]
      %v1272 = vld [vmem:[#allocation2 + $0x80] sm:$0xf]
      %v1273 = vld [vmem:[#allocation2 + $0x88] sm:$0xf]
      %v1274 = vld [vmem:[#allocation2 + $0x90] sm:$0xf]
      %v1275 = vld [vmem:[#allocation2 + $0x98] sm:$0xf]
      %s1276 = scalar_lea.vmem %s2, 4
      %v1277 = vld [vmem:[%s1276] sm:$0xf]
      %1279 = vset.pattern.permute.xlu0 0
      %1280 = vperm.xlu0 %1279, %v1277
      %v1281 = vpop.permute.xlu0 %1280
      %vm1283 = vcmask 588800
      %v1285 = vsel %vm1283, %v1255, 0
      %vm1287 = vcmask 1043456
      %v1289 = vsel %vm1287, %v1272, 0
      %v1292 = vsel %vm1287, %v1273, 0
      %v1295 = vsel %vm1287, %v1274, 0
      %v1298 = vsel %vm1287, %v1275, 0
      %1300 = vmatprep.subr.bf16.mxu0 %v1257
      %1301 = vmatpush1.bf16.msra.mxu0 %v1256
      %1302 = vmatprep.subr.bf16.mxu0 %v1261
      %1303 = vmatpush1.bf16.msra.mxu0 %v1260
      %1304 = vmatprep.subr.bf16.mxu0 %v1265
      %1305 = vmatpush1.bf16.msra.mxu0 %v1264
      %1306 = vmatprep.subr.bf16.mxu0 %v1269
      %1307 = vmatpush1.bf16.msra.mxu0 %v1268
      %1308 = vmatprep.subr.bf16.mxu0 %v1292
      %1309 = vmatpush1.bf16.msra.mxu0 %v1289
      %1310 = vmatprep.subr.bf16.mxu0 0
      %1311 = vmatpush1.bf16.msra.mxu0 0
      %1312 = vmatprep.subr.bf16.mxu0 0
      %1313 = vmatpush1.bf16.msra.mxu0 0
      %1314 = vmatprep.subr.bf16.mxu0 0
      %1315 = vmatpush1.bf16.msra.mxu0 0
      %1316 = vmatprep.subr.bf16.mxu0 0
      %1317 = vmatpush1.bf16.msra.mxu0 0
      %1318 = vmatprep.subr.bf16.mxu0 0
      %1319 = vmatpush1.bf16.msra.mxu0 0
      %1320 = vmatprep.subr.bf16.mxu0 0
      %1321 = vmatpush1.bf16.msra.mxu0 0
      %1322 = vmatprep.subr.bf16.mxu0 0
      %1323 = vmatpush1.bf16.msra.mxu0 0
      %1324 = vmatprep.subr.bf16.mxu0 0
      %1325 = vmatpush1.bf16.msra.mxu0 0
      %1326 = vmatprep.subr.bf16.mxu0 0
      %1327 = vmatpush1.bf16.msra.mxu0 0
      %1328 = vmatprep.subr.bf16.mxu0 0
      %1329 = vmatpush1.bf16.msra.mxu0 0
      %1330 = vmatprep.subr.bf16.mxu0 0
      %1331 = vmatpush1.bf16.msra.mxu0 0
      %1332 = vmatprep.mubr.bf16.mxu0 0
      %1333 = vmatmul.mubr.bf16.gmra.mrb[0].mxu0 %v1285
      %v1334 = vpop.f32.mrb[0].mxu0
      %v1335 = vadd.f32 %v1281, %v1334
      %v1336 = vpop.f32.mrb[0].mxu0
      %v1337 = vadd.f32 %v1281, %v1336
      %v1338 = vpop.f32.mrb[0].mxu0
      %v1339 = vpop.f32.mrb[0].mxu0
      %1340 = vdwg.mxu0
      %1341 = vmatprep.subr.bf16.mxu0 %v1259
      %1342 = vmatpush1.bf16.msra.mxu0 %v1258
      %1343 = vmatprep.subr.bf16.mxu0 %v1263
      %1344 = vmatpush1.bf16.msra.mxu0 %v1262
      %1345 = vmatprep.subr.bf16.mxu0 %v1267
      %1346 = vmatpush1.bf16.msra.mxu0 %v1266
      %1347 = vmatprep.subr.bf16.mxu0 %v1271
      %1348 = vmatpush1.bf16.msra.mxu0 %v1270
      %1349 = vmatprep.subr.bf16.mxu0 %v1298
      %1350 = vmatpush1.bf16.msra.mxu0 %v1295
      %1351 = vmatprep.subr.bf16.mxu0 0
      %1352 = vmatpush1.bf16.msra.mxu0 0
      %1353 = vmatprep.subr.bf16.mxu0 0
      %1354 = vmatpush1.bf16.msra.mxu0 0
      %1355 = vmatprep.subr.bf16.mxu0 0
      %1356 = vmatpush1.bf16.msra.mxu0 0
      %1357 = vmatprep.subr.bf16.mxu0 0
      %1358 = vmatpush1.bf16.msra.mxu0 0
      %1359 = vmatprep.subr.bf16.mxu0 0
      %1360 = vmatpush1.bf16.msra.mxu0 0
      %1361 = vmatprep.subr.bf16.mxu0 0
      %1362 = vmatpush1.bf16.msra.mxu0 0
      %1363 = vmatprep.subr.bf16.mxu0 0
      %1364 = vmatpush1.bf16.msra.mxu0 0
      %1365 = vmatprep.subr.bf16.mxu0 0
      %1366 = vmatpush1.bf16.msra.mxu0 0
      %1367 = vmatprep.subr.bf16.mxu0 0
      %1368 = vmatpush1.bf16.msra.mxu0 0
      %1369 = vmatprep.subr.bf16.mxu0 0
      %1370 = vmatpush1.bf16.msra.mxu0 0
      %1371 = vmatprep.subr.bf16.mxu0 0
      %1372 = vmatpush1.bf16.msra.mxu0 0
      %1373 = vmatprep.mubr.bf16.mxu0 0
      %1374 = vmatmul.mubr.bf16.gmra.mrb[0].mxu0 %v1285
      %v1375 = vpop.f32.mrb[0].mxu0
      %v1376 = vadd.f32 %v1281, %v1375
      %v1377 = vpop.f32.mrb[0].mxu0
      %v1378 = vadd.f32 %v1281, %v1377
      %v1379 = vpop.f32.mrb[0].mxu0
      %v1380 = vpop.f32.mrb[0].mxu0
      %1381 = vdwg.mxu0
      %v1382 = vmax.f32 %v1335, 0.0
      %v1383 = vmax.f32 %v1337, 0.0
      %v1384 = vmax.f32 %v1376, 0.0
      %v1385 = vmax.f32 %v1378, 0.0
      %1386 = vrot.lane.b32.xlu0 %v1382, 17
      %v1387 = vpop.permute.xlu0 %1386
      %1388 = vrot.lane.b32.xlu0 %v1383, 17
      %v1389 = vpop.permute.xlu0 %1388
      %1390 = vrot.lane.b32.xlu0 %v1384, 17
      %v1391 = vpop.permute.xlu0 %1390
      %1392 = vrot.lane.b32.xlu0 %v1385, 17
      %v1393 = vpop.permute.xlu0 %1392
      %v1394 = vsel %vm217, %v1391, %v1393
      %v1395 = vsel %vm217, %v1389, %v1391
      %v1396 = vsel %vm217, %v1387, %v1389
      %v1397 = vsel %vm217, %v1393, %v1387
      %v1398 = vld [vmem:[%s3] ss:$8 sm:$0xf]
      %v1400 = vlaneseq
      %v1401 = vshrl.u32 %v1400, 7
      %v1402 = vsub.s32 0, %v1401
      %v1403 = vrot.slane %v1398, %v1402
      %v1404 = vlaneseq
      %v1405 = vshrl.u32 %v1404, 7
      %v1406 = vsub.s32 1, %v1405
      %v1407 = vrot.slane %v1398, %v1406
      %v1408 = vlaneseq
      %v1409 = vshrl.u32 %v1408, 7
      %v1410 = vsub.s32 2, %v1409
      %v1411 = vrot.slane %v1398, %v1410
      %v1412 = vlaneseq
      %v1413 = vshrl.u32 %v1412, 7
      %v1414 = vsub.s32 3, %v1413
      %v1415 = vrot.slane %v1398, %v1414
      %v1420 = vmul.f32 %v1397, %v1403
      %v1421 = vmul.f32 %v1396, %v1407
      %v1422 = vmul.f32 %v1395, %v1411
      %v1423 = vmul.f32 %v1394, %v1415
      %v1424 = vpack.c.bf16 %v1420, %v1420
      %v1425 = vpack.c.bf16 %v1421, %v1421
      %v1426 = vpack.c.bf16 %v1422, %v1422
      %v1427 = vpack.c.bf16 %v1423, %v1423
      %v1432 = vrot.slane %v1424, 4
      %v1433 = vrot.slane %v1425, 4
      %v1434 = vrot.slane %v1426, 4
      %v1435 = vrot.slane %v1427, 4
      %1440 = vst [vmem:[#allocation2 + $0x80] sm:$0x30] %v1432
      %1441 = vst [vmem:[#allocation2 + $0x88] sm:$0x30] %v1433
      %1442 = vst [vmem:[#allocation2 + $0x90] sm:$0x30] %v1434
      %1443 = vst [vmem:[#allocation2 + $0x98] sm:$0x30] %v1435
      %1444 = vrot.lane.b32.xlu0 %v1382, 16
      %v1445 = vpop.permute.xlu0 %1444
      %1446 = vrot.lane.b32.xlu0 %v1383, 16
      %v1447 = vpop.permute.xlu0 %1446
      %1448 = vrot.lane.b32.xlu0 %v1384, 16
      %v1449 = vpop.permute.xlu0 %1448
      %1450 = vrot.lane.b32.xlu0 %v1385, 16
      %v1451 = vpop.permute.xlu0 %1450
      %v1452 = vsel %vm264, %v1449, %v1451
      %v1453 = vsel %vm264, %v1447, %v1449
      %v1454 = vsel %vm264, %v1445, %v1447
      %v1455 = vsel %vm264, %v1451, %v1445
      %v1456 = vld [vmem:[%s269] ss:$8 sm:$0xf]
      %v1458 = vlaneseq
      %v1459 = vshrl.u32 %v1458, 7
      %v1460 = vsub.s32 0, %v1459
      %v1461 = vrot.slane %v1456, %v1460
      %v1462 = vlaneseq
      %v1463 = vshrl.u32 %v1462, 7
      %v1464 = vsub.s32 1, %v1463
      %v1465 = vrot.slane %v1456, %v1464
      %v1466 = vlaneseq
      %v1467 = vshrl.u32 %v1466, 7
      %v1468 = vsub.s32 2, %v1467
      %v1469 = vrot.slane %v1456, %v1468
      %v1470 = vlaneseq
      %v1471 = vshrl.u32 %v1470, 7
      %v1472 = vsub.s32 3, %v1471
      %v1473 = vrot.slane %v1456, %v1472
      %v1478 = vmul.f32 %v1455, %v1461
      %v1479 = vmul.f32 %v1454, %v1465
      %v1480 = vmul.f32 %v1453, %v1469
      %v1481 = vmul.f32 %v1452, %v1473
      %v1482 = vpack.c.bf16 %v1478, %v1478
      %v1483 = vpack.c.bf16 %v1479, %v1479
      %v1484 = vpack.c.bf16 %v1480, %v1480
      %v1485 = vpack.c.bf16 %v1481, %v1481
      %v1490 = vrot.slane %v1482, 2
      %v1491 = vrot.slane %v1483, 2
      %v1492 = vrot.slane %v1484, 2
      %v1493 = vrot.slane %v1485, 2
      %1498 = vst [vmem:[#allocation2 + $0x80] sm:$0xc0] %v1490
      %1499 = vst [vmem:[#allocation2 + $0x88] sm:$0xc0] %v1491
      %1500 = vst [vmem:[#allocation2 + $0x90] sm:$0xc0] %v1492
      %1501 = vst [vmem:[#allocation2 + $0x98] sm:$0xc0] %v1493
      %1502 = vrot.lane.b32.xlu0 %v1382, 15
      %v1503 = vpop.permute.xlu0 %1502
      %1504 = vrot.lane.b32.xlu0 %v1383, 15
      %v1505 = vpop.permute.xlu0 %1504
      %1506 = vrot.lane.b32.xlu0 %v1384, 15
      %v1507 = vpop.permute.xlu0 %1506
      %1508 = vrot.lane.b32.xlu0 %v1385, 15
      %v1509 = vpop.permute.xlu0 %1508
      %v1510 = vsel %vm324, %v1507, %v1509
      %v1511 = vsel %vm324, %v1505, %v1507
      %v1512 = vsel %vm324, %v1503, %v1505
      %v1513 = vsel %vm324, %v1509, %v1503
      %v1514 = vld [vmem:[%s329] ss:$8 sm:$0xf]
      %v1516 = vlaneseq
      %v1517 = vshrl.u32 %v1516, 7
      %v1518 = vsub.s32 0, %v1517
      %v1519 = vrot.slane %v1514, %v1518
      %v1520 = vlaneseq
      %v1521 = vshrl.u32 %v1520, 7
      %v1522 = vsub.s32 1, %v1521
      %v1523 = vrot.slane %v1514, %v1522
      %v1524 = vlaneseq
      %v1525 = vshrl.u32 %v1524, 7
      %v1526 = vsub.s32 2, %v1525
      %v1527 = vrot.slane %v1514, %v1526
      %v1528 = vlaneseq
      %v1529 = vshrl.u32 %v1528, 7
      %v1530 = vsub.s32 3, %v1529
      %v1531 = vrot.slane %v1514, %v1530
      %v1536 = vmul.f32 %v1513, %v1519
      %v1537 = vmul.f32 %v1512, %v1523
      %v1538 = vmul.f32 %v1511, %v1527
      %v1539 = vmul.f32 %v1510, %v1531
      %v1540 = vpack.c.bf16 %v1536, %v1536
      %v1541 = vpack.c.bf16 %v1537, %v1537
      %v1542 = vpack.c.bf16 %v1538, %v1538
      %v1543 = vpack.c.bf16 %v1539, %v1539
      %1544 = vst [vmem:[#allocation2 + $0xa0] sm:$0x3] %v1540
      %1545 = vst [vmem:[#allocation2 + $0xa8] sm:$0x3] %v1541
      %1546 = vst [vmem:[#allocation2 + $0xb0] sm:$0x3] %v1542
      %1547 = vst [vmem:[#allocation2 + $0xb8] sm:$0x3] %v1543
      %1548 = vrot.lane.b32.xlu0 %v1382, 1
      %v1549 = vpop.permute.xlu0 %1548
      %1550 = vrot.lane.b32.xlu0 %v1383, 1
      %v1551 = vpop.permute.xlu0 %1550
      %1552 = vrot.lane.b32.xlu0 %v1384, 1
      %v1553 = vpop.permute.xlu0 %1552
      %1554 = vrot.lane.b32.xlu0 %v1385, 1
      %v1555 = vpop.permute.xlu0 %1554
      %v1556 = vsel %vm384, %v1553, %v1555
      %v1557 = vsel %vm384, %v1551, %v1553
      %v1558 = vsel %vm384, %v1549, %v1551
      %v1559 = vsel %vm384, %v1555, %v1549
      %v1560 = vld [vmem:[%s389] ss:$8 sm:$0xf]
      %v1562 = vlaneseq
      %v1563 = vshrl.u32 %v1562, 7
      %v1564 = vsub.s32 0, %v1563
      %v1565 = vrot.slane %v1560, %v1564
      %v1566 = vlaneseq
      %v1567 = vshrl.u32 %v1566, 7
      %v1568 = vsub.s32 1, %v1567
      %v1569 = vrot.slane %v1560, %v1568
      %v1570 = vlaneseq
      %v1571 = vshrl.u32 %v1570, 7
      %v1572 = vsub.s32 2, %v1571
      %v1573 = vrot.slane %v1560, %v1572
      %v1574 = vlaneseq
      %v1575 = vshrl.u32 %v1574, 7
      %v1576 = vsub.s32 3, %v1575
      %v1577 = vrot.slane %v1560, %v1576
      %v1582 = vmul.f32 %v1559, %v1565
      %v1583 = vmul.f32 %v1558, %v1569
      %v1584 = vmul.f32 %v1557, %v1573
      %v1585 = vmul.f32 %v1556, %v1577
      %v1586 = vpack.c.bf16 %v1582, %v1582
      %v1587 = vpack.c.bf16 %v1583, %v1583
      %v1588 = vpack.c.bf16 %v1584, %v1584
      %v1589 = vpack.c.bf16 %v1585, %v1585
      %v1594 = vrot.slane %v1586, 6
      %v1595 = vrot.slane %v1587, 6
      %v1596 = vrot.slane %v1588, 6
      %v1597 = vrot.slane %v1589, 6
      %1602 = vst [vmem:[#allocation2 + $0xa0] sm:$0xc] %v1594
      %1603 = vst [vmem:[#allocation2 + $0xa8] sm:$0xc] %v1595
      %1604 = vst [vmem:[#allocation2 + $0xb0] sm:$0xc] %v1596
      %1605 = vst [vmem:[#allocation2 + $0xb8] sm:$0xc] %v1597
      %v1606 = vpack.c.bf16 %v1382, %v1382
      %v1607 = vpack.c.bf16 %v1383, %v1383
      %v1608 = vpack.c.bf16 %v1384, %v1384
      %v1609 = vpack.c.bf16 %v1385, %v1385
      %v1614 = vrot.slane %v1606, 4
      %v1615 = vrot.slane %v1607, 4
      %v1616 = vrot.slane %v1608, 4
      %v1617 = vrot.slane %v1609, 4
      %1622 = vst [vmem:[#allocation2 + $0xa0] sm:$0x30] %v1614
      %1623 = vst [vmem:[#allocation2 + $0xa8] sm:$0x30] %v1615
      %1624 = vst [vmem:[#allocation2 + $0xb0] sm:$0x30] %v1616
      %1625 = vst [vmem:[#allocation2 + $0xb8] sm:$0x30] %v1617
      %1626 = vrot.lane.b32.xlu0 %v1382, 127
      %v1627 = vpop.permute.xlu0 %1626
      %1628 = vrot.lane.b32.xlu0 %v1383, 127
      %v1629 = vpop.permute.xlu0 %1628
      %1630 = vrot.lane.b32.xlu0 %v1384, 127
      %v1631 = vpop.permute.xlu0 %1630
      %1632 = vrot.lane.b32.xlu0 %v1385, 127
      %v1633 = vpop.permute.xlu0 %1632
      %v1634 = vsel %vm452, %v1631, %v1633
      %v1635 = vsel %vm452, %v1629, %v1631
      %v1636 = vsel %vm452, %v1627, %v1629
      %v1637 = vsel %vm452, %v1633, %v1627
      %v1638 = vld [vmem:[%s457] ss:$8 sm:$0xf]
      %v1640 = vlaneseq
      %v1641 = vshrl.u32 %v1640, 7
      %v1642 = vsub.s32 0, %v1641
      %v1643 = vrot.slane %v1638, %v1642
      %v1644 = vlaneseq
      %v1645 = vshrl.u32 %v1644, 7
      %v1646 = vsub.s32 1, %v1645
      %v1647 = vrot.slane %v1638, %v1646
      %v1648 = vlaneseq
      %v1649 = vshrl.u32 %v1648, 7
      %v1650 = vsub.s32 2, %v1649
      %v1651 = vrot.slane %v1638, %v1650
      %v1652 = vlaneseq
      %v1653 = vshrl.u32 %v1652, 7
      %v1654 = vsub.s32 3, %v1653
      %v1655 = vrot.slane %v1638, %v1654
      %v1660 = vmul.f32 %v1636, %v1643
      %v1661 = vmul.f32 %v1635, %v1647
      %v1662 = vmul.f32 %v1634, %v1651
      %v1663 = vmul.f32 %v1637, %v1655
      %v1664 = vpack.c.bf16 %v1660, %v1660
      %v1665 = vpack.c.bf16 %v1661, %v1661
      %v1666 = vpack.c.bf16 %v1662, %v1662
      %v1667 = vpack.c.bf16 %v1663, %v1663
      %v1672 = vrot.slane %v1664, 2
      %v1673 = vrot.slane %v1665, 2
      %v1674 = vrot.slane %v1666, 2
      %v1675 = vrot.slane %v1667, 2
      %1680 = vst [vmem:[#allocation2 + $0xa0] sm:$0xc0] %v1672
      %1681 = vst [vmem:[#allocation2 + $0xa8] sm:$0xc0] %v1673
      %1682 = vst [vmem:[#allocation2 + $0xb0] sm:$0xc0] %v1674
      %1683 = vst [vmem:[#allocation2 + $0xb8] sm:$0xc0] %v1675
      %1684 = vrot.lane.b32.xlu0 %v1382, 113
      %v1685 = vpop.permute.xlu0 %1684
      %1686 = vrot.lane.b32.xlu0 %v1383, 113
      %v1687 = vpop.permute.xlu0 %1686
      %1688 = vrot.lane.b32.xlu0 %v1384, 113
      %v1689 = vpop.permute.xlu0 %1688
      %1690 = vrot.lane.b32.xlu0 %v1385, 113
      %v1691 = vpop.permute.xlu0 %1690
      %v1692 = vsel %vm512, %v1689, %v1691
      %v1693 = vsel %vm512, %v1687, %v1689
      %v1694 = vsel %vm512, %v1685, %v1687
      %v1695 = vsel %vm512, %v1691, %v1685
      %v1696 = vld [vmem:[%s517] ss:$8 sm:$0xf]
      %v1698 = vlaneseq
      %v1699 = vshrl.u32 %v1698, 7
      %v1700 = vsub.s32 0, %v1699
      %v1701 = vrot.slane %v1696, %v1700
      %v1702 = vlaneseq
      %v1703 = vshrl.u32 %v1702, 7
      %v1704 = vsub.s32 1, %v1703
      %v1705 = vrot.slane %v1696, %v1704
      %v1706 = vlaneseq
      %v1707 = vshrl.u32 %v1706, 7
      %v1708 = vsub.s32 2, %v1707
      %v1709 = vrot.slane %v1696, %v1708
      %v1710 = vlaneseq
      %v1711 = vshrl.u32 %v1710, 7
      %v1712 = vsub.s32 3, %v1711
      %v1713 = vrot.slane %v1696, %v1712
      %v1718 = vmul.f32 %v1694, %v1701
      %v1719 = vmul.f32 %v1693, %v1705
      %v1720 = vmul.f32 %v1692, %v1709
      %v1721 = vmul.f32 %v1695, %v1713
      %v1722 = vpack.c.bf16 %v1718, %v1718
      %v1723 = vpack.c.bf16 %v1719, %v1719
      %v1724 = vpack.c.bf16 %v1720, %v1720
      %v1725 = vpack.c.bf16 %v1721, %v1721
      %1726 = vst [vmem:[#allocation2 + $0xc0] sm:$0x3] %v1722
      %1727 = vst [vmem:[#allocation2 + $0xc8] sm:$0x3] %v1723
      %1728 = vst [vmem:[#allocation2 + $0xd0] sm:$0x3] %v1724
      %1729 = vst [vmem:[#allocation2 + $0xd8] sm:$0x3] %v1725
      %1730 = vrot.lane.b32.xlu0 %v1382, 112
      %v1731 = vpop.permute.xlu0 %1730
      %1732 = vrot.lane.b32.xlu0 %v1383, 112
      %v1733 = vpop.permute.xlu0 %1732
      %1734 = vrot.lane.b32.xlu0 %v1384, 112
      %v1735 = vpop.permute.xlu0 %1734
      %1736 = vrot.lane.b32.xlu0 %v1385, 112
      %v1737 = vpop.permute.xlu0 %1736
      %v1738 = vsel %vm572, %v1735, %v1737
      %v1739 = vsel %vm572, %v1733, %v1735
      %v1740 = vsel %vm572, %v1731, %v1733
      %v1741 = vsel %vm572, %v1737, %v1731
      %v1742 = vld [vmem:[%s577] ss:$8 sm:$0xf]
      %v1744 = vlaneseq
      %v1745 = vshrl.u32 %v1744, 7
      %v1746 = vsub.s32 0, %v1745
      %v1747 = vrot.slane %v1742, %v1746
      %v1748 = vlaneseq
      %v1749 = vshrl.u32 %v1748, 7
      %v1750 = vsub.s32 1, %v1749
      %v1751 = vrot.slane %v1742, %v1750
      %v1752 = vlaneseq
      %v1753 = vshrl.u32 %v1752, 7
      %v1754 = vsub.s32 2, %v1753
      %v1755 = vrot.slane %v1742, %v1754
      %v1756 = vlaneseq
      %v1757 = vshrl.u32 %v1756, 7
      %v1758 = vsub.s32 3, %v1757
      %v1759 = vrot.slane %v1742, %v1758
      %v1764 = vmul.f32 %v1740, %v1747
      %v1765 = vmul.f32 %v1739, %v1751
      %v1766 = vmul.f32 %v1738, %v1755
      %v1767 = vmul.f32 %v1741, %v1759
      %v1768 = vpack.c.bf16 %v1764, %v1764
      %v1769 = vpack.c.bf16 %v1765, %v1765
      %v1770 = vpack.c.bf16 %v1766, %v1766
      %v1771 = vpack.c.bf16 %v1767, %v1767
      %v1776 = vrot.slane %v1768, 6
      %v1777 = vrot.slane %v1769, 6
      %v1778 = vrot.slane %v1770, 6
      %v1779 = vrot.slane %v1771, 6
      %1784 = vst [vmem:[#allocation2 + $0xc0] sm:$0xc] %v1776
      %1785 = vst [vmem:[#allocation2 + $0xc8] sm:$0xc] %v1777
      %1786 = vst [vmem:[#allocation2 + $0xd0] sm:$0xc] %v1778
      %1787 = vst [vmem:[#allocation2 + $0xd8] sm:$0xc] %v1779
      %1788 = vrot.lane.b32.xlu0 %v1382, 111
      %v1789 = vpop.permute.xlu0 %1788
      %1790 = vrot.lane.b32.xlu0 %v1383, 111
      %v1791 = vpop.permute.xlu0 %1790
      %1792 = vrot.lane.b32.xlu0 %v1384, 111
      %v1793 = vpop.permute.xlu0 %1792
      %1794 = vrot.lane.b32.xlu0 %v1385, 111
      %v1795 = vpop.permute.xlu0 %1794
      %v1796 = vsel %vm632, %v1793, %v1795
      %v1797 = vsel %vm632, %v1791, %v1793
      %v1798 = vsel %vm632, %v1789, %v1791
      %v1799 = vsel %vm632, %v1795, %v1789
      %v1800 = vld [vmem:[%s637] ss:$8 sm:$0xf]
      %v1802 = vlaneseq
      %v1803 = vshrl.u32 %v1802, 7
      %v1804 = vsub.s32 0, %v1803
      %v1805 = vrot.slane %v1800, %v1804
      %v1806 = vlaneseq
      %v1807 = vshrl.u32 %v1806, 7
      %v1808 = vsub.s32 1, %v1807
      %v1809 = vrot.slane %v1800, %v1808
      %v1810 = vlaneseq
      %v1811 = vshrl.u32 %v1810, 7
      %v1812 = vsub.s32 2, %v1811
      %v1813 = vrot.slane %v1800, %v1812
      %v1814 = vlaneseq
      %v1815 = vshrl.u32 %v1814, 7
      %v1816 = vsub.s32 3, %v1815
      %v1817 = vrot.slane %v1800, %v1816
      %v1822 = vmul.f32 %v1798, %v1805
      %v1823 = vmul.f32 %v1797, %v1809
      %v1824 = vmul.f32 %v1796, %v1813
      %v1825 = vmul.f32 %v1799, %v1817
      %v1826 = vpack.c.bf16 %v1822, %v1822
      %v1827 = vpack.c.bf16 %v1823, %v1823
      %v1828 = vpack.c.bf16 %v1824, %v1824
      %v1829 = vpack.c.bf16 %v1825, %v1825
      %v1834 = vrot.slane %v1826, 4
      %v1835 = vrot.slane %v1827, 4
      %v1836 = vrot.slane %v1828, 4
      %v1837 = vrot.slane %v1829, 4
      %1842 = vst [vmem:[#allocation2 + $0xc0] sm:$0x30] %v1834
      %1843 = vst [vmem:[#allocation2 + $0xc8] sm:$0x30] %v1835
      %1844 = vst [vmem:[#allocation2 + $0xd0] sm:$0x30] %v1836
      %1845 = vst [vmem:[#allocation2 + $0xd8] sm:$0x30] %v1837
      %s1846 = scalar_lea.vmem %s1, 8
      %v1847 = vld [vmem:[%s1846] sm:$0xf]
      %v1848 = vld [vmem:[#allocation2] sm:$0xff]
      %v1849 = vld [vmem:[#allocation2 + $0x8] sm:$0xff]
      %v1850 = vld [vmem:[#allocation2 + $0x10] sm:$0xff]
      %v1851 = vld [vmem:[#allocation2 + $0x18] sm:$0xff]
      %v1852 = vld [vmem:[#allocation2 + $0x20] sm:$0xff]
      %v1853 = vld [vmem:[#allocation2 + $0x28] sm:$0xff]
      %v1854 = vld [vmem:[#allocation2 + $0x30] sm:$0xff]
      %v1855 = vld [vmem:[#allocation2 + $0x38] sm:$0xff]
      %v1856 = vld [vmem:[#allocation2 + $0x40] sm:$0xff]
      %v1857 = vld [vmem:[#allocation2 + $0x48] sm:$0xff]
      %v1858 = vld [vmem:[#allocation2 + $0x50] sm:$0xff]
      %v1859 = vld [vmem:[#allocation2 + $0x58] sm:$0xff]
      %v1860 = vld [vmem:[#allocation2 + $0x60] sm:$0xff]
      %v1861 = vld [vmem:[#allocation2 + $0x68] sm:$0xff]
      %v1862 = vld [vmem:[#allocation2 + $0x70] sm:$0xff]
      %v1863 = vld [vmem:[#allocation2 + $0x78] sm:$0xff]
      %v1864 = vld [vmem:[#allocation2 + $0x80] sm:$0xff]
      %v1865 = vld [vmem:[#allocation2 + $0x88] sm:$0xff]
      %v1866 = vld [vmem:[#allocation2 + $0x90] sm:$0xff]
      %v1867 = vld [vmem:[#allocation2 + $0x98] sm:$0xff]
      %v1868 = vld [vmem:[#allocation2 + $0xa0] sm:$0xff]
      %v1869 = vld [vmem:[#allocation2 + $0xa8] sm:$0xff]
      %v1870 = vld [vmem:[#allocation2 + $0xb0] sm:$0xff]
      %v1871 = vld [vmem:[#allocation2 + $0xb8] sm:$0xff]
      %v1872 = vld [vmem:[#allocation2 + $0xc0] sm:$0x3f]
      %v1873 = vld [vmem:[#allocation2 + $0xc8] sm:$0x3f]
      %v1874 = vld [vmem:[#allocation2 + $0xd0] sm:$0x3f]
      %v1875 = vld [vmem:[#allocation2 + $0xd8] sm:$0x3f]
      %s1876 = scalar_lea.vmem %s2, 8
      %v1877 = vld [vmem:[%s1876] sm:$0xf]
      %1879 = vset.pattern.permute.xlu0 0
      %1880 = vperm.xlu0 %1879, %v1877
      %v1881 = vpop.permute.xlu0 %1880
      %vm1883 = vcmask 883712
      %v1885 = vsel %vm1883, %v1847, 0
      %vm1887 = vcmask 1045504
      %v1889 = vsel %vm1887, %v1872, 0
      %v1892 = vsel %vm1887, %v1873, 0
      %v1895 = vsel %vm1887, %v1874, 0
      %v1898 = vsel %vm1887, %v1875, 0
      %1900 = vmatprep.subr.bf16.mxu0 %v1849
      %1901 = vmatpush1.bf16.msra.mxu0 %v1848
      %1902 = vmatprep.subr.bf16.mxu0 %v1853
      %1903 = vmatpush1.bf16.msra.mxu0 %v1852
      %1904 = vmatprep.subr.bf16.mxu0 %v1857
      %1905 = vmatpush1.bf16.msra.mxu0 %v1856
      %1906 = vmatprep.subr.bf16.mxu0 %v1861
      %1907 = vmatpush1.bf16.msra.mxu0 %v1860
      %1908 = vmatprep.subr.bf16.mxu0 %v1865
      %1909 = vmatpush1.bf16.msra.mxu0 %v1864
      %1910 = vmatprep.subr.bf16.mxu0 %v1869
      %1911 = vmatpush1.bf16.msra.mxu0 %v1868
      %1912 = vmatprep.subr.bf16.mxu0 %v1892
      %1913 = vmatpush1.bf16.msra.mxu0 %v1889
      %1914 = vmatprep.subr.bf16.mxu0 0
      %1915 = vmatpush1.bf16.msra.mxu0 0
      %1916 = vmatprep.subr.bf16.mxu0 0
      %1917 = vmatpush1.bf16.msra.mxu0 0
      %1918 = vmatprep.subr.bf16.mxu0 0
      %1919 = vmatpush1.bf16.msra.mxu0 0
      %1920 = vmatprep.subr.bf16.mxu0 0
      %1921 = vmatpush1.bf16.msra.mxu0 0
      %1922 = vmatprep.subr.bf16.mxu0 0
      %1923 = vmatpush1.bf16.msra.mxu0 0
      %1924 = vmatprep.subr.bf16.mxu0 0
      %1925 = vmatpush1.bf16.msra.mxu0 0
      %1926 = vmatprep.subr.bf16.mxu0 0
      %1927 = vmatpush1.bf16.msra.mxu0 0
      %1928 = vmatprep.subr.bf16.mxu0 0
      %1929 = vmatpush1.bf16.msra.mxu0 0
      %1930 = vmatprep.subr.bf16.mxu0 0
      %1931 = vmatpush1.bf16.msra.mxu0 0
      %1932 = vmatprep.mubr.bf16.mxu0 0
      %1933 = vmatmul.mubr.bf16.gmra.mrb[0].mxu0 %v1885
      %v1934 = vpop.f32.mrb[0].mxu0
      %v1935 = vadd.f32 %v1881, %v1934
      %v1936 = vpop.f32.mrb[0].mxu0
      %v1937 = vadd.f32 %v1881, %v1936
      %v1938 = vpop.f32.mrb[0].mxu0
      %v1939 = vpop.f32.mrb[0].mxu0
      %1940 = vdwg.mxu0
      %1941 = vmatprep.subr.bf16.mxu0 %v1851
      %1942 = vmatpush1.bf16.msra.mxu0 %v1850
      %1943 = vmatprep.subr.bf16.mxu0 %v1855
      %1944 = vmatpush1.bf16.msra.mxu0 %v1854
      %1945 = vmatprep.subr.bf16.mxu0 %v1859
      %1946 = vmatpush1.bf16.msra.mxu0 %v1858
      %1947 = vmatprep.subr.bf16.mxu0 %v1863
      %1948 = vmatpush1.bf16.msra.mxu0 %v1862
      %1949 = vmatprep.subr.bf16.mxu0 %v1867
      %1950 = vmatpush1.bf16.msra.mxu0 %v1866
      %1951 = vmatprep.subr.bf16.mxu0 %v1871
      %1952 = vmatpush1.bf16.msra.mxu0 %v1870
      %1953 = vmatprep.subr.bf16.mxu0 %v1898
      %1954 = vmatpush1.bf16.msra.mxu0 %v1895
      %1955 = vmatprep.subr.bf16.mxu0 0
      %1956 = vmatpush1.bf16.msra.mxu0 0
      %1957 = vmatprep.subr.bf16.mxu0 0
      %1958 = vmatpush1.bf16.msra.mxu0 0
      %1959 = vmatprep.subr.bf16.mxu0 0
      %1960 = vmatpush1.bf16.msra.mxu0 0
      %1961 = vmatprep.subr.bf16.mxu0 0
      %1962 = vmatpush1.bf16.msra.mxu0 0
      %1963 = vmatprep.subr.bf16.mxu0 0
      %1964 = vmatpush1.bf16.msra.mxu0 0
      %1965 = vmatprep.subr.bf16.mxu0 0
      %1966 = vmatpush1.bf16.msra.mxu0 0
      %1967 = vmatprep.subr.bf16.mxu0 0
      %1968 = vmatpush1.bf16.msra.mxu0 0
      %1969 = vmatprep.subr.bf16.mxu0 0
      %1970 = vmatpush1.bf16.msra.mxu0 0
      %1971 = vmatprep.subr.bf16.mxu0 0
      %1972 = vmatpush1.bf16.msra.mxu0 0
      %1973 = vmatprep.mubr.bf16.mxu0 0
      %1974 = vmatmul.mubr.bf16.gmra.mrb[0].mxu0 %v1885
      %v1975 = vpop.f32.mrb[0].mxu0
      %v1976 = vadd.f32 %v1881, %v1975
      %v1977 = vpop.f32.mrb[0].mxu0
      %v1978 = vadd.f32 %v1881, %v1977
      %v1979 = vpop.f32.mrb[0].mxu0
      %v1980 = vpop.f32.mrb[0].mxu0
      %1981 = vdwg.mxu0
      %v1982 = vmax.f32 %v1935, 0.0
      %v1983 = vmax.f32 %v1937, 0.0
      %v1984 = vmax.f32 %v1976, 0.0
      %v1985 = vmax.f32 %v1978, 0.0
      %1986 = vrot.lane.b32.xlu0 %v1982, 17
      %v1987 = vpop.permute.xlu0 %1986
      %1988 = vrot.lane.b32.xlu0 %v1983, 17
      %v1989 = vpop.permute.xlu0 %1988
      %1990 = vrot.lane.b32.xlu0 %v1984, 17
      %v1991 = vpop.permute.xlu0 %1990
      %1992 = vrot.lane.b32.xlu0 %v1985, 17
      %v1993 = vpop.permute.xlu0 %1992
      %v1994 = vsel %vm217, %v1991, %v1993
      %v1995 = vsel %vm217, %v1989, %v1991
      %v1996 = vsel %vm217, %v1987, %v1989
      %v1997 = vsel %vm217, %v1993, %v1987
      %v1998 = vld [vmem:[%s3] ss:$8 sm:$0xf]
      %v2000 = vlaneseq
      %v2001 = vshrl.u32 %v2000, 7
      %v2002 = vsub.s32 0, %v2001
      %v2003 = vrot.slane %v1998, %v2002
      %v2004 = vlaneseq
      %v2005 = vshrl.u32 %v2004, 7
      %v2006 = vsub.s32 1, %v2005
      %v2007 = vrot.slane %v1998, %v2006
      %v2008 = vlaneseq
      %v2009 = vshrl.u32 %v2008, 7
      %v2010 = vsub.s32 2, %v2009
      %v2011 = vrot.slane %v1998, %v2010
      %v2012 = vlaneseq
      %v2013 = vshrl.u32 %v2012, 7
      %v2014 = vsub.s32 3, %v2013
      %v2015 = vrot.slane %v1998, %v2014
      %v2020 = vmul.f32 %v1997, %v2003
      %v2021 = vmul.f32 %v1996, %v2007
      %v2022 = vmul.f32 %v1995, %v2011
      %v2023 = vmul.f32 %v1994, %v2015
      %v2024 = vpack.c.bf16 %v2020, %v2020
      %v2025 = vpack.c.bf16 %v2021, %v2021
      %v2026 = vpack.c.bf16 %v2022, %v2022
      %v2027 = vpack.c.bf16 %v2023, %v2023
      %v2032 = vrot.slane %v2024, 2
      %v2033 = vrot.slane %v2025, 2
      %v2034 = vrot.slane %v2026, 2
      %v2035 = vrot.slane %v2027, 2
      %2040 = vst [vmem:[#allocation2 + $0xc0] sm:$0xc0] %v2032
      %2041 = vst [vmem:[#allocation2 + $0xc8] sm:$0xc0] %v2033
      %2042 = vst [vmem:[#allocation2 + $0xd0] sm:$0xc0] %v2034
      %2043 = vst [vmem:[#allocation2 + $0xd8] sm:$0xc0] %v2035
      %2044 = vrot.lane.b32.xlu0 %v1982, 16
      %v2045 = vpop.permute.xlu0 %2044
      %2046 = vrot.lane.b32.xlu0 %v1983, 16
      %v2047 = vpop.permute.xlu0 %2046
      %2048 = vrot.lane.b32.xlu0 %v1984, 16
      %v2049 = vpop.permute.xlu0 %2048
      %2050 = vrot.lane.b32.xlu0 %v1985, 16
      %v2051 = vpop.permute.xlu0 %2050
      %v2052 = vsel %vm264, %v2049, %v2051
      %v2053 = vsel %vm264, %v2047, %v2049
      %v2054 = vsel %vm264, %v2045, %v2047
      %v2055 = vsel %vm264, %v2051, %v2045
      %v2056 = vld [vmem:[%s269] ss:$8 sm:$0xf]
      %v2058 = vlaneseq
      %v2059 = vshrl.u32 %v2058, 7
      %v2060 = vsub.s32 0, %v2059
      %v2061 = vrot.slane %v2056, %v2060
      %v2062 = vlaneseq
      %v2063 = vshrl.u32 %v2062, 7
      %v2064 = vsub.s32 1, %v2063
      %v2065 = vrot.slane %v2056, %v2064
      %v2066 = vlaneseq
      %v2067 = vshrl.u32 %v2066, 7
      %v2068 = vsub.s32 2, %v2067
      %v2069 = vrot.slane %v2056, %v2068
      %v2070 = vlaneseq
      %v2071 = vshrl.u32 %v2070, 7
      %v2072 = vsub.s32 3, %v2071
      %v2073 = vrot.slane %v2056, %v2072
      %v2078 = vmul.f32 %v2055, %v2061
      %v2079 = vmul.f32 %v2054, %v2065
      %v2080 = vmul.f32 %v2053, %v2069
      %v2081 = vmul.f32 %v2052, %v2073
      %v2082 = vpack.c.bf16 %v2078, %v2078
      %v2083 = vpack.c.bf16 %v2079, %v2079
      %v2084 = vpack.c.bf16 %v2080, %v2080
      %v2085 = vpack.c.bf16 %v2081, %v2081
      %2086 = vst [vmem:[#allocation2 + $0xe0] sm:$0x3] %v2082
      %2087 = vst [vmem:[#allocation2 + $0xe8] sm:$0x3] %v2083
      %2088 = vst [vmem:[#allocation2 + $0xf0] sm:$0x3] %v2084
      %2089 = vst [vmem:[#allocation2 + $0xf8] sm:$0x3] %v2085
      %2090 = vrot.lane.b32.xlu0 %v1982, 15
      %v2091 = vpop.permute.xlu0 %2090
      %2092 = vrot.lane.b32.xlu0 %v1983, 15
      %v2093 = vpop.permute.xlu0 %2092
      %2094 = vrot.lane.b32.xlu0 %v1984, 15
      %v2095 = vpop.permute.xlu0 %2094
      %2096 = vrot.lane.b32.xlu0 %v1985, 15
      %v2097 = vpop.permute.xlu0 %2096
      %v2098 = vsel %vm324, %v2095, %v2097
      %v2099 = vsel %vm324, %v2093, %v2095
      %v2100 = vsel %vm324, %v2091, %v2093
      %v2101 = vsel %vm324, %v2097, %v2091
      %v2102 = vld [vmem:[%s329] ss:$8 sm:$0xf]
      %v2104 = vlaneseq
      %v2105 = vshrl.u32 %v2104, 7
      %v2106 = vsub.s32 0, %v2105
      %v2107 = vrot.slane %v2102, %v2106
      %v2108 = vlaneseq
      %v2109 = vshrl.u32 %v2108, 7
      %v2110 = vsub.s32 1, %v2109
      %v2111 = vrot.slane %v2102, %v2110
      %v2112 = vlaneseq
      %v2113 = vshrl.u32 %v2112, 7
      %v2114 = vsub.s32 2, %v2113
      %v2115 = vrot.slane %v2102, %v2114
      %v2116 = vlaneseq
      %v2117 = vshrl.u32 %v2116, 7
      %v2118 = vsub.s32 3, %v2117
      %v2119 = vrot.slane %v2102, %v2118
      %v2124 = vmul.f32 %v2101, %v2107
      %v2125 = vmul.f32 %v2100, %v2111
      %v2126 = vmul.f32 %v2099, %v2115
      %v2127 = vmul.f32 %v2098, %v2119
      %v2128 = vpack.c.bf16 %v2124, %v2124
      %v2129 = vpack.c.bf16 %v2125, %v2125
      %v2130 = vpack.c.bf16 %v2126, %v2126
      %v2131 = vpack.c.bf16 %v2127, %v2127
      %v2136 = vrot.slane %v2128, 6
      %v2137 = vrot.slane %v2129, 6
      %v2138 = vrot.slane %v2130, 6
      %v2139 = vrot.slane %v2131, 6
      %2144 = vst [vmem:[#allocation2 + $0xe0] sm:$0xc] %v2136
      %2145 = vst [vmem:[#allocation2 + $0xe8] sm:$0xc] %v2137
      %2146 = vst [vmem:[#allocation2 + $0xf0] sm:$0xc] %v2138
      %2147 = vst [vmem:[#allocation2 + $0xf8] sm:$0xc] %v2139
      %2148 = vrot.lane.b32.xlu0 %v1982, 1
      %v2149 = vpop.permute.xlu0 %2148
      %2150 = vrot.lane.b32.xlu0 %v1983, 1
      %v2151 = vpop.permute.xlu0 %2150
      %2152 = vrot.lane.b32.xlu0 %v1984, 1
      %v2153 = vpop.permute.xlu0 %2152
      %2154 = vrot.lane.b32.xlu0 %v1985, 1
      %v2155 = vpop.permute.xlu0 %2154
      %v2156 = vsel %vm384, %v2153, %v2155
      %v2157 = vsel %vm384, %v2151, %v2153
      %v2158 = vsel %vm384, %v2149, %v2151
      %v2159 = vsel %vm384, %v2155, %v2149
      %v2160 = vld [vmem:[%s389] ss:$8 sm:$0xf]
      %v2162 = vlaneseq
      %v2163 = vshrl.u32 %v2162, 7
      %v2164 = vsub.s32 0, %v2163
      %v2165 = vrot.slane %v2160, %v2164
      %v2166 = vlaneseq
      %v2167 = vshrl.u32 %v2166, 7
      %v2168 = vsub.s32 1, %v2167
      %v2169 = vrot.slane %v2160, %v2168
      %v2170 = vlaneseq
      %v2171 = vshrl.u32 %v2170, 7
      %v2172 = vsub.s32 2, %v2171
      %v2173 = vrot.slane %v2160, %v2172
      %v2174 = vlaneseq
      %v2175 = vshrl.u32 %v2174, 7
      %v2176 = vsub.s32 3, %v2175
      %v2177 = vrot.slane %v2160, %v2176
      %v2182 = vmul.f32 %v2159, %v2165
      %v2183 = vmul.f32 %v2158, %v2169
      %v2184 = vmul.f32 %v2157, %v2173
      %v2185 = vmul.f32 %v2156, %v2177
      %v2186 = vpack.c.bf16 %v2182, %v2182
      %v2187 = vpack.c.bf16 %v2183, %v2183
      %v2188 = vpack.c.bf16 %v2184, %v2184
      %v2189 = vpack.c.bf16 %v2185, %v2185
      %v2194 = vrot.slane %v2186, 4
      %v2195 = vrot.slane %v2187, 4
      %v2196 = vrot.slane %v2188, 4
      %v2197 = vrot.slane %v2189, 4
      %2202 = vst [vmem:[#allocation2 + $0xe0] sm:$0x30] %v2194
      %2203 = vst [vmem:[#allocation2 + $0xe8] sm:$0x30] %v2195
      %2204 = vst [vmem:[#allocation2 + $0xf0] sm:$0x30] %v2196
      %2205 = vst [vmem:[#allocation2 + $0xf8] sm:$0x30] %v2197
      %v2206 = vpack.c.bf16 %v1982, %v1982
      %v2207 = vpack.c.bf16 %v1983, %v1983
      %v2208 = vpack.c.bf16 %v1984, %v1984
      %v2209 = vpack.c.bf16 %v1985, %v1985
      %v2214 = vrot.slane %v2206, 2
      %v2215 = vrot.slane %v2207, 2
      %v2216 = vrot.slane %v2208, 2
      %v2217 = vrot.slane %v2209, 2
      %2222 = vst [vmem:[#allocation2 + $0xe0] sm:$0xc0] %v2214
      %2223 = vst [vmem:[#allocation2 + $0xe8] sm:$0xc0] %v2215
      %2224 = vst [vmem:[#allocation2 + $0xf0] sm:$0xc0] %v2216
      %2225 = vst [vmem:[#allocation2 + $0xf8] sm:$0xc0] %v2217
      %2226 = vrot.lane.b32.xlu0 %v1982, 127
      %v2227 = vpop.permute.xlu0 %2226
      %2228 = vrot.lane.b32.xlu0 %v1983, 127
      %v2229 = vpop.permute.xlu0 %2228
      %2230 = vrot.lane.b32.xlu0 %v1984, 127
      %v2231 = vpop.permute.xlu0 %2230
      %2232 = vrot.lane.b32.xlu0 %v1985, 127
      %v2233 = vpop.permute.xlu0 %2232
      %v2234 = vsel %vm452, %v2231, %v2233
      %v2235 = vsel %vm452, %v2229, %v2231
      %v2236 = vsel %vm452, %v2227, %v2229
      %v2237 = vsel %vm452, %v2233, %v2227
      %v2238 = vld [vmem:[%s457] ss:$8 sm:$0xf]
      %v2240 = vlaneseq
      %v2241 = vshrl.u32 %v2240, 7
      %v2242 = vsub.s32 0, %v2241
      %v2243 = vrot.slane %v2238, %v2242
      %v2244 = vlaneseq
      %v2245 = vshrl.u32 %v2244, 7
      %v2246 = vsub.s32 1, %v2245
      %v2247 = vrot.slane %v2238, %v2246
      %v2248 = vlaneseq
      %v2249 = vshrl.u32 %v2248, 7
      %v2250 = vsub.s32 2, %v2249
      %v2251 = vrot.slane %v2238, %v2250
      %v2252 = vlaneseq
      %v2253 = vshrl.u32 %v2252, 7
      %v2254 = vsub.s32 3, %v2253
      %v2255 = vrot.slane %v2238, %v2254
      %v2260 = vmul.f32 %v2236, %v2243
      %v2261 = vmul.f32 %v2235, %v2247
      %v2262 = vmul.f32 %v2234, %v2251
      %v2263 = vmul.f32 %v2237, %v2255
      %v2264 = vpack.c.bf16 %v2260, %v2260
      %v2265 = vpack.c.bf16 %v2261, %v2261
      %v2266 = vpack.c.bf16 %v2262, %v2262
      %v2267 = vpack.c.bf16 %v2263, %v2263
      %2268 = vst [vmem:[#allocation2 + $0x100] sm:$0x3] %v2264
      %2269 = vst [vmem:[#allocation2 + $0x108] sm:$0x3] %v2265
      %2270 = vst [vmem:[#allocation2 + $0x110] sm:$0x3] %v2266
      %2271 = vst [vmem:[#allocation2 + $0x118] sm:$0x3] %v2267
      %2272 = vrot.lane.b32.xlu0 %v1982, 113
      %v2273 = vpop.permute.xlu0 %2272
      %2274 = vrot.lane.b32.xlu0 %v1983, 113
      %v2275 = vpop.permute.xlu0 %2274
      %2276 = vrot.lane.b32.xlu0 %v1984, 113
      %v2277 = vpop.permute.xlu0 %2276
      %2278 = vrot.lane.b32.xlu0 %v1985, 113
      %v2279 = vpop.permute.xlu0 %2278
      %v2280 = vsel %vm512, %v2277, %v2279
      %v2281 = vsel %vm512, %v2275, %v2277
      %v2282 = vsel %vm512, %v2273, %v2275
      %v2283 = vsel %vm512, %v2279, %v2273
      %v2284 = vld [vmem:[%s517] ss:$8 sm:$0xf]
      %v2286 = vlaneseq
      %v2287 = vshrl.u32 %v2286, 7
      %v2288 = vsub.s32 0, %v2287
      %v2289 = vrot.slane %v2284, %v2288
      %v2290 = vlaneseq
      %v2291 = vshrl.u32 %v2290, 7
      %v2292 = vsub.s32 1, %v2291
      %v2293 = vrot.slane %v2284, %v2292
      %v2294 = vlaneseq
      %v2295 = vshrl.u32 %v2294, 7
      %v2296 = vsub.s32 2, %v2295
      %v2297 = vrot.slane %v2284, %v2296
      %v2298 = vlaneseq
      %v2299 = vshrl.u32 %v2298, 7
      %v2300 = vsub.s32 3, %v2299
      %v2301 = vrot.slane %v2284, %v2300
      %v2306 = vmul.f32 %v2282, %v2289
      %v2307 = vmul.f32 %v2281, %v2293
      %v2308 = vmul.f32 %v2280, %v2297
      %v2309 = vmul.f32 %v2283, %v2301
      %v2310 = vpack.c.bf16 %v2306, %v2306
      %v2311 = vpack.c.bf16 %v2307, %v2307
      %v2312 = vpack.c.bf16 %v2308, %v2308
      %v2313 = vpack.c.bf16 %v2309, %v2309
      %v2318 = vrot.slane %v2310, 6
      %v2319 = vrot.slane %v2311, 6
      %v2320 = vrot.slane %v2312, 6
      %v2321 = vrot.slane %v2313, 6
      %2326 = vst [vmem:[#allocation2 + $0x100] sm:$0xc] %v2318
      %2327 = vst [vmem:[#allocation2 + $0x108] sm:$0xc] %v2319
      %2328 = vst [vmem:[#allocation2 + $0x110] sm:$0xc] %v2320
      %2329 = vst [vmem:[#allocation2 + $0x118] sm:$0xc] %v2321
      %2330 = vrot.lane.b32.xlu0 %v1982, 112
      %v2331 = vpop.permute.xlu0 %2330
      %2332 = vrot.lane.b32.xlu0 %v1983, 112
      %v2333 = vpop.permute.xlu0 %2332
      %2334 = vrot.lane.b32.xlu0 %v1984, 112
      %v2335 = vpop.permute.xlu0 %2334
      %2336 = vrot.lane.b32.xlu0 %v1985, 112
      %v2337 = vpop.permute.xlu0 %2336
      %v2338 = vsel %vm572, %v2335, %v2337
      %v2339 = vsel %vm572, %v2333, %v2335
      %v2340 = vsel %vm572, %v2331, %v2333
      %v2341 = vsel %vm572, %v2337, %v2331
      %v2342 = vld [vmem:[%s577] ss:$8 sm:$0xf]
      %v2344 = vlaneseq
      %v2345 = vshrl.u32 %v2344, 7
      %v2346 = vsub.s32 0, %v2345
      %v2347 = vrot.slane %v2342, %v2346
      %v2348 = vlaneseq
      %v2349 = vshrl.u32 %v2348, 7
      %v2350 = vsub.s32 1, %v2349
      %v2351 = vrot.slane %v2342, %v2350
      %v2352 = vlaneseq
      %v2353 = vshrl.u32 %v2352, 7
      %v2354 = vsub.s32 2, %v2353
      %v2355 = vrot.slane %v2342, %v2354
      %v2356 = vlaneseq
      %v2357 = vshrl.u32 %v2356, 7
      %v2358 = vsub.s32 3, %v2357
      %v2359 = vrot.slane %v2342, %v2358
      %v2364 = vmul.f32 %v2340, %v2347
      %v2365 = vmul.f32 %v2339, %v2351
      %v2366 = vmul.f32 %v2338, %v2355
      %v2367 = vmul.f32 %v2341, %v2359
      %v2368 = vpack.c.bf16 %v2364, %v2364
      %v2369 = vpack.c.bf16 %v2365, %v2365
      %v2370 = vpack.c.bf16 %v2366, %v2366
      %v2371 = vpack.c.bf16 %v2367, %v2367
      %v2376 = vrot.slane %v2368, 4
      %v2377 = vrot.slane %v2369, 4
      %v2378 = vrot.slane %v2370, 4
      %v2379 = vrot.slane %v2371, 4
      %2384 = vst [vmem:[#allocation2 + $0x100] sm:$0x30] %v2376
      %2385 = vst [vmem:[#allocation2 + $0x108] sm:$0x30] %v2377
      %2386 = vst [vmem:[#allocation2 + $0x110] sm:$0x30] %v2378
      %2387 = vst [vmem:[#allocation2 + $0x118] sm:$0x30] %v2379
      %2388 = vrot.lane.b32.xlu0 %v1982, 111
      %v2389 = vpop.permute.xlu0 %2388
      %2390 = vrot.lane.b32.xlu0 %v1983, 111
      %v2391 = vpop.permute.xlu0 %2390
      %2392 = vrot.lane.b32.xlu0 %v1984, 111
      %v2393 = vpop.permute.xlu0 %2392
      %2394 = vrot.lane.b32.xlu0 %v1985, 111
      %v2395 = vpop.permute.xlu0 %2394
      %v2396 = vsel %vm632, %v2393, %v2395
      %v2397 = vsel %vm632, %v2391, %v2393
      %v2398 = vsel %vm632, %v2389, %v2391
      %v2399 = vsel %vm632, %v2395, %v2389
      %v2400 = vld [vmem:[%s637] ss:$8 sm:$0xf]
      %v2402 = vlaneseq
      %v2403 = vshrl.u32 %v2402, 7
      %v2404 = vsub.s32 0, %v2403
      %v2405 = vrot.slane %v2400, %v2404
      %v2406 = vlaneseq
      %v2407 = vshrl.u32 %v2406, 7
      %v2408 = vsub.s32 1, %v2407
      %v2409 = vrot.slane %v2400, %v2408
      %v2410 = vlaneseq
      %v2411 = vshrl.u32 %v2410, 7
      %v2412 = vsub.s32 2, %v2411
      %v2413 = vrot.slane %v2400, %v2412
      %v2414 = vlaneseq
      %v2415 = vshrl.u32 %v2414, 7
      %v2416 = vsub.s32 3, %v2415
      %v2417 = vrot.slane %v2400, %v2416
      %v2422 = vmul.f32 %v2398, %v2405
      %v2423 = vmul.f32 %v2397, %v2409
      %v2424 = vmul.f32 %v2396, %v2413
      %v2425 = vmul.f32 %v2399, %v2417
      %v2426 = vpack.c.bf16 %v2422, %v2422
      %v2427 = vpack.c.bf16 %v2423, %v2423
      %v2428 = vpack.c.bf16 %v2424, %v2424
      %v2429 = vpack.c.bf16 %v2425, %v2425
      %v2434 = vrot.slane %v2426, 2
      %v2435 = vrot.slane %v2427, 2
      %v2436 = vrot.slane %v2428, 2
      %v2437 = vrot.slane %v2429, 2
      %2442 = vst [vmem:[#allocation2 + $0x100] sm:$0xc0] %v2434
      %2443 = vst [vmem:[#allocation2 + $0x108] sm:$0xc0] %v2435
      %2444 = vst [vmem:[#allocation2 + $0x110] sm:$0xc0] %v2436
      %2445 = vst [vmem:[#allocation2 + $0x118] sm:$0xc0] %v2437
      %s2446 = scalar_lea.vmem %s1, 12
      %v2447 = vld [vmem:[%s2446] sm:$0xf]
      %v2448 = vld [vmem:[#allocation2] sm:$0xff]
      %v2449 = vld [vmem:[#allocation2 + $0x8] sm:$0xff]
      %v2450 = vld [vmem:[#allocation2 + $0x10] sm:$0xff]
      %v2451 = vld [vmem:[#allocation2 + $0x18] sm:$0xff]
      %v2452 = vld [vmem:[#allocation2 + $0x20] sm:$0xff]
      %v2453 = vld [vmem:[#allocation2 + $0x28] sm:$0xff]
      %v2454 = vld [vmem:[#allocation2 + $0x30] sm:$0xff]
      %v2455 = vld [vmem:[#allocation2 + $0x38] sm:$0xff]
      %v2456 = vld [vmem:[#allocation2 + $0x40] sm:$0xff]
      %v2457 = vld [vmem:[#allocation2 + $0x48] sm:$0xff]
      %v2458 = vld [vmem:[#allocation2 + $0x50] sm:$0xff]
      %v2459 = vld [vmem:[#allocation2 + $0x58] sm:$0xff]
      %v2460 = vld [vmem:[#allocation2 + $0x60] sm:$0xff]
      %v2461 = vld [vmem:[#allocation2 + $0x68] sm:$0xff]
      %v2462 = vld [vmem:[#allocation2 + $0x70] sm:$0xff]
      %v2463 = vld [vmem:[#allocation2 + $0x78] sm:$0xff]
      %v2464 = vld [vmem:[#allocation2 + $0x80] sm:$0xff]
      %v2465 = vld [vmem:[#allocation2 + $0x88] sm:$0xff]
      %v2466 = vld [vmem:[#allocation2 + $0x90] sm:$0xff]
      %v2467 = vld [vmem:[#allocation2 + $0x98] sm:$0xff]
      %v2468 = vld [vmem:[#allocation2 + $0xa0] sm:$0xff]
      %v2469 = vld [vmem:[#allocation2 + $0xa8] sm:$0xff]
      %v2470 = vld [vmem:[#allocation2 + $0xb0] sm:$0xff]
      %v2471 = vld [vmem:[#allocation2 + $0xb8] sm:$0xff]
      %v2472 = vld [vmem:[#allocation2 + $0xc0] sm:$0xff]
      %v2473 = vld [vmem:[#allocation2 + $0xc8] sm:$0xff]
      %v2474 = vld [vmem:[#allocation2 + $0xd0] sm:$0xff]
      %v2475 = vld [vmem:[#allocation2 + $0xd8] sm:$0xff]
      %v2476 = vld [vmem:[#allocation2 + $0xe0] sm:$0xff]
      %v2477 = vld [vmem:[#allocation2 + $0xe8] sm:$0xff]
      %v2478 = vld [vmem:[#allocation2 + $0xf0] sm:$0xff]
      %v2479 = vld [vmem:[#allocation2 + $0xf8] sm:$0xff]
      %v2480 = vld [vmem:[#allocation2 + $0x100] sm:$0xff]
      %v2481 = vld [vmem:[#allocation2 + $0x108] sm:$0xff]
      %v2482 = vld [vmem:[#allocation2 + $0x110] sm:$0xff]
      %v2483 = vld [vmem:[#allocation2 + $0x118] sm:$0xff]
      %s2484 = scalar_lea.vmem %s2, 12
      %v2485 = vld [vmem:[%s2484] sm:$0xf]
      %2487 = vset.pattern.permute.xlu0 0
      %2488 = vperm.xlu0 %2487, %v2485
      %v2489 = vpop.permute.xlu0 %2488
      %v2493 = vunpack.c.l.s4 1983009808
      %v2494 = vunpack.c.0.s8 %v2493
      %v2495 = vlaneseq
      %v2496 = vshrl.u32 %v2495, 7
      %v2497 = vsub.s32 %v2494, %v2496
      %v2498 = vrot.slane %v2447, %v2497
      %v2499 = vcombine.high %v2498, %v2498
      %vm2501 = vcmask 130048
      %v2503 = vsel %vm2501, %v2499, 0
      %2505 = vmatprep.subr.bf16.mxu0 %v2449
      %2506 = vmatpush1.bf16.msra.mxu0 %v2448
      %2507 = vmatprep.subr.bf16.mxu0 %v2453
      %2508 = vmatpush1.bf16.msra.mxu0 %v2452
      %2509 = vmatprep.subr.bf16.mxu0 %v2457
      %2510 = vmatpush1.bf16.msra.mxu0 %v2456
      %2511 = vmatprep.subr.bf16.mxu0 %v2461
      %2512 = vmatpush1.bf16.msra.mxu0 %v2460
      %2513 = vmatprep.subr.bf16.mxu0 %v2465
      %2514 = vmatpush1.bf16.msra.mxu0 %v2464
      %2515 = vmatprep.subr.bf16.mxu0 %v2469
      %2516 = vmatpush1.bf16.msra.mxu0 %v2468
      %2517 = vmatprep.subr.bf16.mxu0 %v2473
      %2518 = vmatpush1.bf16.msra.mxu0 %v2472
      %2519 = vmatprep.subr.bf16.mxu0 %v2477
      %2520 = vmatpush1.bf16.msra.mxu0 %v2476
      %2521 = vmatprep.subr.bf16.mxu0 %v2481
      %2522 = vmatpush1.bf16.msra.mxu0 %v2480
      %2523 = vmatprep.subr.bf16.mxu0 0
      %2524 = vmatpush1.bf16.msra.mxu0 0
      %2525 = vmatprep.subr.bf16.mxu0 0
      %2526 = vmatpush1.bf16.msra.mxu0 0
      %2527 = vmatprep.subr.bf16.mxu0 0
      %2528 = vmatpush1.bf16.msra.mxu0 0
      %2529 = vmatprep.subr.bf16.mxu0 0
      %2530 = vmatpush1.bf16.msra.mxu0 0
      %2531 = vmatprep.subr.bf16.mxu0 0
      %2532 = vmatpush1.bf16.msra.mxu0 0
      %2533 = vmatprep.subr.bf16.mxu0 0
      %2534 = vmatpush1.bf16.msra.mxu0 0
      %2535 = vmatprep.subr.bf16.mxu0 0
      %2536 = vmatpush1.bf16.msra.mxu0 0
      %2537 = vmatprep.mubr.bf16.mxu0 %v2503
      %2538 = vmatmul.mubr.bf16.gmra.mrb[0].mxu0 %v2498
      %v2539 = vpop.f32.mrb[0].mxu0
      %v2540 = vadd.f32 %v2489, %v2539
      %v2541 = vpop.f32.mrb[0].mxu0
      %v2542 = vadd.f32 %v2489, %v2541
      %v2543 = vpop.f32.mrb[0].mxu0
      %v2544 = vpop.f32.mrb[0].mxu0
      %2545 = vdwg.mxu0
      %2546 = vmatprep.subr.bf16.mxu0 %v2451
      %2547 = vmatpush1.bf16.msra.mxu0 %v2450
      %2548 = vmatprep.subr.bf16.mxu0 %v2455
      %2549 = vmatpush1.bf16.msra.mxu0 %v2454
      %2550 = vmatprep.subr.bf16.mxu0 %v2459
      %2551 = vmatpush1.bf16.msra.mxu0 %v2458
      %2552 = vmatprep.subr.bf16.mxu0 %v2463
      %2553 = vmatpush1.bf16.msra.mxu0 %v2462
      %2554 = vmatprep.subr.bf16.mxu0 %v2467
      %2555 = vmatpush1.bf16.msra.mxu0 %v2466
      %2556 = vmatprep.subr.bf16.mxu0 %v2471
      %2557 = vmatpush1.bf16.msra.mxu0 %v2470
      %2558 = vmatprep.subr.bf16.mxu0 %v2475
      %2559 = vmatpush1.bf16.msra.mxu0 %v2474
      %2560 = vmatprep.subr.bf16.mxu0 %v2479
      %2561 = vmatpush1.bf16.msra.mxu0 %v2478
      %2562 = vmatprep.subr.bf16.mxu0 %v2483
      %2563 = vmatpush1.bf16.msra.mxu0 %v2482
      %2564 = vmatprep.subr.bf16.mxu0 0
      %2565 = vmatpush1.bf16.msra.mxu0 0
      %2566 = vmatprep.subr.bf16.mxu0 0
      %2567 = vmatpush1.bf16.msra.mxu0 0
      %2568 = vmatprep.subr.bf16.mxu0 0
      %2569 = vmatpush1.bf16.msra.mxu0 0
      %2570 = vmatprep.subr.bf16.mxu0 0
      %2571 = vmatpush1.bf16.msra.mxu0 0
      %2572 = vmatprep.subr.bf16.mxu0 0
      %2573 = vmatpush1.bf16.msra.mxu0 0
      %2574 = vmatprep.subr.bf16.mxu0 0
      %2575 = vmatpush1.bf16.msra.mxu0 0
      %2576 = vmatprep.subr.bf16.mxu0 0
      %2577 = vmatpush1.bf16.msra.mxu0 0
      %2578 = vmatprep.mubr.bf16.mxu0 %v2503
      %2579 = vmatmul.mubr.bf16.gmra.mrb[0].mxu0 %v2498
      %v2580 = vpop.f32.mrb[0].mxu0
      %v2581 = vadd.f32 %v2489, %v2580
      %v2582 = vpop.f32.mrb[0].mxu0
      %v2583 = vadd.f32 %v2489, %v2582
      %v2584 = vpop.f32.mrb[0].mxu0
      %v2585 = vpop.f32.mrb[0].mxu0
      %2586 = vdwg.mxu0
      %v2587 = vmax.f32 %v2540, 0.0
      %v2588 = vmax.f32 %v2542, 0.0
      %v2589 = vmax.f32 %v2581, 0.0
      %v2590 = vmax.f32 %v2583, 0.0
      %2591 = vrot.lane.b32.xlu0 %v2587, 17
      %v2592 = vpop.permute.xlu0 %2591
      %2593 = vrot.lane.b32.xlu0 %v2588, 17
      %v2594 = vpop.permute.xlu0 %2593
      %2595 = vrot.lane.b32.xlu0 %v2589, 17
      %v2596 = vpop.permute.xlu0 %2595
      %2597 = vrot.lane.b32.xlu0 %v2590, 17
      %v2598 = vpop.permute.xlu0 %2597
      %v2599 = vsel %vm217, %v2596, %v2598
      %v2600 = vsel %vm217, %v2594, %v2596
      %v2601 = vsel %vm217, %v2592, %v2594
      %v2602 = vsel %vm217, %v2598, %v2592
      %v2603 = vld [vmem:[%s3] ss:$8 sm:$0xf]
      %v2605 = vlaneseq
      %v2606 = vshrl.u32 %v2605, 7
      %v2607 = vsub.s32 0, %v2606
      %v2608 = vrot.slane %v2603, %v2607
      %v2609 = vlaneseq
      %v2610 = vshrl.u32 %v2609, 7
      %v2611 = vsub.s32 1, %v2610
      %v2612 = vrot.slane %v2603, %v2611
      %v2613 = vlaneseq
      %v2614 = vshrl.u32 %v2613, 7
      %v2615 = vsub.s32 2, %v2614
      %v2616 = vrot.slane %v2603, %v2615
      %v2617 = vlaneseq
      %v2618 = vshrl.u32 %v2617, 7
      %v2619 = vsub.s32 3, %v2618
      %v2620 = vrot.slane %v2603, %v2619
      %v2625 = vmul.f32 %v2602, %v2608
      %v2626 = vmul.f32 %v2601, %v2612
      %v2627 = vmul.f32 %v2600, %v2616
      %v2628 = vmul.f32 %v2599, %v2620
      %v2629 = vpack.c.bf16 %v2625, %v2625
      %v2630 = vpack.c.bf16 %v2626, %v2626
      %v2631 = vpack.c.bf16 %v2627, %v2627
      %v2632 = vpack.c.bf16 %v2628, %v2628
      %2633 = vst [vmem:[#allocation2 + $0x120] sm:$0x3] %v2629
      %2634 = vst [vmem:[#allocation2 + $0x128] sm:$0x3] %v2630
      %2635 = vst [vmem:[#allocation2 + $0x130] sm:$0x3] %v2631
      %2636 = vst [vmem:[#allocation2 + $0x138] sm:$0x3] %v2632
      %2637 = vrot.lane.b32.xlu0 %v2587, 16
      %v2638 = vpop.permute.xlu0 %2637
      %2639 = vrot.lane.b32.xlu0 %v2588, 16
      %v2640 = vpop.permute.xlu0 %2639
      %2641 = vrot.lane.b32.xlu0 %v2589, 16
      %v2642 = vpop.permute.xlu0 %2641
      %2643 = vrot.lane.b32.xlu0 %v2590, 16
      %v2644 = vpop.permute.xlu0 %2643
      %v2645 = vsel %vm264, %v2642, %v2644
      %v2646 = vsel %vm264, %v2640, %v2642
      %v2647 = vsel %vm264, %v2638, %v2640
      %v2648 = vsel %vm264, %v2644, %v2638
      %v2649 = vld [vmem:[%s269] ss:$8 sm:$0xf]
      %v2651 = vlaneseq
      %v2652 = vshrl.u32 %v2651, 7
      %v2653 = vsub.s32 0, %v2652
      %v2654 = vrot.slane %v2649, %v2653
      %v2655 = vlaneseq
      %v2656 = vshrl.u32 %v2655, 7
      %v2657 = vsub.s32 1, %v2656
      %v2658 = vrot.slane %v2649, %v2657
      %v2659 = vlaneseq
      %v2660 = vshrl.u32 %v2659, 7
      %v2661 = vsub.s32 2, %v2660
      %v2662 = vrot.slane %v2649, %v2661
      %v2663 = vlaneseq
      %v2664 = vshrl.u32 %v2663, 7
      %v2665 = vsub.s32 3, %v2664
      %v2666 = vrot.slane %v2649, %v2665
      %v2671 = vmul.f32 %v2648, %v2654
      %v2672 = vmul.f32 %v2647, %v2658
      %v2673 = vmul.f32 %v2646, %v2662
      %v2674 = vmul.f32 %v2645, %v2666
      %v2675 = vpack.c.bf16 %v2671, %v2671
      %v2676 = vpack.c.bf16 %v2672, %v2672
      %v2677 = vpack.c.bf16 %v2673, %v2673
      %v2678 = vpack.c.bf16 %v2674, %v2674
      %v2683 = vrot.slane %v2675, 6
      %v2684 = vrot.slane %v2676, 6
      %v2685 = vrot.slane %v2677, 6
      %v2686 = vrot.slane %v2678, 6
      %2691 = vst [vmem:[#allocation2 + $0x120] sm:$0xc] %v2683
      %2692 = vst [vmem:[#allocation2 + $0x128] sm:$0xc] %v2684
      %2693 = vst [vmem:[#allocation2 + $0x130] sm:$0xc] %v2685
      %2694 = vst [vmem:[#allocation2 + $0x138] sm:$0xc] %v2686
      %2695 = vrot.lane.b32.xlu0 %v2587, 15
      %v2696 = vpop.permute.xlu0 %2695
      %2697 = vrot.lane.b32.xlu0 %v2588, 15
      %v2698 = vpop.permute.xlu0 %2697
      %2699 = vrot.lane.b32.xlu0 %v2589, 15
      %v2700 = vpop.permute.xlu0 %2699
      %2701 = vrot.lane.b32.xlu0 %v2590, 15
      %v2702 = vpop.permute.xlu0 %2701
      %v2703 = vsel %vm324, %v2700, %v2702
      %v2704 = vsel %vm324, %v2698, %v2700
      %v2705 = vsel %vm324, %v2696, %v2698
      %v2706 = vsel %vm324, %v2702, %v2696
      %v2707 = vld [vmem:[%s329] ss:$8 sm:$0xf]
      %v2709 = vlaneseq
      %v2710 = vshrl.u32 %v2709, 7
      %v2711 = vsub.s32 0, %v2710
      %v2712 = vrot.slane %v2707, %v2711
      %v2713 = vlaneseq
      %v2714 = vshrl.u32 %v2713, 7
      %v2715 = vsub.s32 1, %v2714
      %v2716 = vrot.slane %v2707, %v2715
      %v2717 = vlaneseq
      %v2718 = vshrl.u32 %v2717, 7
      %v2719 = vsub.s32 2, %v2718
      %v2720 = vrot.slane %v2707, %v2719
      %v2721 = vlaneseq
      %v2722 = vshrl.u32 %v2721, 7
      %v2723 = vsub.s32 3, %v2722
      %v2724 = vrot.slane %v2707, %v2723
      %v2729 = vmul.f32 %v2706, %v2712
      %v2730 = vmul.f32 %v2705, %v2716
      %v2731 = vmul.f32 %v2704, %v2720
      %v2732 = vmul.f32 %v2703, %v2724
      %v2733 = vpack.c.bf16 %v2729, %v2729
      %v2734 = vpack.c.bf16 %v2730, %v2730
      %v2735 = vpack.c.bf16 %v2731, %v2731
      %v2736 = vpack.c.bf16 %v2732, %v2732
      %v2741 = vrot.slane %v2733, 4
      %v2742 = vrot.slane %v2734, 4
      %v2743 = vrot.slane %v2735, 4
      %v2744 = vrot.slane %v2736, 4
      %2749 = vst [vmem:[#allocation2 + $0x120] sm:$0x30] %v2741
      %2750 = vst [vmem:[#allocation2 + $0x128] sm:$0x30] %v2742
      %2751 = vst [vmem:[#allocation2 + $0x130] sm:$0x30] %v2743
      %2752 = vst [vmem:[#allocation2 + $0x138] sm:$0x30] %v2744
      %2753 = vrot.lane.b32.xlu0 %v2587, 1
      %v2754 = vpop.permute.xlu0 %2753
      %2755 = vrot.lane.b32.xlu0 %v2588, 1
      %v2756 = vpop.permute.xlu0 %2755
      %2757 = vrot.lane.b32.xlu0 %v2589, 1
      %v2758 = vpop.permute.xlu0 %2757
      %2759 = vrot.lane.b32.xlu0 %v2590, 1
      %v2760 = vpop.permute.xlu0 %2759
      %v2761 = vsel %vm384, %v2758, %v2760
      %v2762 = vsel %vm384, %v2756, %v2758
      %v2763 = vsel %vm384, %v2754, %v2756
      %v2764 = vsel %vm384, %v2760, %v2754
      %v2765 = vld [vmem:[%s389] ss:$8 sm:$0xf]
      %v2767 = vlaneseq
      %v2768 = vshrl.u32 %v2767, 7
      %v2769 = vsub.s32 0, %v2768
      %v2770 = vrot.slane %v2765, %v2769
      %v2771 = vlaneseq
      %v2772 = vshrl.u32 %v2771, 7
      %v2773 = vsub.s32 1, %v2772
      %v2774 = vrot.slane %v2765, %v2773
      %v2775 = vlaneseq
      %v2776 = vshrl.u32 %v2775, 7
      %v2777 = vsub.s32 2, %v2776
      %v2778 = vrot.slane %v2765, %v2777
      %v2779 = vlaneseq
      %v2780 = vshrl.u32 %v2779, 7
      %v2781 = vsub.s32 3, %v2780
      %v2782 = vrot.slane %v2765, %v2781
      %v2787 = vmul.f32 %v2764, %v2770
      %v2788 = vmul.f32 %v2763, %v2774
      %v2789 = vmul.f32 %v2762, %v2778
      %v2790 = vmul.f32 %v2761, %v2782
      %v2791 = vpack.c.bf16 %v2787, %v2787
      %v2792 = vpack.c.bf16 %v2788, %v2788
      %v2793 = vpack.c.bf16 %v2789, %v2789
      %v2794 = vpack.c.bf16 %v2790, %v2790
      %v2799 = vrot.slane %v2791, 2
      %v2800 = vrot.slane %v2792, 2
      %v2801 = vrot.slane %v2793, 2
      %v2802 = vrot.slane %v2794, 2
      %2807 = vst [vmem:[#allocation2 + $0x120] sm:$0xc0] %v2799
      %2808 = vst [vmem:[#allocation2 + $0x128] sm:$0xc0] %v2800
      %2809 = vst [vmem:[#allocation2 + $0x130] sm:$0xc0] %v2801
      %2810 = vst [vmem:[#allocation2 + $0x138] sm:$0xc0] %v2802
      %v2811 = vpack.c.bf16 %v2587, %v2587
      %v2812 = vpack.c.bf16 %v2588, %v2588
      %v2813 = vpack.c.bf16 %v2589, %v2589
      %v2814 = vpack.c.bf16 %v2590, %v2590
      %2815 = vst [vmem:[#allocation2 + $0x140] sm:$0x3] %v2811
      %2816 = vst [vmem:[#allocation2 + $0x148] sm:$0x3] %v2812
      %2817 = vst [vmem:[#allocation2 + $0x150] sm:$0x3] %v2813
      %2818 = vst [vmem:[#allocation2 + $0x158] sm:$0x3] %v2814
      %2819 = vrot.lane.b32.xlu0 %v2587, 127
      %v2820 = vpop.permute.xlu0 %2819
      %2821 = vrot.lane.b32.xlu0 %v2588, 127
      %v2822 = vpop.permute.xlu0 %2821
      %2823 = vrot.lane.b32.xlu0 %v2589, 127
      %v2824 = vpop.permute.xlu0 %2823
      %2825 = vrot.lane.b32.xlu0 %v2590, 127
      %v2826 = vpop.permute.xlu0 %2825
      %v2827 = vsel %vm452, %v2824, %v2826
      %v2828 = vsel %vm452, %v2822, %v2824
      %v2829 = vsel %vm452, %v2820, %v2822
      %v2830 = vsel %vm452, %v2826, %v2820
      %v2831 = vld [vmem:[%s457] ss:$8 sm:$0xf]
      %v2833 = vlaneseq
      %v2834 = vshrl.u32 %v2833, 7
      %v2835 = vsub.s32 0, %v2834
      %v2836 = vrot.slane %v2831, %v2835
      %v2837 = vlaneseq
      %v2838 = vshrl.u32 %v2837, 7
      %v2839 = vsub.s32 1, %v2838
      %v2840 = vrot.slane %v2831, %v2839
      %v2841 = vlaneseq
      %v2842 = vshrl.u32 %v2841, 7
      %v2843 = vsub.s32 2, %v2842
      %v2844 = vrot.slane %v2831, %v2843
      %v2845 = vlaneseq
      %v2846 = vshrl.u32 %v2845, 7
      %v2847 = vsub.s32 3, %v2846
      %v2848 = vrot.slane %v2831, %v2847
      %v2853 = vmul.f32 %v2829, %v2836
      %v2854 = vmul.f32 %v2828, %v2840
      %v2855 = vmul.f32 %v2827, %v2844
      %v2856 = vmul.f32 %v2830, %v2848
      %v2857 = vpack.c.bf16 %v2853, %v2853
      %v2858 = vpack.c.bf16 %v2854, %v2854
      %v2859 = vpack.c.bf16 %v2855, %v2855
      %v2860 = vpack.c.bf16 %v2856, %v2856
      %v2865 = vrot.slane %v2857, 6
      %v2866 = vrot.slane %v2858, 6
      %v2867 = vrot.slane %v2859, 6
      %v2868 = vrot.slane %v2860, 6
      %2873 = vst [vmem:[#allocation2 + $0x140] sm:$0xc] %v2865
      %2874 = vst [vmem:[#allocation2 + $0x148] sm:$0xc] %v2866
      %2875 = vst [vmem:[#allocation2 + $0x150] sm:$0xc] %v2867
      %2876 = vst [vmem:[#allocation2 + $0x158] sm:$0xc] %v2868
      %2877 = vrot.lane.b32.xlu0 %v2587, 113
      %v2878 = vpop.permute.xlu0 %2877
      %2879 = vrot.lane.b32.xlu0 %v2588, 113
      %v2880 = vpop.permute.xlu0 %2879
      %2881 = vrot.lane.b32.xlu0 %v2589, 113
      %v2882 = vpop.permute.xlu0 %2881
      %2883 = vrot.lane.b32.xlu0 %v2590, 113
      %v2884 = vpop.permute.xlu0 %2883
      %v2885 = vsel %vm512, %v2882, %v2884
      %v2886 = vsel %vm512, %v2880, %v2882
      %v2887 = vsel %vm512, %v2878, %v2880
      %v2888 = vsel %vm512, %v2884, %v2878
      %v2889 = vld [vmem:[%s517] ss:$8 sm:$0xf]
      %v2891 = vlaneseq
      %v2892 = vshrl.u32 %v2891, 7
      %v2893 = vsub.s32 0, %v2892
      %v2894 = vrot.slane %v2889, %v2893
      %v2895 = vlaneseq
      %v2896 = vshrl.u32 %v2895, 7
      %v2897 = vsub.s32 1, %v2896
      %v2898 = vrot.slane %v2889, %v2897
      %v2899 = vlaneseq
      %v2900 = vshrl.u32 %v2899, 7
      %v2901 = vsub.s32 2, %v2900
      %v2902 = vrot.slane %v2889, %v2901
      %v2903 = vlaneseq
      %v2904 = vshrl.u32 %v2903, 7
      %v2905 = vsub.s32 3, %v2904
      %v2906 = vrot.slane %v2889, %v2905
      %v2911 = vmul.f32 %v2887, %v2894
      %v2912 = vmul.f32 %v2886, %v2898
      %v2913 = vmul.f32 %v2885, %v2902
      %v2914 = vmul.f32 %v2888, %v2906
      %v2915 = vpack.c.bf16 %v2911, %v2911
      %v2916 = vpack.c.bf16 %v2912, %v2912
      %v2917 = vpack.c.bf16 %v2913, %v2913
      %v2918 = vpack.c.bf16 %v2914, %v2914
      %v2923 = vrot.slane %v2915, 4
      %v2924 = vrot.slane %v2916, 4
      %v2925 = vrot.slane %v2917, 4
      %v2926 = vrot.slane %v2918, 4
      %2931 = vst [vmem:[#allocation2 + $0x140] sm:$0x30] %v2923
      %2932 = vst [vmem:[#allocation2 + $0x148] sm:$0x30] %v2924
      %2933 = vst [vmem:[#allocation2 + $0x150] sm:$0x30] %v2925
      %2934 = vst [vmem:[#allocation2 + $0x158] sm:$0x30] %v2926
      %2935 = vrot.lane.b32.xlu0 %v2587, 112
      %v2936 = vpop.permute.xlu0 %2935
      %2937 = vrot.lane.b32.xlu0 %v2588, 112
      %v2938 = vpop.permute.xlu0 %2937
      %2939 = vrot.lane.b32.xlu0 %v2589, 112
      %v2940 = vpop.permute.xlu0 %2939
      %2941 = vrot.lane.b32.xlu0 %v2590, 112
      %v2942 = vpop.permute.xlu0 %2941
      %v2943 = vsel %vm572, %v2940, %v2942
      %v2944 = vsel %vm572, %v2938, %v2940
      %v2945 = vsel %vm572, %v2936, %v2938
      %v2946 = vsel %vm572, %v2942, %v2936
      %v2947 = vld [vmem:[%s577] ss:$8 sm:$0xf]
      %v2949 = vlaneseq
      %v2950 = vshrl.u32 %v2949, 7
      %v2951 = vsub.s32 0, %v2950
      %v2952 = vrot.slane %v2947, %v2951
      %v2953 = vlaneseq
      %v2954 = vshrl.u32 %v2953, 7
      %v2955 = vsub.s32 1, %v2954
      %v2956 = vrot.slane %v2947, %v2955
      %v2957 = vlaneseq
      %v2958 = vshrl.u32 %v2957, 7
      %v2959 = vsub.s32 2, %v2958
      %v2960 = vrot.slane %v2947, %v2959
      %v2961 = vlaneseq
      %v2962 = vshrl.u32 %v2961, 7
      %v2963 = vsub.s32 3, %v2962
      %v2964 = vrot.slane %v2947, %v2963
      %v2969 = vmul.f32 %v2945, %v2952
      %v2970 = vmul.f32 %v2944, %v2956
      %v2971 = vmul.f32 %v2943, %v2960
      %v2972 = vmul.f32 %v2946, %v2964
      %v2973 = vpack.c.bf16 %v2969, %v2969
      %v2974 = vpack.c.bf16 %v2970, %v2970
      %v2975 = vpack.c.bf16 %v2971, %v2971
      %v2976 = vpack.c.bf16 %v2972, %v2972
      %v2981 = vrot.slane %v2973, 2
      %v2982 = vrot.slane %v2974, 2
      %v2983 = vrot.slane %v2975, 2
      %v2984 = vrot.slane %v2976, 2
      %2989 = vst [vmem:[#allocation2 + $0x140] sm:$0xc0] %v2981
      %2990 = vst [vmem:[#allocation2 + $0x148] sm:$0xc0] %v2982
      %2991 = vst [vmem:[#allocation2 + $0x150] sm:$0xc0] %v2983
      %2992 = vst [vmem:[#allocation2 + $0x158] sm:$0xc0] %v2984
      %2993 = vrot.lane.b32.xlu0 %v2587, 111
      %v2994 = vpop.permute.xlu0 %2993
      %2995 = vrot.lane.b32.xlu0 %v2588, 111
      %v2996 = vpop.permute.xlu0 %2995
      %2997 = vrot.lane.b32.xlu0 %v2589, 111
      %v2998 = vpop.permute.xlu0 %2997
      %2999 = vrot.lane.b32.xlu0 %v2590, 111
      %v3000 = vpop.permute.xlu0 %2999
      %v3001 = vsel %vm632, %v2998, %v3000
      %v3002 = vsel %vm632, %v2996, %v2998
      %v3003 = vsel %vm632, %v2994, %v2996
      %v3004 = vsel %vm632, %v3000, %v2994
      %v3005 = vld [vmem:[%s637] ss:$8 sm:$0xf]
      %v3007 = vlaneseq
      %v3008 = vshrl.u32 %v3007, 7
      %v3009 = vsub.s32 0, %v3008
      %v3010 = vrot.slane %v3005, %v3009
      %v3011 = vlaneseq
      %v3012 = vshrl.u32 %v3011, 7
      %v3013 = vsub.s32 1, %v3012
      %v3014 = vrot.slane %v3005, %v3013
      %v3015 = vlaneseq
      %v3016 = vshrl.u32 %v3015, 7
      %v3017 = vsub.s32 2, %v3016
      %v3018 = vrot.slane %v3005, %v3017
      %v3019 = vlaneseq
      %v3020 = vshrl.u32 %v3019, 7
      %v3021 = vsub.s32 3, %v3020
      %v3022 = vrot.slane %v3005, %v3021
      %v3027 = vmul.f32 %v3003, %v3010
      %v3028 = vmul.f32 %v3002, %v3014
      %v3029 = vmul.f32 %v3001, %v3018
      %v3030 = vmul.f32 %v3004, %v3022
      %v3031 = vpack.c.bf16 %v3027, %v3027
      %v3032 = vpack.c.bf16 %v3028, %v3028
      %v3033 = vpack.c.bf16 %v3029, %v3029
      %v3034 = vpack.c.bf16 %v3030, %v3030
      %3035 = vst [vmem:[#allocation2 + $0x160] sm:$0x3] %v3031
      %3036 = vst [vmem:[#allocation2 + $0x168] sm:$0x3] %v3032
      %3037 = vst [vmem:[#allocation2 + $0x170] sm:$0x3] %v3033
      %3038 = vst [vmem:[#allocation2 + $0x178] sm:$0x3] %v3034
      %s3039 = scalar_lea.vmem %s1, 16
      %v3040 = vld [vmem:[%s3039] sm:$0xf]
      %v3041 = vld [vmem:[#allocation2] sm:$0xff]
      %v3042 = vld [vmem:[#allocation2 + $0x8] sm:$0xff]
      %v3043 = vld [vmem:[#allocation2 + $0x10] sm:$0xff]
      %v3044 = vld [vmem:[#allocation2 + $0x18] sm:$0xff]
      %v3045 = vld [vmem:[#allocation2 + $0x20] sm:$0xff]
      %v3046 = vld [vmem:[#allocation2 + $0x28] sm:$0xff]
      %v3047 = vld [vmem:[#allocation2 + $0x30] sm:$0xff]
      %v3048 = vld [vmem:[#allocation2 + $0x38] sm:$0xff]
      %v3049 = vld [vmem:[#allocation2 + $0x40] sm:$0xff]
      %v3050 = vld [vmem:[#allocation2 + $0x48] sm:$0xff]
      %v3051 = vld [vmem:[#allocation2 + $0x50] sm:$0xff]
      %v3052 = vld [vmem:[#allocation2 + $0x58] sm:$0xff]
      %v3053 = vld [vmem:[#allocation2 + $0x60] sm:$0xff]
      %v3054 = vld [vmem:[#allocation2 + $0x68] sm:$0xff]
      %v3055 = vld [vmem:[#allocation2 + $0x70] sm:$0xff]
      %v3056 = vld [vmem:[#allocation2 + $0x78] sm:$0xff]
      %v3057 = vld [vmem:[#allocation2 + $0x80] sm:$0xff]
      %v3058 = vld [vmem:[#allocation2 + $0x88] sm:$0xff]
      %v3059 = vld [vmem:[#allocation2 + $0x90] sm:$0xff]
      %v3060 = vld [vmem:[#allocation2 + $0x98] sm:$0xff]
      %v3061 = vld [vmem:[#allocation2 + $0xa0] sm:$0xff]
      %v3062 = vld [vmem:[#allocation2 + $0xa8] sm:$0xff]
      %v3063 = vld [vmem:[#allocation2 + $0xb0] sm:$0xff]
      %v3064 = vld [vmem:[#allocation2 + $0xb8] sm:$0xff]
      %v3065 = vld [vmem:[#allocation2 + $0xc0] sm:$0xff]
      %v3066 = vld [vmem:[#allocation2 + $0xc8] sm:$0xff]
      %v3067 = vld [vmem:[#allocation2 + $0xd0] sm:$0xff]
      %v3068 = vld [vmem:[#allocation2 + $0xd8] sm:$0xff]
      %v3069 = vld [vmem:[#allocation2 + $0xe0] sm:$0xff]
      %v3070 = vld [vmem:[#allocation2 + $0xe8] sm:$0xff]
      %v3071 = vld [vmem:[#allocation2 + $0xf0] sm:$0xff]
      %v3072 = vld [vmem:[#allocation2 + $0xf8] sm:$0xff]
      %v3073 = vld [vmem:[#allocation2 + $0x100] sm:$0xff]
      %v3074 = vld [vmem:[#allocation2 + $0x108] sm:$0xff]
      %v3075 = vld [vmem:[#allocation2 + $0x110] sm:$0xff]
      %v3076 = vld [vmem:[#allocation2 + $0x118] sm:$0xff]
      %v3077 = vld [vmem:[#allocation2 + $0x120] sm:$0xff]
      %v3078 = vld [vmem:[#allocation2 + $0x128] sm:$0xff]
      %v3079 = vld [vmem:[#allocation2 + $0x130] sm:$0xff]
      %v3080 = vld [vmem:[#allocation2 + $0x138] sm:$0xff]
      %v3081 = vld [vmem:[#allocation2 + $0x140] sm:$0xff]
      %v3082 = vld [vmem:[#allocation2 + $0x148] sm:$0xff]
      %v3083 = vld [vmem:[#allocation2 + $0x150] sm:$0xff]
      %v3084 = vld [vmem:[#allocation2 + $0x158] sm:$0xff]
      %v3085 = vld [vmem:[#allocation2 + $0x160] sm:$0x3]
      %v3086 = vld [vmem:[#allocation2 + $0x168] sm:$0x3]
      %v3087 = vld [vmem:[#allocation2 + $0x170] sm:$0x3]
      %v3088 = vld [vmem:[#allocation2 + $0x178] sm:$0x3]
      %s3089 = scalar_lea.vmem %s2, 16
      %v3090 = vld [vmem:[%s3089] sm:$0xf]
      %3092 = vset.pattern.permute.xlu0 0
      %3093 = vperm.xlu0 %3092, %v3090
      %v3094 = vpop.permute.xlu0 %3093
      %v3098 = vunpack.c.l.s4 1983009808
      %v3099 = vunpack.c.0.s8 %v3098
      %v3100 = vlaneseq
      %v3101 = vshrl.u32 %v3100, 7
      %v3102 = vsub.s32 %v3099, %v3101
      %v3103 = vrot.slane %v3040, %v3102
      %v3104 = vcombine.high %v3103, %v3103
      %vm3106 = vcmask 424960
      %v3108 = vsel %vm3106, %v3104, 0
      %v3111 = vsel %vm695, %v3085, 0
      %v3114 = vsel %vm695, %v3086, 0
      %v3117 = vsel %vm695, %v3087, 0
      %v3120 = vsel %vm695, %v3088, 0
      %3122 = vmatprep.subr.bf16.mxu0 %v3042
      %3123 = vmatpush1.bf16.msra.mxu0 %v3041
      %3124 = vmatprep.subr.bf16.mxu0 %v3046
      %3125 = vmatpush1.bf16.msra.mxu0 %v3045
      %3126 = vmatprep.subr.bf16.mxu0 %v3050
      %3127 = vmatpush1.bf16.msra.mxu0 %v3049
      %3128 = vmatprep.subr.bf16.mxu0 %v3054
      %3129 = vmatpush1.bf16.msra.mxu0 %v3053
      %3130 = vmatprep.subr.bf16.mxu0 %v3058
      %3131 = vmatpush1.bf16.msra.mxu0 %v3057
      %3132 = vmatprep.subr.bf16.mxu0 %v3062
      %3133 = vmatpush1.bf16.msra.mxu0 %v3061
      %3134 = vmatprep.subr.bf16.mxu0 %v3066
      %3135 = vmatpush1.bf16.msra.mxu0 %v3065
      %3136 = vmatprep.subr.bf16.mxu0 %v3070
      %3137 = vmatpush1.bf16.msra.mxu0 %v3069
      %3138 = vmatprep.subr.bf16.mxu0 %v3074
      %3139 = vmatpush1.bf16.msra.mxu0 %v3073
      %3140 = vmatprep.subr.bf16.mxu0 %v3078
      %3141 = vmatpush1.bf16.msra.mxu0 %v3077
      %3142 = vmatprep.subr.bf16.mxu0 %v3082
      %3143 = vmatpush1.bf16.msra.mxu0 %v3081
      %3144 = vmatprep.subr.bf16.mxu0 %v3114
      %3145 = vmatpush1.bf16.msra.mxu0 %v3111
      %3146 = vmatprep.subr.bf16.mxu0 0
      %3147 = vmatpush1.bf16.msra.mxu0 0
      %3148 = vmatprep.subr.bf16.mxu0 0
      %3149 = vmatpush1.bf16.msra.mxu0 0
      %3150 = vmatprep.subr.bf16.mxu0 0
      %3151 = vmatpush1.bf16.msra.mxu0 0
      %3152 = vmatprep.subr.bf16.mxu0 0
      %3153 = vmatpush1.bf16.msra.mxu0 0
      %3154 = vmatprep.mubr.bf16.mxu0 %v3108
      %3155 = vmatmul.mubr.bf16.gmra.mrb[0].mxu0 %v3103
      %v3156 = vpop.f32.mrb[0].mxu0
      %v3157 = vadd.f32 %v3094, %v3156
      %v3158 = vpop.f32.mrb[0].mxu0
      %v3159 = vadd.f32 %v3094, %v3158
      %v3160 = vpop.f32.mrb[0].mxu0
      %v3161 = vpop.f32.mrb[0].mxu0
      %3162 = vdwg.mxu0
      %3163 = vmatprep.subr.bf16.mxu0 %v3044
      %3164 = vmatpush1.bf16.msra.mxu0 %v3043
      %3165 = vmatprep.subr.bf16.mxu0 %v3048
      %3166 = vmatpush1.bf16.msra.mxu0 %v3047
      %3167 = vmatprep.subr.bf16.mxu0 %v3052
      %3168 = vmatpush1.bf16.msra.mxu0 %v3051
      %3169 = vmatprep.subr.bf16.mxu0 %v3056
      %3170 = vmatpush1.bf16.msra.mxu0 %v3055
      %3171 = vmatprep.subr.bf16.mxu0 %v3060
      %3172 = vmatpush1.bf16.msra.mxu0 %v3059
      %3173 = vmatprep.subr.bf16.mxu0 %v3064
      %3174 = vmatpush1.bf16.msra.mxu0 %v3063
      %3175 = vmatprep.subr.bf16.mxu0 %v3068
      %3176 = vmatpush1.bf16.msra.mxu0 %v3067
      %3177 = vmatprep.subr.bf16.mxu0 %v3072
      %3178 = vmatpush1.bf16.msra.mxu0 %v3071
      %3179 = vmatprep.subr.bf16.mxu0 %v3076
      %3180 = vmatpush1.bf16.msra.mxu0 %v3075
      %3181 = vmatprep.subr.bf16.mxu0 %v3080
      %3182 = vmatpush1.bf16.msra.mxu0 %v3079
      %3183 = vmatprep.subr.bf16.mxu0 %v3084
      %3184 = vmatpush1.bf16.msra.mxu0 %v3083
      %3185 = vmatprep.subr.bf16.mxu0 %v3120
      %3186 = vmatpush1.bf16.msra.mxu0 %v3117
      %3187 = vmatprep.subr.bf16.mxu0 0
      %3188 = vmatpush1.bf16.msra.mxu0 0
      %3189 = vmatprep.subr.bf16.mxu0 0
      %3190 = vmatpush1.bf16.msra.mxu0 0
      %3191 = vmatprep.subr.bf16.mxu0 0
      %3192 = vmatpush1.bf16.msra.mxu0 0
      %3193 = vmatprep.subr.bf16.mxu0 0
      %3194 = vmatpush1.bf16.msra.mxu0 0
      %3195 = vmatprep.mubr.bf16.mxu0 %v3108
      %3196 = vmatmul.mubr.bf16.gmra.mrb[0].mxu0 %v3103
      %v3197 = vpop.f32.mrb[0].mxu0
      %v3198 = vadd.f32 %v3094, %v3197
      %v3199 = vpop.f32.mrb[0].mxu0
      %v3200 = vadd.f32 %v3094, %v3199
      %v3201 = vpop.f32.mrb[0].mxu0
      %v3202 = vpop.f32.mrb[0].mxu0
      %3203 = vdwg.mxu0
      %v3204 = vmul.f32 %v3157, 0.2
      %v3205 = vmul.f32 %v3159, 0.2
      %v3206 = vmul.f32 %v3198, 0.2
      %v3207 = vmul.f32 %v3200, 0.2
      %v3208 = vadd.f32 %v3204, %v199
      %v3209 = vadd.f32 %v3205, %v203
      %v3210 = vadd.f32 %v3206, %v200
      %v3211 = vadd.f32 %v3207, %v204
      %3212 = vrot.lane.b32.xlu0 %v3208, 17
      %v3213 = vpop.permute.xlu0 %3212
      %3214 = vrot.lane.b32.xlu0 %v3209, 17
      %v3215 = vpop.permute.xlu0 %3214
      %3216 = vrot.lane.b32.xlu0 %v3210, 17
      %v3217 = vpop.permute.xlu0 %3216
      %3218 = vrot.lane.b32.xlu0 %v3211, 17
      %v3219 = vpop.permute.xlu0 %3218
      %v3220 = vsel %vm217, %v3217, %v3219
      %v3221 = vsel %vm217, %v3215, %v3217
      %v3222 = vsel %vm217, %v3213, %v3215
      %v3223 = vsel %vm217, %v3219, %v3213
      %v3224 = vld [vmem:[%s3] ss:$8 sm:$0xf]
      %v3226 = vlaneseq
      %v3227 = vshrl.u32 %v3226, 7
      %v3228 = vsub.s32 0, %v3227
      %v3229 = vrot.slane %v3224, %v3228
      %v3230 = vlaneseq
      %v3231 = vshrl.u32 %v3230, 7
      %v3232 = vsub.s32 1, %v3231
      %v3233 = vrot.slane %v3224, %v3232
      %v3234 = vlaneseq
      %v3235 = vshrl.u32 %v3234, 7
      %v3236 = vsub.s32 2, %v3235
      %v3237 = vrot.slane %v3224, %v3236
      %v3238 = vlaneseq
      %v3239 = vshrl.u32 %v3238, 7
      %v3240 = vsub.s32 3, %v3239
      %v3241 = vrot.slane %v3224, %v3240
      %v3246 = vmul.f32 %v3223, %v3229
      %v3247 = vmul.f32 %v3222, %v3233
      %v3248 = vmul.f32 %v3221, %v3237
      %v3249 = vmul.f32 %v3220, %v3241
      %v3250 = vpack.c.bf16 %v3246, %v3246
      %v3251 = vpack.c.bf16 %v3247, %v3247
      %v3252 = vpack.c.bf16 %v3248, %v3248
      %v3253 = vpack.c.bf16 %v3249, %v3249
      %3254 = vst [vmem:[#allocation2] sm:$0x3] %v3250
      %3255 = vst [vmem:[#allocation2 + $0x8] sm:$0x3] %v3251
      %3256 = vst [vmem:[#allocation2 + $0x10] sm:$0x3] %v3252
      %3257 = vst [vmem:[#allocation2 + $0x18] sm:$0x3] %v3253
      %3258 = vrot.lane.b32.xlu0 %v3208, 16
      %v3259 = vpop.permute.xlu0 %3258
      %3260 = vrot.lane.b32.xlu0 %v3209, 16
      %v3261 = vpop.permute.xlu0 %3260
      %3262 = vrot.lane.b32.xlu0 %v3210, 16
      %v3263 = vpop.permute.xlu0 %3262
      %3264 = vrot.lane.b32.xlu0 %v3211, 16
      %v3265 = vpop.permute.xlu0 %3264
      %v3266 = vsel %vm264, %v3263, %v3265
      %v3267 = vsel %vm264, %v3261, %v3263
      %v3268 = vsel %vm264, %v3259, %v3261
      %v3269 = vsel %vm264, %v3265, %v3259
      %v3270 = vld [vmem:[%s269] ss:$8 sm:$0xf]
      %v3272 = vlaneseq
      %v3273 = vshrl.u32 %v3272, 7
      %v3274 = vsub.s32 0, %v3273
      %v3275 = vrot.slane %v3270, %v3274
      %v3276 = vlaneseq
      %v3277 = vshrl.u32 %v3276, 7
      %v3278 = vsub.s32 1, %v3277
      %v3279 = vrot.slane %v3270, %v3278
      %v3280 = vlaneseq
      %v3281 = vshrl.u32 %v3280, 7
      %v3282 = vsub.s32 2, %v3281
      %v3283 = vrot.slane %v3270, %v3282
      %v3284 = vlaneseq
      %v3285 = vshrl.u32 %v3284, 7
      %v3286 = vsub.s32 3, %v3285
      %v3287 = vrot.slane %v3270, %v3286
      %v3292 = vmul.f32 %v3269, %v3275
      %v3293 = vmul.f32 %v3268, %v3279
      %v3294 = vmul.f32 %v3267, %v3283
      %v3295 = vmul.f32 %v3266, %v3287
      %v3296 = vpack.c.bf16 %v3292, %v3292
      %v3297 = vpack.c.bf16 %v3293, %v3293
      %v3298 = vpack.c.bf16 %v3294, %v3294
      %v3299 = vpack.c.bf16 %v3295, %v3295
      %v3304 = vrot.slane %v3296, 6
      %v3305 = vrot.slane %v3297, 6
      %v3306 = vrot.slane %v3298, 6
      %v3307 = vrot.slane %v3299, 6
      %3312 = vst [vmem:[#allocation2] sm:$0xc] %v3304
      %3313 = vst [vmem:[#allocation2 + $0x8] sm:$0xc] %v3305
      %3314 = vst [vmem:[#allocation2 + $0x10] sm:$0xc] %v3306
      %3315 = vst [vmem:[#allocation2 + $0x18] sm:$0xc] %v3307
      %3316 = vrot.lane.b32.xlu0 %v3208, 15
      %v3317 = vpop.permute.xlu0 %3316
      %3318 = vrot.lane.b32.xlu0 %v3209, 15
      %v3319 = vpop.permute.xlu0 %3318
      %3320 = vrot.lane.b32.xlu0 %v3210, 15
      %v3321 = vpop.permute.xlu0 %3320
      %3322 = vrot.lane.b32.xlu0 %v3211, 15
      %v3323 = vpop.permute.xlu0 %3322
      %v3324 = vsel %vm324, %v3321, %v3323
      %v3325 = vsel %vm324, %v3319, %v3321
      %v3326 = vsel %vm324, %v3317, %v3319
      %v3327 = vsel %vm324, %v3323, %v3317
      %v3328 = vld [vmem:[%s329] ss:$8 sm:$0xf]
      %v3330 = vlaneseq
      %v3331 = vshrl.u32 %v3330, 7
      %v3332 = vsub.s32 0, %v3331
      %v3333 = vrot.slane %v3328, %v3332
      %v3334 = vlaneseq
      %v3335 = vshrl.u32 %v3334, 7
      %v3336 = vsub.s32 1, %v3335
      %v3337 = vrot.slane %v3328, %v3336
      %v3338 = vlaneseq
      %v3339 = vshrl.u32 %v3338, 7
      %v3340 = vsub.s32 2, %v3339
      %v3341 = vrot.slane %v3328, %v3340
      %v3342 = vlaneseq
      %v3343 = vshrl.u32 %v3342, 7
      %v3344 = vsub.s32 3, %v3343
      %v3345 = vrot.slane %v3328, %v3344
      %v3350 = vmul.f32 %v3327, %v3333
      %v3351 = vmul.f32 %v3326, %v3337
      %v3352 = vmul.f32 %v3325, %v3341
      %v3353 = vmul.f32 %v3324, %v3345
      %v3354 = vpack.c.bf16 %v3350, %v3350
      %v3355 = vpack.c.bf16 %v3351, %v3351
      %v3356 = vpack.c.bf16 %v3352, %v3352
      %v3357 = vpack.c.bf16 %v3353, %v3353
      %v3362 = vrot.slane %v3354, 4
      %v3363 = vrot.slane %v3355, 4
      %v3364 = vrot.slane %v3356, 4
      %v3365 = vrot.slane %v3357, 4
      %3370 = vst [vmem:[#allocation2] sm:$0x30] %v3362
      %3371 = vst [vmem:[#allocation2 + $0x8] sm:$0x30] %v3363
      %3372 = vst [vmem:[#allocation2 + $0x10] sm:$0x30] %v3364
      %3373 = vst [vmem:[#allocation2 + $0x18] sm:$0x30] %v3365
      %3374 = vrot.lane.b32.xlu0 %v3208, 1
      %v3375 = vpop.permute.xlu0 %3374
      %3376 = vrot.lane.b32.xlu0 %v3209, 1
      %v3377 = vpop.permute.xlu0 %3376
      %3378 = vrot.lane.b32.xlu0 %v3210, 1
      %v3379 = vpop.permute.xlu0 %3378
      %3380 = vrot.lane.b32.xlu0 %v3211, 1
      %v3381 = vpop.permute.xlu0 %3380
      %v3382 = vsel %vm384, %v3379, %v3381
      %v3383 = vsel %vm384, %v3377, %v3379
      %v3384 = vsel %vm384, %v3375, %v3377
      %v3385 = vsel %vm384, %v3381, %v3375
      %v3386 = vld [vmem:[%s389] ss:$8 sm:$0xf]
      %v3388 = vlaneseq
      %v3389 = vshrl.u32 %v3388, 7
      %v3390 = vsub.s32 0, %v3389
      %v3391 = vrot.slane %v3386, %v3390
      %v3392 = vlaneseq
      %v3393 = vshrl.u32 %v3392, 7
      %v3394 = vsub.s32 1, %v3393
      %v3395 = vrot.slane %v3386, %v3394
      %v3396 = vlaneseq
      %v3397 = vshrl.u32 %v3396, 7
      %v3398 = vsub.s32 2, %v3397
      %v3399 = vrot.slane %v3386, %v3398
      %v3400 = vlaneseq
      %v3401 = vshrl.u32 %v3400, 7
      %v3402 = vsub.s32 3, %v3401
      %v3403 = vrot.slane %v3386, %v3402
      %v3408 = vmul.f32 %v3385, %v3391
      %v3409 = vmul.f32 %v3384, %v3395
      %v3410 = vmul.f32 %v3383, %v3399
      %v3411 = vmul.f32 %v3382, %v3403
      %v3412 = vpack.c.bf16 %v3408, %v3408
      %v3413 = vpack.c.bf16 %v3409, %v3409
      %v3414 = vpack.c.bf16 %v3410, %v3410
      %v3415 = vpack.c.bf16 %v3411, %v3411
      %v3420 = vrot.slane %v3412, 2
      %v3421 = vrot.slane %v3413, 2
      %v3422 = vrot.slane %v3414, 2
      %v3423 = vrot.slane %v3415, 2
      %3428 = vst [vmem:[#allocation2] sm:$0xc0] %v3420
      %3429 = vst [vmem:[#allocation2 + $0x8] sm:$0xc0] %v3421
      %3430 = vst [vmem:[#allocation2 + $0x10] sm:$0xc0] %v3422
      %3431 = vst [vmem:[#allocation2 + $0x18] sm:$0xc0] %v3423
      %v3432 = vpack.c.bf16 %v3208, %v3208
      %v3433 = vpack.c.bf16 %v3209, %v3209
      %v3434 = vpack.c.bf16 %v3210, %v3210
      %v3435 = vpack.c.bf16 %v3211, %v3211
      %3436 = vst [vmem:[#allocation2 + $0x20] sm:$0x3] %v3432
      %3437 = vst [vmem:[#allocation2 + $0x28] sm:$0x3] %v3433
      %3438 = vst [vmem:[#allocation2 + $0x30] sm:$0x3] %v3434
      %3439 = vst [vmem:[#allocation2 + $0x38] sm:$0x3] %v3435
      %3440 = vrot.lane.b32.xlu0 %v3208, 127
      %v3441 = vpop.permute.xlu0 %3440
      %3442 = vrot.lane.b32.xlu0 %v3209, 127
      %v3443 = vpop.permute.xlu0 %3442
      %3444 = vrot.lane.b32.xlu0 %v3210, 127
      %v3445 = vpop.permute.xlu0 %3444
      %3446 = vrot.lane.b32.xlu0 %v3211, 127
      %v3447 = vpop.permute.xlu0 %3446
      %v3448 = vsel %vm452, %v3445, %v3447
      %v3449 = vsel %vm452, %v3443, %v3445
      %v3450 = vsel %vm452, %v3441, %v3443
      %v3451 = vsel %vm452, %v3447, %v3441
      %v3452 = vld [vmem:[%s457] ss:$8 sm:$0xf]
      %v3454 = vlaneseq
      %v3455 = vshrl.u32 %v3454, 7
      %v3456 = vsub.s32 0, %v3455
      %v3457 = vrot.slane %v3452, %v3456
      %v3458 = vlaneseq
      %v3459 = vshrl.u32 %v3458, 7
      %v3460 = vsub.s32 1, %v3459
      %v3461 = vrot.slane %v3452, %v3460
      %v3462 = vlaneseq
      %v3463 = vshrl.u32 %v3462, 7
      %v3464 = vsub.s32 2, %v3463
      %v3465 = vrot.slane %v3452, %v3464
      %v3466 = vlaneseq
      %v3467 = vshrl.u32 %v3466, 7
      %v3468 = vsub.s32 3, %v3467
      %v3469 = vrot.slane %v3452, %v3468
      %v3474 = vmul.f32 %v3450, %v3457
      %v3475 = vmul.f32 %v3449, %v3461
      %v3476 = vmul.f32 %v3448, %v3465
      %v3477 = vmul.f32 %v3451, %v3469
      %v3478 = vpack.c.bf16 %v3474, %v3474
      %v3479 = vpack.c.bf16 %v3475, %v3475
      %v3480 = vpack.c.bf16 %v3476, %v3476
      %v3481 = vpack.c.bf16 %v3477, %v3477
      %v3486 = vrot.slane %v3478, 6
      %v3487 = vrot.slane %v3479, 6
      %v3488 = vrot.slane %v3480, 6
      %v3489 = vrot.slane %v3481, 6
      %3494 = vst [vmem:[#allocation2 + $0x20] sm:$0xc] %v3486
      %3495 = vst [vmem:[#allocation2 + $0x28] sm:$0xc] %v3487
      %3496 = vst [vmem:[#allocation2 + $0x30] sm:$0xc] %v3488
      %3497 = vst [vmem:[#allocation2 + $0x38] sm:$0xc] %v3489
      %3498 = vrot.lane.b32.xlu0 %v3208, 113
      %v3499 = vpop.permute.xlu0 %3498
      %3500 = vrot.lane.b32.xlu0 %v3209, 113
      %v3501 = vpop.permute.xlu0 %3500
      %3502 = vrot.lane.b32.xlu0 %v3210, 113
      %v3503 = vpop.permute.xlu0 %3502
      %3504 = vrot.lane.b32.xlu0 %v3211, 113
      %v3505 = vpop.permute.xlu0 %3504
      %v3506 = vsel %vm512, %v3503, %v3505
      %v3507 = vsel %vm512, %v3501, %v3503
      %v3508 = vsel %vm512, %v3499, %v3501
      %v3509 = vsel %vm512, %v3505, %v3499
      %v3510 = vld [vmem:[%s517] ss:$8 sm:$0xf]
      %v3512 = vlaneseq
      %v3513 = vshrl.u32 %v3512, 7
      %v3514 = vsub.s32 0, %v3513
      %v3515 = vrot.slane %v3510, %v3514
      %v3516 = vlaneseq
      %v3517 = vshrl.u32 %v3516, 7
      %v3518 = vsub.s32 1, %v3517
      %v3519 = vrot.slane %v3510, %v3518
      %v3520 = vlaneseq
      %v3521 = vshrl.u32 %v3520, 7
      %v3522 = vsub.s32 2, %v3521
      %v3523 = vrot.slane %v3510, %v3522
      %v3524 = vlaneseq
      %v3525 = vshrl.u32 %v3524, 7
      %v3526 = vsub.s32 3, %v3525
      %v3527 = vrot.slane %v3510, %v3526
      %v3532 = vmul.f32 %v3508, %v3515
      %v3533 = vmul.f32 %v3507, %v3519
      %v3534 = vmul.f32 %v3506, %v3523
      %v3535 = vmul.f32 %v3509, %v3527
      %v3536 = vpack.c.bf16 %v3532, %v3532
      %v3537 = vpack.c.bf16 %v3533, %v3533
      %v3538 = vpack.c.bf16 %v3534, %v3534
      %v3539 = vpack.c.bf16 %v3535, %v3535
      %v3544 = vrot.slane %v3536, 4
      %v3545 = vrot.slane %v3537, 4
      %v3546 = vrot.slane %v3538, 4
      %v3547 = vrot.slane %v3539, 4
      %3552 = vst [vmem:[#allocation2 + $0x20] sm:$0x30] %v3544
      %3553 = vst [vmem:[#allocation2 + $0x28] sm:$0x30] %v3545
      %3554 = vst [vmem:[#allocation2 + $0x30] sm:$0x30] %v3546
      %3555 = vst [vmem:[#allocation2 + $0x38] sm:$0x30] %v3547
      %3556 = vrot.lane.b32.xlu0 %v3208, 112
      %v3557 = vpop.permute.xlu0 %3556
      %3558 = vrot.lane.b32.xlu0 %v3209, 112
      %v3559 = vpop.permute.xlu0 %3558
      %3560 = vrot.lane.b32.xlu0 %v3210, 112
      %v3561 = vpop.permute.xlu0 %3560
      %3562 = vrot.lane.b32.xlu0 %v3211, 112
      %v3563 = vpop.permute.xlu0 %3562
      %v3564 = vsel %vm572, %v3561, %v3563
      %v3565 = vsel %vm572, %v3559, %v3561
      %v3566 = vsel %vm572, %v3557, %v3559
      %v3567 = vsel %vm572, %v3563, %v3557
      %v3568 = vld [vmem:[%s577] ss:$8 sm:$0xf]
      %v3570 = vlaneseq
      %v3571 = vshrl.u32 %v3570, 7
      %v3572 = vsub.s32 0, %v3571
      %v3573 = vrot.slane %v3568, %v3572
      %v3574 = vlaneseq
      %v3575 = vshrl.u32 %v3574, 7
      %v3576 = vsub.s32 1, %v3575
      %v3577 = vrot.slane %v3568, %v3576
      %v3578 = vlaneseq
      %v3579 = vshrl.u32 %v3578, 7
      %v3580 = vsub.s32 2, %v3579
      %v3581 = vrot.slane %v3568, %v3580
      %v3582 = vlaneseq
      %v3583 = vshrl.u32 %v3582, 7
      %v3584 = vsub.s32 3, %v3583
      %v3585 = vrot.slane %v3568, %v3584
      %v3590 = vmul.f32 %v3566, %v3573
      %v3591 = vmul.f32 %v3565, %v3577
      %v3592 = vmul.f32 %v3564, %v3581
      %v3593 = vmul.f32 %v3567, %v3585
      %v3594 = vpack.c.bf16 %v3590, %v3590
      %v3595 = vpack.c.bf16 %v3591, %v3591
      %v3596 = vpack.c.bf16 %v3592, %v3592
      %v3597 = vpack.c.bf16 %v3593, %v3593
      %v3602 = vrot.slane %v3594, 2
      %v3603 = vrot.slane %v3595, 2
      %v3604 = vrot.slane %v3596, 2
      %v3605 = vrot.slane %v3597, 2
      %3610 = vst [vmem:[#allocation2 + $0x20] sm:$0xc0] %v3602
      %3611 = vst [vmem:[#allocation2 + $0x28] sm:$0xc0] %v3603
      %3612 = vst [vmem:[#allocation2 + $0x30] sm:$0xc0] %v3604
      %3613 = vst [vmem:[#allocation2 + $0x38] sm:$0xc0] %v3605
      %3614 = vrot.lane.b32.xlu0 %v3208, 111
      %v3615 = vpop.permute.xlu0 %3614
      %3616 = vrot.lane.b32.xlu0 %v3209, 111
      %v3617 = vpop.permute.xlu0 %3616
      %3618 = vrot.lane.b32.xlu0 %v3210, 111
      %v3619 = vpop.permute.xlu0 %3618
      %3620 = vrot.lane.b32.xlu0 %v3211, 111
      %v3621 = vpop.permute.xlu0 %3620
      %v3622 = vsel %vm632, %v3619, %v3621
      %v3623 = vsel %vm632, %v3617, %v3619
      %v3624 = vsel %vm632, %v3615, %v3617
      %v3625 = vsel %vm632, %v3621, %v3615
      %v3626 = vld [vmem:[%s637] ss:$8 sm:$0xf]
      %v3628 = vlaneseq
      %v3629 = vshrl.u32 %v3628, 7
      %v3630 = vsub.s32 0, %v3629
      %v3631 = vrot.slane %v3626, %v3630
      %v3632 = vlaneseq
      %v3633 = vshrl.u32 %v3632, 7
      %v3634 = vsub.s32 1, %v3633
      %v3635 = vrot.slane %v3626, %v3634
      %v3636 = vlaneseq
      %v3637 = vshrl.u32 %v3636, 7
      %v3638 = vsub.s32 2, %v3637
      %v3639 = vrot.slane %v3626, %v3638
      %v3640 = vlaneseq
      %v3641 = vshrl.u32 %v3640, 7
      %v3642 = vsub.s32 3, %v3641
      %v3643 = vrot.slane %v3626, %v3642
      %v3648 = vmul.f32 %v3624, %v3631
      %v3649 = vmul.f32 %v3623, %v3635
      %v3650 = vmul.f32 %v3622, %v3639
      %v3651 = vmul.f32 %v3625, %v3643
      %v3652 = vpack.c.bf16 %v3648, %v3648
      %v3653 = vpack.c.bf16 %v3649, %v3649
      %v3654 = vpack.c.bf16 %v3650, %v3650
      %v3655 = vpack.c.bf16 %v3651, %v3651
      %3656 = vst [vmem:[#allocation2 + $0x40] sm:$0x3] %v3652
      %3657 = vst [vmem:[#allocation2 + $0x48] sm:$0x3] %v3653
      %3658 = vst [vmem:[#allocation2 + $0x50] sm:$0x3] %v3654
      %3659 = vst [vmem:[#allocation2 + $0x58] sm:$0x3] %v3655
      %s3660 = scalar_lea.vmem %s1, 20
      %v3661 = vld [vmem:[%s3660] sm:$0xf]
      %v3662 = vld [vmem:[#allocation2] sm:$0xff]
      %v3663 = vld [vmem:[#allocation2 + $0x8] sm:$0xff]
      %v3664 = vld [vmem:[#allocation2 + $0x10] sm:$0xff]
      %v3665 = vld [vmem:[#allocation2 + $0x18] sm:$0xff]
      %v3666 = vld [vmem:[#allocation2 + $0x20] sm:$0xff]
      %v3667 = vld [vmem:[#allocation2 + $0x28] sm:$0xff]
      %v3668 = vld [vmem:[#allocation2 + $0x30] sm:$0xff]
      %v3669 = vld [vmem:[#allocation2 + $0x38] sm:$0xff]
      %v3670 = vld [vmem:[#allocation2 + $0x40] sm:$0x3]
      %v3671 = vld [vmem:[#allocation2 + $0x48] sm:$0x3]
      %v3672 = vld [vmem:[#allocation2 + $0x50] sm:$0x3]
      %v3673 = vld [vmem:[#allocation2 + $0x58] sm:$0x3]
      %s3674 = scalar_lea.vmem %s2, 20
      %v3675 = vld [vmem:[%s3674] sm:$0xf]
      %3677 = vset.pattern.permute.xlu0 0
      %3678 = vperm.xlu0 %3677, %v3675
      %v3679 = vpop.permute.xlu0 %3678
      %v3682 = vsel %vm691, %v3661, 0
      %v3685 = vsel %vm695, %v3670, 0
      %v3688 = vsel %vm695, %v3671, 0
      %v3691 = vsel %vm695, %v3672, 0
      %v3694 = vsel %vm695, %v3673, 0
      %3696 = vmatprep.subr.bf16.mxu0 %v3663
      %3697 = vmatpush1.bf16.msra.mxu0 %v3662
      %3698 = vmatprep.subr.bf16.mxu0 %v3667
      %3699 = vmatpush1.bf16.msra.mxu0 %v3666
      %3700 = vmatprep.subr.bf16.mxu0 %v3688
      %3701 = vmatpush1.bf16.msra.mxu0 %v3685
      %3702 = vmatprep.subr.bf16.mxu0 0
      %3703 = vmatpush1.bf16.msra.mxu0 0
      %3704 = vmatprep.subr.bf16.mxu0 0
      %3705 = vmatpush1.bf16.msra.mxu0 0
      %3706 = vmatprep.subr.bf16.mxu0 0
      %3707 = vmatpush1.bf16.msra.mxu0 0
      %3708 = vmatprep.subr.bf16.mxu0 0
      %3709 = vmatpush1.bf16.msra.mxu0 0
      %3710 = vmatprep.subr.bf16.mxu0 0
      %3711 = vmatpush1.bf16.msra.mxu0 0
      %3712 = vmatprep.subr.bf16.mxu0 0
      %3713 = vmatpush1.bf16.msra.mxu0 0
      %3714 = vmatprep.subr.bf16.mxu0 0
      %3715 = vmatpush1.bf16.msra.mxu0 0
      %3716 = vmatprep.subr.bf16.mxu0 0
      %3717 = vmatpush1.bf16.msra.mxu0 0
      %3718 = vmatprep.subr.bf16.mxu0 0
      %3719 = vmatpush1.bf16.msra.mxu0 0
      %3720 = vmatprep.subr.bf16.mxu0 0
      %3721 = vmatpush1.bf16.msra.mxu0 0
      %3722 = vmatprep.subr.bf16.mxu0 0
      %3723 = vmatpush1.bf16.msra.mxu0 0
      %3724 = vmatprep.subr.bf16.mxu0 0
      %3725 = vmatpush1.bf16.msra.mxu0 0
      %3726 = vmatprep.subr.bf16.mxu0 0
      %3727 = vmatpush1.bf16.msra.mxu0 0
      %3728 = vmatprep.mubr.bf16.mxu0 0
      %3729 = vmatmul.mubr.bf16.gmra.mrb[0].mxu0 %v3682
      %v3730 = vpop.f32.mrb[0].mxu0
      %v3731 = vadd.f32 %v3679, %v3730
      %v3732 = vpop.f32.mrb[0].mxu0
      %v3733 = vadd.f32 %v3679, %v3732
      %v3734 = vpop.f32.mrb[0].mxu0
      %v3735 = vpop.f32.mrb[0].mxu0
      %3736 = vdwg.mxu0
      %3737 = vmatprep.subr.bf16.mxu0 %v3665
      %3738 = vmatpush1.bf16.msra.mxu0 %v3664
      %3739 = vmatprep.subr.bf16.mxu0 %v3669
      %3740 = vmatpush1.bf16.msra.mxu0 %v3668
      %3741 = vmatprep.subr.bf16.mxu0 %v3694
      %3742 = vmatpush1.bf16.msra.mxu0 %v3691
      %3743 = vmatprep.subr.bf16.mxu0 0
      %3744 = vmatpush1.bf16.msra.mxu0 0
      %3745 = vmatprep.subr.bf16.mxu0 0
      %3746 = vmatpush1.bf16.msra.mxu0 0
      %3747 = vmatprep.subr.bf16.mxu0 0
      %3748 = vmatpush1.bf16.msra.mxu0 0
      %3749 = vmatprep.subr.bf16.mxu0 0
      %3750 = vmatpush1.bf16.msra.mxu0 0
      %3751 = vmatprep.subr.bf16.mxu0 0
      %3752 = vmatpush1.bf16.msra.mxu0 0
      %3753 = vmatprep.subr.bf16.mxu0 0
      %3754 = vmatpush1.bf16.msra.mxu0 0
      %3755 = vmatprep.subr.bf16.mxu0 0
      %3756 = vmatpush1.bf16.msra.mxu0 0
      %3757 = vmatprep.subr.bf16.mxu0 0
      %3758 = vmatpush1.bf16.msra.mxu0 0
      %3759 = vmatprep.subr.bf16.mxu0 0
      %3760 = vmatpush1.bf16.msra.mxu0 0
      %3761 = vmatprep.subr.bf16.mxu0 0
      %3762 = vmatpush1.bf16.msra.mxu0 0
      %3763 = vmatprep.subr.bf16.mxu0 0
      %3764 = vmatpush1.bf16.msra.mxu0 0
      %3765 = vmatprep.subr.bf16.mxu0 0
      %3766 = vmatpush1.bf16.msra.mxu0 0
      %3767 = vmatprep.subr.bf16.mxu0 0
      %3768 = vmatpush1.bf16.msra.mxu0 0
      %3769 = vmatprep.mubr.bf16.mxu0 0
      %3770 = vmatmul.mubr.bf16.gmra.mrb[0].mxu0 %v3682
      %v3771 = vpop.f32.mrb[0].mxu0
      %v3772 = vadd.f32 %v3679, %v3771
      %v3773 = vpop.f32.mrb[0].mxu0
      %v3774 = vadd.f32 %v3679, %v3773
      %v3775 = vpop.f32.mrb[0].mxu0
      %v3776 = vpop.f32.mrb[0].mxu0
      %3777 = vdwg.mxu0
      %v3778 = vmax.f32 %v3731, 0.0
      %v3779 = vmax.f32 %v3733, 0.0
      %v3780 = vmax.f32 %v3772, 0.0
      %v3781 = vmax.f32 %v3774, 0.0
      %3782 = vrot.lane.b32.xlu0 %v3778, 17
      %v3783 = vpop.permute.xlu0 %3782
      %3784 = vrot.lane.b32.xlu0 %v3779, 17
      %v3785 = vpop.permute.xlu0 %3784
      %3786 = vrot.lane.b32.xlu0 %v3780, 17
      %v3787 = vpop.permute.xlu0 %3786
      %3788 = vrot.lane.b32.xlu0 %v3781, 17
      %v3789 = vpop.permute.xlu0 %3788
      %v3790 = vsel %vm217, %v3787, %v3789
      %v3791 = vsel %vm217, %v3785, %v3787
      %v3792 = vsel %vm217, %v3783, %v3785
      %v3793 = vsel %vm217, %v3789, %v3783
      %v3794 = vld [vmem:[%s3] ss:$8 sm:$0xf]
      %v3796 = vlaneseq
      %v3797 = vshrl.u32 %v3796, 7
      %v3798 = vsub.s32 0, %v3797
      %v3799 = vrot.slane %v3794, %v3798
      %v3800 = vlaneseq
      %v3801 = vshrl.u32 %v3800, 7
      %v3802 = vsub.s32 1, %v3801
      %v3803 = vrot.slane %v3794, %v3802
      %v3804 = vlaneseq
      %v3805 = vshrl.u32 %v3804, 7
      %v3806 = vsub.s32 2, %v3805
      %v3807 = vrot.slane %v3794, %v3806
      %v3808 = vlaneseq
      %v3809 = vshrl.u32 %v3808, 7
      %v3810 = vsub.s32 3, %v3809
      %v3811 = vrot.slane %v3794, %v3810
      %v3816 = vmul.f32 %v3793, %v3799
      %v3817 = vmul.f32 %v3792, %v3803
      %v3818 = vmul.f32 %v3791, %v3807
      %v3819 = vmul.f32 %v3790, %v3811
      %v3820 = vpack.c.bf16 %v3816, %v3816
      %v3821 = vpack.c.bf16 %v3817, %v3817
      %v3822 = vpack.c.bf16 %v3818, %v3818
      %v3823 = vpack.c.bf16 %v3819, %v3819
      %v3828 = vrot.slane %v3820, 6
      %v3829 = vrot.slane %v3821, 6
      %v3830 = vrot.slane %v3822, 6
      %v3831 = vrot.slane %v3823, 6
      %3836 = vst [vmem:[#allocation2 + $0x40] sm:$0xc] %v3828
      %3837 = vst [vmem:[#allocation2 + $0x48] sm:$0xc] %v3829
      %3838 = vst [vmem:[#allocation2 + $0x50] sm:$0xc] %v3830
      %3839 = vst [vmem:[#allocation2 + $0x58] sm:$0xc] %v3831
      %3840 = vrot.lane.b32.xlu0 %v3778, 16
      %v3841 = vpop.permute.xlu0 %3840
      %3842 = vrot.lane.b32.xlu0 %v3779, 16
      %v3843 = vpop.permute.xlu0 %3842
      %3844 = vrot.lane.b32.xlu0 %v3780, 16
      %v3845 = vpop.permute.xlu0 %3844
      %3846 = vrot.lane.b32.xlu0 %v3781, 16
      %v3847 = vpop.permute.xlu0 %3846
      %v3848 = vsel %vm264, %v3845, %v3847
      %v3849 = vsel %vm264, %v3843, %v3845
      %v3850 = vsel %vm264, %v3841, %v3843
      %v3851 = vsel %vm264, %v3847, %v3841
      %v3852 = vld [vmem:[%s269] ss:$8 sm:$0xf]
      %v3854 = vlaneseq
      %v3855 = vshrl.u32 %v3854, 7
      %v3856 = vsub.s32 0, %v3855
      %v3857 = vrot.slane %v3852, %v3856
      %v3858 = vlaneseq
      %v3859 = vshrl.u32 %v3858, 7
      %v3860 = vsub.s32 1, %v3859
      %v3861 = vrot.slane %v3852, %v3860
      %v3862 = vlaneseq
      %v3863 = vshrl.u32 %v3862, 7
      %v3864 = vsub.s32 2, %v3863
      %v3865 = vrot.slane %v3852, %v3864
      %v3866 = vlaneseq
      %v3867 = vshrl.u32 %v3866, 7
      %v3868 = vsub.s32 3, %v3867
      %v3869 = vrot.slane %v3852, %v3868
      %v3874 = vmul.f32 %v3851, %v3857
      %v3875 = vmul.f32 %v3850, %v3861
      %v3876 = vmul.f32 %v3849, %v3865
      %v3877 = vmul.f32 %v3848, %v3869
      %v3878 = vpack.c.bf16 %v3874, %v3874
      %v3879 = vpack.c.bf16 %v3875, %v3875
      %v3880 = vpack.c.bf16 %v3876, %v3876
      %v3881 = vpack.c.bf16 %v3877, %v3877
      %v3886 = vrot.slane %v3878, 4
      %v3887 = vrot.slane %v3879, 4
      %v3888 = vrot.slane %v3880, 4
      %v3889 = vrot.slane %v3881, 4
      %3894 = vst [vmem:[#allocation2 + $0x40] sm:$0x30] %v3886
      %3895 = vst [vmem:[#allocation2 + $0x48] sm:$0x30] %v3887
      %3896 = vst [vmem:[#allocation2 + $0x50] sm:$0x30] %v3888
      %3897 = vst [vmem:[#allocation2 + $0x58] sm:$0x30] %v3889
      %3898 = vrot.lane.b32.xlu0 %v3778, 15
      %v3899 = vpop.permute.xlu0 %3898
      %3900 = vrot.lane.b32.xlu0 %v3779, 15
      %v3901 = vpop.permute.xlu0 %3900
      %3902 = vrot.lane.b32.xlu0 %v3780, 15
      %v3903 = vpop.permute.xlu0 %3902
      %3904 = vrot.lane.b32.xlu0 %v3781, 15
      %v3905 = vpop.permute.xlu0 %3904
      %v3906 = vsel %vm324, %v3903, %v3905
      %v3907 = vsel %vm324, %v3901, %v3903
      %v3908 = vsel %vm324, %v3899, %v3901
      %v3909 = vsel %vm324, %v3905, %v3899
      %v3910 = vld [vmem:[%s329] ss:$8 sm:$0xf]
      %v3912 = vlaneseq
      %v3913 = vshrl.u32 %v3912, 7
      %v3914 = vsub.s32 0, %v3913
      %v3915 = vrot.slane %v3910, %v3914
      %v3916 = vlaneseq
      %v3917 = vshrl.u32 %v3916, 7
      %v3918 = vsub.s32 1, %v3917
      %v3919 = vrot.slane %v3910, %v3918
      %v3920 = vlaneseq
      %v3921 = vshrl.u32 %v3920, 7
      %v3922 = vsub.s32 2, %v3921
      %v3923 = vrot.slane %v3910, %v3922
      %v3924 = vlaneseq
      %v3925 = vshrl.u32 %v3924, 7
      %v3926 = vsub.s32 3, %v3925
      %v3927 = vrot.slane %v3910, %v3926
      %v3932 = vmul.f32 %v3909, %v3915
      %v3933 = vmul.f32 %v3908, %v3919
      %v3934 = vmul.f32 %v3907, %v3923
      %v3935 = vmul.f32 %v3906, %v3927
      %v3936 = vpack.c.bf16 %v3932, %v3932
      %v3937 = vpack.c.bf16 %v3933, %v3933
      %v3938 = vpack.c.bf16 %v3934, %v3934
      %v3939 = vpack.c.bf16 %v3935, %v3935
      %v3944 = vrot.slane %v3936, 2
      %v3945 = vrot.slane %v3937, 2
      %v3946 = vrot.slane %v3938, 2
      %v3947 = vrot.slane %v3939, 2
      %3952 = vst [vmem:[#allocation2 + $0x40] sm:$0xc0] %v3944
      %3953 = vst [vmem:[#allocation2 + $0x48] sm:$0xc0] %v3945
      %3954 = vst [vmem:[#allocation2 + $0x50] sm:$0xc0] %v3946
      %3955 = vst [vmem:[#allocation2 + $0x58] sm:$0xc0] %v3947
      %3956 = vrot.lane.b32.xlu0 %v3778, 1
      %v3957 = vpop.permute.xlu0 %3956
      %3958 = vrot.lane.b32.xlu0 %v3779, 1
      %v3959 = vpop.permute.xlu0 %3958
      %3960 = vrot.lane.b32.xlu0 %v3780, 1
      %v3961 = vpop.permute.xlu0 %3960
      %3962 = vrot.lane.b32.xlu0 %v3781, 1
      %v3963 = vpop.permute.xlu0 %3962
      %v3964 = vsel %vm384, %v3961, %v3963
      %v3965 = vsel %vm384, %v3959, %v3961
      %v3966 = vsel %vm384, %v3957, %v3959
      %v3967 = vsel %vm384, %v3963, %v3957
      %v3968 = vld [vmem:[%s389] ss:$8 sm:$0xf]
      %v3970 = vlaneseq
      %v3971 = vshrl.u32 %v3970, 7
      %v3972 = vsub.s32 0, %v3971
      %v3973 = vrot.slane %v3968, %v3972
      %v3974 = vlaneseq
      %v3975 = vshrl.u32 %v3974, 7
      %v3976 = vsub.s32 1, %v3975
      %v3977 = vrot.slane %v3968, %v3976
      %v3978 = vlaneseq
      %v3979 = vshrl.u32 %v3978, 7
      %v3980 = vsub.s32 2, %v3979
      %v3981 = vrot.slane %v3968, %v3980
      %v3982 = vlaneseq
      %v3983 = vshrl.u32 %v3982, 7
      %v3984 = vsub.s32 3, %v3983
      %v3985 = vrot.slane %v3968, %v3984
      %v3990 = vmul.f32 %v3967, %v3973
      %v3991 = vmul.f32 %v3966, %v3977
      %v3992 = vmul.f32 %v3965, %v3981
      %v3993 = vmul.f32 %v3964, %v3985
      %v3994 = vpack.c.bf16 %v3990, %v3990
      %v3995 = vpack.c.bf16 %v3991, %v3991
      %v3996 = vpack.c.bf16 %v3992, %v3992
      %v3997 = vpack.c.bf16 %v3993, %v3993
      %3998 = vst [vmem:[#allocation2 + $0x60] sm:$0x3] %v3994
      %3999 = vst [vmem:[#allocation2 + $0x68] sm:$0x3] %v3995
      %4000 = vst [vmem:[#allocation2 + $0x70] sm:$0x3] %v3996
      %4001 = vst [vmem:[#allocation2 + $0x78] sm:$0x3] %v3997
      %v4002 = vpack.c.bf16 %v3778, %v3778
      %v4003 = vpack.c.bf16 %v3779, %v3779
      %v4004 = vpack.c.bf16 %v3780, %v3780
      %v4005 = vpack.c.bf16 %v3781, %v3781
      %v4010 = vrot.slane %v4002, 6
      %v4011 = vrot.slane %v4003, 6
      %v4012 = vrot.slane %v4004, 6
      %v4013 = vrot.slane %v4005, 6
      %4018 = vst [vmem:[#allocation2 + $0x60] sm:$0xc] %v4010
      %4019 = vst [vmem:[#allocation2 + $0x68] sm:$0xc] %v4011
      %4020 = vst [vmem:[#allocation2 + $0x70] sm:$0xc] %v4012
      %4021 = vst [vmem:[#allocation2 + $0x78] sm:$0xc] %v4013
      %4022 = vrot.lane.b32.xlu0 %v3778, 127
      %v4023 = vpop.permute.xlu0 %4022
      %4024 = vrot.lane.b32.xlu0 %v3779, 127
      %v4025 = vpop.permute.xlu0 %4024
      %4026 = vrot.lane.b32.xlu0 %v3780, 127
      %v4027 = vpop.permute.xlu0 %4026
      %4028 = vrot.lane.b32.xlu0 %v3781, 127
      %v4029 = vpop.permute.xlu0 %4028
      %v4030 = vsel %vm452, %v4027, %v4029
      %v4031 = vsel %vm452, %v4025, %v4027
      %v4032 = vsel %vm452, %v4023, %v4025
      %v4033 = vsel %vm452, %v4029, %v4023
      %v4034 = vld [vmem:[%s457] ss:$8 sm:$0xf]
      %v4036 = vlaneseq
      %v4037 = vshrl.u32 %v4036, 7
      %v4038 = vsub.s32 0, %v4037
      %v4039 = vrot.slane %v4034, %v4038
      %v4040 = vlaneseq
      %v4041 = vshrl.u32 %v4040, 7
      %v4042 = vsub.s32 1, %v4041
      %v4043 = vrot.slane %v4034, %v4042
      %v4044 = vlaneseq
      %v4045 = vshrl.u32 %v4044, 7
      %v4046 = vsub.s32 2, %v4045
      %v4047 = vrot.slane %v4034, %v4046
      %v4048 = vlaneseq
      %v4049 = vshrl.u32 %v4048, 7
      %v4050 = vsub.s32 3, %v4049
      %v4051 = vrot.slane %v4034, %v4050
      %v4056 = vmul.f32 %v4032, %v4039
      %v4057 = vmul.f32 %v4031, %v4043
      %v4058 = vmul.f32 %v4030, %v4047
      %v4059 = vmul.f32 %v4033, %v4051
      %v4060 = vpack.c.bf16 %v4056, %v4056
      %v4061 = vpack.c.bf16 %v4057, %v4057
      %v4062 = vpack.c.bf16 %v4058, %v4058
      %v4063 = vpack.c.bf16 %v4059, %v4059
      %v4068 = vrot.slane %v4060, 4
      %v4069 = vrot.slane %v4061, 4
      %v4070 = vrot.slane %v4062, 4
      %v4071 = vrot.slane %v4063, 4
      %4076 = vst [vmem:[#allocation2 + $0x60] sm:$0x30] %v4068
      %4077 = vst [vmem:[#allocation2 + $0x68] sm:$0x30] %v4069
      %4078 = vst [vmem:[#allocation2 + $0x70] sm:$0x30] %v4070
      %4079 = vst [vmem:[#allocation2 + $0x78] sm:$0x30] %v4071
      %4080 = vrot.lane.b32.xlu0 %v3778, 113
      %v4081 = vpop.permute.xlu0 %4080
      %4082 = vrot.lane.b32.xlu0 %v3779, 113
      %v4083 = vpop.permute.xlu0 %4082
      %4084 = vrot.lane.b32.xlu0 %v3780, 113
      %v4085 = vpop.permute.xlu0 %4084
      %4086 = vrot.lane.b32.xlu0 %v3781, 113
      %v4087 = vpop.permute.xlu0 %4086
      %v4088 = vsel %vm512, %v4085, %v4087
      %v4089 = vsel %vm512, %v4083, %v4085
      %v4090 = vsel %vm512, %v4081, %v4083
      %v4091 = vsel %vm512, %v4087, %v4081
      %v4092 = vld [vmem:[%s517] ss:$8 sm:$0xf]
      %v4094 = vlaneseq
      %v4095 = vshrl.u32 %v4094, 7
      %v4096 = vsub.s32 0, %v4095
      %v4097 = vrot.slane %v4092, %v4096
      %v4098 = vlaneseq
      %v4099 = vshrl.u32 %v4098, 7
      %v4100 = vsub.s32 1, %v4099
      %v4101 = vrot.slane %v4092, %v4100
      %v4102 = vlaneseq
      %v4103 = vshrl.u32 %v4102, 7
      %v4104 = vsub.s32 2, %v4103
      %v4105 = vrot.slane %v4092, %v4104
      %v4106 = vlaneseq
      %v4107 = vshrl.u32 %v4106, 7
      %v4108 = vsub.s32 3, %v4107
      %v4109 = vrot.slane %v4092, %v4108
      %v4114 = vmul.f32 %v4090, %v4097
      %v4115 = vmul.f32 %v4089, %v4101
      %v4116 = vmul.f32 %v4088, %v4105
      %v4117 = vmul.f32 %v4091, %v4109
      %v4118 = vpack.c.bf16 %v4114, %v4114
      %v4119 = vpack.c.bf16 %v4115, %v4115
      %v4120 = vpack.c.bf16 %v4116, %v4116
      %v4121 = vpack.c.bf16 %v4117, %v4117
      %v4126 = vrot.slane %v4118, 2
      %v4127 = vrot.slane %v4119, 2
      %v4128 = vrot.slane %v4120, 2
      %v4129 = vrot.slane %v4121, 2
      %4134 = vst [vmem:[#allocation2 + $0x60] sm:$0xc0] %v4126
      %4135 = vst [vmem:[#allocation2 + $0x68] sm:$0xc0] %v4127
      %4136 = vst [vmem:[#allocation2 + $0x70] sm:$0xc0] %v4128
      %4137 = vst [vmem:[#allocation2 + $0x78] sm:$0xc0] %v4129
      %4138 = vrot.lane.b32.xlu0 %v3778, 112
      %v4139 = vpop.permute.xlu0 %4138
      %4140 = vrot.lane.b32.xlu0 %v3779, 112
      %v4141 = vpop.permute.xlu0 %4140
      %4142 = vrot.lane.b32.xlu0 %v3780, 112
      %v4143 = vpop.permute.xlu0 %4142
      %4144 = vrot.lane.b32.xlu0 %v3781, 112
      %v4145 = vpop.permute.xlu0 %4144
      %v4146 = vsel %vm572, %v4143, %v4145
      %v4147 = vsel %vm572, %v4141, %v4143
      %v4148 = vsel %vm572, %v4139, %v4141
      %v4149 = vsel %vm572, %v4145, %v4139
      %v4150 = vld [vmem:[%s577] ss:$8 sm:$0xf]
      %v4152 = vlaneseq
      %v4153 = vshrl.u32 %v4152, 7
      %v4154 = vsub.s32 0, %v4153
      %v4155 = vrot.slane %v4150, %v4154
      %v4156 = vlaneseq
      %v4157 = vshrl.u32 %v4156, 7
      %v4158 = vsub.s32 1, %v4157
      %v4159 = vrot.slane %v4150, %v4158
      %v4160 = vlaneseq
      %v4161 = vshrl.u32 %v4160, 7
      %v4162 = vsub.s32 2, %v4161
      %v4163 = vrot.slane %v4150, %v4162
      %v4164 = vlaneseq
      %v4165 = vshrl.u32 %v4164, 7
      %v4166 = vsub.s32 3, %v4165
      %v4167 = vrot.slane %v4150, %v4166
      %v4172 = vmul.f32 %v4148, %v4155
      %v4173 = vmul.f32 %v4147, %v4159
      %v4174 = vmul.f32 %v4146, %v4163
      %v4175 = vmul.f32 %v4149, %v4167
      %v4176 = vpack.c.bf16 %v4172, %v4172
      %v4177 = vpack.c.bf16 %v4173, %v4173
      %v4178 = vpack.c.bf16 %v4174, %v4174
      %v4179 = vpack.c.bf16 %v4175, %v4175
      %4180 = vst [vmem:[#allocation2 + $0x80] sm:$0x3] %v4176
      %4181 = vst [vmem:[#allocation2 + $0x88] sm:$0x3] %v4177
      %4182 = vst [vmem:[#allocation2 + $0x90] sm:$0x3] %v4178
      %4183 = vst [vmem:[#allocation2 + $0x98] sm:$0x3] %v4179
      %4184 = vrot.lane.b32.xlu0 %v3778, 111
      %v4185 = vpop.permute.xlu0 %4184
      %4186 = vrot.lane.b32.xlu0 %v3779, 111
      %v4187 = vpop.permute.xlu0 %4186
      %4188 = vrot.lane.b32.xlu0 %v3780, 111
      %v4189 = vpop.permute.xlu0 %4188
      %4190 = vrot.lane.b32.xlu0 %v3781, 111
      %v4191 = vpop.permute.xlu0 %4190
      %v4192 = vsel %vm632, %v4189, %v4191
      %v4193 = vsel %vm632, %v4187, %v4189
      %v4194 = vsel %vm632, %v4185, %v4187
      %v4195 = vsel %vm632, %v4191, %v4185
      %v4196 = vld [vmem:[%s637] ss:$8 sm:$0xf]
      %v4198 = vlaneseq
      %v4199 = vshrl.u32 %v4198, 7
      %v4200 = vsub.s32 0, %v4199
      %v4201 = vrot.slane %v4196, %v4200
      %v4202 = vlaneseq
      %v4203 = vshrl.u32 %v4202, 7
      %v4204 = vsub.s32 1, %v4203
      %v4205 = vrot.slane %v4196, %v4204
      %v4206 = vlaneseq
      %v4207 = vshrl.u32 %v4206, 7
      %v4208 = vsub.s32 2, %v4207
      %v4209 = vrot.slane %v4196, %v4208
      %v4210 = vlaneseq
      %v4211 = vshrl.u32 %v4210, 7
      %v4212 = vsub.s32 3, %v4211
      %v4213 = vrot.slane %v4196, %v4212
      %v4218 = vmul.f32 %v4194, %v4201
      %v4219 = vmul.f32 %v4193, %v4205
      %v4220 = vmul.f32 %v4192, %v4209
      %v4221 = vmul.f32 %v4195, %v4213
      %v4222 = vpack.c.bf16 %v4218, %v4218
      %v4223 = vpack.c.bf16 %v4219, %v4219
      %v4224 = vpack.c.bf16 %v4220, %v4220
      %v4225 = vpack.c.bf16 %v4221, %v4221
      %v4230 = vrot.slane %v4222, 6
      %v4231 = vrot.slane %v4223, 6
      %v4232 = vrot.slane %v4224, 6
      %v4233 = vrot.slane %v4225, 6
      %4238 = vst [vmem:[#allocation2 + $0x80] sm:$0xc] %v4230
      %4239 = vst [vmem:[#allocation2 + $0x88] sm:$0xc] %v4231
      %4240 = vst [vmem:[#allocation2 + $0x90] sm:$0xc] %v4232
      %4241 = vst [vmem:[#allocation2 + $0x98] sm:$0xc] %v4233
      %s4242 = scalar_lea.vmem %s1, 24
      %v4243 = vld [vmem:[%s4242] sm:$0xf]
      %v4244 = vld [vmem:[#allocation2] sm:$0xff]
      %v4245 = vld [vmem:[#allocation2 + $0x8] sm:$0xff]
      %v4246 = vld [vmem:[#allocation2 + $0x10] sm:$0xff]
      %v4247 = vld [vmem:[#allocation2 + $0x18] sm:$0xff]
      %v4248 = vld [vmem:[#allocation2 + $0x20] sm:$0xff]
      %v4249 = vld [vmem:[#allocation2 + $0x28] sm:$0xff]
      %v4250 = vld [vmem:[#allocation2 + $0x30] sm:$0xff]
      %v4251 = vld [vmem:[#allocation2 + $0x38] sm:$0xff]
      %v4252 = vld [vmem:[#allocation2 + $0x40] sm:$0xff]
      %v4253 = vld [vmem:[#allocation2 + $0x48] sm:$0xff]
      %v4254 = vld [vmem:[#allocation2 + $0x50] sm:$0xff]
      %v4255 = vld [vmem:[#allocation2 + $0x58] sm:$0xff]
      %v4256 = vld [vmem:[#allocation2 + $0x60] sm:$0xff]
      %v4257 = vld [vmem:[#allocation2 + $0x68] sm:$0xff]
      %v4258 = vld [vmem:[#allocation2 + $0x70] sm:$0xff]
      %v4259 = vld [vmem:[#allocation2 + $0x78] sm:$0xff]
      %v4260 = vld [vmem:[#allocation2 + $0x80] sm:$0xf]
      %v4261 = vld [vmem:[#allocation2 + $0x88] sm:$0xf]
      %v4262 = vld [vmem:[#allocation2 + $0x90] sm:$0xf]
      %v4263 = vld [vmem:[#allocation2 + $0x98] sm:$0xf]
      %s4264 = scalar_lea.vmem %s2, 24
      %v4265 = vld [vmem:[%s4264] sm:$0xf]
      %4267 = vset.pattern.permute.xlu0 0
      %4268 = vperm.xlu0 %4267, %v4265
      %v4269 = vpop.permute.xlu0 %4268
      %v4272 = vsel %vm1283, %v4243, 0
      %v4275 = vsel %vm1287, %v4260, 0
      %v4278 = vsel %vm1287, %v4261, 0
      %v4281 = vsel %vm1287, %v4262, 0
      %v4284 = vsel %vm1287, %v4263, 0
      %4286 = vmatprep.subr.bf16.mxu0 %v4245
      %4287 = vmatpush1.bf16.msra.mxu0 %v4244
      %4288 = vmatprep.subr.bf16.mxu0 %v4249
      %4289 = vmatpush1.bf16.msra.mxu0 %v4248
      %4290 = vmatprep.subr.bf16.mxu0 %v4253
      %4291 = vmatpush1.bf16.msra.mxu0 %v4252
      %4292 = vmatprep.subr.bf16.mxu0 %v4257
      %4293 = vmatpush1.bf16.msra.mxu0 %v4256
      %4294 = vmatprep.subr.bf16.mxu0 %v4278
      %4295 = vmatpush1.bf16.msra.mxu0 %v4275
      %4296 = vmatprep.subr.bf16.mxu0 0
      %4297 = vmatpush1.bf16.msra.mxu0 0
      %4298 = vmatprep.subr.bf16.mxu0 0
      %4299 = vmatpush1.bf16.msra.mxu0 0
      %4300 = vmatprep.subr.bf16.mxu0 0
      %4301 = vmatpush1.bf16.msra.mxu0 0
      %4302 = vmatprep.subr.bf16.mxu0 0
      %4303 = vmatpush1.bf16.msra.mxu0 0
      %4304 = vmatprep.subr.bf16.mxu0 0
      %4305 = vmatpush1.bf16.msra.mxu0 0
      %4306 = vmatprep.subr.bf16.mxu0 0
      %4307 = vmatpush1.bf16.msra.mxu0 0
      %4308 = vmatprep.subr.bf16.mxu0 0
      %4309 = vmatpush1.bf16.msra.mxu0 0
      %4310 = vmatprep.subr.bf16.mxu0 0
      %4311 = vmatpush1.bf16.msra.mxu0 0
      %4312 = vmatprep.subr.bf16.mxu0 0
      %4313 = vmatpush1.bf16.msra.mxu0 0
      %4314 = vmatprep.subr.bf16.mxu0 0
      %4315 = vmatpush1.bf16.msra.mxu0 0
      %4316 = vmatprep.subr.bf16.mxu0 0
      %4317 = vmatpush1.bf16.msra.mxu0 0
      %4318 = vmatprep.mubr.bf16.mxu0 0
      %4319 = vmatmul.mubr.bf16.gmra.mrb[0].mxu0 %v4272
      %v4320 = vpop.f32.mrb[0].mxu0
      %v4321 = vadd.f32 %v4269, %v4320
      %v4322 = vpop.f32.mrb[0].mxu0
      %v4323 = vadd.f32 %v4269, %v4322
      %v4324 = vpop.f32.mrb[0].mxu0
      %v4325 = vpop.f32.mrb[0].mxu0
      %4326 = vdwg.mxu0
      %4327 = vmatprep.subr.bf16.mxu0 %v4247
      %4328 = vmatpush1.bf16.msra.mxu0 %v4246
      %4329 = vmatprep.subr.bf16.mxu0 %v4251
      %4330 = vmatpush1.bf16.msra.mxu0 %v4250
      %4331 = vmatprep.subr.bf16.mxu0 %v4255
      %4332 = vmatpush1.bf16.msra.mxu0 %v4254
      %4333 = vmatprep.subr.bf16.mxu0 %v4259
      %4334 = vmatpush1.bf16.msra.mxu0 %v4258
      %4335 = vmatprep.subr.bf16.mxu0 %v4284
      %4336 = vmatpush1.bf16.msra.mxu0 %v4281
      %4337 = vmatprep.subr.bf16.mxu0 0
      %4338 = vmatpush1.bf16.msra.mxu0 0
      %4339 = vmatprep.subr.bf16.mxu0 0
      %4340 = vmatpush1.bf16.msra.mxu0 0
      %4341 = vmatprep.subr.bf16.mxu0 0
      %4342 = vmatpush1.bf16.msra.mxu0 0
      %4343 = vmatprep.subr.bf16.mxu0 0
      %4344 = vmatpush1.bf16.msra.mxu0 0
      %4345 = vmatprep.subr.bf16.mxu0 0
      %4346 = vmatpush1.bf16.msra.mxu0 0
      %4347 = vmatprep.subr.bf16.mxu0 0
      %4348 = vmatpush1.bf16.msra.mxu0 0
      %4349 = vmatprep.subr.bf16.mxu0 0
      %4350 = vmatpush1.bf16.msra.mxu0 0
      %4351 = vmatprep.subr.bf16.mxu0 0
      %4352 = vmatpush1.bf16.msra.mxu0 0
      %4353 = vmatprep.subr.bf16.mxu0 0
      %4354 = vmatpush1.bf16.msra.mxu0 0
      %4355 = vmatprep.subr.bf16.mxu0 0
      %4356 = vmatpush1.bf16.msra.mxu0 0
      %4357 = vmatprep.subr.bf16.mxu0 0
      %4358 = vmatpush1.bf16.msra.mxu0 0
      %4359 = vmatprep.mubr.bf16.mxu0 0
      %4360 = vmatmul.mubr.bf16.gmra.mrb[0].mxu0 %v4272
      %v4361 = vpop.f32.mrb[0].mxu0
      %v4362 = vadd.f32 %v4269, %v4361
      %v4363 = vpop.f32.mrb[0].mxu0
      %v4364 = vadd.f32 %v4269, %v4363
      %v4365 = vpop.f32.mrb[0].mxu0
      %v4366 = vpop.f32.mrb[0].mxu0
      %4367 = vdwg.mxu0
      %v4368 = vmax.f32 %v4321, 0.0
      %v4369 = vmax.f32 %v4323, 0.0
      %v4370 = vmax.f32 %v4362, 0.0
      %v4371 = vmax.f32 %v4364, 0.0
      %4372 = vrot.lane.b32.xlu0 %v4368, 17
      %v4373 = vpop.permute.xlu0 %4372
      %4374 = vrot.lane.b32.xlu0 %v4369, 17
      %v4375 = vpop.permute.xlu0 %4374
      %4376 = vrot.lane.b32.xlu0 %v4370, 17
      %v4377 = vpop.permute.xlu0 %4376
      %4378 = vrot.lane.b32.xlu0 %v4371, 17
      %v4379 = vpop.permute.xlu0 %4378
      %v4380 = vsel %vm217, %v4377, %v4379
      %v4381 = vsel %vm217, %v4375, %v4377
      %v4382 = vsel %vm217, %v4373, %v4375
      %v4383 = vsel %vm217, %v4379, %v4373
      %v4384 = vld [vmem:[%s3] ss:$8 sm:$0xf]
      %v4386 = vlaneseq
      %v4387 = vshrl.u32 %v4386, 7
      %v4388 = vsub.s32 0, %v4387
      %v4389 = vrot.slane %v4384, %v4388
      %v4390 = vlaneseq
      %v4391 = vshrl.u32 %v4390, 7
      %v4392 = vsub.s32 1, %v4391
      %v4393 = vrot.slane %v4384, %v4392
      %v4394 = vlaneseq
      %v4395 = vshrl.u32 %v4394, 7
      %v4396 = vsub.s32 2, %v4395
      %v4397 = vrot.slane %v4384, %v4396
      %v4398 = vlaneseq
      %v4399 = vshrl.u32 %v4398, 7
      %v4400 = vsub.s32 3, %v4399
      %v4401 = vrot.slane %v4384, %v4400
      %v4406 = vmul.f32 %v4383, %v4389
      %v4407 = vmul.f32 %v4382, %v4393
      %v4408 = vmul.f32 %v4381, %v4397
      %v4409 = vmul.f32 %v4380, %v4401
      %v4410 = vpack.c.bf16 %v4406, %v4406
      %v4411 = vpack.c.bf16 %v4407, %v4407
      %v4412 = vpack.c.bf16 %v4408, %v4408
      %v4413 = vpack.c.bf16 %v4409, %v4409
      %v4418 = vrot.slane %v4410, 4
      %v4419 = vrot.slane %v4411, 4
      %v4420 = vrot.slane %v4412, 4
      %v4421 = vrot.slane %v4413, 4
      %4426 = vst [vmem:[#allocation2 + $0x80] sm:$0x30] %v4418
      %4427 = vst [vmem:[#allocation2 + $0x88] sm:$0x30] %v4419
      %4428 = vst [vmem:[#allocation2 + $0x90] sm:$0x30] %v4420
      %4429 = vst [vmem:[#allocation2 + $0x98] sm:$0x30] %v4421
      %4430 = vrot.lane.b32.xlu0 %v4368, 16
      %v4431 = vpop.permute.xlu0 %4430
      %4432 = vrot.lane.b32.xlu0 %v4369, 16
      %v4433 = vpop.permute.xlu0 %4432
      %4434 = vrot.lane.b32.xlu0 %v4370, 16
      %v4435 = vpop.permute.xlu0 %4434
      %4436 = vrot.lane.b32.xlu0 %v4371, 16
      %v4437 = vpop.permute.xlu0 %4436
      %v4438 = vsel %vm264, %v4435, %v4437
      %v4439 = vsel %vm264, %v4433, %v4435
      %v4440 = vsel %vm264, %v4431, %v4433
      %v4441 = vsel %vm264, %v4437, %v4431
      %v4442 = vld [vmem:[%s269] ss:$8 sm:$0xf]
      %v4444 = vlaneseq
      %v4445 = vshrl.u32 %v4444, 7
      %v4446 = vsub.s32 0, %v4445
      %v4447 = vrot.slane %v4442, %v4446
      %v4448 = vlaneseq
      %v4449 = vshrl.u32 %v4448, 7
      %v4450 = vsub.s32 1, %v4449
      %v4451 = vrot.slane %v4442, %v4450
      %v4452 = vlaneseq
      %v4453 = vshrl.u32 %v4452, 7
      %v4454 = vsub.s32 2, %v4453
      %v4455 = vrot.slane %v4442, %v4454
      %v4456 = vlaneseq
      %v4457 = vshrl.u32 %v4456, 7
      %v4458 = vsub.s32 3, %v4457
      %v4459 = vrot.slane %v4442, %v4458
      %v4464 = vmul.f32 %v4441, %v4447
      %v4465 = vmul.f32 %v4440, %v4451
      %v4466 = vmul.f32 %v4439, %v4455
      %v4467 = vmul.f32 %v4438, %v4459
      %v4468 = vpack.c.bf16 %v4464, %v4464
      %v4469 = vpack.c.bf16 %v4465, %v4465
      %v4470 = vpack.c.bf16 %v4466, %v4466
      %v4471 = vpack.c.bf16 %v4467, %v4467
      %v4476 = vrot.slane %v4468, 2
      %v4477 = vrot.slane %v4469, 2
      %v4478 = vrot.slane %v4470, 2
      %v4479 = vrot.slane %v4471, 2
      %4484 = vst [vmem:[#allocation2 + $0x80] sm:$0xc0] %v4476
      %4485 = vst [vmem:[#allocation2 + $0x88] sm:$0xc0] %v4477
      %4486 = vst [vmem:[#allocation2 + $0x90] sm:$0xc0] %v4478
      %4487 = vst [vmem:[#allocation2 + $0x98] sm:$0xc0] %v4479
      %4488 = vrot.lane.b32.xlu0 %v4368, 15
      %v4489 = vpop.permute.xlu0 %4488
      %4490 = vrot.lane.b32.xlu0 %v4369, 15
      %v4491 = vpop.permute.xlu0 %4490
      %4492 = vrot.lane.b32.xlu0 %v4370, 15
      %v4493 = vpop.permute.xlu0 %4492
      %4494 = vrot.lane.b32.xlu0 %v4371, 15
      %v4495 = vpop.permute.xlu0 %4494
      %v4496 = vsel %vm324, %v4493, %v4495
      %v4497 = vsel %vm324, %v4491, %v4493
      %v4498 = vsel %vm324, %v4489, %v4491
      %v4499 = vsel %vm324, %v4495, %v4489
      %v4500 = vld [vmem:[%s329] ss:$8 sm:$0xf]
      %v4502 = vlaneseq
      %v4503 = vshrl.u32 %v4502, 7
      %v4504 = vsub.s32 0, %v4503
      %v4505 = vrot.slane %v4500, %v4504
      %v4506 = vlaneseq
      %v4507 = vshrl.u32 %v4506, 7
      %v4508 = vsub.s32 1, %v4507
      %v4509 = vrot.slane %v4500, %v4508
      %v4510 = vlaneseq
      %v4511 = vshrl.u32 %v4510, 7
      %v4512 = vsub.s32 2, %v4511
      %v4513 = vrot.slane %v4500, %v4512
      %v4514 = vlaneseq
      %v4515 = vshrl.u32 %v4514, 7
      %v4516 = vsub.s32 3, %v4515
      %v4517 = vrot.slane %v4500, %v4516
      %v4522 = vmul.f32 %v4499, %v4505
      %v4523 = vmul.f32 %v4498, %v4509
      %v4524 = vmul.f32 %v4497, %v4513
      %v4525 = vmul.f32 %v4496, %v4517
      %v4526 = vpack.c.bf16 %v4522, %v4522
      %v4527 = vpack.c.bf16 %v4523, %v4523
      %v4528 = vpack.c.bf16 %v4524, %v4524
      %v4529 = vpack.c.bf16 %v4525, %v4525
      %4530 = vst [vmem:[#allocation2 + $0xa0] sm:$0x3] %v4526
      %4531 = vst [vmem:[#allocation2 + $0xa8] sm:$0x3] %v4527
      %4532 = vst [vmem:[#allocation2 + $0xb0] sm:$0x3] %v4528
      %4533 = vst [vmem:[#allocation2 + $0xb8] sm:$0x3] %v4529
      %4534 = vrot.lane.b32.xlu0 %v4368, 1
      %v4535 = vpop.permute.xlu0 %4534
      %4536 = vrot.lane.b32.xlu0 %v4369, 1
      %v4537 = vpop.permute.xlu0 %4536
      %4538 = vrot.lane.b32.xlu0 %v4370, 1
      %v4539 = vpop.permute.xlu0 %4538
      %4540 = vrot.lane.b32.xlu0 %v4371, 1
      %v4541 = vpop.permute.xlu0 %4540
      %v4542 = vsel %vm384, %v4539, %v4541
      %v4543 = vsel %vm384, %v4537, %v4539
      %v4544 = vsel %vm384, %v4535, %v4537
      %v4545 = vsel %vm384, %v4541, %v4535
      %v4546 = vld [vmem:[%s389] ss:$8 sm:$0xf]
      %v4548 = vlaneseq
      %v4549 = vshrl.u32 %v4548, 7
      %v4550 = vsub.s32 0, %v4549
      %v4551 = vrot.slane %v4546, %v4550
      %v4552 = vlaneseq
      %v4553 = vshrl.u32 %v4552, 7
      %v4554 = vsub.s32 1, %v4553
      %v4555 = vrot.slane %v4546, %v4554
      %v4556 = vlaneseq
      %v4557 = vshrl.u32 %v4556, 7
      %v4558 = vsub.s32 2, %v4557
      %v4559 = vrot.slane %v4546, %v4558
      %v4560 = vlaneseq
      %v4561 = vshrl.u32 %v4560, 7
      %v4562 = vsub.s32 3, %v4561
      %v4563 = vrot.slane %v4546, %v4562
      %v4568 = vmul.f32 %v4545, %v4551
      %v4569 = vmul.f32 %v4544, %v4555
      %v4570 = vmul.f32 %v4543, %v4559
      %v4571 = vmul.f32 %v4542, %v4563
      %v4572 = vpack.c.bf16 %v4568, %v4568
      %v4573 = vpack.c.bf16 %v4569, %v4569
      %v4574 = vpack.c.bf16 %v4570, %v4570
      %v4575 = vpack.c.bf16 %v4571, %v4571
      %v4580 = vrot.slane %v4572, 6
      %v4581 = vrot.slane %v4573, 6
      %v4582 = vrot.slane %v4574, 6
      %v4583 = vrot.slane %v4575, 6
      %4588 = vst [vmem:[#allocation2 + $0xa0] sm:$0xc] %v4580
      %4589 = vst [vmem:[#allocation2 + $0xa8] sm:$0xc] %v4581
      %4590 = vst [vmem:[#allocation2 + $0xb0] sm:$0xc] %v4582
      %4591 = vst [vmem:[#allocation2 + $0xb8] sm:$0xc] %v4583
      %v4592 = vpack.c.bf16 %v4368, %v4368
      %v4593 = vpack.c.bf16 %v4369, %v4369
      %v4594 = vpack.c.bf16 %v4370, %v4370
      %v4595 = vpack.c.bf16 %v4371, %v4371
      %v4600 = vrot.slane %v4592, 4
      %v4601 = vrot.slane %v4593, 4
      %v4602 = vrot.slane %v4594, 4
      %v4603 = vrot.slane %v4595, 4
      %4608 = vst [vmem:[#allocation2 + $0xa0] sm:$0x30] %v4600
      %4609 = vst [vmem:[#allocation2 + $0xa8] sm:$0x30] %v4601
      %4610 = vst [vmem:[#allocation2 + $0xb0] sm:$0x30] %v4602
      %4611 = vst [vmem:[#allocation2 + $0xb8] sm:$0x30] %v4603
      %4612 = vrot.lane.b32.xlu0 %v4368, 127
      %v4613 = vpop.permute.xlu0 %4612
      %4614 = vrot.lane.b32.xlu0 %v4369, 127
      %v4615 = vpop.permute.xlu0 %4614
      %4616 = vrot.lane.b32.xlu0 %v4370, 127
      %v4617 = vpop.permute.xlu0 %4616
      %4618 = vrot.lane.b32.xlu0 %v4371, 127
      %v4619 = vpop.permute.xlu0 %4618
      %v4620 = vsel %vm452, %v4617, %v4619
      %v4621 = vsel %vm452, %v4615, %v4617
      %v4622 = vsel %vm452, %v4613, %v4615
      %v4623 = vsel %vm452, %v4619, %v4613
      %v4624 = vld [vmem:[%s457] ss:$8 sm:$0xf]
      %v4626 = vlaneseq
      %v4627 = vshrl.u32 %v4626, 7
      %v4628 = vsub.s32 0, %v4627
      %v4629 = vrot.slane %v4624, %v4628
      %v4630 = vlaneseq
      %v4631 = vshrl.u32 %v4630, 7
      %v4632 = vsub.s32 1, %v4631
      %v4633 = vrot.slane %v4624, %v4632
      %v4634 = vlaneseq
      %v4635 = vshrl.u32 %v4634, 7
      %v4636 = vsub.s32 2, %v4635
      %v4637 = vrot.slane %v4624, %v4636
      %v4638 = vlaneseq
      %v4639 = vshrl.u32 %v4638, 7
      %v4640 = vsub.s32 3, %v4639
      %v4641 = vrot.slane %v4624, %v4640
      %v4646 = vmul.f32 %v4622, %v4629
      %v4647 = vmul.f32 %v4621, %v4633
      %v4648 = vmul.f32 %v4620, %v4637
      %v4649 = vmul.f32 %v4623, %v4641
      %v4650 = vpack.c.bf16 %v4646, %v4646
      %v4651 = vpack.c.bf16 %v4647, %v4647
      %v4652 = vpack.c.bf16 %v4648, %v4648
      %v4653 = vpack.c.bf16 %v4649, %v4649
      %v4658 = vrot.slane %v4650, 2
      %v4659 = vrot.slane %v4651, 2
      %v4660 = vrot.slane %v4652, 2
      %v4661 = vrot.slane %v4653, 2
      %4666 = vst [vmem:[#allocation2 + $0xa0] sm:$0xc0] %v4658
      %4667 = vst [vmem:[#allocation2 + $0xa8] sm:$0xc0] %v4659
      %4668 = vst [vmem:[#allocation2 + $0xb0] sm:$0xc0] %v4660
      %4669 = vst [vmem:[#allocation2 + $0xb8] sm:$0xc0] %v4661
      %4670 = vrot.lane.b32.xlu0 %v4368, 113
      %v4671 = vpop.permute.xlu0 %4670
      %4672 = vrot.lane.b32.xlu0 %v4369, 113
      %v4673 = vpop.permute.xlu0 %4672
      %4674 = vrot.lane.b32.xlu0 %v4370, 113
      %v4675 = vpop.permute.xlu0 %4674
      %4676 = vrot.lane.b32.xlu0 %v4371, 113
      %v4677 = vpop.permute.xlu0 %4676
      %v4678 = vsel %vm512, %v4675, %v4677
      %v4679 = vsel %vm512, %v4673, %v4675
      %v4680 = vsel %vm512, %v4671, %v4673
      %v4681 = vsel %vm512, %v4677, %v4671
      %v4682 = vld [vmem:[%s517] ss:$8 sm:$0xf]
      %v4684 = vlaneseq
      %v4685 = vshrl.u32 %v4684, 7
      %v4686 = vsub.s32 0, %v4685
      %v4687 = vrot.slane %v4682, %v4686
      %v4688 = vlaneseq
      %v4689 = vshrl.u32 %v4688, 7
      %v4690 = vsub.s32 1, %v4689
      %v4691 = vrot.slane %v4682, %v4690
      %v4692 = vlaneseq
      %v4693 = vshrl.u32 %v4692, 7
      %v4694 = vsub.s32 2, %v4693
      %v4695 = vrot.slane %v4682, %v4694
      %v4696 = vlaneseq
      %v4697 = vshrl.u32 %v4696, 7
      %v4698 = vsub.s32 3, %v4697
      %v4699 = vrot.slane %v4682, %v4698
      %v4704 = vmul.f32 %v4680, %v4687
      %v4705 = vmul.f32 %v4679, %v4691
      %v4706 = vmul.f32 %v4678, %v4695
      %v4707 = vmul.f32 %v4681, %v4699
      %v4708 = vpack.c.bf16 %v4704, %v4704
      %v4709 = vpack.c.bf16 %v4705, %v4705
      %v4710 = vpack.c.bf16 %v4706, %v4706
      %v4711 = vpack.c.bf16 %v4707, %v4707
      %4712 = vst [vmem:[#allocation2 + $0xc0] sm:$0x3] %v4708
      %4713 = vst [vmem:[#allocation2 + $0xc8] sm:$0x3] %v4709
      %4714 = vst [vmem:[#allocation2 + $0xd0] sm:$0x3] %v4710
      %4715 = vst [vmem:[#allocation2 + $0xd8] sm:$0x3] %v4711
      %4716 = vrot.lane.b32.xlu0 %v4368, 112
      %v4717 = vpop.permute.xlu0 %4716
      %4718 = vrot.lane.b32.xlu0 %v4369, 112
      %v4719 = vpop.permute.xlu0 %4718
      %4720 = vrot.lane.b32.xlu0 %v4370, 112
      %v4721 = vpop.permute.xlu0 %4720
      %4722 = vrot.lane.b32.xlu0 %v4371, 112
      %v4723 = vpop.permute.xlu0 %4722
      %v4724 = vsel %vm572, %v4721, %v4723
      %v4725 = vsel %vm572, %v4719, %v4721
      %v4726 = vsel %vm572, %v4717, %v4719
      %v4727 = vsel %vm572, %v4723, %v4717
      %v4728 = vld [vmem:[%s577] ss:$8 sm:$0xf]
      %v4730 = vlaneseq
      %v4731 = vshrl.u32 %v4730, 7
      %v4732 = vsub.s32 0, %v4731
      %v4733 = vrot.slane %v4728, %v4732
      %v4734 = vlaneseq
      %v4735 = vshrl.u32 %v4734, 7
      %v4736 = vsub.s32 1, %v4735
      %v4737 = vrot.slane %v4728, %v4736
      %v4738 = vlaneseq
      %v4739 = vshrl.u32 %v4738, 7
      %v4740 = vsub.s32 2, %v4739
      %v4741 = vrot.slane %v4728, %v4740
      %v4742 = vlaneseq
      %v4743 = vshrl.u32 %v4742, 7
      %v4744 = vsub.s32 3, %v4743
      %v4745 = vrot.slane %v4728, %v4744
      %v4750 = vmul.f32 %v4726, %v4733
      %v4751 = vmul.f32 %v4725, %v4737
      %v4752 = vmul.f32 %v4724, %v4741
      %v4753 = vmul.f32 %v4727, %v4745
      %v4754 = vpack.c.bf16 %v4750, %v4750
      %v4755 = vpack.c.bf16 %v4751, %v4751
      %v4756 = vpack.c.bf16 %v4752, %v4752
      %v4757 = vpack.c.bf16 %v4753, %v4753
      %v4762 = vrot.slane %v4754, 6
      %v4763 = vrot.slane %v4755, 6
      %v4764 = vrot.slane %v4756, 6
      %v4765 = vrot.slane %v4757, 6
      %4770 = vst [vmem:[#allocation2 + $0xc0] sm:$0xc] %v4762
      %4771 = vst [vmem:[#allocation2 + $0xc8] sm:$0xc] %v4763
      %4772 = vst [vmem:[#allocation2 + $0xd0] sm:$0xc] %v4764
      %4773 = vst [vmem:[#allocation2 + $0xd8] sm:$0xc] %v4765
      %4774 = vrot.lane.b32.xlu0 %v4368, 111
      %v4775 = vpop.permute.xlu0 %4774
      %4776 = vrot.lane.b32.xlu0 %v4369, 111
      %v4777 = vpop.permute.xlu0 %4776
      %4778 = vrot.lane.b32.xlu0 %v4370, 111
      %v4779 = vpop.permute.xlu0 %4778
      %4780 = vrot.lane.b32.xlu0 %v4371, 111
      %v4781 = vpop.permute.xlu0 %4780
      %v4782 = vsel %vm632, %v4779, %v4781
      %v4783 = vsel %vm632, %v4777, %v4779
      %v4784 = vsel %vm632, %v4775, %v4777
      %v4785 = vsel %vm632, %v4781, %v4775
      %v4786 = vld [vmem:[%s637] ss:$8 sm:$0xf]
      %v4788 = vlaneseq
      %v4789 = vshrl.u32 %v4788, 7
      %v4790 = vsub.s32 0, %v4789
      %v4791 = vrot.slane %v4786, %v4790
      %v4792 = vlaneseq
      %v4793 = vshrl.u32 %v4792, 7
      %v4794 = vsub.s32 1, %v4793
      %v4795 = vrot.slane %v4786, %v4794
      %v4796 = vlaneseq
      %v4797 = vshrl.u32 %v4796, 7
      %v4798 = vsub.s32 2, %v4797
      %v4799 = vrot.slane %v4786, %v4798
      %v4800 = vlaneseq
      %v4801 = vshrl.u32 %v4800, 7
      %v4802 = vsub.s32 3, %v4801
      %v4803 = vrot.slane %v4786, %v4802
      %v4808 = vmul.f32 %v4784, %v4791
      %v4809 = vmul.f32 %v4783, %v4795
      %v4810 = vmul.f32 %v4782, %v4799
      %v4811 = vmul.f32 %v4785, %v4803
      %v4812 = vpack.c.bf16 %v4808, %v4808
      %v4813 = vpack.c.bf16 %v4809, %v4809
      %v4814 = vpack.c.bf16 %v4810, %v4810
      %v4815 = vpack.c.bf16 %v4811, %v4811
      %v4820 = vrot.slane %v4812, 4
      %v4821 = vrot.slane %v4813, 4
      %v4822 = vrot.slane %v4814, 4
      %v4823 = vrot.slane %v4815, 4
      %4828 = vst [vmem:[#allocation2 + $0xc0] sm:$0x30] %v4820
      %4829 = vst [vmem:[#allocation2 + $0xc8] sm:$0x30] %v4821
      %4830 = vst [vmem:[#allocation2 + $0xd0] sm:$0x30] %v4822
      %4831 = vst [vmem:[#allocation2 + $0xd8] sm:$0x30] %v4823
      %s4832 = scalar_lea.vmem %s1, 28
      %v4833 = vld [vmem:[%s4832] sm:$0xf]
      %v4834 = vld [vmem:[#allocation2] sm:$0xff]
      %v4835 = vld [vmem:[#allocation2 + $0x8] sm:$0xff]
      %v4836 = vld [vmem:[#allocation2 + $0x10] sm:$0xff]
      %v4837 = vld [vmem:[#allocation2 + $0x18] sm:$0xff]
      %v4838 = vld [vmem:[#allocation2 + $0x20] sm:$0xff]
      %v4839 = vld [vmem:[#allocation2 + $0x28] sm:$0xff]
      %v4840 = vld [vmem:[#allocation2 + $0x30] sm:$0xff]
      %v4841 = vld [vmem:[#allocation2 + $0x38] sm:$0xff]
      %v4842 = vld [vmem:[#allocation2 + $0x40] sm:$0xff]
      %v4843 = vld [vmem:[#allocation2 + $0x48] sm:$0xff]
      %v4844 = vld [vmem:[#allocation2 + $0x50] sm:$0xff]
      %v4845 = vld [vmem:[#allocation2 + $0x58] sm:$0xff]
      %v4846 = vld [vmem:[#allocation2 + $0x60] sm:$0xff]
      %v4847 = vld [vmem:[#allocation2 + $0x68] sm:$0xff]
      %v4848 = vld [vmem:[#allocation2 + $0x70] sm:$0xff]
      %v4849 = vld [vmem:[#allocation2 + $0x78] sm:$0xff]
      %v4850 = vld [vmem:[#allocation2 + $0x80] sm:$0xff]
      %v4851 = vld [vmem:[#allocation2 + $0x88] sm:$0xff]
      %v4852 = vld [vmem:[#allocation2 + $0x90] sm:$0xff]
      %v4853 = vld [vmem:[#allocation2 + $0x98] sm:$0xff]
      %v4854 = vld [vmem:[#allocation2 + $0xa0] sm:$0xff]
      %v4855 = vld [vmem:[#allocation2 + $0xa8] sm:$0xff]
      %v4856 = vld [vmem:[#allocation2 + $0xb0] sm:$0xff]
      %v4857 = vld [vmem:[#allocation2 + $0xb8] sm:$0xff]
      %v4858 = vld [vmem:[#allocation2 + $0xc0] sm:$0x3f]
      %v4859 = vld [vmem:[#allocation2 + $0xc8] sm:$0x3f]
      %v4860 = vld [vmem:[#allocation2 + $0xd0] sm:$0x3f]
      %v4861 = vld [vmem:[#allocation2 + $0xd8] sm:$0x3f]
      %s4862 = scalar_lea.vmem %s2, 28
      %v4863 = vld [vmem:[%s4862] sm:$0xf]
      %4865 = vset.pattern.permute.xlu0 0
      %4866 = vperm.xlu0 %4865, %v4863
      %v4867 = vpop.permute.xlu0 %4866
      %v4870 = vsel %vm1883, %v4833, 0
      %v4873 = vsel %vm1887, %v4858, 0
      %v4876 = vsel %vm1887, %v4859, 0
      %v4879 = vsel %vm1887, %v4860, 0
      %v4882 = vsel %vm1887, %v4861, 0
      %4884 = vmatprep.subr.bf16.mxu0 %v4835
      %4885 = vmatpush1.bf16.msra.mxu0 %v4834
      %4886 = vmatprep.subr.bf16.mxu0 %v4839
      %4887 = vmatpush1.bf16.msra.mxu0 %v4838
      %4888 = vmatprep.subr.bf16.mxu0 %v4843
      %4889 = vmatpush1.bf16.msra.mxu0 %v4842
      %4890 = vmatprep.subr.bf16.mxu0 %v4847
      %4891 = vmatpush1.bf16.msra.mxu0 %v4846
      %4892 = vmatprep.subr.bf16.mxu0 %v4851
      %4893 = vmatpush1.bf16.msra.mxu0 %v4850
      %4894 = vmatprep.subr.bf16.mxu0 %v4855
      %4895 = vmatpush1.bf16.msra.mxu0 %v4854
      %4896 = vmatprep.subr.bf16.mxu0 %v4876
      %4897 = vmatpush1.bf16.msra.mxu0 %v4873
      %4898 = vmatprep.subr.bf16.mxu0 0
      %4899 = vmatpush1.bf16.msra.mxu0 0
      %4900 = vmatprep.subr.bf16.mxu0 0
      %4901 = vmatpush1.bf16.msra.mxu0 0
      %4902 = vmatprep.subr.bf16.mxu0 0
      %4903 = vmatpush1.bf16.msra.mxu0 0
      %4904 = vmatprep.subr.bf16.mxu0 0
      %4905 = vmatpush1.bf16.msra.mxu0 0
      %4906 = vmatprep.subr.bf16.mxu0 0
      %4907 = vmatpush1.bf16.msra.mxu0 0
      %4908 = vmatprep.subr.bf16.mxu0 0
      %4909 = vmatpush1.bf16.msra.mxu0 0
      %4910 = vmatprep.subr.bf16.mxu0 0
      %4911 = vmatpush1.bf16.msra.mxu0 0
      %4912 = vmatprep.subr.bf16.mxu0 0
      %4913 = vmatpush1.bf16.msra.mxu0 0
      %4914 = vmatprep.subr.bf16.mxu0 0
      %4915 = vmatpush1.bf16.msra.mxu0 0
      %4916 = vmatprep.mubr.bf16.mxu0 0
      %4917 = vmatmul.mubr.bf16.gmra.mrb[0].mxu0 %v4870
      %v4918 = vpop.f32.mrb[0].mxu0
      %v4919 = vadd.f32 %v4867, %v4918
      %v4920 = vpop.f32.mrb[0].mxu0
      %v4921 = vadd.f32 %v4867, %v4920
      %v4922 = vpop.f32.mrb[0].mxu0
      %v4923 = vpop.f32.mrb[0].mxu0
      %4924 = vdwg.mxu0
      %4925 = vmatprep.subr.bf16.mxu0 %v4837
      %4926 = vmatpush1.bf16.msra.mxu0 %v4836
      %4927 = vmatprep.subr.bf16.mxu0 %v4841
      %4928 = vmatpush1.bf16.msra.mxu0 %v4840
      %4929 = vmatprep.subr.bf16.mxu0 %v4845
      %4930 = vmatpush1.bf16.msra.mxu0 %v4844
      %4931 = vmatprep.subr.bf16.mxu0 %v4849
      %4932 = vmatpush1.bf16.msra.mxu0 %v4848
      %4933 = vmatprep.subr.bf16.mxu0 %v4853
      %4934 = vmatpush1.bf16.msra.mxu0 %v4852
      %4935 = vmatprep.subr.bf16.mxu0 %v4857
      %4936 = vmatpush1.bf16.msra.mxu0 %v4856
      %4937 = vmatprep.subr.bf16.mxu0 %v4882
      %4938 = vmatpush1.bf16.msra.mxu0 %v4879
      %4939 = vmatprep.subr.bf16.mxu0 0
      %4940 = vmatpush1.bf16.msra.mxu0 0
      %4941 = vmatprep.subr.bf16.mxu0 0
      %4942 = vmatpush1.bf16.msra.mxu0 0
      %4943 = vmatprep.subr.bf16.mxu0 0
      %4944 = vmatpush1.bf16.msra.mxu0 0
      %4945 = vmatprep.subr.bf16.mxu0 0
      %4946 = vmatpush1.bf16.msra.mxu0 0
      %4947 = vmatprep.subr.bf16.mxu0 0
      %4948 = vmatpush1.bf16.msra.mxu0 0
      %4949 = vmatprep.subr.bf16.mxu0 0
      %4950 = vmatpush1.bf16.msra.mxu0 0
      %4951 = vmatprep.subr.bf16.mxu0 0
      %4952 = vmatpush1.bf16.msra.mxu0 0
      %4953 = vmatprep.subr.bf16.mxu0 0
      %4954 = vmatpush1.bf16.msra.mxu0 0
      %4955 = vmatprep.subr.bf16.mxu0 0
      %4956 = vmatpush1.bf16.msra.mxu0 0
      %4957 = vmatprep.mubr.bf16.mxu0 0
      %4958 = vmatmul.mubr.bf16.gmra.mrb[0].mxu0 %v4870
      %v4959 = vpop.f32.mrb[0].mxu0
      %v4960 = vadd.f32 %v4867, %v4959
      %v4961 = vpop.f32.mrb[0].mxu0
      %v4962 = vadd.f32 %v4867, %v4961
      %v4963 = vpop.f32.mrb[0].mxu0
      %v4964 = vpop.f32.mrb[0].mxu0
      %4965 = vdwg.mxu0
      %v4966 = vmax.f32 %v4919, 0.0
      %v4967 = vmax.f32 %v4921, 0.0
      %v4968 = vmax.f32 %v4960, 0.0
      %v4969 = vmax.f32 %v4962, 0.0
      %4970 = vrot.lane.b32.xlu0 %v4966, 17
      %v4971 = vpop.permute.xlu0 %4970
      %4972 = vrot.lane.b32.xlu0 %v4967, 17
      %v4973 = vpop.permute.xlu0 %4972
      %4974 = vrot.lane.b32.xlu0 %v4968, 17
      %v4975 = vpop.permute.xlu0 %4974
      %4976 = vrot.lane.b32.xlu0 %v4969, 17
      %v4977 = vpop.permute.xlu0 %4976
      %v4978 = vsel %vm217, %v4975, %v4977
      %v4979 = vsel %vm217, %v4973, %v4975
      %v4980 = vsel %vm217, %v4971, %v4973
      %v4981 = vsel %vm217, %v4977, %v4971
      %v4982 = vld [vmem:[%s3] ss:$8 sm:$0xf]
      %v4984 = vlaneseq
      %v4985 = vshrl.u32 %v4984, 7
      %v4986 = vsub.s32 0, %v4985
      %v4987 = vrot.slane %v4982, %v4986
      %v4988 = vlaneseq
      %v4989 = vshrl.u32 %v4988, 7
      %v4990 = vsub.s32 1, %v4989
      %v4991 = vrot.slane %v4982, %v4990
      %v4992 = vlaneseq
      %v4993 = vshrl.u32 %v4992, 7
      %v4994 = vsub.s32 2, %v4993
      %v4995 = vrot.slane %v4982, %v4994
      %v4996 = vlaneseq
      %v4997 = vshrl.u32 %v4996, 7
      %v4998 = vsub.s32 3, %v4997
      %v4999 = vrot.slane %v4982, %v4998
      %v5004 = vmul.f32 %v4981, %v4987
      %v5005 = vmul.f32 %v4980, %v4991
      %v5006 = vmul.f32 %v4979, %v4995
      %v5007 = vmul.f32 %v4978, %v4999
      %v5008 = vpack.c.bf16 %v5004, %v5004
      %v5009 = vpack.c.bf16 %v5005, %v5005
      %v5010 = vpack.c.bf16 %v5006, %v5006
      %v5011 = vpack.c.bf16 %v5007, %v5007
      %v5016 = vrot.slane %v5008, 2
      %v5017 = vrot.slane %v5009, 2
      %v5018 = vrot.slane %v5010, 2
      %v5019 = vrot.slane %v5011, 2
      %5024 = vst [vmem:[#allocation2 + $0xc0] sm:$0xc0] %v5016
      %5025 = vst [vmem:[#allocation2 + $0xc8] sm:$0xc0] %v5017
      %5026 = vst [vmem:[#allocation2 + $0xd0] sm:$0xc0] %v5018
      %5027 = vst [vmem:[#allocation2 + $0xd8] sm:$0xc0] %v5019
      %5028 = vrot.lane.b32.xlu0 %v4966, 16
      %v5029 = vpop.permute.xlu0 %5028
      %5030 = vrot.lane.b32.xlu0 %v4967, 16
      %v5031 = vpop.permute.xlu0 %5030
      %5032 = vrot.lane.b32.xlu0 %v4968, 16
      %v5033 = vpop.permute.xlu0 %5032
      %5034 = vrot.lane.b32.xlu0 %v4969, 16
      %v5035 = vpop.permute.xlu0 %5034
      %v5036 = vsel %vm264, %v5033, %v5035
      %v5037 = vsel %vm264, %v5031, %v5033
      %v5038 = vsel %vm264, %v5029, %v5031
      %v5039 = vsel %vm264, %v5035, %v5029
      %v5040 = vld [vmem:[%s269] ss:$8 sm:$0xf]
      %v5042 = vlaneseq
      %v5043 = vshrl.u32 %v5042, 7
      %v5044 = vsub.s32 0, %v5043
      %v5045 = vrot.slane %v5040, %v5044
      %v5046 = vlaneseq
      %v5047 = vshrl.u32 %v5046, 7
      %v5048 = vsub.s32 1, %v5047
      %v5049 = vrot.slane %v5040, %v5048
      %v5050 = vlaneseq
      %v5051 = vshrl.u32 %v5050, 7
      %v5052 = vsub.s32 2, %v5051
      %v5053 = vrot.slane %v5040, %v5052
      %v5054 = vlaneseq
      %v5055 = vshrl.u32 %v5054, 7
      %v5056 = vsub.s32 3, %v5055
      %v5057 = vrot.slane %v5040, %v5056
      %v5062 = vmul.f32 %v5039, %v5045
      %v5063 = vmul.f32 %v5038, %v5049
      %v5064 = vmul.f32 %v5037, %v5053
      %v5065 = vmul.f32 %v5036, %v5057
      %v5066 = vpack.c.bf16 %v5062, %v5062
      %v5067 = vpack.c.bf16 %v5063, %v5063
      %v5068 = vpack.c.bf16 %v5064, %v5064
      %v5069 = vpack.c.bf16 %v5065, %v5065
      %5070 = vst [vmem:[#allocation2 + $0xe0] sm:$0x3] %v5066
      %5071 = vst [vmem:[#allocation2 + $0xe8] sm:$0x3] %v5067
      %5072 = vst [vmem:[#allocation2 + $0xf0] sm:$0x3] %v5068
      %5073 = vst [vmem:[#allocation2 + $0xf8] sm:$0x3] %v5069
      %5074 = vrot.lane.b32.xlu0 %v4966, 15
      %v5075 = vpop.permute.xlu0 %5074
      %5076 = vrot.lane.b32.xlu0 %v4967, 15
      %v5077 = vpop.permute.xlu0 %5076
      %5078 = vrot.lane.b32.xlu0 %v4968, 15
      %v5079 = vpop.permute.xlu0 %5078
      %5080 = vrot.lane.b32.xlu0 %v4969, 15
      %v5081 = vpop.permute.xlu0 %5080
      %v5082 = vsel %vm324, %v5079, %v5081
      %v5083 = vsel %vm324, %v5077, %v5079
      %v5084 = vsel %vm324, %v5075, %v5077
      %v5085 = vsel %vm324, %v5081, %v5075
      %v5086 = vld [vmem:[%s329] ss:$8 sm:$0xf]
      %v5088 = vlaneseq
      %v5089 = vshrl.u32 %v5088, 7
      %v5090 = vsub.s32 0, %v5089
      %v5091 = vrot.slane %v5086, %v5090
      %v5092 = vlaneseq
      %v5093 = vshrl.u32 %v5092, 7
      %v5094 = vsub.s32 1, %v5093
      %v5095 = vrot.slane %v5086, %v5094
      %v5096 = vlaneseq
      %v5097 = vshrl.u32 %v5096, 7
      %v5098 = vsub.s32 2, %v5097
      %v5099 = vrot.slane %v5086, %v5098
      %v5100 = vlaneseq
      %v5101 = vshrl.u32 %v5100, 7
      %v5102 = vsub.s32 3, %v5101
      %v5103 = vrot.slane %v5086, %v5102
      %v5108 = vmul.f32 %v5085, %v5091
      %v5109 = vmul.f32 %v5084, %v5095
      %v5110 = vmul.f32 %v5083, %v5099
      %v5111 = vmul.f32 %v5082, %v5103
      %v5112 = vpack.c.bf16 %v5108, %v5108
      %v5113 = vpack.c.bf16 %v5109, %v5109
      %v5114 = vpack.c.bf16 %v5110, %v5110
      %v5115 = vpack.c.bf16 %v5111, %v5111
      %v5120 = vrot.slane %v5112, 6
      %v5121 = vrot.slane %v5113, 6
      %v5122 = vrot.slane %v5114, 6
      %v5123 = vrot.slane %v5115, 6
      %5128 = vst [vmem:[#allocation2 + $0xe0] sm:$0xc] %v5120
      %5129 = vst [vmem:[#allocation2 + $0xe8] sm:$0xc] %v5121
      %5130 = vst [vmem:[#allocation2 + $0xf0] sm:$0xc] %v5122
      %5131 = vst [vmem:[#allocation2 + $0xf8] sm:$0xc] %v5123
      %5132 = vrot.lane.b32.xlu0 %v4966, 1
      %v5133 = vpop.permute.xlu0 %5132
      %5134 = vrot.lane.b32.xlu0 %v4967, 1
      %v5135 = vpop.permute.xlu0 %5134
      %5136 = vrot.lane.b32.xlu0 %v4968, 1
      %v5137 = vpop.permute.xlu0 %5136
      %5138 = vrot.lane.b32.xlu0 %v4969, 1
      %v5139 = vpop.permute.xlu0 %5138
      %v5140 = vsel %vm384, %v5137, %v5139
      %v5141 = vsel %vm384, %v5135, %v5137
      %v5142 = vsel %vm384, %v5133, %v5135
      %v5143 = vsel %vm384, %v5139, %v5133
      %v5144 = vld [vmem:[%s389] ss:$8 sm:$0xf]
      %v5146 = vlaneseq
      %v5147 = vshrl.u32 %v5146, 7
      %v5148 = vsub.s32 0, %v5147
      %v5149 = vrot.slane %v5144, %v5148
      %v5150 = vlaneseq
      %v5151 = vshrl.u32 %v5150, 7
      %v5152 = vsub.s32 1, %v5151
      %v5153 = vrot.slane %v5144, %v5152
      %v5154 = vlaneseq
      %v5155 = vshrl.u32 %v5154, 7
      %v5156 = vsub.s32 2, %v5155
      %v5157 = vrot.slane %v5144, %v5156
      %v5158 = vlaneseq
      %v5159 = vshrl.u32 %v5158, 7
      %v5160 = vsub.s32 3, %v5159
      %v5161 = vrot.slane %v5144, %v5160
      %v5166 = vmul.f32 %v5143, %v5149
      %v5167 = vmul.f32 %v5142, %v5153
      %v5168 = vmul.f32 %v5141, %v5157
      %v5169 = vmul.f32 %v5140, %v5161
      %v5170 = vpack.c.bf16 %v5166, %v5166
      %v5171 = vpack.c.bf16 %v5167, %v5167
      %v5172 = vpack.c.bf16 %v5168, %v5168
      %v5173 = vpack.c.bf16 %v5169, %v5169
      %v5178 = vrot.slane %v5170, 4
      %v5179 = vrot.slane %v5171, 4
      %v5180 = vrot.slane %v5172, 4
      %v5181 = vrot.slane %v5173, 4
      %5186 = vst [vmem:[#allocation2 + $0xe0] sm:$0x30] %v5178
      %5187 = vst [vmem:[#allocation2 + $0xe8] sm:$0x30] %v5179
      %5188 = vst [vmem:[#allocation2 + $0xf0] sm:$0x30] %v5180
      %5189 = vst [vmem:[#allocation2 + $0xf8] sm:$0x30] %v5181
      %v5190 = vpack.c.bf16 %v4966, %v4966
      %v5191 = vpack.c.bf16 %v4967, %v4967
      %v5192 = vpack.c.bf16 %v4968, %v4968
      %v5193 = vpack.c.bf16 %v4969, %v4969
      %v5198 = vrot.slane %v5190, 2
      %v5199 = vrot.slane %v5191, 2
      %v5200 = vrot.slane %v5192, 2
      %v5201 = vrot.slane %v5193, 2
      %5206 = vst [vmem:[#allocation2 + $0xe0] sm:$0xc0] %v5198
      %5207 = vst [vmem:[#allocation2 + $0xe8] sm:$0xc0] %v5199
      %5208 = vst [vmem:[#allocation2 + $0xf0] sm:$0xc0] %v5200
      %5209 = vst [vmem:[#allocation2 + $0xf8] sm:$0xc0] %v5201
      %5210 = vrot.lane.b32.xlu0 %v4966, 127
      %v5211 = vpop.permute.xlu0 %5210
      %5212 = vrot.lane.b32.xlu0 %v4967, 127
      %v5213 = vpop.permute.xlu0 %5212
      %5214 = vrot.lane.b32.xlu0 %v4968, 127
      %v5215 = vpop.permute.xlu0 %5214
      %5216 = vrot.lane.b32.xlu0 %v4969, 127
      %v5217 = vpop.permute.xlu0 %5216
      %v5218 = vsel %vm452, %v5215, %v5217
      %v5219 = vsel %vm452, %v5213, %v5215
      %v5220 = vsel %vm452, %v5211, %v5213
      %v5221 = vsel %vm452, %v5217, %v5211
      %v5222 = vld [vmem:[%s457] ss:$8 sm:$0xf]
      %v5224 = vlaneseq
      %v5225 = vshrl.u32 %v5224, 7
      %v5226 = vsub.s32 0, %v5225
      %v5227 = vrot.slane %v5222, %v5226
      %v5228 = vlaneseq
      %v5229 = vshrl.u32 %v5228, 7
      %v5230 = vsub.s32 1, %v5229
      %v5231 = vrot.slane %v5222, %v5230
      %v5232 = vlaneseq
      %v5233 = vshrl.u32 %v5232, 7
      %v5234 = vsub.s32 2, %v5233
      %v5235 = vrot.slane %v5222, %v5234
      %v5236 = vlaneseq
      %v5237 = vshrl.u32 %v5236, 7
      %v5238 = vsub.s32 3, %v5237
      %v5239 = vrot.slane %v5222, %v5238
      %v5244 = vmul.f32 %v5220, %v5227
      %v5245 = vmul.f32 %v5219, %v5231
      %v5246 = vmul.f32 %v5218, %v5235
      %v5247 = vmul.f32 %v5221, %v5239
      %v5248 = vpack.c.bf16 %v5244, %v5244
      %v5249 = vpack.c.bf16 %v5245, %v5245
      %v5250 = vpack.c.bf16 %v5246, %v5246
      %v5251 = vpack.c.bf16 %v5247, %v5247
      %5252 = vst [vmem:[#allocation2 + $0x100] sm:$0x3] %v5248
      %5253 = vst [vmem:[#allocation2 + $0x108] sm:$0x3] %v5249
      %5254 = vst [vmem:[#allocation2 + $0x110] sm:$0x3] %v5250
      %5255 = vst [vmem:[#allocation2 + $0x118] sm:$0x3] %v5251
      %5256 = vrot.lane.b32.xlu0 %v4966, 113
      %v5257 = vpop.permute.xlu0 %5256
      %5258 = vrot.lane.b32.xlu0 %v4967, 113
      %v5259 = vpop.permute.xlu0 %5258
      %5260 = vrot.lane.b32.xlu0 %v4968, 113
      %v5261 = vpop.permute.xlu0 %5260
      %5262 = vrot.lane.b32.xlu0 %v4969, 113
      %v5263 = vpop.permute.xlu0 %5262
      %v5264 = vsel %vm512, %v5261, %v5263
      %v5265 = vsel %vm512, %v5259, %v5261
      %v5266 = vsel %vm512, %v5257, %v5259
      %v5267 = vsel %vm512, %v5263, %v5257
      %v5268 = vld [vmem:[%s517] ss:$8 sm:$0xf]
      %v5270 = vlaneseq
      %v5271 = vshrl.u32 %v5270, 7
      %v5272 = vsub.s32 0, %v5271
      %v5273 = vrot.slane %v5268, %v5272
      %v5274 = vlaneseq
      %v5275 = vshrl.u32 %v5274, 7
      %v5276 = vsub.s32 1, %v5275
      %v5277 = vrot.slane %v5268, %v5276
      %v5278 = vlaneseq
      %v5279 = vshrl.u32 %v5278, 7
      %v5280 = vsub.s32 2, %v5279
      %v5281 = vrot.slane %v5268, %v5280
      %v5282 = vlaneseq
      %v5283 = vshrl.u32 %v5282, 7
      %v5284 = vsub.s32 3, %v5283
      %v5285 = vrot.slane %v5268, %v5284
      %v5290 = vmul.f32 %v5266, %v5273
      %v5291 = vmul.f32 %v5265, %v5277
      %v5292 = vmul.f32 %v5264, %v5281
      %v5293 = vmul.f32 %v5267, %v5285
      %v5294 = vpack.c.bf16 %v5290, %v5290
      %v5295 = vpack.c.bf16 %v5291, %v5291
      %v5296 = vpack.c.bf16 %v5292, %v5292
      %v5297 = vpack.c.bf16 %v5293, %v5293
      %v5302 = vrot.slane %v5294, 6
      %v5303 = vrot.slane %v5295, 6
      %v5304 = vrot.slane %v5296, 6
      %v5305 = vrot.slane %v5297, 6
      %5310 = vst [vmem:[#allocation2 + $0x100] sm:$0xc] %v5302
      %5311 = vst [vmem:[#allocation2 + $0x108] sm:$0xc] %v5303
      %5312 = vst [vmem:[#allocation2 + $0x110] sm:$0xc] %v5304
      %5313 = vst [vmem:[#allocation2 + $0x118] sm:$0xc] %v5305
      %5314 = vrot.lane.b32.xlu0 %v4966, 112
      %v5315 = vpop.permute.xlu0 %5314
      %5316 = vrot.lane.b32.xlu0 %v4967, 112
      %v5317 = vpop.permute.xlu0 %5316
      %5318 = vrot.lane.b32.xlu0 %v4968, 112
      %v5319 = vpop.permute.xlu0 %5318
      %5320 = vrot.lane.b32.xlu0 %v4969, 112
      %v5321 = vpop.permute.xlu0 %5320
      %v5322 = vsel %vm572, %v5319, %v5321
      %v5323 = vsel %vm572, %v5317, %v5319
      %v5324 = vsel %vm572, %v5315, %v5317
      %v5325 = vsel %vm572, %v5321, %v5315
      %v5326 = vld [vmem:[%s577] ss:$8 sm:$0xf]
      %v5328 = vlaneseq
      %v5329 = vshrl.u32 %v5328, 7
      %v5330 = vsub.s32 0, %v5329
      %v5331 = vrot.slane %v5326, %v5330
      %v5332 = vlaneseq
      %v5333 = vshrl.u32 %v5332, 7
      %v5334 = vsub.s32 1, %v5333
      %v5335 = vrot.slane %v5326, %v5334
      %v5336 = vlaneseq
      %v5337 = vshrl.u32 %v5336, 7
      %v5338 = vsub.s32 2, %v5337
      %v5339 = vrot.slane %v5326, %v5338
      %v5340 = vlaneseq
      %v5341 = vshrl.u32 %v5340, 7
      %v5342 = vsub.s32 3, %v5341
      %v5343 = vrot.slane %v5326, %v5342
      %v5348 = vmul.f32 %v5324, %v5331
      %v5349 = vmul.f32 %v5323, %v5335
      %v5350 = vmul.f32 %v5322, %v5339
      %v5351 = vmul.f32 %v5325, %v5343
      %v5352 = vpack.c.bf16 %v5348, %v5348
      %v5353 = vpack.c.bf16 %v5349, %v5349
      %v5354 = vpack.c.bf16 %v5350, %v5350
      %v5355 = vpack.c.bf16 %v5351, %v5351
      %v5360 = vrot.slane %v5352, 4
      %v5361 = vrot.slane %v5353, 4
      %v5362 = vrot.slane %v5354, 4
      %v5363 = vrot.slane %v5355, 4
      %5368 = vst [vmem:[#allocation2 + $0x100] sm:$0x30] %v5360
      %5369 = vst [vmem:[#allocation2 + $0x108] sm:$0x30] %v5361
      %5370 = vst [vmem:[#allocation2 + $0x110] sm:$0x30] %v5362
      %5371 = vst [vmem:[#allocation2 + $0x118] sm:$0x30] %v5363
      %5372 = vrot.lane.b32.xlu0 %v4966, 111
      %v5373 = vpop.permute.xlu0 %5372
      %5374 = vrot.lane.b32.xlu0 %v4967, 111
      %v5375 = vpop.permute.xlu0 %5374
      %5376 = vrot.lane.b32.xlu0 %v4968, 111
      %v5377 = vpop.permute.xlu0 %5376
      %5378 = vrot.lane.b32.xlu0 %v4969, 111
      %v5379 = vpop.permute.xlu0 %5378
      %v5380 = vsel %vm632, %v5377, %v5379
      %v5381 = vsel %vm632, %v5375, %v5377
      %v5382 = vsel %vm632, %v5373, %v5375
      %v5383 = vsel %vm632, %v5379, %v5373
      %v5384 = vld [vmem:[%s637] ss:$8 sm:$0xf]
      %v5386 = vlaneseq
      %v5387 = vshrl.u32 %v5386, 7
      %v5388 = vsub.s32 0, %v5387
      %v5389 = vrot.slane %v5384, %v5388
      %v5390 = vlaneseq
      %v5391 = vshrl.u32 %v5390, 7
      %v5392 = vsub.s32 1, %v5391
      %v5393 = vrot.slane %v5384, %v5392
      %v5394 = vlaneseq
      %v5395 = vshrl.u32 %v5394, 7
      %v5396 = vsub.s32 2, %v5395
      %v5397 = vrot.slane %v5384, %v5396
      %v5398 = vlaneseq
      %v5399 = vshrl.u32 %v5398, 7
      %v5400 = vsub.s32 3, %v5399
      %v5401 = vrot.slane %v5384, %v5400
      %v5406 = vmul.f32 %v5382, %v5389
      %v5407 = vmul.f32 %v5381, %v5393
      %v5408 = vmul.f32 %v5380, %v5397
      %v5409 = vmul.f32 %v5383, %v5401
      %v5410 = vpack.c.bf16 %v5406, %v5406
      %v5411 = vpack.c.bf16 %v5407, %v5407
      %v5412 = vpack.c.bf16 %v5408, %v5408
      %v5413 = vpack.c.bf16 %v5409, %v5409
      %v5418 = vrot.slane %v5410, 2
      %v5419 = vrot.slane %v5411, 2
      %v5420 = vrot.slane %v5412, 2
      %v5421 = vrot.slane %v5413, 2
      %5426 = vst [vmem:[#allocation2 + $0x100] sm:$0xc0] %v5418
      %5427 = vst [vmem:[#allocation2 + $0x108] sm:$0xc0] %v5419
      %5428 = vst [vmem:[#allocation2 + $0x110] sm:$0xc0] %v5420
      %5429 = vst [vmem:[#allocation2 + $0x118] sm:$0xc0] %v5421
      %s5430 = scalar_lea.vmem %s1, 32
      %v5431 = vld [vmem:[%s5430] sm:$0xf]
      %v5432 = vld [vmem:[#allocation2] sm:$0xff]
      %v5433 = vld [vmem:[#allocation2 + $0x8] sm:$0xff]
      %v5434 = vld [vmem:[#allocation2 + $0x10] sm:$0xff]
      %v5435 = vld [vmem:[#allocation2 + $0x18] sm:$0xff]
      %v5436 = vld [vmem:[#allocation2 + $0x20] sm:$0xff]
      %v5437 = vld [vmem:[#allocation2 + $0x28] sm:$0xff]
      %v5438 = vld [vmem:[#allocation2 + $0x30] sm:$0xff]
      %v5439 = vld [vmem:[#allocation2 + $0x38] sm:$0xff]
      %v5440 = vld [vmem:[#allocation2 + $0x40] sm:$0xff]
      %v5441 = vld [vmem:[#allocation2 + $0x48] sm:$0xff]
      %v5442 = vld [vmem:[#allocation2 + $0x50] sm:$0xff]
      %v5443 = vld [vmem:[#allocation2 + $0x58] sm:$0xff]
      %v5444 = vld [vmem:[#allocation2 + $0x60] sm:$0xff]
      %v5445 = vld [vmem:[#allocation2 + $0x68] sm:$0xff]
      %v5446 = vld [vmem:[#allocation2 + $0x70] sm:$0xff]
      %v5447 = vld [vmem:[#allocation2 + $0x78] sm:$0xff]
      %v5448 = vld [vmem:[#allocation2 + $0x80] sm:$0xff]
      %v5449 = vld [vmem:[#allocation2 + $0x88] sm:$0xff]
      %v5450 = vld [vmem:[#allocation2 + $0x90] sm:$0xff]
      %v5451 = vld [vmem:[#allocation2 + $0x98] sm:$0xff]
      %v5452 = vld [vmem:[#allocation2 + $0xa0] sm:$0xff]
      %v5453 = vld [vmem:[#allocation2 + $0xa8] sm:$0xff]
      %v5454 = vld [vmem:[#allocation2 + $0xb0] sm:$0xff]
      %v5455 = vld [vmem:[#allocation2 + $0xb8] sm:$0xff]
      %v5456 = vld [vmem:[#allocation2 + $0xc0] sm:$0xff]
      %v5457 = vld [vmem:[#allocation2 + $0xc8] sm:$0xff]
      %v5458 = vld [vmem:[#allocation2 + $0xd0] sm:$0xff]
      %v5459 = vld [vmem:[#allocation2 + $0xd8] sm:$0xff]
      %v5460 = vld [vmem:[#allocation2 + $0xe0] sm:$0xff]
      %v5461 = vld [vmem:[#allocation2 + $0xe8] sm:$0xff]
      %v5462 = vld [vmem:[#allocation2 + $0xf0] sm:$0xff]
      %v5463 = vld [vmem:[#allocation2 + $0xf8] sm:$0xff]
      %v5464 = vld [vmem:[#allocation2 + $0x100] sm:$0xff]
      %v5465 = vld [vmem:[#allocation2 + $0x108] sm:$0xff]
      %v5466 = vld [vmem:[#allocation2 + $0x110] sm:$0xff]
      %v5467 = vld [vmem:[#allocation2 + $0x118] sm:$0xff]
      %s5468 = scalar_lea.vmem %s2, 32
      %v5469 = vld [vmem:[%s5468] sm:$0xf]
      %5471 = vset.pattern.permute.xlu0 0
      %5472 = vperm.xlu0 %5471, %v5469
      %v5473 = vpop.permute.xlu0 %5472
      %v5477 = vunpack.c.l.s4 1983009808
      %v5478 = vunpack.c.0.s8 %v5477
      %v5479 = vlaneseq
      %v5480 = vshrl.u32 %v5479, 7
      %v5481 = vsub.s32 %v5478, %v5480
      %v5482 = vrot.slane %v5431, %v5481
      %v5483 = vcombine.high %v5482, %v5482
      %v5486 = vsel %vm2501, %v5483, 0
      %5488 = vmatprep.subr.bf16.mxu0 %v5433
      %5489 = vmatpush1.bf16.msra.mxu0 %v5432
      %5490 = vmatprep.subr.bf16.mxu0 %v5437
      %5491 = vmatpush1.bf16.msra.mxu0 %v5436
      %5492 = vmatprep.subr.bf16.mxu0 %v5441
      %5493 = vmatpush1.bf16.msra.mxu0 %v5440
      %5494 = vmatprep.subr.bf16.mxu0 %v5445
      %5495 = vmatpush1.bf16.msra.mxu0 %v5444
      %5496 = vmatprep.subr.bf16.mxu0 %v5449
      %5497 = vmatpush1.bf16.msra.mxu0 %v5448
      %5498 = vmatprep.subr.bf16.mxu0 %v5453
      %5499 = vmatpush1.bf16.msra.mxu0 %v5452
      %5500 = vmatprep.subr.bf16.mxu0 %v5457
      %5501 = vmatpush1.bf16.msra.mxu0 %v5456
      %5502 = vmatprep.subr.bf16.mxu0 %v5461
      %5503 = vmatpush1.bf16.msra.mxu0 %v5460
      %5504 = vmatprep.subr.bf16.mxu0 %v5465
      %5505 = vmatpush1.bf16.msra.mxu0 %v5464
      %5506 = vmatprep.subr.bf16.mxu0 0
      %5507 = vmatpush1.bf16.msra.mxu0 0
      %5508 = vmatprep.subr.bf16.mxu0 0
      %5509 = vmatpush1.bf16.msra.mxu0 0
      %5510 = vmatprep.subr.bf16.mxu0 0
      %5511 = vmatpush1.bf16.msra.mxu0 0
      %5512 = vmatprep.subr.bf16.mxu0 0
      %5513 = vmatpush1.bf16.msra.mxu0 0
      %5514 = vmatprep.subr.bf16.mxu0 0
      %5515 = vmatpush1.bf16.msra.mxu0 0
      %5516 = vmatprep.subr.bf16.mxu0 0
      %5517 = vmatpush1.bf16.msra.mxu0 0
      %5518 = vmatprep.subr.bf16.mxu0 0
      %5519 = vmatpush1.bf16.msra.mxu0 0
      %5520 = vmatprep.mubr.bf16.mxu0 %v5486
      %5521 = vmatmul.mubr.bf16.gmra.mrb[0].mxu0 %v5482
      %v5522 = vpop.f32.mrb[0].mxu0
      %v5523 = vadd.f32 %v5473, %v5522
      %v5524 = vpop.f32.mrb[0].mxu0
      %v5525 = vadd.f32 %v5473, %v5524
      %v5526 = vpop.f32.mrb[0].mxu0
      %v5527 = vpop.f32.mrb[0].mxu0
      %5528 = vdwg.mxu0
      %5529 = vmatprep.subr.bf16.mxu0 %v5435
      %5530 = vmatpush1.bf16.msra.mxu0 %v5434
      %5531 = vmatprep.subr.bf16.mxu0 %v5439
      %5532 = vmatpush1.bf16.msra.mxu0 %v5438
      %5533 = vmatprep.subr.bf16.mxu0 %v5443
      %5534 = vmatpush1.bf16.msra.mxu0 %v5442
      %5535 = vmatprep.subr.bf16.mxu0 %v5447
      %5536 = vmatpush1.bf16.msra.mxu0 %v5446
      %5537 = vmatprep.subr.bf16.mxu0 %v5451
      %5538 = vmatpush1.bf16.msra.mxu0 %v5450
      %5539 = vmatprep.subr.bf16.mxu0 %v5455
      %5540 = vmatpush1.bf16.msra.mxu0 %v5454
      %5541 = vmatprep.subr.bf16.mxu0 %v5459
      %5542 = vmatpush1.bf16.msra.mxu0 %v5458
      %5543 = vmatprep.subr.bf16.mxu0 %v5463
      %5544 = vmatpush1.bf16.msra.mxu0 %v5462
      %5545 = vmatprep.subr.bf16.mxu0 %v5467
      %5546 = vmatpush1.bf16.msra.mxu0 %v5466
      %5547 = vmatprep.subr.bf16.mxu0 0
      %5548 = vmatpush1.bf16.msra.mxu0 0
      %5549 = vmatprep.subr.bf16.mxu0 0
      %5550 = vmatpush1.bf16.msra.mxu0 0
      %5551 = vmatprep.subr.bf16.mxu0 0
      %5552 = vmatpush1.bf16.msra.mxu0 0
      %5553 = vmatprep.subr.bf16.mxu0 0
      %5554 = vmatpush1.bf16.msra.mxu0 0
      %5555 = vmatprep.subr.bf16.mxu0 0
      %5556 = vmatpush1.bf16.msra.mxu0 0
      %5557 = vmatprep.subr.bf16.mxu0 0
      %5558 = vmatpush1.bf16.msra.mxu0 0
      %5559 = vmatprep.subr.bf16.mxu0 0
      %5560 = vmatpush1.bf16.msra.mxu0 0
      %5561 = vmatprep.mubr.bf16.mxu0 %v5486
      %5562 = vmatmul.mubr.bf16.gmra.mrb[0].mxu0 %v5482
      %v5563 = vpop.f32.mrb[0].mxu0
      %v5564 = vadd.f32 %v5473, %v5563
      %v5565 = vpop.f32.mrb[0].mxu0
      %v5566 = vadd.f32 %v5473, %v5565
      %v5567 = vpop.f32.mrb[0].mxu0
      %v5568 = vpop.f32.mrb[0].mxu0
      %5569 = vdwg.mxu0
      %v5570 = vmax.f32 %v5523, 0.0
      %v5571 = vmax.f32 %v5525, 0.0
      %v5572 = vmax.f32 %v5564, 0.0
      %v5573 = vmax.f32 %v5566, 0.0
      %5574 = vrot.lane.b32.xlu0 %v5570, 17
      %v5575 = vpop.permute.xlu0 %5574
      %5576 = vrot.lane.b32.xlu0 %v5571, 17
      %v5577 = vpop.permute.xlu0 %5576
      %5578 = vrot.lane.b32.xlu0 %v5572, 17
      %v5579 = vpop.permute.xlu0 %5578
      %5580 = vrot.lane.b32.xlu0 %v5573, 17
      %v5581 = vpop.permute.xlu0 %5580
      %v5582 = vsel %vm217, %v5579, %v5581
      %v5583 = vsel %vm217, %v5577, %v5579
      %v5584 = vsel %vm217, %v5575, %v5577
      %v5585 = vsel %vm217, %v5581, %v5575
      %v5586 = vld [vmem:[%s3] ss:$8 sm:$0xf]
      %v5588 = vlaneseq
      %v5589 = vshrl.u32 %v5588, 7
      %v5590 = vsub.s32 0, %v5589
      %v5591 = vrot.slane %v5586, %v5590
      %v5592 = vlaneseq
      %v5593 = vshrl.u32 %v5592, 7
      %v5594 = vsub.s32 1, %v5593
      %v5595 = vrot.slane %v5586, %v5594
      %v5596 = vlaneseq
      %v5597 = vshrl.u32 %v5596, 7
      %v5598 = vsub.s32 2, %v5597
      %v5599 = vrot.slane %v5586, %v5598
      %v5600 = vlaneseq
      %v5601 = vshrl.u32 %v5600, 7
      %v5602 = vsub.s32 3, %v5601
      %v5603 = vrot.slane %v5586, %v5602
      %v5608 = vmul.f32 %v5585, %v5591
      %v5609 = vmul.f32 %v5584, %v5595
      %v5610 = vmul.f32 %v5583, %v5599
      %v5611 = vmul.f32 %v5582, %v5603
      %v5612 = vpack.c.bf16 %v5608, %v5608
      %v5613 = vpack.c.bf16 %v5609, %v5609
      %v5614 = vpack.c.bf16 %v5610, %v5610
      %v5615 = vpack.c.bf16 %v5611, %v5611
      %5616 = vst [vmem:[#allocation2 + $0x120] sm:$0x3] %v5612
      %5617 = vst [vmem:[#allocation2 + $0x128] sm:$0x3] %v5613
      %5618 = vst [vmem:[#allocation2 + $0x130] sm:$0x3] %v5614
      %5619 = vst [vmem:[#allocation2 + $0x138] sm:$0x3] %v5615
      %5620 = vrot.lane.b32.xlu0 %v5570, 16
      %v5621 = vpop.permute.xlu0 %5620
      %5622 = vrot.lane.b32.xlu0 %v5571, 16
      %v5623 = vpop.permute.xlu0 %5622
      %5624 = vrot.lane.b32.xlu0 %v5572, 16
      %v5625 = vpop.permute.xlu0 %5624
      %5626 = vrot.lane.b32.xlu0 %v5573, 16
      %v5627 = vpop.permute.xlu0 %5626
      %v5628 = vsel %vm264, %v5625, %v5627
      %v5629 = vsel %vm264, %v5623, %v5625
      %v5630 = vsel %vm264, %v5621, %v5623
      %v5631 = vsel %vm264, %v5627, %v5621
      %v5632 = vld [vmem:[%s269] ss:$8 sm:$0xf]
      %v5634 = vlaneseq
      %v5635 = vshrl.u32 %v5634, 7
      %v5636 = vsub.s32 0, %v5635
      %v5637 = vrot.slane %v5632, %v5636
      %v5638 = vlaneseq
      %v5639 = vshrl.u32 %v5638, 7
      %v5640 = vsub.s32 1, %v5639
      %v5641 = vrot.slane %v5632, %v5640
      %v5642 = vlaneseq
      %v5643 = vshrl.u32 %v5642, 7
      %v5644 = vsub.s32 2, %v5643
      %v5645 = vrot.slane %v5632, %v5644
      %v5646 = vlaneseq
      %v5647 = vshrl.u32 %v5646, 7
      %v5648 = vsub.s32 3, %v5647
      %v5649 = vrot.slane %v5632, %v5648
      %v5654 = vmul.f32 %v5631, %v5637
      %v5655 = vmul.f32 %v5630, %v5641
      %v5656 = vmul.f32 %v5629, %v5645
      %v5657 = vmul.f32 %v5628, %v5649
      %v5658 = vpack.c.bf16 %v5654, %v5654
      %v5659 = vpack.c.bf16 %v5655, %v5655
      %v5660 = vpack.c.bf16 %v5656, %v5656
      %v5661 = vpack.c.bf16 %v5657, %v5657
      %v5666 = vrot.slane %v5658, 6
      %v5667 = vrot.slane %v5659, 6
      %v5668 = vrot.slane %v5660, 6
      %v5669 = vrot.slane %v5661, 6
      %5674 = vst [vmem:[#allocation2 + $0x120] sm:$0xc] %v5666
      %5675 = vst [vmem:[#allocation2 + $0x128] sm:$0xc] %v5667
      %5676 = vst [vmem:[#allocation2 + $0x130] sm:$0xc] %v5668
      %5677 = vst [vmem:[#allocation2 + $0x138] sm:$0xc] %v5669
      %5678 = vrot.lane.b32.xlu0 %v5570, 15
      %v5679 = vpop.permute.xlu0 %5678
      %5680 = vrot.lane.b32.xlu0 %v5571, 15
      %v5681 = vpop.permute.xlu0 %5680
      %5682 = vrot.lane.b32.xlu0 %v5572, 15
      %v5683 = vpop.permute.xlu0 %5682
      %5684 = vrot.lane.b32.xlu0 %v5573, 15
      %v5685 = vpop.permute.xlu0 %5684
      %v5686 = vsel %vm324, %v5683, %v5685
      %v5687 = vsel %vm324, %v5681, %v5683
      %v5688 = vsel %vm324, %v5679, %v5681
      %v5689 = vsel %vm324, %v5685, %v5679
      %v5690 = vld [vmem:[%s329] ss:$8 sm:$0xf]
      %v5692 = vlaneseq
      %v5693 = vshrl.u32 %v5692, 7
      %v5694 = vsub.s32 0, %v5693
      %v5695 = vrot.slane %v5690, %v5694
      %v5696 = vlaneseq
      %v5697 = vshrl.u32 %v5696, 7
      %v5698 = vsub.s32 1, %v5697
      %v5699 = vrot.slane %v5690, %v5698
      %v5700 = vlaneseq
      %v5701 = vshrl.u32 %v5700, 7
      %v5702 = vsub.s32 2, %v5701
      %v5703 = vrot.slane %v5690, %v5702
      %v5704 = vlaneseq
      %v5705 = vshrl.u32 %v5704, 7
      %v5706 = vsub.s32 3, %v5705
      %v5707 = vrot.slane %v5690, %v5706
      %v5712 = vmul.f32 %v5689, %v5695
      %v5713 = vmul.f32 %v5688, %v5699
      %v5714 = vmul.f32 %v5687, %v5703
      %v5715 = vmul.f32 %v5686, %v5707
      %v5716 = vpack.c.bf16 %v5712, %v5712
      %v5717 = vpack.c.bf16 %v5713, %v5713
      %v5718 = vpack.c.bf16 %v5714, %v5714
      %v5719 = vpack.c.bf16 %v5715, %v5715
      %v5724 = vrot.slane %v5716, 4
      %v5725 = vrot.slane %v5717, 4
      %v5726 = vrot.slane %v5718, 4
      %v5727 = vrot.slane %v5719, 4
      %5732 = vst [vmem:[#allocation2 + $0x120] sm:$0x30] %v5724
      %5733 = vst [vmem:[#allocation2 + $0x128] sm:$0x30] %v5725
      %5734 = vst [vmem:[#allocation2 + $0x130] sm:$0x30] %v5726
      %5735 = vst [vmem:[#allocation2 + $0x138] sm:$0x30] %v5727
      %5736 = vrot.lane.b32.xlu0 %v5570, 1
      %v5737 = vpop.permute.xlu0 %5736
      %5738 = vrot.lane.b32.xlu0 %v5571, 1
      %v5739 = vpop.permute.xlu0 %5738
      %5740 = vrot.lane.b32.xlu0 %v5572, 1
      %v5741 = vpop.permute.xlu0 %5740
      %5742 = vrot.lane.b32.xlu0 %v5573, 1
      %v5743 = vpop.permute.xlu0 %5742
      %v5744 = vsel %vm384, %v5741, %v5743
      %v5745 = vsel %vm384, %v5739, %v5741
      %v5746 = vsel %vm384, %v5737, %v5739
      %v5747 = vsel %vm384, %v5743, %v5737
      %v5748 = vld [vmem:[%s389] ss:$8 sm:$0xf]
      %v5750 = vlaneseq
      %v5751 = vshrl.u32 %v5750, 7
      %v5752 = vsub.s32 0, %v5751
      %v5753 = vrot.slane %v5748, %v5752
      %v5754 = vlaneseq
      %v5755 = vshrl.u32 %v5754, 7
      %v5756 = vsub.s32 1, %v5755
      %v5757 = vrot.slane %v5748, %v5756
      %v5758 = vlaneseq
      %v5759 = vshrl.u32 %v5758, 7
      %v5760 = vsub.s32 2, %v5759
      %v5761 = vrot.slane %v5748, %v5760
      %v5762 = vlaneseq
      %v5763 = vshrl.u32 %v5762, 7
      %v5764 = vsub.s32 3, %v5763
      %v5765 = vrot.slane %v5748, %v5764
      %v5770 = vmul.f32 %v5747, %v5753
      %v5771 = vmul.f32 %v5746, %v5757
      %v5772 = vmul.f32 %v5745, %v5761
      %v5773 = vmul.f32 %v5744, %v5765
      %v5774 = vpack.c.bf16 %v5770, %v5770
      %v5775 = vpack.c.bf16 %v5771, %v5771
      %v5776 = vpack.c.bf16 %v5772, %v5772
      %v5777 = vpack.c.bf16 %v5773, %v5773
      %v5782 = vrot.slane %v5774, 2
      %v5783 = vrot.slane %v5775, 2
      %v5784 = vrot.slane %v5776, 2
      %v5785 = vrot.slane %v5777, 2
      %5790 = vst [vmem:[#allocation2 + $0x120] sm:$0xc0] %v5782
      %5791 = vst [vmem:[#allocation2 + $0x128] sm:$0xc0] %v5783
      %5792 = vst [vmem:[#allocation2 + $0x130] sm:$0xc0] %v5784
      %5793 = vst [vmem:[#allocation2 + $0x138] sm:$0xc0] %v5785
      %v5794 = vpack.c.bf16 %v5570, %v5570
      %v5795 = vpack.c.bf16 %v5571, %v5571
      %v5796 = vpack.c.bf16 %v5572, %v5572
      %v5797 = vpack.c.bf16 %v5573, %v5573
      %5798 = vst [vmem:[#allocation2 + $0x140] sm:$0x3] %v5794
      %5799 = vst [vmem:[#allocation2 + $0x148] sm:$0x3] %v5795
      %5800 = vst [vmem:[#allocation2 + $0x150] sm:$0x3] %v5796
      %5801 = vst [vmem:[#allocation2 + $0x158] sm:$0x3] %v5797
      %5802 = vrot.lane.b32.xlu0 %v5570, 127
      %v5803 = vpop.permute.xlu0 %5802
      %5804 = vrot.lane.b32.xlu0 %v5571, 127
      %v5805 = vpop.permute.xlu0 %5804
      %5806 = vrot.lane.b32.xlu0 %v5572, 127
      %v5807 = vpop.permute.xlu0 %5806
      %5808 = vrot.lane.b32.xlu0 %v5573, 127
      %v5809 = vpop.permute.xlu0 %5808
      %v5810 = vsel %vm452, %v5807, %v5809
      %v5811 = vsel %vm452, %v5805, %v5807
      %v5812 = vsel %vm452, %v5803, %v5805
      %v5813 = vsel %vm452, %v5809, %v5803
      %v5814 = vld [vmem:[%s457] ss:$8 sm:$0xf]
      %v5816 = vlaneseq
      %v5817 = vshrl.u32 %v5816, 7
      %v5818 = vsub.s32 0, %v5817
      %v5819 = vrot.slane %v5814, %v5818
      %v5820 = vlaneseq
      %v5821 = vshrl.u32 %v5820, 7
      %v5822 = vsub.s32 1, %v5821
      %v5823 = vrot.slane %v5814, %v5822
      %v5824 = vlaneseq
      %v5825 = vshrl.u32 %v5824, 7
      %v5826 = vsub.s32 2, %v5825
      %v5827 = vrot.slane %v5814, %v5826
      %v5828 = vlaneseq
      %v5829 = vshrl.u32 %v5828, 7
      %v5830 = vsub.s32 3, %v5829
      %v5831 = vrot.slane %v5814, %v5830
      %v5836 = vmul.f32 %v5812, %v5819
      %v5837 = vmul.f32 %v5811, %v5823
      %v5838 = vmul.f32 %v5810, %v5827
      %v5839 = vmul.f32 %v5813, %v5831
      %v5840 = vpack.c.bf16 %v5836, %v5836
      %v5841 = vpack.c.bf16 %v5837, %v5837
      %v5842 = vpack.c.bf16 %v5838, %v5838
      %v5843 = vpack.c.bf16 %v5839, %v5839
      %v5848 = vrot.slane %v5840, 6
      %v5849 = vrot.slane %v5841, 6
      %v5850 = vrot.slane %v5842, 6
      %v5851 = vrot.slane %v5843, 6
      %5856 = vst [vmem:[#allocation2 + $0x140] sm:$0xc] %v5848
      %5857 = vst [vmem:[#allocation2 + $0x148] sm:$0xc] %v5849
      %5858 = vst [vmem:[#allocation2 + $0x150] sm:$0xc] %v5850
      %5859 = vst [vmem:[#allocation2 + $0x158] sm:$0xc] %v5851
      %5860 = vrot.lane.b32.xlu0 %v5570, 113
      %v5861 = vpop.permute.xlu0 %5860
      %5862 = vrot.lane.b32.xlu0 %v5571, 113
      %v5863 = vpop.permute.xlu0 %5862
      %5864 = vrot.lane.b32.xlu0 %v5572, 113
      %v5865 = vpop.permute.xlu0 %5864
      %5866 = vrot.lane.b32.xlu0 %v5573, 113
      %v5867 = vpop.permute.xlu0 %5866
      %v5868 = vsel %vm512, %v5865, %v5867
      %v5869 = vsel %vm512, %v5863, %v5865
      %v5870 = vsel %vm512, %v5861, %v5863
      %v5871 = vsel %vm512, %v5867, %v5861
      %v5872 = vld [vmem:[%s517] ss:$8 sm:$0xf]
      %v5874 = vlaneseq
      %v5875 = vshrl.u32 %v5874, 7
      %v5876 = vsub.s32 0, %v5875
      %v5877 = vrot.slane %v5872, %v5876
      %v5878 = vlaneseq
      %v5879 = vshrl.u32 %v5878, 7
      %v5880 = vsub.s32 1, %v5879
      %v5881 = vrot.slane %v5872, %v5880
      %v5882 = vlaneseq
      %v5883 = vshrl.u32 %v5882, 7
      %v5884 = vsub.s32 2, %v5883
      %v5885 = vrot.slane %v5872, %v5884
      %v5886 = vlaneseq
      %v5887 = vshrl.u32 %v5886, 7
      %v5888 = vsub.s32 3, %v5887
      %v5889 = vrot.slane %v5872, %v5888
      %v5894 = vmul.f32 %v5870, %v5877
      %v5895 = vmul.f32 %v5869, %v5881
      %v5896 = vmul.f32 %v5868, %v5885
      %v5897 = vmul.f32 %v5871, %v5889
      %v5898 = vpack.c.bf16 %v5894, %v5894
      %v5899 = vpack.c.bf16 %v5895, %v5895
      %v5900 = vpack.c.bf16 %v5896, %v5896
      %v5901 = vpack.c.bf16 %v5897, %v5897
      %v5906 = vrot.slane %v5898, 4
      %v5907 = vrot.slane %v5899, 4
      %v5908 = vrot.slane %v5900, 4
      %v5909 = vrot.slane %v5901, 4
      %5914 = vst [vmem:[#allocation2 + $0x140] sm:$0x30] %v5906
      %5915 = vst [vmem:[#allocation2 + $0x148] sm:$0x30] %v5907
      %5916 = vst [vmem:[#allocation2 + $0x150] sm:$0x30] %v5908
      %5917 = vst [vmem:[#allocation2 + $0x158] sm:$0x30] %v5909
      %5918 = vrot.lane.b32.xlu0 %v5570, 112
      %v5919 = vpop.permute.xlu0 %5918
      %5920 = vrot.lane.b32.xlu0 %v5571, 112
      %v5921 = vpop.permute.xlu0 %5920
      %5922 = vrot.lane.b32.xlu0 %v5572, 112
      %v5923 = vpop.permute.xlu0 %5922
      %5924 = vrot.lane.b32.xlu0 %v5573, 112
      %v5925 = vpop.permute.xlu0 %5924
      %v5926 = vsel %vm572, %v5923, %v5925
      %v5927 = vsel %vm572, %v5921, %v5923
      %v5928 = vsel %vm572, %v5919, %v5921
      %v5929 = vsel %vm572, %v5925, %v5919
      %v5930 = vld [vmem:[%s577] ss:$8 sm:$0xf]
      %v5932 = vlaneseq
      %v5933 = vshrl.u32 %v5932, 7
      %v5934 = vsub.s32 0, %v5933
      %v5935 = vrot.slane %v5930, %v5934
      %v5936 = vlaneseq
      %v5937 = vshrl.u32 %v5936, 7
      %v5938 = vsub.s32 1, %v5937
      %v5939 = vrot.slane %v5930, %v5938
      %v5940 = vlaneseq
      %v5941 = vshrl.u32 %v5940, 7
      %v5942 = vsub.s32 2, %v5941
      %v5943 = vrot.slane %v5930, %v5942
      %v5944 = vlaneseq
      %v5945 = vshrl.u32 %v5944, 7
      %v5946 = vsub.s32 3, %v5945
      %v5947 = vrot.slane %v5930, %v5946
      %v5952 = vmul.f32 %v5928, %v5935
      %v5953 = vmul.f32 %v5927, %v5939
      %v5954 = vmul.f32 %v5926, %v5943
      %v5955 = vmul.f32 %v5929, %v5947
      %v5956 = vpack.c.bf16 %v5952, %v5952
      %v5957 = vpack.c.bf16 %v5953, %v5953
      %v5958 = vpack.c.bf16 %v5954, %v5954
      %v5959 = vpack.c.bf16 %v5955, %v5955
      %v5964 = vrot.slane %v5956, 2
      %v5965 = vrot.slane %v5957, 2
      %v5966 = vrot.slane %v5958, 2
      %v5967 = vrot.slane %v5959, 2
      %5972 = vst [vmem:[#allocation2 + $0x140] sm:$0xc0] %v5964
      %5973 = vst [vmem:[#allocation2 + $0x148] sm:$0xc0] %v5965
      %5974 = vst [vmem:[#allocation2 + $0x150] sm:$0xc0] %v5966
      %5975 = vst [vmem:[#allocation2 + $0x158] sm:$0xc0] %v5967
      %5976 = vrot.lane.b32.xlu0 %v5570, 111
      %v5977 = vpop.permute.xlu0 %5976
      %5978 = vrot.lane.b32.xlu0 %v5571, 111
      %v5979 = vpop.permute.xlu0 %5978
      %5980 = vrot.lane.b32.xlu0 %v5572, 111
      %v5981 = vpop.permute.xlu0 %5980
      %5982 = vrot.lane.b32.xlu0 %v5573, 111
      %v5983 = vpop.permute.xlu0 %5982
      %v5984 = vsel %vm632, %v5981, %v5983
      %v5985 = vsel %vm632, %v5979, %v5981
      %v5986 = vsel %vm632, %v5977, %v5979
      %v5987 = vsel %vm632, %v5983, %v5977
      %v5988 = vld [vmem:[%s637] ss:$8 sm:$0xf]
      %v5990 = vlaneseq
      %v5991 = vshrl.u32 %v5990, 7
      %v5992 = vsub.s32 0, %v5991
      %v5993 = vrot.slane %v5988, %v5992
      %v5994 = vlaneseq
      %v5995 = vshrl.u32 %v5994, 7
      %v5996 = vsub.s32 1, %v5995
      %v5997 = vrot.slane %v5988, %v5996
      %v5998 = vlaneseq
      %v5999 = vshrl.u32 %v5998, 7
      %v6000 = vsub.s32 2, %v5999
      %v6001 = vrot.slane %v5988, %v6000
      %v6002 = vlaneseq
      %v6003 = vshrl.u32 %v6002, 7
      %v6004 = vsub.s32 3, %v6003
      %v6005 = vrot.slane %v5988, %v6004
      %v6010 = vmul.f32 %v5986, %v5993
      %v6011 = vmul.f32 %v5985, %v5997
      %v6012 = vmul.f32 %v5984, %v6001
      %v6013 = vmul.f32 %v5987, %v6005
      %v6014 = vpack.c.bf16 %v6010, %v6010
      %v6015 = vpack.c.bf16 %v6011, %v6011
      %v6016 = vpack.c.bf16 %v6012, %v6012
      %v6017 = vpack.c.bf16 %v6013, %v6013
      %6018 = vst [vmem:[#allocation2 + $0x160] sm:$0x3] %v6014
      %6019 = vst [vmem:[#allocation2 + $0x168] sm:$0x3] %v6015
      %6020 = vst [vmem:[#allocation2 + $0x170] sm:$0x3] %v6016
      %6021 = vst [vmem:[#allocation2 + $0x178] sm:$0x3] %v6017
      %s6022 = scalar_lea.vmem %s1, 36
      %v6023 = vld [vmem:[%s6022] sm:$0xf]
      %v6024 = vld [vmem:[#allocation2] sm:$0xff]
      %v6025 = vld [vmem:[#allocation2 + $0x8] sm:$0xff]
      %v6026 = vld [vmem:[#allocation2 + $0x10] sm:$0xff]
      %v6027 = vld [vmem:[#allocation2 + $0x18] sm:$0xff]
      %v6028 = vld [vmem:[#allocation2 + $0x20] sm:$0xff]
      %v6029 = vld [vmem:[#allocation2 + $0x28] sm:$0xff]
      %v6030 = vld [vmem:[#allocation2 + $0x30] sm:$0xff]
      %v6031 = vld [vmem:[#allocation2 + $0x38] sm:$0xff]
      %v6032 = vld [vmem:[#allocation2 + $0x40] sm:$0xff]
      %v6033 = vld [vmem:[#allocation2 + $0x48] sm:$0xff]
      %v6034 = vld [vmem:[#allocation2 + $0x50] sm:$0xff]
      %v6035 = vld [vmem:[#allocation2 + $0x58] sm:$0xff]
      %v6036 = vld [vmem:[#allocation2 + $0x60] sm:$0xff]
      %v6037 = vld [vmem:[#allocation2 + $0x68] sm:$0xff]
      %v6038 = vld [vmem:[#allocation2 + $0x70] sm:$0xff]
      %v6039 = vld [vmem:[#allocation2 + $0x78] sm:$0xff]
      %v6040 = vld [vmem:[#allocation2 + $0x80] sm:$0xff]
      %v6041 = vld [vmem:[#allocation2 + $0x88] sm:$0xff]
      %v6042 = vld [vmem:[#allocation2 + $0x90] sm:$0xff]
      %v6043 = vld [vmem:[#allocation2 + $0x98] sm:$0xff]
      %v6044 = vld [vmem:[#allocation2 + $0xa0] sm:$0xff]
      %v6045 = vld [vmem:[#allocation2 + $0xa8] sm:$0xff]
      %v6046 = vld [vmem:[#allocation2 + $0xb0] sm:$0xff]
      %v6047 = vld [vmem:[#allocation2 + $0xb8] sm:$0xff]
      %v6048 = vld [vmem:[#allocation2 + $0xc0] sm:$0xff]
      %v6049 = vld [vmem:[#allocation2 + $0xc8] sm:$0xff]
      %v6050 = vld [vmem:[#allocation2 + $0xd0] sm:$0xff]
      %v6051 = vld [vmem:[#allocation2 + $0xd8] sm:$0xff]
      %v6052 = vld [vmem:[#allocation2 + $0xe0] sm:$0xff]
      %v6053 = vld [vmem:[#allocation2 + $0xe8] sm:$0xff]
      %v6054 = vld [vmem:[#allocation2 + $0xf0] sm:$0xff]
      %v6055 = vld [vmem:[#allocation2 + $0xf8] sm:$0xff]
      %v6056 = vld [vmem:[#allocation2 + $0x100] sm:$0xff]
      %v6057 = vld [vmem:[#allocation2 + $0x108] sm:$0xff]
      %v6058 = vld [vmem:[#allocation2 + $0x110] sm:$0xff]
      %v6059 = vld [vmem:[#allocation2 + $0x118] sm:$0xff]
      %v6060 = vld [vmem:[#allocation2 + $0x120] sm:$0xff]
      %v6061 = vld [vmem:[#allocation2 + $0x128] sm:$0xff]
      %v6062 = vld [vmem:[#allocation2 + $0x130] sm:$0xff]
      %v6063 = vld [vmem:[#allocation2 + $0x138] sm:$0xff]
      %v6064 = vld [vmem:[#allocation2 + $0x140] sm:$0xff]
      %v6065 = vld [vmem:[#allocation2 + $0x148] sm:$0xff]
      %v6066 = vld [vmem:[#allocation2 + $0x150] sm:$0xff]
      %v6067 = vld [vmem:[#allocation2 + $0x158] sm:$0xff]
      %v6068 = vld [vmem:[#allocation2 + $0x160] sm:$0x3]
      %v6069 = vld [vmem:[#allocation2 + $0x168] sm:$0x3]
      %v6070 = vld [vmem:[#allocation2 + $0x170] sm:$0x3]
      %v6071 = vld [vmem:[#allocation2 + $0x178] sm:$0x3]
      %s6072 = scalar_lea.vmem %s2, 36
      %v6073 = vld [vmem:[%s6072] sm:$0xf]
      %6075 = vset.pattern.permute.xlu0 0
      %6076 = vperm.xlu0 %6075, %v6073
      %v6077 = vpop.permute.xlu0 %6076
      %v6081 = vunpack.c.l.s4 1983009808
      %v6082 = vunpack.c.0.s8 %v6081
      %v6083 = vlaneseq
      %v6084 = vshrl.u32 %v6083, 7
      %v6085 = vsub.s32 %v6082, %v6084
      %v6086 = vrot.slane %v6023, %v6085
      %v6087 = vcombine.high %v6086, %v6086
      %v6090 = vsel %vm3106, %v6087, 0
      %v6093 = vsel %vm695, %v6068, 0
      %v6096 = vsel %vm695, %v6069, 0
      %v6099 = vsel %vm695, %v6070, 0
      %v6102 = vsel %vm695, %v6071, 0
      %6104 = vmatprep.subr.bf16.mxu0 %v6025
      %6105 = vmatpush1.bf16.msra.mxu0 %v6024
      %6106 = vmatprep.subr.bf16.mxu0 %v6029
      %6107 = vmatpush1.bf16.msra.mxu0 %v6028
      %6108 = vmatprep.subr.bf16.mxu0 %v6033
      %6109 = vmatpush1.bf16.msra.mxu0 %v6032
      %6110 = vmatprep.subr.bf16.mxu0 %v6037
      %6111 = vmatpush1.bf16.msra.mxu0 %v6036
      %6112 = vmatprep.subr.bf16.mxu0 %v6041
      %6113 = vmatpush1.bf16.msra.mxu0 %v6040
      %6114 = vmatprep.subr.bf16.mxu0 %v6045
      %6115 = vmatpush1.bf16.msra.mxu0 %v6044
      %6116 = vmatprep.subr.bf16.mxu0 %v6049
      %6117 = vmatpush1.bf16.msra.mxu0 %v6048
      %6118 = vmatprep.subr.bf16.mxu0 %v6053
      %6119 = vmatpush1.bf16.msra.mxu0 %v6052
      %6120 = vmatprep.subr.bf16.mxu0 %v6057
      %6121 = vmatpush1.bf16.msra.mxu0 %v6056
      %6122 = vmatprep.subr.bf16.mxu0 %v6061
      %6123 = vmatpush1.bf16.msra.mxu0 %v6060
      %6124 = vmatprep.subr.bf16.mxu0 %v6065
      %6125 = vmatpush1.bf16.msra.mxu0 %v6064
      %6126 = vmatprep.subr.bf16.mxu0 %v6096
      %6127 = vmatpush1.bf16.msra.mxu0 %v6093
      %6128 = vmatprep.subr.bf16.mxu0 0
      %6129 = vmatpush1.bf16.msra.mxu0 0
      %6130 = vmatprep.subr.bf16.mxu0 0
      %6131 = vmatpush1.bf16.msra.mxu0 0
      %6132 = vmatprep.subr.bf16.mxu0 0
      %6133 = vmatpush1.bf16.msra.mxu0 0
      %6134 = vmatprep.subr.bf16.mxu0 0
      %6135 = vmatpush1.bf16.msra.mxu0 0
      %6136 = vmatprep.mubr.bf16.mxu0 %v6090
      %6137 = vmatmul.mubr.bf16.gmra.mrb[0].mxu0 %v6086
      %v6138 = vpop.f32.mrb[0].mxu0
      %v6139 = vadd.f32 %v6077, %v6138
      %v6140 = vpop.f32.mrb[0].mxu0
      %v6141 = vadd.f32 %v6077, %v6140
      %v6142 = vpop.f32.mrb[0].mxu0
      %v6143 = vpop.f32.mrb[0].mxu0
      %6144 = vdwg.mxu0
      %6145 = vmatprep.subr.bf16.mxu0 %v6027
      %6146 = vmatpush1.bf16.msra.mxu0 %v6026
      %6147 = vmatprep.subr.bf16.mxu0 %v6031
      %6148 = vmatpush1.bf16.msra.mxu0 %v6030
      %6149 = vmatprep.subr.bf16.mxu0 %v6035
      %6150 = vmatpush1.bf16.msra.mxu0 %v6034
      %6151 = vmatprep.subr.bf16.mxu0 %v6039
      %6152 = vmatpush1.bf16.msra.mxu0 %v6038
      %6153 = vmatprep.subr.bf16.mxu0 %v6043
      %6154 = vmatpush1.bf16.msra.mxu0 %v6042
      %6155 = vmatprep.subr.bf16.mxu0 %v6047
      %6156 = vmatpush1.bf16.msra.mxu0 %v6046
      %6157 = vmatprep.subr.bf16.mxu0 %v6051
      %6158 = vmatpush1.bf16.msra.mxu0 %v6050
      %6159 = vmatprep.subr.bf16.mxu0 %v6055
      %6160 = vmatpush1.bf16.msra.mxu0 %v6054
      %6161 = vmatprep.subr.bf16.mxu0 %v6059
      %6162 = vmatpush1.bf16.msra.mxu0 %v6058
      %6163 = vmatprep.subr.bf16.mxu0 %v6063
      %6164 = vmatpush1.bf16.msra.mxu0 %v6062
      %6165 = vmatprep.subr.bf16.mxu0 %v6067
      %6166 = vmatpush1.bf16.msra.mxu0 %v6066
      %6167 = vmatprep.subr.bf16.mxu0 %v6102
      %6168 = vmatpush1.bf16.msra.mxu0 %v6099
      %6169 = vmatprep.subr.bf16.mxu0 0
      %6170 = vmatpush1.bf16.msra.mxu0 0
      %6171 = vmatprep.subr.bf16.mxu0 0
      %6172 = vmatpush1.bf16.msra.mxu0 0
      %6173 = vmatprep.subr.bf16.mxu0 0
      %6174 = vmatpush1.bf16.msra.mxu0 0
      %6175 = vmatprep.subr.bf16.mxu0 0
      %6176 = vmatpush1.bf16.msra.mxu0 0
      %6177 = vmatprep.mubr.bf16.mxu0 %v6090
      %6178 = vmatmul.mubr.bf16.gmra.mrb[0].mxu0 %v6086
      %v6179 = vpop.f32.mrb[0].mxu0
      %v6180 = vadd.f32 %v6077, %v6179
      %v6181 = vpop.f32.mrb[0].mxu0
      %v6182 = vadd.f32 %v6077, %v6181
      %v6183 = vpop.f32.mrb[0].mxu0
      %v6184 = vpop.f32.mrb[0].mxu0
      %6185 = vdwg.mxu0
      %v6186 = vmul.f32 %v6139, 0.2
      %v6187 = vmul.f32 %v6141, 0.2
      %v6188 = vmul.f32 %v6180, 0.2
      %v6189 = vmul.f32 %v6182, 0.2
      %v6190 = vadd.f32 %v6186, %v3208
      %v6191 = vadd.f32 %v6187, %v3209
      %v6192 = vadd.f32 %v6188, %v3210
      %v6193 = vadd.f32 %v6189, %v3211
      %6194 = vrot.lane.b32.xlu0 %v6190, 17
      %v6195 = vpop.permute.xlu0 %6194
      %6196 = vrot.lane.b32.xlu0 %v6191, 17
      %v6197 = vpop.permute.xlu0 %6196
      %6198 = vrot.lane.b32.xlu0 %v6192, 17
      %v6199 = vpop.permute.xlu0 %6198
      %6200 = vrot.lane.b32.xlu0 %v6193, 17
      %v6201 = vpop.permute.xlu0 %6200
      %v6202 = vsel %vm217, %v6199, %v6201
      %v6203 = vsel %vm217, %v6197, %v6199
      %v6204 = vsel %vm217, %v6195, %v6197
      %v6205 = vsel %vm217, %v6201, %v6195
      %v6206 = vld [vmem:[%s3] ss:$8 sm:$0xf]
      %v6208 = vlaneseq
      %v6209 = vshrl.u32 %v6208, 7
      %v6210 = vsub.s32 0, %v6209
      %v6211 = vrot.slane %v6206, %v6210
      %v6212 = vlaneseq
      %v6213 = vshrl.u32 %v6212, 7
      %v6214 = vsub.s32 1, %v6213
      %v6215 = vrot.slane %v6206, %v6214
      %v6216 = vlaneseq
      %v6217 = vshrl.u32 %v6216, 7
      %v6218 = vsub.s32 2, %v6217
      %v6219 = vrot.slane %v6206, %v6218
      %v6220 = vlaneseq
      %v6221 = vshrl.u32 %v6220, 7
      %v6222 = vsub.s32 3, %v6221
      %v6223 = vrot.slane %v6206, %v6222
      %v6228 = vmul.f32 %v6205, %v6211
      %v6229 = vmul.f32 %v6204, %v6215
      %v6230 = vmul.f32 %v6203, %v6219
      %v6231 = vmul.f32 %v6202, %v6223
      %v6232 = vpack.c.bf16 %v6228, %v6228
      %v6233 = vpack.c.bf16 %v6229, %v6229
      %v6234 = vpack.c.bf16 %v6230, %v6230
      %v6235 = vpack.c.bf16 %v6231, %v6231
      %6236 = vst [vmem:[#allocation2] sm:$0x3] %v6232
      %6237 = vst [vmem:[#allocation2 + $0x8] sm:$0x3] %v6233
      %6238 = vst [vmem:[#allocation2 + $0x10] sm:$0x3] %v6234
      %6239 = vst [vmem:[#allocation2 + $0x18] sm:$0x3] %v6235
      %6240 = vrot.lane.b32.xlu0 %v6190, 16
      %v6241 = vpop.permute.xlu0 %6240
      %6242 = vrot.lane.b32.xlu0 %v6191, 16
      %v6243 = vpop.permute.xlu0 %6242
      %6244 = vrot.lane.b32.xlu0 %v6192, 16
      %v6245 = vpop.permute.xlu0 %6244
      %6246 = vrot.lane.b32.xlu0 %v6193, 16
      %v6247 = vpop.permute.xlu0 %6246
      %v6248 = vsel %vm264, %v6245, %v6247
      %v6249 = vsel %vm264, %v6243, %v6245
      %v6250 = vsel %vm264, %v6241, %v6243
      %v6251 = vsel %vm264, %v6247, %v6241
      %v6252 = vld [vmem:[%s269] ss:$8 sm:$0xf]
      %v6254 = vlaneseq
      %v6255 = vshrl.u32 %v6254, 7
      %v6256 = vsub.s32 0, %v6255
      %v6257 = vrot.slane %v6252, %v6256
      %v6258 = vlaneseq
      %v6259 = vshrl.u32 %v6258, 7
      %v6260 = vsub.s32 1, %v6259
      %v6261 = vrot.slane %v6252, %v6260
      %v6262 = vlaneseq
      %v6263 = vshrl.u32 %v6262, 7
      %v6264 = vsub.s32 2, %v6263
      %v6265 = vrot.slane %v6252, %v6264
      %v6266 = vlaneseq
      %v6267 = vshrl.u32 %v6266, 7
      %v6268 = vsub.s32 3, %v6267
      %v6269 = vrot.slane %v6252, %v6268
      %v6274 = vmul.f32 %v6251, %v6257
      %v6275 = vmul.f32 %v6250, %v6261
      %v6276 = vmul.f32 %v6249, %v6265
      %v6277 = vmul.f32 %v6248, %v6269
      %v6278 = vpack.c.bf16 %v6274, %v6274
      %v6279 = vpack.c.bf16 %v6275, %v6275
      %v6280 = vpack.c.bf16 %v6276, %v6276
      %v6281 = vpack.c.bf16 %v6277, %v6277
      %v6286 = vrot.slane %v6278, 6
      %v6287 = vrot.slane %v6279, 6
      %v6288 = vrot.slane %v6280, 6
      %v6289 = vrot.slane %v6281, 6
      %6294 = vst [vmem:[#allocation2] sm:$0xc] %v6286
      %6295 = vst [vmem:[#allocation2 + $0x8] sm:$0xc] %v6287
      %6296 = vst [vmem:[#allocation2 + $0x10] sm:$0xc] %v6288
      %6297 = vst [vmem:[#allocation2 + $0x18] sm:$0xc] %v6289
      %6298 = vrot.lane.b32.xlu0 %v6190, 15
      %v6299 = vpop.permute.xlu0 %6298
      %6300 = vrot.lane.b32.xlu0 %v6191, 15
      %v6301 = vpop.permute.xlu0 %6300
      %6302 = vrot.lane.b32.xlu0 %v6192, 15
      %v6303 = vpop.permute.xlu0 %6302
      %6304 = vrot.lane.b32.xlu0 %v6193, 15
      %v6305 = vpop.permute.xlu0 %6304
      %v6306 = vsel %vm324, %v6303, %v6305
      %v6307 = vsel %vm324, %v6301, %v6303
      %v6308 = vsel %vm324, %v6299, %v6301
      %v6309 = vsel %vm324, %v6305, %v6299
      %v6310 = vld [vmem:[%s329] ss:$8 sm:$0xf]
      %v6312 = vlaneseq
      %v6313 = vshrl.u32 %v6312, 7
      %v6314 = vsub.s32 0, %v6313
      %v6315 = vrot.slane %v6310, %v6314
      %v6316 = vlaneseq
      %v6317 = vshrl.u32 %v6316, 7
      %v6318 = vsub.s32 1, %v6317
      %v6319 = vrot.slane %v6310, %v6318
      %v6320 = vlaneseq
      %v6321 = vshrl.u32 %v6320, 7
      %v6322 = vsub.s32 2, %v6321
      %v6323 = vrot.slane %v6310, %v6322
      %v6324 = vlaneseq
      %v6325 = vshrl.u32 %v6324, 7
      %v6326 = vsub.s32 3, %v6325
      %v6327 = vrot.slane %v6310, %v6326
      %v6332 = vmul.f32 %v6309, %v6315
      %v6333 = vmul.f32 %v6308, %v6319
      %v6334 = vmul.f32 %v6307, %v6323
      %v6335 = vmul.f32 %v6306, %v6327
      %v6336 = vpack.c.bf16 %v6332, %v6332
      %v6337 = vpack.c.bf16 %v6333, %v6333
      %v6338 = vpack.c.bf16 %v6334, %v6334
      %v6339 = vpack.c.bf16 %v6335, %v6335
      %v6344 = vrot.slane %v6336, 4
      %v6345 = vrot.slane %v6337, 4
      %v6346 = vrot.slane %v6338, 4
      %v6347 = vrot.slane %v6339, 4
      %6352 = vst [vmem:[#allocation2] sm:$0x30] %v6344
      %6353 = vst [vmem:[#allocation2 + $0x8] sm:$0x30] %v6345
      %6354 = vst [vmem:[#allocation2 + $0x10] sm:$0x30] %v6346
      %6355 = vst [vmem:[#allocation2 + $0x18] sm:$0x30] %v6347
      %6356 = vrot.lane.b32.xlu0 %v6190, 1
      %v6357 = vpop.permute.xlu0 %6356
      %6358 = vrot.lane.b32.xlu0 %v6191, 1
      %v6359 = vpop.permute.xlu0 %6358
      %6360 = vrot.lane.b32.xlu0 %v6192, 1
      %v6361 = vpop.permute.xlu0 %6360
      %6362 = vrot.lane.b32.xlu0 %v6193, 1
      %v6363 = vpop.permute.xlu0 %6362
      %v6364 = vsel %vm384, %v6361, %v6363
      %v6365 = vsel %vm384, %v6359, %v6361
      %v6366 = vsel %vm384, %v6357, %v6359
      %v6367 = vsel %vm384, %v6363, %v6357
      %v6368 = vld [vmem:[%s389] ss:$8 sm:$0xf]
      %v6370 = vlaneseq
      %v6371 = vshrl.u32 %v6370, 7
      %v6372 = vsub.s32 0, %v6371
      %v6373 = vrot.slane %v6368, %v6372
      %v6374 = vlaneseq
      %v6375 = vshrl.u32 %v6374, 7
      %v6376 = vsub.s32 1, %v6375
      %v6377 = vrot.slane %v6368, %v6376
      %v6378 = vlaneseq
      %v6379 = vshrl.u32 %v6378, 7
      %v6380 = vsub.s32 2, %v6379
      %v6381 = vrot.slane %v6368, %v6380
      %v6382 = vlaneseq
      %v6383 = vshrl.u32 %v6382, 7
      %v6384 = vsub.s32 3, %v6383
      %v6385 = vrot.slane %v6368, %v6384
      %v6390 = vmul.f32 %v6367, %v6373
      %v6391 = vmul.f32 %v6366, %v6377
      %v6392 = vmul.f32 %v6365, %v6381
      %v6393 = vmul.f32 %v6364, %v6385
      %v6394 = vpack.c.bf16 %v6390, %v6390
      %v6395 = vpack.c.bf16 %v6391, %v6391
      %v6396 = vpack.c.bf16 %v6392, %v6392
      %v6397 = vpack.c.bf16 %v6393, %v6393
      %v6402 = vrot.slane %v6394, 2
      %v6403 = vrot.slane %v6395, 2
      %v6404 = vrot.slane %v6396, 2
      %v6405 = vrot.slane %v6397, 2
      %6410 = vst [vmem:[#allocation2] sm:$0xc0] %v6402
      %6411 = vst [vmem:[#allocation2 + $0x8] sm:$0xc0] %v6403
      %6412 = vst [vmem:[#allocation2 + $0x10] sm:$0xc0] %v6404
      %6413 = vst [vmem:[#allocation2 + $0x18] sm:$0xc0] %v6405
      %v6414 = vpack.c.bf16 %v6190, %v6190
      %v6415 = vpack.c.bf16 %v6191, %v6191
      %v6416 = vpack.c.bf16 %v6192, %v6192
      %v6417 = vpack.c.bf16 %v6193, %v6193
      %6418 = vst [vmem:[#allocation2 + $0x20] sm:$0x3] %v6414
      %6419 = vst [vmem:[#allocation2 + $0x28] sm:$0x3] %v6415
      %6420 = vst [vmem:[#allocation2 + $0x30] sm:$0x3] %v6416
      %6421 = vst [vmem:[#allocation2 + $0x38] sm:$0x3] %v6417
      %6422 = vrot.lane.b32.xlu0 %v6190, 127
      %v6423 = vpop.permute.xlu0 %6422
      %6424 = vrot.lane.b32.xlu0 %v6191, 127
      %v6425 = vpop.permute.xlu0 %6424
      %6426 = vrot.lane.b32.xlu0 %v6192, 127
      %v6427 = vpop.permute.xlu0 %6426
      %6428 = vrot.lane.b32.xlu0 %v6193, 127
      %v6429 = vpop.permute.xlu0 %6428
      %v6430 = vsel %vm452, %v6427, %v6429
      %v6431 = vsel %vm452, %v6425, %v6427
      %v6432 = vsel %vm452, %v6423, %v6425
      %v6433 = vsel %vm452, %v6429, %v6423
      %v6434 = vld [vmem:[%s457] ss:$8 sm:$0xf]
      %v6436 = vlaneseq
      %v6437 = vshrl.u32 %v6436, 7
      %v6438 = vsub.s32 0, %v6437
      %v6439 = vrot.slane %v6434, %v6438
      %v6440 = vlaneseq
      %v6441 = vshrl.u32 %v6440, 7
      %v6442 = vsub.s32 1, %v6441
      %v6443 = vrot.slane %v6434, %v6442
      %v6444 = vlaneseq
      %v6445 = vshrl.u32 %v6444, 7
      %v6446 = vsub.s32 2, %v6445
      %v6447 = vrot.slane %v6434, %v6446
      %v6448 = vlaneseq
      %v6449 = vshrl.u32 %v6448, 7
      %v6450 = vsub.s32 3, %v6449
      %v6451 = vrot.slane %v6434, %v6450
      %v6456 = vmul.f32 %v6432, %v6439
      %v6457 = vmul.f32 %v6431, %v6443
      %v6458 = vmul.f32 %v6430, %v6447
      %v6459 = vmul.f32 %v6433, %v6451
      %v6460 = vpack.c.bf16 %v6456, %v6456
      %v6461 = vpack.c.bf16 %v6457, %v6457
      %v6462 = vpack.c.bf16 %v6458, %v6458
      %v6463 = vpack.c.bf16 %v6459, %v6459
      %v6468 = vrot.slane %v6460, 6
      %v6469 = vrot.slane %v6461, 6
      %v6470 = vrot.slane %v6462, 6
      %v6471 = vrot.slane %v6463, 6
      %6476 = vst [vmem:[#allocation2 + $0x20] sm:$0xc] %v6468
      %6477 = vst [vmem:[#allocation2 + $0x28] sm:$0xc] %v6469
      %6478 = vst [vmem:[#allocation2 + $0x30] sm:$0xc] %v6470
      %6479 = vst [vmem:[#allocation2 + $0x38] sm:$0xc] %v6471
      %6480 = vrot.lane.b32.xlu0 %v6190, 113
      %v6481 = vpop.permute.xlu0 %6480
      %6482 = vrot.lane.b32.xlu0 %v6191, 113
      %v6483 = vpop.permute.xlu0 %6482
      %6484 = vrot.lane.b32.xlu0 %v6192, 113
      %v6485 = vpop.permute.xlu0 %6484
      %6486 = vrot.lane.b32.xlu0 %v6193, 113
      %v6487 = vpop.permute.xlu0 %6486
      %v6488 = vsel %vm512, %v6485, %v6487
      %v6489 = vsel %vm512, %v6483, %v6485
      %v6490 = vsel %vm512, %v6481, %v6483
      %v6491 = vsel %vm512, %v6487, %v6481
      %v6492 = vld [vmem:[%s517] ss:$8 sm:$0xf]
      %v6494 = vlaneseq
      %v6495 = vshrl.u32 %v6494, 7
      %v6496 = vsub.s32 0, %v6495
      %v6497 = vrot.slane %v6492, %v6496
      %v6498 = vlaneseq
      %v6499 = vshrl.u32 %v6498, 7
      %v6500 = vsub.s32 1, %v6499
      %v6501 = vrot.slane %v6492, %v6500
      %v6502 = vlaneseq
      %v6503 = vshrl.u32 %v6502, 7
      %v6504 = vsub.s32 2, %v6503
      %v6505 = vrot.slane %v6492, %v6504
      %v6506 = vlaneseq
      %v6507 = vshrl.u32 %v6506, 7
      %v6508 = vsub.s32 3, %v6507
      %v6509 = vrot.slane %v6492, %v6508
      %v6514 = vmul.f32 %v6490, %v6497
      %v6515 = vmul.f32 %v6489, %v6501
      %v6516 = vmul.f32 %v6488, %v6505
      %v6517 = vmul.f32 %v6491, %v6509
      %v6518 = vpack.c.bf16 %v6514, %v6514
      %v6519 = vpack.c.bf16 %v6515, %v6515
      %v6520 = vpack.c.bf16 %v6516, %v6516
      %v6521 = vpack.c.bf16 %v6517, %v6517
      %v6526 = vrot.slane %v6518, 4
      %v6527 = vrot.slane %v6519, 4
      %v6528 = vrot.slane %v6520, 4
      %v6529 = vrot.slane %v6521, 4
      %6534 = vst [vmem:[#allocation2 + $0x20] sm:$0x30] %v6526
      %6535 = vst [vmem:[#allocation2 + $0x28] sm:$0x30] %v6527
      %6536 = vst [vmem:[#allocation2 + $0x30] sm:$0x30] %v6528
      %6537 = vst [vmem:[#allocation2 + $0x38] sm:$0x30] %v6529
      %6538 = vrot.lane.b32.xlu0 %v6190, 112
      %v6539 = vpop.permute.xlu0 %6538
      %6540 = vrot.lane.b32.xlu0 %v6191, 112
      %v6541 = vpop.permute.xlu0 %6540
      %6542 = vrot.lane.b32.xlu0 %v6192, 112
      %v6543 = vpop.permute.xlu0 %6542
      %6544 = vrot.lane.b32.xlu0 %v6193, 112
      %v6545 = vpop.permute.xlu0 %6544
      %v6546 = vsel %vm572, %v6543, %v6545
      %v6547 = vsel %vm572, %v6541, %v6543
      %v6548 = vsel %vm572, %v6539, %v6541
      %v6549 = vsel %vm572, %v6545, %v6539
      %v6550 = vld [vmem:[%s577] ss:$8 sm:$0xf]
      %v6552 = vlaneseq
      %v6553 = vshrl.u32 %v6552, 7
      %v6554 = vsub.s32 0, %v6553
      %v6555 = vrot.slane %v6550, %v6554
      %v6556 = vlaneseq
      %v6557 = vshrl.u32 %v6556, 7
      %v6558 = vsub.s32 1, %v6557
      %v6559 = vrot.slane %v6550, %v6558
      %v6560 = vlaneseq
      %v6561 = vshrl.u32 %v6560, 7
      %v6562 = vsub.s32 2, %v6561
      %v6563 = vrot.slane %v6550, %v6562
      %v6564 = vlaneseq
      %v6565 = vshrl.u32 %v6564, 7
      %v6566 = vsub.s32 3, %v6565
      %v6567 = vrot.slane %v6550, %v6566
      %v6572 = vmul.f32 %v6548, %v6555
      %v6573 = vmul.f32 %v6547, %v6559
      %v6574 = vmul.f32 %v6546, %v6563
      %v6575 = vmul.f32 %v6549, %v6567
      %v6576 = vpack.c.bf16 %v6572, %v6572
      %v6577 = vpack.c.bf16 %v6573, %v6573
      %v6578 = vpack.c.bf16 %v6574, %v6574
      %v6579 = vpack.c.bf16 %v6575, %v6575
      %v6584 = vrot.slane %v6576, 2
      %v6585 = vrot.slane %v6577, 2
      %v6586 = vrot.slane %v6578, 2
      %v6587 = vrot.slane %v6579, 2
      %6592 = vst [vmem:[#allocation2 + $0x20] sm:$0xc0] %v6584
      %6593 = vst [vmem:[#allocation2 + $0x28] sm:$0xc0] %v6585
      %6594 = vst [vmem:[#allocation2 + $0x30] sm:$0xc0] %v6586
      %6595 = vst [vmem:[#allocation2 + $0x38] sm:$0xc0] %v6587
      %6596 = vrot.lane.b32.xlu0 %v6190, 111
      %v6597 = vpop.permute.xlu0 %6596
      %6598 = vrot.lane.b32.xlu0 %v6191, 111
      %v6599 = vpop.permute.xlu0 %6598
      %6600 = vrot.lane.b32.xlu0 %v6192, 111
      %v6601 = vpop.permute.xlu0 %6600
      %6602 = vrot.lane.b32.xlu0 %v6193, 111
      %v6603 = vpop.permute.xlu0 %6602
      %v6604 = vsel %vm632, %v6601, %v6603
      %v6605 = vsel %vm632, %v6599, %v6601
      %v6606 = vsel %vm632, %v6597, %v6599
      %v6607 = vsel %vm632, %v6603, %v6597
      %v6608 = vld [vmem:[%s637] ss:$8 sm:$0xf]
      %v6610 = vlaneseq
      %v6611 = vshrl.u32 %v6610, 7
      %v6612 = vsub.s32 0, %v6611
      %v6613 = vrot.slane %v6608, %v6612
      %v6614 = vlaneseq
      %v6615 = vshrl.u32 %v6614, 7
      %v6616 = vsub.s32 1, %v6615
      %v6617 = vrot.slane %v6608, %v6616
      %v6618 = vlaneseq
      %v6619 = vshrl.u32 %v6618, 7
      %v6620 = vsub.s32 2, %v6619
      %v6621 = vrot.slane %v6608, %v6620
      %v6622 = vlaneseq
      %v6623 = vshrl.u32 %v6622, 7
      %v6624 = vsub.s32 3, %v6623
      %v6625 = vrot.slane %v6608, %v6624
      %v6630 = vmul.f32 %v6606, %v6613
      %v6631 = vmul.f32 %v6605, %v6617
      %v6632 = vmul.f32 %v6604, %v6621
      %v6633 = vmul.f32 %v6607, %v6625
      %v6634 = vpack.c.bf16 %v6630, %v6630
      %v6635 = vpack.c.bf16 %v6631, %v6631
      %v6636 = vpack.c.bf16 %v6632, %v6632
      %v6637 = vpack.c.bf16 %v6633, %v6633
      %6638 = vst [vmem:[#allocation2 + $0x40] sm:$0x3] %v6634
      %6639 = vst [vmem:[#allocation2 + $0x48] sm:$0x3] %v6635
      %6640 = vst [vmem:[#allocation2 + $0x50] sm:$0x3] %v6636
      %6641 = vst [vmem:[#allocation2 + $0x58] sm:$0x3] %v6637
      %s6642 = scalar_lea.vmem %s1, 40
      %v6643 = vld [vmem:[%s6642] sm:$0xf]
      %v6644 = vld [vmem:[#allocation2] sm:$0xff]
      %v6645 = vld [vmem:[#allocation2 + $0x8] sm:$0xff]
      %v6646 = vld [vmem:[#allocation2 + $0x10] sm:$0xff]
      %v6647 = vld [vmem:[#allocation2 + $0x18] sm:$0xff]
      %v6648 = vld [vmem:[#allocation2 + $0x20] sm:$0xff]
      %v6649 = vld [vmem:[#allocation2 + $0x28] sm:$0xff]
      %v6650 = vld [vmem:[#allocation2 + $0x30] sm:$0xff]
      %v6651 = vld [vmem:[#allocation2 + $0x38] sm:$0xff]
      %v6652 = vld [vmem:[#allocation2 + $0x40] sm:$0x3]
      %v6653 = vld [vmem:[#allocation2 + $0x48] sm:$0x3]
      %v6654 = vld [vmem:[#allocation2 + $0x50] sm:$0x3]
      %v6655 = vld [vmem:[#allocation2 + $0x58] sm:$0x3]
      %s6656 = scalar_lea.vmem %s2, 40
      %v6657 = vld [vmem:[%s6656] sm:$0xf]
      %6659 = vset.pattern.permute.xlu0 0
      %6660 = vperm.xlu0 %6659, %v6657
      %v6661 = vpop.permute.xlu0 %6660
      %v6664 = vsel %vm691, %v6643, 0
      %v6667 = vsel %vm695, %v6652, 0
      %v6670 = vsel %vm695, %v6653, 0
      %v6673 = vsel %vm695, %v6654, 0
      %v6676 = vsel %vm695, %v6655, 0
      %6678 = vmatprep.subr.bf16.mxu0 %v6645
      %6679 = vmatpush1.bf16.msra.mxu0 %v6644
      %6680 = vmatprep.subr.bf16.mxu0 %v6649
      %6681 = vmatpush1.bf16.msra.mxu0 %v6648
      %6682 = vmatprep.subr.bf16.mxu0 %v6670
      %6683 = vmatpush1.bf16.msra.mxu0 %v6667
      %6684 = vmatprep.subr.bf16.mxu0 0
      %6685 = vmatpush1.bf16.msra.mxu0 0
      %6686 = vmatprep.subr.bf16.mxu0 0
      %6687 = vmatpush1.bf16.msra.mxu0 0
      %6688 = vmatprep.subr.bf16.mxu0 0
      %6689 = vmatpush1.bf16.msra.mxu0 0
      %6690 = vmatprep.subr.bf16.mxu0 0
      %6691 = vmatpush1.bf16.msra.mxu0 0
      %6692 = vmatprep.subr.bf16.mxu0 0
      %6693 = vmatpush1.bf16.msra.mxu0 0
      %6694 = vmatprep.subr.bf16.mxu0 0
      %6695 = vmatpush1.bf16.msra.mxu0 0
      %6696 = vmatprep.subr.bf16.mxu0 0
      %6697 = vmatpush1.bf16.msra.mxu0 0
      %6698 = vmatprep.subr.bf16.mxu0 0
      %6699 = vmatpush1.bf16.msra.mxu0 0
      %6700 = vmatprep.subr.bf16.mxu0 0
      %6701 = vmatpush1.bf16.msra.mxu0 0
      %6702 = vmatprep.subr.bf16.mxu0 0
      %6703 = vmatpush1.bf16.msra.mxu0 0
      %6704 = vmatprep.subr.bf16.mxu0 0
      %6705 = vmatpush1.bf16.msra.mxu0 0
      %6706 = vmatprep.subr.bf16.mxu0 0
      %6707 = vmatpush1.bf16.msra.mxu0 0
      %6708 = vmatprep.subr.bf16.mxu0 0
      %6709 = vmatpush1.bf16.msra.mxu0 0
      %6710 = vmatprep.mubr.bf16.mxu0 0
      %6711 = vmatmul.mubr.bf16.gmra.mrb[0].mxu0 %v6664
      %v6712 = vpop.f32.mrb[0].mxu0
      %v6713 = vadd.f32 %v6661, %v6712
      %v6714 = vpop.f32.mrb[0].mxu0
      %v6715 = vadd.f32 %v6661, %v6714
      %v6716 = vpop.f32.mrb[0].mxu0
      %v6717 = vpop.f32.mrb[0].mxu0
      %6718 = vdwg.mxu0
      %6719 = vmatprep.subr.bf16.mxu0 %v6647
      %6720 = vmatpush1.bf16.msra.mxu0 %v6646
      %6721 = vmatprep.subr.bf16.mxu0 %v6651
      %6722 = vmatpush1.bf16.msra.mxu0 %v6650
      %6723 = vmatprep.subr.bf16.mxu0 %v6676
      %6724 = vmatpush1.bf16.msra.mxu0 %v6673
      %6725 = vmatprep.subr.bf16.mxu0 0
      %6726 = vmatpush1.bf16.msra.mxu0 0
      %6727 = vmatprep.subr.bf16.mxu0 0
      %6728 = vmatpush1.bf16.msra.mxu0 0
      %6729 = vmatprep.subr.bf16.mxu0 0
      %6730 = vmatpush1.bf16.msra.mxu0 0
      %6731 = vmatprep.subr.bf16.mxu0 0
      %6732 = vmatpush1.bf16.msra.mxu0 0
      %6733 = vmatprep.subr.bf16.mxu0 0
      %6734 = vmatpush1.bf16.msra.mxu0 0
      %6735 = vmatprep.subr.bf16.mxu0 0
      %6736 = vmatpush1.bf16.msra.mxu0 0
      %6737 = vmatprep.subr.bf16.mxu0 0
      %6738 = vmatpush1.bf16.msra.mxu0 0
      %6739 = vmatprep.subr.bf16.mxu0 0
      %6740 = vmatpush1.bf16.msra.mxu0 0
      %6741 = vmatprep.subr.bf16.mxu0 0
      %6742 = vmatpush1.bf16.msra.mxu0 0
      %6743 = vmatprep.subr.bf16.mxu0 0
      %6744 = vmatpush1.bf16.msra.mxu0 0
      %6745 = vmatprep.subr.bf16.mxu0 0
      %6746 = vmatpush1.bf16.msra.mxu0 0
      %6747 = vmatprep.subr.bf16.mxu0 0
      %6748 = vmatpush1.bf16.msra.mxu0 0
      %6749 = vmatprep.subr.bf16.mxu0 0
      %6750 = vmatpush1.bf16.msra.mxu0 0
      %6751 = vmatprep.mubr.bf16.mxu0 0
      %6752 = vmatmul.mubr.bf16.gmra.mrb[0].mxu0 %v6664
      %v6753 = vpop.f32.mrb[0].mxu0
      %v6754 = vadd.f32 %v6661, %v6753
      %v6755 = vpop.f32.mrb[0].mxu0
      %v6756 = vadd.f32 %v6661, %v6755
      %v6757 = vpop.f32.mrb[0].mxu0
      %v6758 = vpop.f32.mrb[0].mxu0
      %6759 = vdwg.mxu0
      %v6760 = vmax.f32 %v6713, 0.0
      %v6761 = vmax.f32 %v6715, 0.0
      %v6762 = vmax.f32 %v6754, 0.0
      %v6763 = vmax.f32 %v6756, 0.0
      %6764 = vrot.lane.b32.xlu0 %v6760, 17
      %v6765 = vpop.permute.xlu0 %6764
      %6766 = vrot.lane.b32.xlu0 %v6761, 17
      %v6767 = vpop.permute.xlu0 %6766
      %6768 = vrot.lane.b32.xlu0 %v6762, 17
      %v6769 = vpop.permute.xlu0 %6768
      %6770 = vrot.lane.b32.xlu0 %v6763, 17
      %v6771 = vpop.permute.xlu0 %6770
      %v6772 = vsel %vm217, %v6769, %v6771
      %v6773 = vsel %vm217, %v6767, %v6769
      %v6774 = vsel %vm217, %v6765, %v6767
      %v6775 = vsel %vm217, %v6771, %v6765
      %v6776 = vld [vmem:[%s3] ss:$8 sm:$0xf]
      %v6778 = vlaneseq
      %v6779 = vshrl.u32 %v6778, 7
      %v6780 = vsub.s32 0, %v6779
      %v6781 = vrot.slane %v6776, %v6780
      %v6782 = vlaneseq
      %v6783 = vshrl.u32 %v6782, 7
      %v6784 = vsub.s32 1, %v6783
      %v6785 = vrot.slane %v6776, %v6784
      %v6786 = vlaneseq
      %v6787 = vshrl.u32 %v6786, 7
      %v6788 = vsub.s32 2, %v6787
      %v6789 = vrot.slane %v6776, %v6788
      %v6790 = vlaneseq
      %v6791 = vshrl.u32 %v6790, 7
      %v6792 = vsub.s32 3, %v6791
      %v6793 = vrot.slane %v6776, %v6792
      %v6798 = vmul.f32 %v6775, %v6781
      %v6799 = vmul.f32 %v6774, %v6785
      %v6800 = vmul.f32 %v6773, %v6789
      %v6801 = vmul.f32 %v6772, %v6793
      %v6802 = vpack.c.bf16 %v6798, %v6798
      %v6803 = vpack.c.bf16 %v6799, %v6799
      %v6804 = vpack.c.bf16 %v6800, %v6800
      %v6805 = vpack.c.bf16 %v6801, %v6801
      %v6810 = vrot.slane %v6802, 6
      %v6811 = vrot.slane %v6803, 6
      %v6812 = vrot.slane %v6804, 6
      %v6813 = vrot.slane %v6805, 6
      %6818 = vst [vmem:[#allocation2 + $0x40] sm:$0xc] %v6810
      %6819 = vst [vmem:[#allocation2 + $0x48] sm:$0xc] %v6811
      %6820 = vst [vmem:[#allocation2 + $0x50] sm:$0xc] %v6812
      %6821 = vst [vmem:[#allocation2 + $0x58] sm:$0xc] %v6813
      %6822 = vrot.lane.b32.xlu0 %v6760, 16
      %v6823 = vpop.permute.xlu0 %6822
      %6824 = vrot.lane.b32.xlu0 %v6761, 16
      %v6825 = vpop.permute.xlu0 %6824
      %6826 = vrot.lane.b32.xlu0 %v6762, 16
      %v6827 = vpop.permute.xlu0 %6826
      %6828 = vrot.lane.b32.xlu0 %v6763, 16
      %v6829 = vpop.permute.xlu0 %6828
      %v6830 = vsel %vm264, %v6827, %v6829
      %v6831 = vsel %vm264, %v6825, %v6827
      %v6832 = vsel %vm264, %v6823, %v6825
      %v6833 = vsel %vm264, %v6829, %v6823
      %v6834 = vld [vmem:[%s269] ss:$8 sm:$0xf]
      %v6836 = vlaneseq
      %v6837 = vshrl.u32 %v6836, 7
      %v6838 = vsub.s32 0, %v6837
      %v6839 = vrot.slane %v6834, %v6838
      %v6840 = vlaneseq
      %v6841 = vshrl.u32 %v6840, 7
      %v6842 = vsub.s32 1, %v6841
      %v6843 = vrot.slane %v6834, %v6842
      %v6844 = vlaneseq
      %v6845 = vshrl.u32 %v6844, 7
      %v6846 = vsub.s32 2, %v6845
      %v6847 = vrot.slane %v6834, %v6846
      %v6848 = vlaneseq
      %v6849 = vshrl.u32 %v6848, 7
      %v6850 = vsub.s32 3, %v6849
      %v6851 = vrot.slane %v6834, %v6850
      %v6856 = vmul.f32 %v6833, %v6839
      %v6857 = vmul.f32 %v6832, %v6843
      %v6858 = vmul.f32 %v6831, %v6847
      %v6859 = vmul.f32 %v6830, %v6851
      %v6860 = vpack.c.bf16 %v6856, %v6856
      %v6861 = vpack.c.bf16 %v6857, %v6857
      %v6862 = vpack.c.bf16 %v6858, %v6858
      %v6863 = vpack.c.bf16 %v6859, %v6859
      %v6868 = vrot.slane %v6860, 4
      %v6869 = vrot.slane %v6861, 4
      %v6870 = vrot.slane %v6862, 4
      %v6871 = vrot.slane %v6863, 4
      %6876 = vst [vmem:[#allocation2 + $0x40] sm:$0x30] %v6868
      %6877 = vst [vmem:[#allocation2 + $0x48] sm:$0x30] %v6869
      %6878 = vst [vmem:[#allocation2 + $0x50] sm:$0x30] %v6870
      %6879 = vst [vmem:[#allocation2 + $0x58] sm:$0x30] %v6871
      %6880 = vrot.lane.b32.xlu0 %v6760, 15
      %v6881 = vpop.permute.xlu0 %6880
      %6882 = vrot.lane.b32.xlu0 %v6761, 15
      %v6883 = vpop.permute.xlu0 %6882
      %6884 = vrot.lane.b32.xlu0 %v6762, 15
      %v6885 = vpop.permute.xlu0 %6884
      %6886 = vrot.lane.b32.xlu0 %v6763, 15
      %v6887 = vpop.permute.xlu0 %6886
      %v6888 = vsel %vm324, %v6885, %v6887
      %v6889 = vsel %vm324, %v6883, %v6885
      %v6890 = vsel %vm324, %v6881, %v6883
      %v6891 = vsel %vm324, %v6887, %v6881
      %v6892 = vld [vmem:[%s329] ss:$8 sm:$0xf]
      %v6894 = vlaneseq
      %v6895 = vshrl.u32 %v6894, 7
      %v6896 = vsub.s32 0, %v6895
      %v6897 = vrot.slane %v6892, %v6896
      %v6898 = vlaneseq
      %v6899 = vshrl.u32 %v6898, 7
      %v6900 = vsub.s32 1, %v6899
      %v6901 = vrot.slane %v6892, %v6900
      %v6902 = vlaneseq
      %v6903 = vshrl.u32 %v6902, 7
      %v6904 = vsub.s32 2, %v6903
      %v6905 = vrot.slane %v6892, %v6904
      %v6906 = vlaneseq
      %v6907 = vshrl.u32 %v6906, 7
      %v6908 = vsub.s32 3, %v6907
      %v6909 = vrot.slane %v6892, %v6908
      %v6914 = vmul.f32 %v6891, %v6897
      %v6915 = vmul.f32 %v6890, %v6901
      %v6916 = vmul.f32 %v6889, %v6905
      %v6917 = vmul.f32 %v6888, %v6909
      %v6918 = vpack.c.bf16 %v6914, %v6914
      %v6919 = vpack.c.bf16 %v6915, %v6915
      %v6920 = vpack.c.bf16 %v6916, %v6916
      %v6921 = vpack.c.bf16 %v6917, %v6917
      %v6926 = vrot.slane %v6918, 2
      %v6927 = vrot.slane %v6919, 2
      %v6928 = vrot.slane %v6920, 2
      %v6929 = vrot.slane %v6921, 2
      %6934 = vst [vmem:[#allocation2 + $0x40] sm:$0xc0] %v6926
      %6935 = vst [vmem:[#allocation2 + $0x48] sm:$0xc0] %v6927
      %6936 = vst [vmem:[#allocation2 + $0x50] sm:$0xc0] %v6928
      %6937 = vst [vmem:[#allocation2 + $0x58] sm:$0xc0] %v6929
      %6938 = vrot.lane.b32.xlu0 %v6760, 1
      %v6939 = vpop.permute.xlu0 %6938
      %6940 = vrot.lane.b32.xlu0 %v6761, 1
      %v6941 = vpop.permute.xlu0 %6940
      %6942 = vrot.lane.b32.xlu0 %v6762, 1
      %v6943 = vpop.permute.xlu0 %6942
      %6944 = vrot.lane.b32.xlu0 %v6763, 1
      %v6945 = vpop.permute.xlu0 %6944
      %v6946 = vsel %vm384, %v6943, %v6945
      %v6947 = vsel %vm384, %v6941, %v6943
      %v6948 = vsel %vm384, %v6939, %v6941
      %v6949 = vsel %vm384, %v6945, %v6939
      %v6950 = vld [vmem:[%s389] ss:$8 sm:$0xf]
      %v6952 = vlaneseq
      %v6953 = vshrl.u32 %v6952, 7
      %v6954 = vsub.s32 0, %v6953
      %v6955 = vrot.slane %v6950, %v6954
      %v6956 = vlaneseq
      %v6957 = vshrl.u32 %v6956, 7
      %v6958 = vsub.s32 1, %v6957
      %v6959 = vrot.slane %v6950, %v6958
      %v6960 = vlaneseq
      %v6961 = vshrl.u32 %v6960, 7
      %v6962 = vsub.s32 2, %v6961
      %v6963 = vrot.slane %v6950, %v6962
      %v6964 = vlaneseq
      %v6965 = vshrl.u32 %v6964, 7
      %v6966 = vsub.s32 3, %v6965
      %v6967 = vrot.slane %v6950, %v6966
      %v6972 = vmul.f32 %v6949, %v6955
      %v6973 = vmul.f32 %v6948, %v6959
      %v6974 = vmul.f32 %v6947, %v6963
      %v6975 = vmul.f32 %v6946, %v6967
      %v6976 = vpack.c.bf16 %v6972, %v6972
      %v6977 = vpack.c.bf16 %v6973, %v6973
      %v6978 = vpack.c.bf16 %v6974, %v6974
      %v6979 = vpack.c.bf16 %v6975, %v6975
      %6980 = vst [vmem:[#allocation2 + $0x60] sm:$0x3] %v6976
      %6981 = vst [vmem:[#allocation2 + $0x68] sm:$0x3] %v6977
      %6982 = vst [vmem:[#allocation2 + $0x70] sm:$0x3] %v6978
      %6983 = vst [vmem:[#allocation2 + $0x78] sm:$0x3] %v6979
      %v6984 = vpack.c.bf16 %v6760, %v6760
      %v6985 = vpack.c.bf16 %v6761, %v6761
      %v6986 = vpack.c.bf16 %v6762, %v6762
      %v6987 = vpack.c.bf16 %v6763, %v6763
      %v6992 = vrot.slane %v6984, 6
      %v6993 = vrot.slane %v6985, 6
      %v6994 = vrot.slane %v6986, 6
      %v6995 = vrot.slane %v6987, 6
      %7000 = vst [vmem:[#allocation2 + $0x60] sm:$0xc] %v6992
      %7001 = vst [vmem:[#allocation2 + $0x68] sm:$0xc] %v6993
      %7002 = vst [vmem:[#allocation2 + $0x70] sm:$0xc] %v6994
      %7003 = vst [vmem:[#allocation2 + $0x78] sm:$0xc] %v6995
      %7004 = vrot.lane.b32.xlu0 %v6760, 127
      %v7005 = vpop.permute.xlu0 %7004
      %7006 = vrot.lane.b32.xlu0 %v6761, 127
      %v7007 = vpop.permute.xlu0 %7006
      %7008 = vrot.lane.b32.xlu0 %v6762, 127
      %v7009 = vpop.permute.xlu0 %7008
      %7010 = vrot.lane.b32.xlu0 %v6763, 127
      %v7011 = vpop.permute.xlu0 %7010
      %v7012 = vsel %vm452, %v7009, %v7011
      %v7013 = vsel %vm452, %v7007, %v7009
      %v7014 = vsel %vm452, %v7005, %v7007
      %v7015 = vsel %vm452, %v7011, %v7005
      %v7016 = vld [vmem:[%s457] ss:$8 sm:$0xf]
      %v7018 = vlaneseq
      %v7019 = vshrl.u32 %v7018, 7
      %v7020 = vsub.s32 0, %v7019
      %v7021 = vrot.slane %v7016, %v7020
      %v7022 = vlaneseq
      %v7023 = vshrl.u32 %v7022, 7
      %v7024 = vsub.s32 1, %v7023
      %v7025 = vrot.slane %v7016, %v7024
      %v7026 = vlaneseq
      %v7027 = vshrl.u32 %v7026, 7
      %v7028 = vsub.s32 2, %v7027
      %v7029 = vrot.slane %v7016, %v7028
      %v7030 = vlaneseq
      %v7031 = vshrl.u32 %v7030, 7
      %v7032 = vsub.s32 3, %v7031
      %v7033 = vrot.slane %v7016, %v7032
      %v7038 = vmul.f32 %v7014, %v7021
      %v7039 = vmul.f32 %v7013, %v7025
      %v7040 = vmul.f32 %v7012, %v7029
      %v7041 = vmul.f32 %v7015, %v7033
      %v7042 = vpack.c.bf16 %v7038, %v7038
      %v7043 = vpack.c.bf16 %v7039, %v7039
      %v7044 = vpack.c.bf16 %v7040, %v7040
      %v7045 = vpack.c.bf16 %v7041, %v7041
      %v7050 = vrot.slane %v7042, 4
      %v7051 = vrot.slane %v7043, 4
      %v7052 = vrot.slane %v7044, 4
      %v7053 = vrot.slane %v7045, 4
      %7058 = vst [vmem:[#allocation2 + $0x60] sm:$0x30] %v7050
      %7059 = vst [vmem:[#allocation2 + $0x68] sm:$0x30] %v7051
      %7060 = vst [vmem:[#allocation2 + $0x70] sm:$0x30] %v7052
      %7061 = vst [vmem:[#allocation2 + $0x78] sm:$0x30] %v7053
      %7062 = vrot.lane.b32.xlu0 %v6760, 113
      %v7063 = vpop.permute.xlu0 %7062
      %7064 = vrot.lane.b32.xlu0 %v6761, 113
      %v7065 = vpop.permute.xlu0 %7064
      %7066 = vrot.lane.b32.xlu0 %v6762, 113
      %v7067 = vpop.permute.xlu0 %7066
      %7068 = vrot.lane.b32.xlu0 %v6763, 113
      %v7069 = vpop.permute.xlu0 %7068
      %v7070 = vsel %vm512, %v7067, %v7069
      %v7071 = vsel %vm512, %v7065, %v7067
      %v7072 = vsel %vm512, %v7063, %v7065
      %v7073 = vsel %vm512, %v7069, %v7063
      %v7074 = vld [vmem:[%s517] ss:$8 sm:$0xf]
      %v7076 = vlaneseq
      %v7077 = vshrl.u32 %v7076, 7
      %v7078 = vsub.s32 0, %v7077
      %v7079 = vrot.slane %v7074, %v7078
      %v7080 = vlaneseq
      %v7081 = vshrl.u32 %v7080, 7
      %v7082 = vsub.s32 1, %v7081
      %v7083 = vrot.slane %v7074, %v7082
      %v7084 = vlaneseq
      %v7085 = vshrl.u32 %v7084, 7
      %v7086 = vsub.s32 2, %v7085
      %v7087 = vrot.slane %v7074, %v7086
      %v7088 = vlaneseq
      %v7089 = vshrl.u32 %v7088, 7
      %v7090 = vsub.s32 3, %v7089
      %v7091 = vrot.slane %v7074, %v7090
      %v7096 = vmul.f32 %v7072, %v7079
      %v7097 = vmul.f32 %v7071, %v7083
      %v7098 = vmul.f32 %v7070, %v7087
      %v7099 = vmul.f32 %v7073, %v7091
      %v7100 = vpack.c.bf16 %v7096, %v7096
      %v7101 = vpack.c.bf16 %v7097, %v7097
      %v7102 = vpack.c.bf16 %v7098, %v7098
      %v7103 = vpack.c.bf16 %v7099, %v7099
      %v7108 = vrot.slane %v7100, 2
      %v7109 = vrot.slane %v7101, 2
      %v7110 = vrot.slane %v7102, 2
      %v7111 = vrot.slane %v7103, 2
      %7116 = vst [vmem:[#allocation2 + $0x60] sm:$0xc0] %v7108
      %7117 = vst [vmem:[#allocation2 + $0x68] sm:$0xc0] %v7109
      %7118 = vst [vmem:[#allocation2 + $0x70] sm:$0xc0] %v7110
      %7119 = vst [vmem:[#allocation2 + $0x78] sm:$0xc0] %v7111
      %7120 = vrot.lane.b32.xlu0 %v6760, 112
      %v7121 = vpop.permute.xlu0 %7120
      %7122 = vrot.lane.b32.xlu0 %v6761, 112
      %v7123 = vpop.permute.xlu0 %7122
      %7124 = vrot.lane.b32.xlu0 %v6762, 112
      %v7125 = vpop.permute.xlu0 %7124
      %7126 = vrot.lane.b32.xlu0 %v6763, 112
      %v7127 = vpop.permute.xlu0 %7126
      %v7128 = vsel %vm572, %v7125, %v7127
      %v7129 = vsel %vm572, %v7123, %v7125
      %v7130 = vsel %vm572, %v7121, %v7123
      %v7131 = vsel %vm572, %v7127, %v7121
      %v7132 = vld [vmem:[%s577] ss:$8 sm:$0xf]
      %v7134 = vlaneseq
      %v7135 = vshrl.u32 %v7134, 7
      %v7136 = vsub.s32 0, %v7135
      %v7137 = vrot.slane %v7132, %v7136
      %v7138 = vlaneseq
      %v7139 = vshrl.u32 %v7138, 7
      %v7140 = vsub.s32 1, %v7139
      %v7141 = vrot.slane %v7132, %v7140
      %v7142 = vlaneseq
      %v7143 = vshrl.u32 %v7142, 7
      %v7144 = vsub.s32 2, %v7143
      %v7145 = vrot.slane %v7132, %v7144
      %v7146 = vlaneseq
      %v7147 = vshrl.u32 %v7146, 7
      %v7148 = vsub.s32 3, %v7147
      %v7149 = vrot.slane %v7132, %v7148
      %v7154 = vmul.f32 %v7130, %v7137
      %v7155 = vmul.f32 %v7129, %v7141
      %v7156 = vmul.f32 %v7128, %v7145
      %v7157 = vmul.f32 %v7131, %v7149
      %v7158 = vpack.c.bf16 %v7154, %v7154
      %v7159 = vpack.c.bf16 %v7155, %v7155
      %v7160 = vpack.c.bf16 %v7156, %v7156
      %v7161 = vpack.c.bf16 %v7157, %v7157
      %7162 = vst [vmem:[#allocation2 + $0x80] sm:$0x3] %v7158
      %7163 = vst [vmem:[#allocation2 + $0x88] sm:$0x3] %v7159
      %7164 = vst [vmem:[#allocation2 + $0x90] sm:$0x3] %v7160
      %7165 = vst [vmem:[#allocation2 + $0x98] sm:$0x3] %v7161
      %7166 = vrot.lane.b32.xlu0 %v6760, 111
      %v7167 = vpop.permute.xlu0 %7166
      %7168 = vrot.lane.b32.xlu0 %v6761, 111
      %v7169 = vpop.permute.xlu0 %7168
      %7170 = vrot.lane.b32.xlu0 %v6762, 111
      %v7171 = vpop.permute.xlu0 %7170
      %7172 = vrot.lane.b32.xlu0 %v6763, 111
      %v7173 = vpop.permute.xlu0 %7172
      %v7174 = vsel %vm632, %v7171, %v7173
      %v7175 = vsel %vm632, %v7169, %v7171
      %v7176 = vsel %vm632, %v7167, %v7169
      %v7177 = vsel %vm632, %v7173, %v7167
      %v7178 = vld [vmem:[%s637] ss:$8 sm:$0xf]
      %v7180 = vlaneseq
      %v7181 = vshrl.u32 %v7180, 7
      %v7182 = vsub.s32 0, %v7181
      %v7183 = vrot.slane %v7178, %v7182
      %v7184 = vlaneseq
      %v7185 = vshrl.u32 %v7184, 7
      %v7186 = vsub.s32 1, %v7185
      %v7187 = vrot.slane %v7178, %v7186
      %v7188 = vlaneseq
      %v7189 = vshrl.u32 %v7188, 7
      %v7190 = vsub.s32 2, %v7189
      %v7191 = vrot.slane %v7178, %v7190
      %v7192 = vlaneseq
      %v7193 = vshrl.u32 %v7192, 7
      %v7194 = vsub.s32 3, %v7193
      %v7195 = vrot.slane %v7178, %v7194
      %v7200 = vmul.f32 %v7176, %v7183
      %v7201 = vmul.f32 %v7175, %v7187
      %v7202 = vmul.f32 %v7174, %v7191
      %v7203 = vmul.f32 %v7177, %v7195
      %v7204 = vpack.c.bf16 %v7200, %v7200
      %v7205 = vpack.c.bf16 %v7201, %v7201
      %v7206 = vpack.c.bf16 %v7202, %v7202
      %v7207 = vpack.c.bf16 %v7203, %v7203
      %v7212 = vrot.slane %v7204, 6
      %v7213 = vrot.slane %v7205, 6
      %v7214 = vrot.slane %v7206, 6
      %v7215 = vrot.slane %v7207, 6
      %7220 = vst [vmem:[#allocation2 + $0x80] sm:$0xc] %v7212
      %7221 = vst [vmem:[#allocation2 + $0x88] sm:$0xc] %v7213
      %7222 = vst [vmem:[#allocation2 + $0x90] sm:$0xc] %v7214
      %7223 = vst [vmem:[#allocation2 + $0x98] sm:$0xc] %v7215
      %s7224 = scalar_lea.vmem %s1, 44
      %v7225 = vld [vmem:[%s7224] sm:$0xf]
      %v7226 = vld [vmem:[#allocation2] sm:$0xff]
      %v7227 = vld [vmem:[#allocation2 + $0x8] sm:$0xff]
      %v7228 = vld [vmem:[#allocation2 + $0x10] sm:$0xff]
      %v7229 = vld [vmem:[#allocation2 + $0x18] sm:$0xff]
      %v7230 = vld [vmem:[#allocation2 + $0x20] sm:$0xff]
      %v7231 = vld [vmem:[#allocation2 + $0x28] sm:$0xff]
      %v7232 = vld [vmem:[#allocation2 + $0x30] sm:$0xff]
      %v7233 = vld [vmem:[#allocation2 + $0x38] sm:$0xff]
      %v7234 = vld [vmem:[#allocation2 + $0x40] sm:$0xff]
      %v7235 = vld [vmem:[#allocation2 + $0x48] sm:$0xff]
      %v7236 = vld [vmem:[#allocation2 + $0x50] sm:$0xff]
      %v7237 = vld [vmem:[#allocation2 + $0x58] sm:$0xff]
      %v7238 = vld [vmem:[#allocation2 + $0x60] sm:$0xff]
      %v7239 = vld [vmem:[#allocation2 + $0x68] sm:$0xff]
      %v7240 = vld [vmem:[#allocation2 + $0x70] sm:$0xff]
      %v7241 = vld [vmem:[#allocation2 + $0x78] sm:$0xff]
      %v7242 = vld [vmem:[#allocation2 + $0x80] sm:$0xf]
      %v7243 = vld [vmem:[#allocation2 + $0x88] sm:$0xf]
      %v7244 = vld [vmem:[#allocation2 + $0x90] sm:$0xf]
      %v7245 = vld [vmem:[#allocation2 + $0x98] sm:$0xf]
      %s7246 = scalar_lea.vmem %s2, 44
      %v7247 = vld [vmem:[%s7246] sm:$0xf]
      %7249 = vset.pattern.permute.xlu0 0
      %7250 = vperm.xlu0 %7249, %v7247
      %v7251 = vpop.permute.xlu0 %7250
      %v7254 = vsel %vm1283, %v7225, 0
      %v7257 = vsel %vm1287, %v7242, 0
      %v7260 = vsel %vm1287, %v7243, 0
      %v7263 = vsel %vm1287, %v7244, 0
      %v7266 = vsel %vm1287, %v7245, 0
      %7268 = vmatprep.subr.bf16.mxu0 %v7227
      %7269 = vmatpush1.bf16.msra.mxu0 %v7226
      %7270 = vmatprep.subr.bf16.mxu0 %v7231
      %7271 = vmatpush1.bf16.msra.mxu0 %v7230
      %7272 = vmatprep.subr.bf16.mxu0 %v7235
      %7273 = vmatpush1.bf16.msra.mxu0 %v7234
      %7274 = vmatprep.subr.bf16.mxu0 %v7239
      %7275 = vmatpush1.bf16.msra.mxu0 %v7238
      %7276 = vmatprep.subr.bf16.mxu0 %v7260
      %7277 = vmatpush1.bf16.msra.mxu0 %v7257
      %7278 = vmatprep.subr.bf16.mxu0 0
      %7279 = vmatpush1.bf16.msra.mxu0 0
      %7280 = vmatprep.subr.bf16.mxu0 0
      %7281 = vmatpush1.bf16.msra.mxu0 0
      %7282 = vmatprep.subr.bf16.mxu0 0
      %7283 = vmatpush1.bf16.msra.mxu0 0
      %7284 = vmatprep.subr.bf16.mxu0 0
      %7285 = vmatpush1.bf16.msra.mxu0 0
      %7286 = vmatprep.subr.bf16.mxu0 0
      %7287 = vmatpush1.bf16.msra.mxu0 0
      %7288 = vmatprep.subr.bf16.mxu0 0
      %7289 = vmatpush1.bf16.msra.mxu0 0
      %7290 = vmatprep.subr.bf16.mxu0 0
      %7291 = vmatpush1.bf16.msra.mxu0 0
      %7292 = vmatprep.subr.bf16.mxu0 0
      %7293 = vmatpush1.bf16.msra.mxu0 0
      %7294 = vmatprep.subr.bf16.mxu0 0
      %7295 = vmatpush1.bf16.msra.mxu0 0
      %7296 = vmatprep.subr.bf16.mxu0 0
      %7297 = vmatpush1.bf16.msra.mxu0 0
      %7298 = vmatprep.subr.bf16.mxu0 0
      %7299 = vmatpush1.bf16.msra.mxu0 0
      %7300 = vmatprep.mubr.bf16.mxu0 0
      %7301 = vmatmul.mubr.bf16.gmra.mrb[0].mxu0 %v7254
      %v7302 = vpop.f32.mrb[0].mxu0
      %v7303 = vadd.f32 %v7251, %v7302
      %v7304 = vpop.f32.mrb[0].mxu0
      %v7305 = vadd.f32 %v7251, %v7304
      %v7306 = vpop.f32.mrb[0].mxu0
      %v7307 = vpop.f32.mrb[0].mxu0
      %7308 = vdwg.mxu0
      %7309 = vmatprep.subr.bf16.mxu0 %v7229
      %7310 = vmatpush1.bf16.msra.mxu0 %v7228
      %7311 = vmatprep.subr.bf16.mxu0 %v7233
      %7312 = vmatpush1.bf16.msra.mxu0 %v7232
      %7313 = vmatprep.subr.bf16.mxu0 %v7237
      %7314 = vmatpush1.bf16.msra.mxu0 %v7236
      %7315 = vmatprep.subr.bf16.mxu0 %v7241
      %7316 = vmatpush1.bf16.msra.mxu0 %v7240
      %7317 = vmatprep.subr.bf16.mxu0 %v7266
      %7318 = vmatpush1.bf16.msra.mxu0 %v7263
      %7319 = vmatprep.subr.bf16.mxu0 0
      %7320 = vmatpush1.bf16.msra.mxu0 0
      %7321 = vmatprep.subr.bf16.mxu0 0
      %7322 = vmatpush1.bf16.msra.mxu0 0
      %7323 = vmatprep.subr.bf16.mxu0 0
      %7324 = vmatpush1.bf16.msra.mxu0 0
      %7325 = vmatprep.subr.bf16.mxu0 0
      %7326 = vmatpush1.bf16.msra.mxu0 0
      %7327 = vmatprep.subr.bf16.mxu0 0
      %7328 = vmatpush1.bf16.msra.mxu0 0
      %7329 = vmatprep.subr.bf16.mxu0 0
      %7330 = vmatpush1.bf16.msra.mxu0 0
      %7331 = vmatprep.subr.bf16.mxu0 0
      %7332 = vmatpush1.bf16.msra.mxu0 0
      %7333 = vmatprep.subr.bf16.mxu0 0
      %7334 = vmatpush1.bf16.msra.mxu0 0
      %7335 = vmatprep.subr.bf16.mxu0 0
      %7336 = vmatpush1.bf16.msra.mxu0 0
      %7337 = vmatprep.subr.bf16.mxu0 0
      %7338 = vmatpush1.bf16.msra.mxu0 0
      %7339 = vmatprep.subr.bf16.mxu0 0
      %7340 = vmatpush1.bf16.msra.mxu0 0
      %7341 = vmatprep.mubr.bf16.mxu0 0
      %7342 = vmatmul.mubr.bf16.gmra.mrb[0].mxu0 %v7254
      %v7343 = vpop.f32.mrb[0].mxu0
      %v7344 = vadd.f32 %v7251, %v7343
      %v7345 = vpop.f32.mrb[0].mxu0
      %v7346 = vadd.f32 %v7251, %v7345
      %v7347 = vpop.f32.mrb[0].mxu0
      %v7348 = vpop.f32.mrb[0].mxu0
      %7349 = vdwg.mxu0
      %v7350 = vmax.f32 %v7303, 0.0
      %v7351 = vmax.f32 %v7305, 0.0
      %v7352 = vmax.f32 %v7344, 0.0
      %v7353 = vmax.f32 %v7346, 0.0
      %7354 = vrot.lane.b32.xlu0 %v7350, 17
      %v7355 = vpop.permute.xlu0 %7354
      %7356 = vrot.lane.b32.xlu0 %v7351, 17
      %v7357 = vpop.permute.xlu0 %7356
      %7358 = vrot.lane.b32.xlu0 %v7352, 17
      %v7359 = vpop.permute.xlu0 %7358
      %7360 = vrot.lane.b32.xlu0 %v7353, 17
      %v7361 = vpop.permute.xlu0 %7360
      %v7362 = vsel %vm217, %v7359, %v7361
      %v7363 = vsel %vm217, %v7357, %v7359
      %v7364 = vsel %vm217, %v7355, %v7357
      %v7365 = vsel %vm217, %v7361, %v7355
      %v7366 = vld [vmem:[%s3] ss:$8 sm:$0xf]
      %v7368 = vlaneseq
      %v7369 = vshrl.u32 %v7368, 7
      %v7370 = vsub.s32 0, %v7369
      %v7371 = vrot.slane %v7366, %v7370
      %v7372 = vlaneseq
      %v7373 = vshrl.u32 %v7372, 7
      %v7374 = vsub.s32 1, %v7373
      %v7375 = vrot.slane %v7366, %v7374
      %v7376 = vlaneseq
      %v7377 = vshrl.u32 %v7376, 7
      %v7378 = vsub.s32 2, %v7377
      %v7379 = vrot.slane %v7366, %v7378
      %v7380 = vlaneseq
      %v7381 = vshrl.u32 %v7380, 7
      %v7382 = vsub.s32 3, %v7381
      %v7383 = vrot.slane %v7366, %v7382
      %v7388 = vmul.f32 %v7365, %v7371
      %v7389 = vmul.f32 %v7364, %v7375
      %v7390 = vmul.f32 %v7363, %v7379
      %v7391 = vmul.f32 %v7362, %v7383
      %v7392 = vpack.c.bf16 %v7388, %v7388
      %v7393 = vpack.c.bf16 %v7389, %v7389
      %v7394 = vpack.c.bf16 %v7390, %v7390
      %v7395 = vpack.c.bf16 %v7391, %v7391
      %v7400 = vrot.slane %v7392, 4
      %v7401 = vrot.slane %v7393, 4
      %v7402 = vrot.slane %v7394, 4
      %v7403 = vrot.slane %v7395, 4
      %7408 = vst [vmem:[#allocation2 + $0x80] sm:$0x30] %v7400
      %7409 = vst [vmem:[#allocation2 + $0x88] sm:$0x30] %v7401
      %7410 = vst [vmem:[#allocation2 + $0x90] sm:$0x30] %v7402
      %7411 = vst [vmem:[#allocation2 + $0x98] sm:$0x30] %v7403
      %7412 = vrot.lane.b32.xlu0 %v7350, 16
      %v7413 = vpop.permute.xlu0 %7412
      %7414 = vrot.lane.b32.xlu0 %v7351, 16
      %v7415 = vpop.permute.xlu0 %7414
      %7416 = vrot.lane.b32.xlu0 %v7352, 16
      %v7417 = vpop.permute.xlu0 %7416
      %7418 = vrot.lane.b32.xlu0 %v7353, 16
      %v7419 = vpop.permute.xlu0 %7418
      %v7420 = vsel %vm264, %v7417, %v7419
      %v7421 = vsel %vm264, %v7415, %v7417
      %v7422 = vsel %vm264, %v7413, %v7415
      %v7423 = vsel %vm264, %v7419, %v7413
      %v7424 = vld [vmem:[%s269] ss:$8 sm:$0xf]
      %v7426 = vlaneseq
      %v7427 = vshrl.u32 %v7426, 7
      %v7428 = vsub.s32 0, %v7427
      %v7429 = vrot.slane %v7424, %v7428
      %v7430 = vlaneseq
      %v7431 = vshrl.u32 %v7430, 7
      %v7432 = vsub.s32 1, %v7431
      %v7433 = vrot.slane %v7424, %v7432
      %v7434 = vlaneseq
      %v7435 = vshrl.u32 %v7434, 7
      %v7436 = vsub.s32 2, %v7435
      %v7437 = vrot.slane %v7424, %v7436
      %v7438 = vlaneseq
      %v7439 = vshrl.u32 %v7438, 7
      %v7440 = vsub.s32 3, %v7439
      %v7441 = vrot.slane %v7424, %v7440
      %v7446 = vmul.f32 %v7423, %v7429
      %v7447 = vmul.f32 %v7422, %v7433
      %v7448 = vmul.f32 %v7421, %v7437
      %v7449 = vmul.f32 %v7420, %v7441
      %v7450 = vpack.c.bf16 %v7446, %v7446
      %v7451 = vpack.c.bf16 %v7447, %v7447
      %v7452 = vpack.c.bf16 %v7448, %v7448
      %v7453 = vpack.c.bf16 %v7449, %v7449
      %v7458 = vrot.slane %v7450, 2
      %v7459 = vrot.slane %v7451, 2
      %v7460 = vrot.slane %v7452, 2
      %v7461 = vrot.slane %v7453, 2
      %7466 = vst [vmem:[#allocation2 + $0x80] sm:$0xc0] %v7458
      %7467 = vst [vmem:[#allocation2 + $0x88] sm:$0xc0] %v7459
      %7468 = vst [vmem:[#allocation2 + $0x90] sm:$0xc0] %v7460
      %7469 = vst [vmem:[#allocation2 + $0x98] sm:$0xc0] %v7461
      %7470 = vrot.lane.b32.xlu0 %v7350, 15
      %v7471 = vpop.permute.xlu0 %7470
      %7472 = vrot.lane.b32.xlu0 %v7351, 15
      %v7473 = vpop.permute.xlu0 %7472
      %7474 = vrot.lane.b32.xlu0 %v7352, 15
      %v7475 = vpop.permute.xlu0 %7474
      %7476 = vrot.lane.b32.xlu0 %v7353, 15
      %v7477 = vpop.permute.xlu0 %7476
      %v7478 = vsel %vm324, %v7475, %v7477
      %v7479 = vsel %vm324, %v7473, %v7475
      %v7480 = vsel %vm324, %v7471, %v7473
      %v7481 = vsel %vm324, %v7477, %v7471
      %v7482 = vld [vmem:[%s329] ss:$8 sm:$0xf]
      %v7484 = vlaneseq
      %v7485 = vshrl.u32 %v7484, 7
      %v7486 = vsub.s32 0, %v7485
      %v7487 = vrot.slane %v7482, %v7486
      %v7488 = vlaneseq
      %v7489 = vshrl.u32 %v7488, 7
      %v7490 = vsub.s32 1, %v7489
      %v7491 = vrot.slane %v7482, %v7490
      %v7492 = vlaneseq
      %v7493 = vshrl.u32 %v7492, 7
      %v7494 = vsub.s32 2, %v7493
      %v7495 = vrot.slane %v7482, %v7494
      %v7496 = vlaneseq
      %v7497 = vshrl.u32 %v7496, 7
      %v7498 = vsub.s32 3, %v7497
      %v7499 = vrot.slane %v7482, %v7498
      %v7504 = vmul.f32 %v7481, %v7487
      %v7505 = vmul.f32 %v7480, %v7491
      %v7506 = vmul.f32 %v7479, %v7495
      %v7507 = vmul.f32 %v7478, %v7499
      %v7508 = vpack.c.bf16 %v7504, %v7504
      %v7509 = vpack.c.bf16 %v7505, %v7505
      %v7510 = vpack.c.bf16 %v7506, %v7506
      %v7511 = vpack.c.bf16 %v7507, %v7507
      %7512 = vst [vmem:[#allocation2 + $0xa0] sm:$0x3] %v7508
      %7513 = vst [vmem:[#allocation2 + $0xa8] sm:$0x3] %v7509
      %7514 = vst [vmem:[#allocation2 + $0xb0] sm:$0x3] %v7510
      %7515 = vst [vmem:[#allocation2 + $0xb8] sm:$0x3] %v7511
      %7516 = vrot.lane.b32.xlu0 %v7350, 1
      %v7517 = vpop.permute.xlu0 %7516
      %7518 = vrot.lane.b32.xlu0 %v7351, 1
      %v7519 = vpop.permute.xlu0 %7518
      %7520 = vrot.lane.b32.xlu0 %v7352, 1
      %v7521 = vpop.permute.xlu0 %7520
      %7522 = vrot.lane.b32.xlu0 %v7353, 1
      %v7523 = vpop.permute.xlu0 %7522
      %v7524 = vsel %vm384, %v7521, %v7523
      %v7525 = vsel %vm384, %v7519, %v7521
      %v7526 = vsel %vm384, %v7517, %v7519
      %v7527 = vsel %vm384, %v7523, %v7517
      %v7528 = vld [vmem:[%s389] ss:$8 sm:$0xf]
      %v7530 = vlaneseq
      %v7531 = vshrl.u32 %v7530, 7
      %v7532 = vsub.s32 0, %v7531
      %v7533 = vrot.slane %v7528, %v7532
      %v7534 = vlaneseq
      %v7535 = vshrl.u32 %v7534, 7
      %v7536 = vsub.s32 1, %v7535
      %v7537 = vrot.slane %v7528, %v7536
      %v7538 = vlaneseq
      %v7539 = vshrl.u32 %v7538, 7
      %v7540 = vsub.s32 2, %v7539
      %v7541 = vrot.slane %v7528, %v7540
      %v7542 = vlaneseq
      %v7543 = vshrl.u32 %v7542, 7
      %v7544 = vsub.s32 3, %v7543
      %v7545 = vrot.slane %v7528, %v7544
      %v7550 = vmul.f32 %v7527, %v7533
      %v7551 = vmul.f32 %v7526, %v7537
      %v7552 = vmul.f32 %v7525, %v7541
      %v7553 = vmul.f32 %v7524, %v7545
      %v7554 = vpack.c.bf16 %v7550, %v7550
      %v7555 = vpack.c.bf16 %v7551, %v7551
      %v7556 = vpack.c.bf16 %v7552, %v7552
      %v7557 = vpack.c.bf16 %v7553, %v7553
      %v7562 = vrot.slane %v7554, 6
      %v7563 = vrot.slane %v7555, 6
      %v7564 = vrot.slane %v7556, 6
      %v7565 = vrot.slane %v7557, 6
      %7570 = vst [vmem:[#allocation2 + $0xa0] sm:$0xc] %v7562
      %7571 = vst [vmem:[#allocation2 + $0xa8] sm:$0xc] %v7563
      %7572 = vst [vmem:[#allocation2 + $0xb0] sm:$0xc] %v7564
      %7573 = vst [vmem:[#allocation2 + $0xb8] sm:$0xc] %v7565
      %v7574 = vpack.c.bf16 %v7350, %v7350
      %v7575 = vpack.c.bf16 %v7351, %v7351
      %v7576 = vpack.c.bf16 %v7352, %v7352
      %v7577 = vpack.c.bf16 %v7353, %v7353
      %v7582 = vrot.slane %v7574, 4
      %v7583 = vrot.slane %v7575, 4
      %v7584 = vrot.slane %v7576, 4
      %v7585 = vrot.slane %v7577, 4
      %7590 = vst [vmem:[#allocation2 + $0xa0] sm:$0x30] %v7582
      %7591 = vst [vmem:[#allocation2 + $0xa8] sm:$0x30] %v7583
      %7592 = vst [vmem:[#allocation2 + $0xb0] sm:$0x30] %v7584
      %7593 = vst [vmem:[#allocation2 + $0xb8] sm:$0x30] %v7585
      %7594 = vrot.lane.b32.xlu0 %v7350, 127
      %v7595 = vpop.permute.xlu0 %7594
      %7596 = vrot.lane.b32.xlu0 %v7351, 127
      %v7597 = vpop.permute.xlu0 %7596
      %7598 = vrot.lane.b32.xlu0 %v7352, 127
      %v7599 = vpop.permute.xlu0 %7598
      %7600 = vrot.lane.b32.xlu0 %v7353, 127
      %v7601 = vpop.permute.xlu0 %7600
      %v7602 = vsel %vm452, %v7599, %v7601
      %v7603 = vsel %vm452, %v7597, %v7599
      %v7604 = vsel %vm452, %v7595, %v7597
      %v7605 = vsel %vm452, %v7601, %v7595
      %v7606 = vld [vmem:[%s457] ss:$8 sm:$0xf]
      %v7608 = vlaneseq
      %v7609 = vshrl.u32 %v7608, 7
      %v7610 = vsub.s32 0, %v7609
      %v7611 = vrot.slane %v7606, %v7610
      %v7612 = vlaneseq
      %v7613 = vshrl.u32 %v7612, 7
      %v7614 = vsub.s32 1, %v7613
      %v7615 = vrot.slane %v7606, %v7614
      %v7616 = vlaneseq
      %v7617 = vshrl.u32 %v7616, 7
      %v7618 = vsub.s32 2, %v7617
      %v7619 = vrot.slane %v7606, %v7618
      %v7620 = vlaneseq
      %v7621 = vshrl.u32 %v7620, 7
      %v7622 = vsub.s32 3, %v7621
      %v7623 = vrot.slane %v7606, %v7622
      %v7628 = vmul.f32 %v7604, %v7611
      %v7629 = vmul.f32 %v7603, %v7615
      %v7630 = vmul.f32 %v7602, %v7619
      %v7631 = vmul.f32 %v7605, %v7623
      %v7632 = vpack.c.bf16 %v7628, %v7628
      %v7633 = vpack.c.bf16 %v7629, %v7629
      %v7634 = vpack.c.bf16 %v7630, %v7630
      %v7635 = vpack.c.bf16 %v7631, %v7631
      %v7640 = vrot.slane %v7632, 2
      %v7641 = vrot.slane %v7633, 2
      %v7642 = vrot.slane %v7634, 2
      %v7643 = vrot.slane %v7635, 2
      %7648 = vst [vmem:[#allocation2 + $0xa0] sm:$0xc0] %v7640
      %7649 = vst [vmem:[#allocation2 + $0xa8] sm:$0xc0] %v7641
      %7650 = vst [vmem:[#allocation2 + $0xb0] sm:$0xc0] %v7642
      %7651 = vst [vmem:[#allocation2 + $0xb8] sm:$0xc0] %v7643
      %7652 = vrot.lane.b32.xlu0 %v7350, 113
      %v7653 = vpop.permute.xlu0 %7652
      %7654 = vrot.lane.b32.xlu0 %v7351, 113
      %v7655 = vpop.permute.xlu0 %7654
      %7656 = vrot.lane.b32.xlu0 %v7352, 113
      %v7657 = vpop.permute.xlu0 %7656
      %7658 = vrot.lane.b32.xlu0 %v7353, 113
      %v7659 = vpop.permute.xlu0 %7658
      %v7660 = vsel %vm512, %v7657, %v7659
      %v7661 = vsel %vm512, %v7655, %v7657
      %v7662 = vsel %vm512, %v7653, %v7655
      %v7663 = vsel %vm512, %v7659, %v7653
      %v7664 = vld [vmem:[%s517] ss:$8 sm:$0xf]
      %v7666 = vlaneseq
      %v7667 = vshrl.u32 %v7666, 7
      %v7668 = vsub.s32 0, %v7667
      %v7669 = vrot.slane %v7664, %v7668
      %v7670 = vlaneseq
      %v7671 = vshrl.u32 %v7670, 7
      %v7672 = vsub.s32 1, %v7671
      %v7673 = vrot.slane %v7664, %v7672
      %v7674 = vlaneseq
      %v7675 = vshrl.u32 %v7674, 7
      %v7676 = vsub.s32 2, %v7675
      %v7677 = vrot.slane %v7664, %v7676
      %v7678 = vlaneseq
      %v7679 = vshrl.u32 %v7678, 7
      %v7680 = vsub.s32 3, %v7679
      %v7681 = vrot.slane %v7664, %v7680
      %v7686 = vmul.f32 %v7662, %v7669
      %v7687 = vmul.f32 %v7661, %v7673
      %v7688 = vmul.f32 %v7660, %v7677
      %v7689 = vmul.f32 %v7663, %v7681
      %v7690 = vpack.c.bf16 %v7686, %v7686
      %v7691 = vpack.c.bf16 %v7687, %v7687
      %v7692 = vpack.c.bf16 %v7688, %v7688
      %v7693 = vpack.c.bf16 %v7689, %v7689
      %7694 = vst [vmem:[#allocation2 + $0xc0] sm:$0x3] %v7690
      %7695 = vst [vmem:[#allocation2 + $0xc8] sm:$0x3] %v7691
      %7696 = vst [vmem:[#allocation2 + $0xd0] sm:$0x3] %v7692
      %7697 = vst [vmem:[#allocation2 + $0xd8] sm:$0x3] %v7693
      %7698 = vrot.lane.b32.xlu0 %v7350, 112
      %v7699 = vpop.permute.xlu0 %7698
      %7700 = vrot.lane.b32.xlu0 %v7351, 112
      %v7701 = vpop.permute.xlu0 %7700
      %7702 = vrot.lane.b32.xlu0 %v7352, 112
      %v7703 = vpop.permute.xlu0 %7702
      %7704 = vrot.lane.b32.xlu0 %v7353, 112
      %v7705 = vpop.permute.xlu0 %7704
      %v7706 = vsel %vm572, %v7703, %v7705
      %v7707 = vsel %vm572, %v7701, %v7703
      %v7708 = vsel %vm572, %v7699, %v7701
      %v7709 = vsel %vm572, %v7705, %v7699
      %v7710 = vld [vmem:[%s577] ss:$8 sm:$0xf]
      %v7712 = vlaneseq
      %v7713 = vshrl.u32 %v7712, 7
      %v7714 = vsub.s32 0, %v7713
      %v7715 = vrot.slane %v7710, %v7714
      %v7716 = vlaneseq
      %v7717 = vshrl.u32 %v7716, 7
      %v7718 = vsub.s32 1, %v7717
      %v7719 = vrot.slane %v7710, %v7718
      %v7720 = vlaneseq
      %v7721 = vshrl.u32 %v7720, 7
      %v7722 = vsub.s32 2, %v7721
      %v7723 = vrot.slane %v7710, %v7722
      %v7724 = vlaneseq
      %v7725 = vshrl.u32 %v7724, 7
      %v7726 = vsub.s32 3, %v7725
      %v7727 = vrot.slane %v7710, %v7726
      %v7732 = vmul.f32 %v7708, %v7715
      %v7733 = vmul.f32 %v7707, %v7719
      %v7734 = vmul.f32 %v7706, %v7723
      %v7735 = vmul.f32 %v7709, %v7727
      %v7736 = vpack.c.bf16 %v7732, %v7732
      %v7737 = vpack.c.bf16 %v7733, %v7733
      %v7738 = vpack.c.bf16 %v7734, %v7734
      %v7739 = vpack.c.bf16 %v7735, %v7735
      %v7744 = vrot.slane %v7736, 6
      %v7745 = vrot.slane %v7737, 6
      %v7746 = vrot.slane %v7738, 6
      %v7747 = vrot.slane %v7739, 6
      %7752 = vst [vmem:[#allocation2 + $0xc0] sm:$0xc] %v7744
      %7753 = vst [vmem:[#allocation2 + $0xc8] sm:$0xc] %v7745
      %7754 = vst [vmem:[#allocation2 + $0xd0] sm:$0xc] %v7746
      %7755 = vst [vmem:[#allocation2 + $0xd8] sm:$0xc] %v7747
      %7756 = vrot.lane.b32.xlu0 %v7350, 111
      %v7757 = vpop.permute.xlu0 %7756
      %7758 = vrot.lane.b32.xlu0 %v7351, 111
      %v7759 = vpop.permute.xlu0 %7758
      %7760 = vrot.lane.b32.xlu0 %v7352, 111
      %v7761 = vpop.permute.xlu0 %7760
      %7762 = vrot.lane.b32.xlu0 %v7353, 111
      %v7763 = vpop.permute.xlu0 %7762
      %v7764 = vsel %vm632, %v7761, %v7763
      %v7765 = vsel %vm632, %v7759, %v7761
      %v7766 = vsel %vm632, %v7757, %v7759
      %v7767 = vsel %vm632, %v7763, %v7757
      %v7768 = vld [vmem:[%s637] ss:$8 sm:$0xf]
      %v7770 = vlaneseq
      %v7771 = vshrl.u32 %v7770, 7
      %v7772 = vsub.s32 0, %v7771
      %v7773 = vrot.slane %v7768, %v7772
      %v7774 = vlaneseq
      %v7775 = vshrl.u32 %v7774, 7
      %v7776 = vsub.s32 1, %v7775
      %v7777 = vrot.slane %v7768, %v7776
      %v7778 = vlaneseq
      %v7779 = vshrl.u32 %v7778, 7
      %v7780 = vsub.s32 2, %v7779
      %v7781 = vrot.slane %v7768, %v7780
      %v7782 = vlaneseq
      %v7783 = vshrl.u32 %v7782, 7
      %v7784 = vsub.s32 3, %v7783
      %v7785 = vrot.slane %v7768, %v7784
      %v7790 = vmul.f32 %v7766, %v7773
      %v7791 = vmul.f32 %v7765, %v7777
      %v7792 = vmul.f32 %v7764, %v7781
      %v7793 = vmul.f32 %v7767, %v7785
      %v7794 = vpack.c.bf16 %v7790, %v7790
      %v7795 = vpack.c.bf16 %v7791, %v7791
      %v7796 = vpack.c.bf16 %v7792, %v7792
      %v7797 = vpack.c.bf16 %v7793, %v7793
      %v7802 = vrot.slane %v7794, 4
      %v7803 = vrot.slane %v7795, 4
      %v7804 = vrot.slane %v7796, 4
      %v7805 = vrot.slane %v7797, 4
      %7810 = vst [vmem:[#allocation2 + $0xc0] sm:$0x30] %v7802
      %7811 = vst [vmem:[#allocation2 + $0xc8] sm:$0x30] %v7803
      %7812 = vst [vmem:[#allocation2 + $0xd0] sm:$0x30] %v7804
      %7813 = vst [vmem:[#allocation2 + $0xd8] sm:$0x30] %v7805
      %s7814 = scalar_lea.vmem %s1, 48
      %v7815 = vld [vmem:[%s7814] sm:$0xf]
      %v7816 = vld [vmem:[#allocation2] sm:$0xff]
      %v7817 = vld [vmem:[#allocation2 + $0x8] sm:$0xff]
      %v7818 = vld [vmem:[#allocation2 + $0x10] sm:$0xff]
      %v7819 = vld [vmem:[#allocation2 + $0x18] sm:$0xff]
      %v7820 = vld [vmem:[#allocation2 + $0x20] sm:$0xff]
      %v7821 = vld [vmem:[#allocation2 + $0x28] sm:$0xff]
      %v7822 = vld [vmem:[#allocation2 + $0x30] sm:$0xff]
      %v7823 = vld [vmem:[#allocation2 + $0x38] sm:$0xff]
      %v7824 = vld [vmem:[#allocation2 + $0x40] sm:$0xff]
      %v7825 = vld [vmem:[#allocation2 + $0x48] sm:$0xff]
      %v7826 = vld [vmem:[#allocation2 + $0x50] sm:$0xff]
      %v7827 = vld [vmem:[#allocation2 + $0x58] sm:$0xff]
      %v7828 = vld [vmem:[#allocation2 + $0x60] sm:$0xff]
      %v7829 = vld [vmem:[#allocation2 + $0x68] sm:$0xff]
      %v7830 = vld [vmem:[#allocation2 + $0x70] sm:$0xff]
      %v7831 = vld [vmem:[#allocation2 + $0x78] sm:$0xff]
      %v7832 = vld [vmem:[#allocation2 + $0x80] sm:$0xff]
      %v7833 = vld [vmem:[#allocation2 + $0x88] sm:$0xff]
      %v7834 = vld [vmem:[#allocation2 + $0x90] sm:$0xff]
      %v7835 = vld [vmem:[#allocation2 + $0x98] sm:$0xff]
      %v7836 = vld [vmem:[#allocation2 + $0xa0] sm:$0xff]
      %v7837 = vld [vmem:[#allocation2 + $0xa8] sm:$0xff]
      %v7838 = vld [vmem:[#allocation2 + $0xb0] sm:$0xff]
      %v7839 = vld [vmem:[#allocation2 + $0xb8] sm:$0xff]
      %v7840 = vld [vmem:[#allocation2 + $0xc0] sm:$0x3f]
      %v7841 = vld [vmem:[#allocation2 + $0xc8] sm:$0x3f]
      %v7842 = vld [vmem:[#allocation2 + $0xd0] sm:$0x3f]
      %v7843 = vld [vmem:[#allocation2 + $0xd8] sm:$0x3f]
      %s7844 = scalar_lea.vmem %s2, 48
      %v7845 = vld [vmem:[%s7844] sm:$0xf]
      %7847 = vset.pattern.permute.xlu0 0
      %7848 = vperm.xlu0 %7847, %v7845
      %v7849 = vpop.permute.xlu0 %7848
      %v7852 = vsel %vm1883, %v7815, 0
      %v7855 = vsel %vm1887, %v7840, 0
      %v7858 = vsel %vm1887, %v7841, 0
      %v7861 = vsel %vm1887, %v7842, 0
      %v7864 = vsel %vm1887, %v7843, 0
      %7866 = vmatprep.subr.bf16.mxu0 %v7817
      %7867 = vmatpush1.bf16.msra.mxu0 %v7816
      %7868 = vmatprep.subr.bf16.mxu0 %v7821
      %7869 = vmatpush1.bf16.msra.mxu0 %v7820
      %7870 = vmatprep.subr.bf16.mxu0 %v7825
      %7871 = vmatpush1.bf16.msra.mxu0 %v7824
      %7872 = vmatprep.subr.bf16.mxu0 %v7829
      %7873 = vmatpush1.bf16.msra.mxu0 %v7828
      %7874 = vmatprep.subr.bf16.mxu0 %v7833
      %7875 = vmatpush1.bf16.msra.mxu0 %v7832
      %7876 = vmatprep.subr.bf16.mxu0 %v7837
      %7877 = vmatpush1.bf16.msra.mxu0 %v7836
      %7878 = vmatprep.subr.bf16.mxu0 %v7858
      %7879 = vmatpush1.bf16.msra.mxu0 %v7855
      %7880 = vmatprep.subr.bf16.mxu0 0
      %7881 = vmatpush1.bf16.msra.mxu0 0
      %7882 = vmatprep.subr.bf16.mxu0 0
      %7883 = vmatpush1.bf16.msra.mxu0 0
      %7884 = vmatprep.subr.bf16.mxu0 0
      %7885 = vmatpush1.bf16.msra.mxu0 0
      %7886 = vmatprep.subr.bf16.mxu0 0
      %7887 = vmatpush1.bf16.msra.mxu0 0
      %7888 = vmatprep.subr.bf16.mxu0 0
      %7889 = vmatpush1.bf16.msra.mxu0 0
      %7890 = vmatprep.subr.bf16.mxu0 0
      %7891 = vmatpush1.bf16.msra.mxu0 0
      %7892 = vmatprep.subr.bf16.mxu0 0
      %7893 = vmatpush1.bf16.msra.mxu0 0
      %7894 = vmatprep.subr.bf16.mxu0 0
      %7895 = vmatpush1.bf16.msra.mxu0 0
      %7896 = vmatprep.subr.bf16.mxu0 0
      %7897 = vmatpush1.bf16.msra.mxu0 0
      %7898 = vmatprep.mubr.bf16.mxu0 0
      %7899 = vmatmul.mubr.bf16.gmra.mrb[0].mxu0 %v7852
      %v7900 = vpop.f32.mrb[0].mxu0
      %v7901 = vadd.f32 %v7849, %v7900
      %v7902 = vpop.f32.mrb[0].mxu0
      %v7903 = vadd.f32 %v7849, %v7902
      %v7904 = vpop.f32.mrb[0].mxu0
      %v7905 = vpop.f32.mrb[0].mxu0
      %7906 = vdwg.mxu0
      %7907 = vmatprep.subr.bf16.mxu0 %v7819
      %7908 = vmatpush1.bf16.msra.mxu0 %v7818
      %7909 = vmatprep.subr.bf16.mxu0 %v7823
      %7910 = vmatpush1.bf16.msra.mxu0 %v7822
      %7911 = vmatprep.subr.bf16.mxu0 %v7827
      %7912 = vmatpush1.bf16.msra.mxu0 %v7826
      %7913 = vmatprep.subr.bf16.mxu0 %v7831
      %7914 = vmatpush1.bf16.msra.mxu0 %v7830
      %7915 = vmatprep.subr.bf16.mxu0 %v7835
      %7916 = vmatpush1.bf16.msra.mxu0 %v7834
      %7917 = vmatprep.subr.bf16.mxu0 %v7839
      %7918 = vmatpush1.bf16.msra.mxu0 %v7838
      %7919 = vmatprep.subr.bf16.mxu0 %v7864
      %7920 = vmatpush1.bf16.msra.mxu0 %v7861
      %7921 = vmatprep.subr.bf16.mxu0 0
      %7922 = vmatpush1.bf16.msra.mxu0 0
      %7923 = vmatprep.subr.bf16.mxu0 0
      %7924 = vmatpush1.bf16.msra.mxu0 0
      %7925 = vmatprep.subr.bf16.mxu0 0
      %7926 = vmatpush1.bf16.msra.mxu0 0
      %7927 = vmatprep.subr.bf16.mxu0 0
      %7928 = vmatpush1.bf16.msra.mxu0 0
      %7929 = vmatprep.subr.bf16.mxu0 0
      %7930 = vmatpush1.bf16.msra.mxu0 0
      %7931 = vmatprep.subr.bf16.mxu0 0
      %7932 = vmatpush1.bf16.msra.mxu0 0
      %7933 = vmatprep.subr.bf16.mxu0 0
      %7934 = vmatpush1.bf16.msra.mxu0 0
      %7935 = vmatprep.subr.bf16.mxu0 0
      %7936 = vmatpush1.bf16.msra.mxu0 0
      %7937 = vmatprep.subr.bf16.mxu0 0
      %7938 = vmatpush1.bf16.msra.mxu0 0
      %7939 = vmatprep.mubr.bf16.mxu0 0
      %7940 = vmatmul.mubr.bf16.gmra.mrb[0].mxu0 %v7852
      %v7941 = vpop.f32.mrb[0].mxu0
      %v7942 = vadd.f32 %v7849, %v7941
      %v7943 = vpop.f32.mrb[0].mxu0
      %v7944 = vadd.f32 %v7849, %v7943
      %v7945 = vpop.f32.mrb[0].mxu0
      %v7946 = vpop.f32.mrb[0].mxu0
      %7947 = vdwg.mxu0
      %v7948 = vmax.f32 %v7901, 0.0
      %v7949 = vmax.f32 %v7903, 0.0
      %v7950 = vmax.f32 %v7942, 0.0
      %v7951 = vmax.f32 %v7944, 0.0
      %7952 = vrot.lane.b32.xlu0 %v7948, 17
      %v7953 = vpop.permute.xlu0 %7952
      %7954 = vrot.lane.b32.xlu0 %v7949, 17
      %v7955 = vpop.permute.xlu0 %7954
      %7956 = vrot.lane.b32.xlu0 %v7950, 17
      %v7957 = vpop.permute.xlu0 %7956
      %7958 = vrot.lane.b32.xlu0 %v7951, 17
      %v7959 = vpop.permute.xlu0 %7958
      %v7960 = vsel %vm217, %v7957, %v7959
      %v7961 = vsel %vm217, %v7955, %v7957
      %v7962 = vsel %vm217, %v7953, %v7955
      %v7963 = vsel %vm217, %v7959, %v7953
      %v7964 = vld [vmem:[%s3] ss:$8 sm:$0xf]
      %v7966 = vlaneseq
      %v7967 = vshrl.u32 %v7966, 7
      %v7968 = vsub.s32 0, %v7967
      %v7969 = vrot.slane %v7964, %v7968
      %v7970 = vlaneseq
      %v7971 = vshrl.u32 %v7970, 7
      %v7972 = vsub.s32 1, %v7971
      %v7973 = vrot.slane %v7964, %v7972
      %v7974 = vlaneseq
      %v7975 = vshrl.u32 %v7974, 7
      %v7976 = vsub.s32 2, %v7975
      %v7977 = vrot.slane %v7964, %v7976
      %v7978 = vlaneseq
      %v7979 = vshrl.u32 %v7978, 7
      %v7980 = vsub.s32 3, %v7979
      %v7981 = vrot.slane %v7964, %v7980
      %v7986 = vmul.f32 %v7963, %v7969
      %v7987 = vmul.f32 %v7962, %v7973
      %v7988 = vmul.f32 %v7961, %v7977
      %v7989 = vmul.f32 %v7960, %v7981
      %v7990 = vpack.c.bf16 %v7986, %v7986
      %v7991 = vpack.c.bf16 %v7987, %v7987
      %v7992 = vpack.c.bf16 %v7988, %v7988
      %v7993 = vpack.c.bf16 %v7989, %v7989
      %v7998 = vrot.slane %v7990, 2
      %v7999 = vrot.slane %v7991, 2
      %v8000 = vrot.slane %v7992, 2
      %v8001 = vrot.slane %v7993, 2
      %8006 = vst [vmem:[#allocation2 + $0xc0] sm:$0xc0] %v7998
      %8007 = vst [vmem:[#allocation2 + $0xc8] sm:$0xc0] %v7999
      %8008 = vst [vmem:[#allocation2 + $0xd0] sm:$0xc0] %v8000
      %8009 = vst [vmem:[#allocation2 + $0xd8] sm:$0xc0] %v8001
      %8010 = vrot.lane.b32.xlu0 %v7948, 16
      %v8011 = vpop.permute.xlu0 %8010
      %8012 = vrot.lane.b32.xlu0 %v7949, 16
      %v8013 = vpop.permute.xlu0 %8012
      %8014 = vrot.lane.b32.xlu0 %v7950, 16
      %v8015 = vpop.permute.xlu0 %8014
      %8016 = vrot.lane.b32.xlu0 %v7951, 16
      %v8017 = vpop.permute.xlu0 %8016
      %v8018 = vsel %vm264, %v8015, %v8017
      %v8019 = vsel %vm264, %v8013, %v8015
      %v8020 = vsel %vm264, %v8011, %v8013
      %v8021 = vsel %vm264, %v8017, %v8011
      %v8022 = vld [vmem:[%s269] ss:$8 sm:$0xf]
      %v8024 = vlaneseq
      %v8025 = vshrl.u32 %v8024, 7
      %v8026 = vsub.s32 0, %v8025
      %v8027 = vrot.slane %v8022, %v8026
      %v8028 = vlaneseq
      %v8029 = vshrl.u32 %v8028, 7
      %v8030 = vsub.s32 1, %v8029
      %v8031 = vrot.slane %v8022, %v8030
      %v8032 = vlaneseq
      %v8033 = vshrl.u32 %v8032, 7
      %v8034 = vsub.s32 2, %v8033
      %v8035 = vrot.slane %v8022, %v8034
      %v8036 = vlaneseq
      %v8037 = vshrl.u32 %v8036, 7
      %v8038 = vsub.s32 3, %v8037
      %v8039 = vrot.slane %v8022, %v8038
      %v8044 = vmul.f32 %v8021, %v8027
      %v8045 = vmul.f32 %v8020, %v8031
      %v8046 = vmul.f32 %v8019, %v8035
      %v8047 = vmul.f32 %v8018, %v8039
      %v8048 = vpack.c.bf16 %v8044, %v8044
      %v8049 = vpack.c.bf16 %v8045, %v8045
      %v8050 = vpack.c.bf16 %v8046, %v8046
      %v8051 = vpack.c.bf16 %v8047, %v8047
      %8052 = vst [vmem:[#allocation2 + $0xe0] sm:$0x3] %v8048
      %8053 = vst [vmem:[#allocation2 + $0xe8] sm:$0x3] %v8049
      %8054 = vst [vmem:[#allocation2 + $0xf0] sm:$0x3] %v8050
      %8055 = vst [vmem:[#allocation2 + $0xf8] sm:$0x3] %v8051
      %8056 = vrot.lane.b32.xlu0 %v7948, 15
      %v8057 = vpop.permute.xlu0 %8056
      %8058 = vrot.lane.b32.xlu0 %v7949, 15
      %v8059 = vpop.permute.xlu0 %8058
      %8060 = vrot.lane.b32.xlu0 %v7950, 15
      %v8061 = vpop.permute.xlu0 %8060
      %8062 = vrot.lane.b32.xlu0 %v7951, 15
      %v8063 = vpop.permute.xlu0 %8062
      %v8064 = vsel %vm324, %v8061, %v8063
      %v8065 = vsel %vm324, %v8059, %v8061
      %v8066 = vsel %vm324, %v8057, %v8059
      %v8067 = vsel %vm324, %v8063, %v8057
      %v8068 = vld [vmem:[%s329] ss:$8 sm:$0xf]
      %v8070 = vlaneseq
      %v8071 = vshrl.u32 %v8070, 7
      %v8072 = vsub.s32 0, %v8071
      %v8073 = vrot.slane %v8068, %v8072
      %v8074 = vlaneseq
      %v8075 = vshrl.u32 %v8074, 7
      %v8076 = vsub.s32 1, %v8075
      %v8077 = vrot.slane %v8068, %v8076
      %v8078 = vlaneseq
      %v8079 = vshrl.u32 %v8078, 7
      %v8080 = vsub.s32 2, %v8079
      %v8081 = vrot.slane %v8068, %v8080
      %v8082 = vlaneseq
      %v8083 = vshrl.u32 %v8082, 7
      %v8084 = vsub.s32 3, %v8083
      %v8085 = vrot.slane %v8068, %v8084
      %v8090 = vmul.f32 %v8067, %v8073
      %v8091 = vmul.f32 %v8066, %v8077
      %v8092 = vmul.f32 %v8065, %v8081
      %v8093 = vmul.f32 %v8064, %v8085
      %v8094 = vpack.c.bf16 %v8090, %v8090
      %v8095 = vpack.c.bf16 %v8091, %v8091
      %v8096 = vpack.c.bf16 %v8092, %v8092
      %v8097 = vpack.c.bf16 %v8093, %v8093
      %v8102 = vrot.slane %v8094, 6
      %v8103 = vrot.slane %v8095, 6
      %v8104 = vrot.slane %v8096, 6
      %v8105 = vrot.slane %v8097, 6
      %8110 = vst [vmem:[#allocation2 + $0xe0] sm:$0xc] %v8102
      %8111 = vst [vmem:[#allocation2 + $0xe8] sm:$0xc] %v8103
      %8112 = vst [vmem:[#allocation2 + $0xf0] sm:$0xc] %v8104
      %8113 = vst [vmem:[#allocation2 + $0xf8] sm:$0xc] %v8105
      %8114 = vrot.lane.b32.xlu0 %v7948, 1
      %v8115 = vpop.permute.xlu0 %8114
      %8116 = vrot.lane.b32.xlu0 %v7949, 1
      %v8117 = vpop.permute.xlu0 %8116
      %8118 = vrot.lane.b32.xlu0 %v7950, 1
      %v8119 = vpop.permute.xlu0 %8118
      %8120 = vrot.lane.b32.xlu0 %v7951, 1
      %v8121 = vpop.permute.xlu0 %8120
      %v8122 = vsel %vm384, %v8119, %v8121
      %v8123 = vsel %vm384, %v8117, %v8119
      %v8124 = vsel %vm384, %v8115, %v8117
      %v8125 = vsel %vm384, %v8121, %v8115
      %v8126 = vld [vmem:[%s389] ss:$8 sm:$0xf]
      %v8128 = vlaneseq
      %v8129 = vshrl.u32 %v8128, 7
      %v8130 = vsub.s32 0, %v8129
      %v8131 = vrot.slane %v8126, %v8130
      %v8132 = vlaneseq
      %v8133 = vshrl.u32 %v8132, 7
      %v8134 = vsub.s32 1, %v8133
      %v8135 = vrot.slane %v8126, %v8134
      %v8136 = vlaneseq
      %v8137 = vshrl.u32 %v8136, 7
      %v8138 = vsub.s32 2, %v8137
      %v8139 = vrot.slane %v8126, %v8138
      %v8140 = vlaneseq
      %v8141 = vshrl.u32 %v8140, 7
      %v8142 = vsub.s32 3, %v8141
      %v8143 = vrot.slane %v8126, %v8142
      %v8148 = vmul.f32 %v8125, %v8131
      %v8149 = vmul.f32 %v8124, %v8135
      %v8150 = vmul.f32 %v8123, %v8139
      %v8151 = vmul.f32 %v8122, %v8143
      %v8152 = vpack.c.bf16 %v8148, %v8148
      %v8153 = vpack.c.bf16 %v8149, %v8149
      %v8154 = vpack.c.bf16 %v8150, %v8150
      %v8155 = vpack.c.bf16 %v8151, %v8151
      %v8160 = vrot.slane %v8152, 4
      %v8161 = vrot.slane %v8153, 4
      %v8162 = vrot.slane %v8154, 4
      %v8163 = vrot.slane %v8155, 4
      %8168 = vst [vmem:[#allocation2 + $0xe0] sm:$0x30] %v8160
      %8169 = vst [vmem:[#allocation2 + $0xe8] sm:$0x30] %v8161
      %8170 = vst [vmem:[#allocation2 + $0xf0] sm:$0x30] %v8162
      %8171 = vst [vmem:[#allocation2 + $0xf8] sm:$0x30] %v8163
      %v8172 = vpack.c.bf16 %v7948, %v7948
      %v8173 = vpack.c.bf16 %v7949, %v7949
      %v8174 = vpack.c.bf16 %v7950, %v7950
      %v8175 = vpack.c.bf16 %v7951, %v7951
      %v8180 = vrot.slane %v8172, 2
      %v8181 = vrot.slane %v8173, 2
      %v8182 = vrot.slane %v8174, 2
      %v8183 = vrot.slane %v8175, 2
      %8188 = vst [vmem:[#allocation2 + $0xe0] sm:$0xc0] %v8180
      %8189 = vst [vmem:[#allocation2 + $0xe8] sm:$0xc0] %v8181
      %8190 = vst [vmem:[#allocation2 + $0xf0] sm:$0xc0] %v8182
      %8191 = vst [vmem:[#allocation2 + $0xf8] sm:$0xc0] %v8183
      %8192 = vrot.lane.b32.xlu0 %v7948, 127
      %v8193 = vpop.permute.xlu0 %8192
      %8194 = vrot.lane.b32.xlu0 %v7949, 127
      %v8195 = vpop.permute.xlu0 %8194
      %8196 = vrot.lane.b32.xlu0 %v7950, 127
      %v8197 = vpop.permute.xlu0 %8196
      %8198 = vrot.lane.b32.xlu0 %v7951, 127
      %v8199 = vpop.permute.xlu0 %8198
      %v8200 = vsel %vm452, %v8197, %v8199
      %v8201 = vsel %vm452, %v8195, %v8197
      %v8202 = vsel %vm452, %v8193, %v8195
      %v8203 = vsel %vm452, %v8199, %v8193
      %v8204 = vld [vmem:[%s457] ss:$8 sm:$0xf]
      %v8206 = vlaneseq
      %v8207 = vshrl.u32 %v8206, 7
      %v8208 = vsub.s32 0, %v8207
      %v8209 = vrot.slane %v8204, %v8208
      %v8210 = vlaneseq
      %v8211 = vshrl.u32 %v8210, 7
      %v8212 = vsub.s32 1, %v8211
      %v8213 = vrot.slane %v8204, %v8212
      %v8214 = vlaneseq
      %v8215 = vshrl.u32 %v8214, 7
      %v8216 = vsub.s32 2, %v8215
      %v8217 = vrot.slane %v8204, %v8216
      %v8218 = vlaneseq
      %v8219 = vshrl.u32 %v8218, 7
      %v8220 = vsub.s32 3, %v8219
      %v8221 = vrot.slane %v8204, %v8220
      %v8226 = vmul.f32 %v8202, %v8209
      %v8227 = vmul.f32 %v8201, %v8213
      %v8228 = vmul.f32 %v8200, %v8217
      %v8229 = vmul.f32 %v8203, %v8221
      %v8230 = vpack.c.bf16 %v8226, %v8226
      %v8231 = vpack.c.bf16 %v8227, %v8227
      %v8232 = vpack.c.bf16 %v8228, %v8228
      %v8233 = vpack.c.bf16 %v8229, %v8229
      %8234 = vst [vmem:[#allocation2 + $0x100] sm:$0x3] %v8230
      %8235 = vst [vmem:[#allocation2 + $0x108] sm:$0x3] %v8231
      %8236 = vst [vmem:[#allocation2 + $0x110] sm:$0x3] %v8232
      %8237 = vst [vmem:[#allocation2 + $0x118] sm:$0x3] %v8233
      %8238 = vrot.lane.b32.xlu0 %v7948, 113
      %v8239 = vpop.permute.xlu0 %8238
      %8240 = vrot.lane.b32.xlu0 %v7949, 113
      %v8241 = vpop.permute.xlu0 %8240
      %8242 = vrot.lane.b32.xlu0 %v7950, 113
      %v8243 = vpop.permute.xlu0 %8242
      %8244 = vrot.lane.b32.xlu0 %v7951, 113
      %v8245 = vpop.permute.xlu0 %8244
      %v8246 = vsel %vm512, %v8243, %v8245
      %v8247 = vsel %vm512, %v8241, %v8243
      %v8248 = vsel %vm512, %v8239, %v8241
      %v8249 = vsel %vm512, %v8245, %v8239
      %v8250 = vld [vmem:[%s517] ss:$8 sm:$0xf]
      %v8252 = vlaneseq
      %v8253 = vshrl.u32 %v8252, 7
      %v8254 = vsub.s32 0, %v8253
      %v8255 = vrot.slane %v8250, %v8254
      %v8256 = vlaneseq
      %v8257 = vshrl.u32 %v8256, 7
      %v8258 = vsub.s32 1, %v8257
      %v8259 = vrot.slane %v8250, %v8258
      %v8260 = vlaneseq
      %v8261 = vshrl.u32 %v8260, 7
      %v8262 = vsub.s32 2, %v8261
      %v8263 = vrot.slane %v8250, %v8262
      %v8264 = vlaneseq
      %v8265 = vshrl.u32 %v8264, 7
      %v8266 = vsub.s32 3, %v8265
      %v8267 = vrot.slane %v8250, %v8266
      %v8272 = vmul.f32 %v8248, %v8255
      %v8273 = vmul.f32 %v8247, %v8259
      %v8274 = vmul.f32 %v8246, %v8263
      %v8275 = vmul.f32 %v8249, %v8267
      %v8276 = vpack.c.bf16 %v8272, %v8272
      %v8277 = vpack.c.bf16 %v8273, %v8273
      %v8278 = vpack.c.bf16 %v8274, %v8274
      %v8279 = vpack.c.bf16 %v8275, %v8275
      %v8284 = vrot.slane %v8276, 6
      %v8285 = vrot.slane %v8277, 6
      %v8286 = vrot.slane %v8278, 6
      %v8287 = vrot.slane %v8279, 6
      %8292 = vst [vmem:[#allocation2 + $0x100] sm:$0xc] %v8284
      %8293 = vst [vmem:[#allocation2 + $0x108] sm:$0xc] %v8285
      %8294 = vst [vmem:[#allocation2 + $0x110] sm:$0xc] %v8286
      %8295 = vst [vmem:[#allocation2 + $0x118] sm:$0xc] %v8287
      %8296 = vrot.lane.b32.xlu0 %v7948, 112
      %v8297 = vpop.permute.xlu0 %8296
      %8298 = vrot.lane.b32.xlu0 %v7949, 112
      %v8299 = vpop.permute.xlu0 %8298
      %8300 = vrot.lane.b32.xlu0 %v7950, 112
      %v8301 = vpop.permute.xlu0 %8300
      %8302 = vrot.lane.b32.xlu0 %v7951, 112
      %v8303 = vpop.permute.xlu0 %8302
      %v8304 = vsel %vm572, %v8301, %v8303
      %v8305 = vsel %vm572, %v8299, %v8301
      %v8306 = vsel %vm572, %v8297, %v8299
      %v8307 = vsel %vm572, %v8303, %v8297
      %v8308 = vld [vmem:[%s577] ss:$8 sm:$0xf]
      %v8310 = vlaneseq
      %v8311 = vshrl.u32 %v8310, 7
      %v8312 = vsub.s32 0, %v8311
      %v8313 = vrot.slane %v8308, %v8312
      %v8314 = vlaneseq
      %v8315 = vshrl.u32 %v8314, 7
      %v8316 = vsub.s32 1, %v8315
      %v8317 = vrot.slane %v8308, %v8316
      %v8318 = vlaneseq
      %v8319 = vshrl.u32 %v8318, 7
      %v8320 = vsub.s32 2, %v8319
      %v8321 = vrot.slane %v8308, %v8320
      %v8322 = vlaneseq
      %v8323 = vshrl.u32 %v8322, 7
      %v8324 = vsub.s32 3, %v8323
      %v8325 = vrot.slane %v8308, %v8324
      %v8330 = vmul.f32 %v8306, %v8313
      %v8331 = vmul.f32 %v8305, %v8317
      %v8332 = vmul.f32 %v8304, %v8321
      %v8333 = vmul.f32 %v8307, %v8325
      %v8334 = vpack.c.bf16 %v8330, %v8330
      %v8335 = vpack.c.bf16 %v8331, %v8331
      %v8336 = vpack.c.bf16 %v8332, %v8332
      %v8337 = vpack.c.bf16 %v8333, %v8333
      %v8342 = vrot.slane %v8334, 4
      %v8343 = vrot.slane %v8335, 4
      %v8344 = vrot.slane %v8336, 4
      %v8345 = vrot.slane %v8337, 4
      %8350 = vst [vmem:[#allocation2 + $0x100] sm:$0x30] %v8342
      %8351 = vst [vmem:[#allocation2 + $0x108] sm:$0x30] %v8343
      %8352 = vst [vmem:[#allocation2 + $0x110] sm:$0x30] %v8344
      %8353 = vst [vmem:[#allocation2 + $0x118] sm:$0x30] %v8345
      %8354 = vrot.lane.b32.xlu0 %v7948, 111
      %v8355 = vpop.permute.xlu0 %8354
      %8356 = vrot.lane.b32.xlu0 %v7949, 111
      %v8357 = vpop.permute.xlu0 %8356
      %8358 = vrot.lane.b32.xlu0 %v7950, 111
      %v8359 = vpop.permute.xlu0 %8358
      %8360 = vrot.lane.b32.xlu0 %v7951, 111
      %v8361 = vpop.permute.xlu0 %8360
      %v8362 = vsel %vm632, %v8359, %v8361
      %v8363 = vsel %vm632, %v8357, %v8359
      %v8364 = vsel %vm632, %v8355, %v8357
      %v8365 = vsel %vm632, %v8361, %v8355
      %v8366 = vld [vmem:[%s637] ss:$8 sm:$0xf]
      %v8368 = vlaneseq
      %v8369 = vshrl.u32 %v8368, 7
      %v8370 = vsub.s32 0, %v8369
      %v8371 = vrot.slane %v8366, %v8370
      %v8372 = vlaneseq
      %v8373 = vshrl.u32 %v8372, 7
      %v8374 = vsub.s32 1, %v8373
      %v8375 = vrot.slane %v8366, %v8374
      %v8376 = vlaneseq
      %v8377 = vshrl.u32 %v8376, 7
      %v8378 = vsub.s32 2, %v8377
      %v8379 = vrot.slane %v8366, %v8378
      %v8380 = vlaneseq
      %v8381 = vshrl.u32 %v8380, 7
      %v8382 = vsub.s32 3, %v8381
      %v8383 = vrot.slane %v8366, %v8382
      %v8388 = vmul.f32 %v8364, %v8371
      %v8389 = vmul.f32 %v8363, %v8375
      %v8390 = vmul.f32 %v8362, %v8379
      %v8391 = vmul.f32 %v8365, %v8383
      %v8392 = vpack.c.bf16 %v8388, %v8388
      %v8393 = vpack.c.bf16 %v8389, %v8389
      %v8394 = vpack.c.bf16 %v8390, %v8390
      %v8395 = vpack.c.bf16 %v8391, %v8391
      %v8400 = vrot.slane %v8392, 2
      %v8401 = vrot.slane %v8393, 2
      %v8402 = vrot.slane %v8394, 2
      %v8403 = vrot.slane %v8395, 2
      %8408 = vst [vmem:[#allocation2 + $0x100] sm:$0xc0] %v8400
      %8409 = vst [vmem:[#allocation2 + $0x108] sm:$0xc0] %v8401
      %8410 = vst [vmem:[#allocation2 + $0x110] sm:$0xc0] %v8402
      %8411 = vst [vmem:[#allocation2 + $0x118] sm:$0xc0] %v8403
      %s8412 = scalar_lea.vmem %s1, 52
      %v8413 = vld [vmem:[%s8412] sm:$0xf]
      %v8414 = vld [vmem:[#allocation2] sm:$0xff]
      %v8415 = vld [vmem:[#allocation2 + $0x8] sm:$0xff]
      %v8416 = vld [vmem:[#allocation2 + $0x10] sm:$0xff]
      %v8417 = vld [vmem:[#allocation2 + $0x18] sm:$0xff]
      %v8418 = vld [vmem:[#allocation2 + $0x20] sm:$0xff]
      %v8419 = vld [vmem:[#allocation2 + $0x28] sm:$0xff]
      %v8420 = vld [vmem:[#allocation2 + $0x30] sm:$0xff]
      %v8421 = vld [vmem:[#allocation2 + $0x38] sm:$0xff]
      %v8422 = vld [vmem:[#allocation2 + $0x40] sm:$0xff]
      %v8423 = vld [vmem:[#allocation2 + $0x48] sm:$0xff]
      %v8424 = vld [vmem:[#allocation2 + $0x50] sm:$0xff]
      %v8425 = vld [vmem:[#allocation2 + $0x58] sm:$0xff]
      %v8426 = vld [vmem:[#allocation2 + $0x60] sm:$0xff]
      %v8427 = vld [vmem:[#allocation2 + $0x68] sm:$0xff]
      %v8428 = vld [vmem:[#allocation2 + $0x70] sm:$0xff]
      %v8429 = vld [vmem:[#allocation2 + $0x78] sm:$0xff]
      %v8430 = vld [vmem:[#allocation2 + $0x80] sm:$0xff]
      %v8431 = vld [vmem:[#allocation2 + $0x88] sm:$0xff]
      %v8432 = vld [vmem:[#allocation2 + $0x90] sm:$0xff]
      %v8433 = vld [vmem:[#allocation2 + $0x98] sm:$0xff]
      %v8434 = vld [vmem:[#allocation2 + $0xa0] sm:$0xff]
      %v8435 = vld [vmem:[#allocation2 + $0xa8] sm:$0xff]
      %v8436 = vld [vmem:[#allocation2 + $0xb0] sm:$0xff]
      %v8437 = vld [vmem:[#allocation2 + $0xb8] sm:$0xff]
      %v8438 = vld [vmem:[#allocation2 + $0xc0] sm:$0xff]
      %v8439 = vld [vmem:[#allocation2 + $0xc8] sm:$0xff]
      %v8440 = vld [vmem:[#allocation2 + $0xd0] sm:$0xff]
      %v8441 = vld [vmem:[#allocation2 + $0xd8] sm:$0xff]
      %v8442 = vld [vmem:[#allocation2 + $0xe0] sm:$0xff]
      %v8443 = vld [vmem:[#allocation2 + $0xe8] sm:$0xff]
      %v8444 = vld [vmem:[#allocation2 + $0xf0] sm:$0xff]
      %v8445 = vld [vmem:[#allocation2 + $0xf8] sm:$0xff]
      %v8446 = vld [vmem:[#allocation2 + $0x100] sm:$0xff]
      %v8447 = vld [vmem:[#allocation2 + $0x108] sm:$0xff]
      %v8448 = vld [vmem:[#allocation2 + $0x110] sm:$0xff]
      %v8449 = vld [vmem:[#allocation2 + $0x118] sm:$0xff]
      %s8450 = scalar_lea.vmem %s2, 52
      %v8451 = vld [vmem:[%s8450] sm:$0xf]
      %8453 = vset.pattern.permute.xlu0 0
      %8454 = vperm.xlu0 %8453, %v8451
      %v8455 = vpop.permute.xlu0 %8454
      %v8459 = vunpack.c.l.s4 1983009808
      %v8460 = vunpack.c.0.s8 %v8459
      %v8461 = vlaneseq
      %v8462 = vshrl.u32 %v8461, 7
      %v8463 = vsub.s32 %v8460, %v8462
      %v8464 = vrot.slane %v8413, %v8463
      %v8465 = vcombine.high %v8464, %v8464
      %v8468 = vsel %vm2501, %v8465, 0
      %8470 = vmatprep.subr.bf16.mxu0 %v8415
      %8471 = vmatpush1.bf16.msra.mxu0 %v8414
      %8472 = vmatprep.subr.bf16.mxu0 %v8419
      %8473 = vmatpush1.bf16.msra.mxu0 %v8418
      %8474 = vmatprep.subr.bf16.mxu0 %v8423
      %8475 = vmatpush1.bf16.msra.mxu0 %v8422
      %8476 = vmatprep.subr.bf16.mxu0 %v8427
      %8477 = vmatpush1.bf16.msra.mxu0 %v8426
      %8478 = vmatprep.subr.bf16.mxu0 %v8431
      %8479 = vmatpush1.bf16.msra.mxu0 %v8430
      %8480 = vmatprep.subr.bf16.mxu0 %v8435
      %8481 = vmatpush1.bf16.msra.mxu0 %v8434
      %8482 = vmatprep.subr.bf16.mxu0 %v8439
      %8483 = vmatpush1.bf16.msra.mxu0 %v8438
      %8484 = vmatprep.subr.bf16.mxu0 %v8443
      %8485 = vmatpush1.bf16.msra.mxu0 %v8442
      %8486 = vmatprep.subr.bf16.mxu0 %v8447
      %8487 = vmatpush1.bf16.msra.mxu0 %v8446
      %8488 = vmatprep.subr.bf16.mxu0 0
      %8489 = vmatpush1.bf16.msra.mxu0 0
      %8490 = vmatprep.subr.bf16.mxu0 0
      %8491 = vmatpush1.bf16.msra.mxu0 0
      %8492 = vmatprep.subr.bf16.mxu0 0
      %8493 = vmatpush1.bf16.msra.mxu0 0
      %8494 = vmatprep.subr.bf16.mxu0 0
      %8495 = vmatpush1.bf16.msra.mxu0 0
      %8496 = vmatprep.subr.bf16.mxu0 0
      %8497 = vmatpush1.bf16.msra.mxu0 0
      %8498 = vmatprep.subr.bf16.mxu0 0
      %8499 = vmatpush1.bf16.msra.mxu0 0
      %8500 = vmatprep.subr.bf16.mxu0 0
      %8501 = vmatpush1.bf16.msra.mxu0 0
      %8502 = vmatprep.mubr.bf16.mxu0 %v8468
      %8503 = vmatmul.mubr.bf16.gmra.mrb[0].mxu0 %v8464
      %v8504 = vpop.f32.mrb[0].mxu0
      %v8505 = vadd.f32 %v8455, %v8504
      %v8506 = vpop.f32.mrb[0].mxu0
      %v8507 = vadd.f32 %v8455, %v8506
      %v8508 = vpop.f32.mrb[0].mxu0
      %v8509 = vpop.f32.mrb[0].mxu0
      %8510 = vdwg.mxu0
      %8511 = vmatprep.subr.bf16.mxu0 %v8417
      %8512 = vmatpush1.bf16.msra.mxu0 %v8416
      %8513 = vmatprep.subr.bf16.mxu0 %v8421
      %8514 = vmatpush1.bf16.msra.mxu0 %v8420
      %8515 = vmatprep.subr.bf16.mxu0 %v8425
      %8516 = vmatpush1.bf16.msra.mxu0 %v8424
      %8517 = vmatprep.subr.bf16.mxu0 %v8429
      %8518 = vmatpush1.bf16.msra.mxu0 %v8428
      %8519 = vmatprep.subr.bf16.mxu0 %v8433
      %8520 = vmatpush1.bf16.msra.mxu0 %v8432
      %8521 = vmatprep.subr.bf16.mxu0 %v8437
      %8522 = vmatpush1.bf16.msra.mxu0 %v8436
      %8523 = vmatprep.subr.bf16.mxu0 %v8441
      %8524 = vmatpush1.bf16.msra.mxu0 %v8440
      %8525 = vmatprep.subr.bf16.mxu0 %v8445
      %8526 = vmatpush1.bf16.msra.mxu0 %v8444
      %8527 = vmatprep.subr.bf16.mxu0 %v8449
      %8528 = vmatpush1.bf16.msra.mxu0 %v8448
      %8529 = vmatprep.subr.bf16.mxu0 0
      %8530 = vmatpush1.bf16.msra.mxu0 0
      %8531 = vmatprep.subr.bf16.mxu0 0
      %8532 = vmatpush1.bf16.msra.mxu0 0
      %8533 = vmatprep.subr.bf16.mxu0 0
      %8534 = vmatpush1.bf16.msra.mxu0 0
      %8535 = vmatprep.subr.bf16.mxu0 0
      %8536 = vmatpush1.bf16.msra.mxu0 0
      %8537 = vmatprep.subr.bf16.mxu0 0
      %8538 = vmatpush1.bf16.msra.mxu0 0
      %8539 = vmatprep.subr.bf16.mxu0 0
      %8540 = vmatpush1.bf16.msra.mxu0 0
      %8541 = vmatprep.subr.bf16.mxu0 0
      %8542 = vmatpush1.bf16.msra.mxu0 0
      %8543 = vmatprep.mubr.bf16.mxu0 %v8468
      %8544 = vmatmul.mubr.bf16.gmra.mrb[0].mxu0 %v8464
      %v8545 = vpop.f32.mrb[0].mxu0
      %v8546 = vadd.f32 %v8455, %v8545
      %v8547 = vpop.f32.mrb[0].mxu0
      %v8548 = vadd.f32 %v8455, %v8547
      %v8549 = vpop.f32.mrb[0].mxu0
      %v8550 = vpop.f32.mrb[0].mxu0
      %8551 = vdwg.mxu0
      %v8552 = vmax.f32 %v8505, 0.0
      %v8553 = vmax.f32 %v8507, 0.0
      %v8554 = vmax.f32 %v8546, 0.0
      %v8555 = vmax.f32 %v8548, 0.0
      %8556 = vrot.lane.b32.xlu0 %v8552, 17
      %v8557 = vpop.permute.xlu0 %8556
      %8558 = vrot.lane.b32.xlu0 %v8553, 17
      %v8559 = vpop.permute.xlu0 %8558
      %8560 = vrot.lane.b32.xlu0 %v8554, 17
      %v8561 = vpop.permute.xlu0 %8560
      %8562 = vrot.lane.b32.xlu0 %v8555, 17
      %v8563 = vpop.permute.xlu0 %8562
      %v8564 = vsel %vm217, %v8561, %v8563
      %v8565 = vsel %vm217, %v8559, %v8561
      %v8566 = vsel %vm217, %v8557, %v8559
      %v8567 = vsel %vm217, %v8563, %v8557
      %v8568 = vld [vmem:[%s3] ss:$8 sm:$0xf]
      %v8570 = vlaneseq
      %v8571 = vshrl.u32 %v8570, 7
      %v8572 = vsub.s32 0, %v8571
      %v8573 = vrot.slane %v8568, %v8572
      %v8574 = vlaneseq
      %v8575 = vshrl.u32 %v8574, 7
      %v8576 = vsub.s32 1, %v8575
      %v8577 = vrot.slane %v8568, %v8576
      %v8578 = vlaneseq
      %v8579 = vshrl.u32 %v8578, 7
      %v8580 = vsub.s32 2, %v8579
      %v8581 = vrot.slane %v8568, %v8580
      %v8582 = vlaneseq
      %v8583 = vshrl.u32 %v8582, 7
      %v8584 = vsub.s32 3, %v8583
      %v8585 = vrot.slane %v8568, %v8584
      %v8590 = vmul.f32 %v8567, %v8573
      %v8591 = vmul.f32 %v8566, %v8577
      %v8592 = vmul.f32 %v8565, %v8581
      %v8593 = vmul.f32 %v8564, %v8585
      %v8594 = vpack.c.bf16 %v8590, %v8590
      %v8595 = vpack.c.bf16 %v8591, %v8591
      %v8596 = vpack.c.bf16 %v8592, %v8592
      %v8597 = vpack.c.bf16 %v8593, %v8593
      %8598 = vst [vmem:[#allocation2 + $0x120] sm:$0x3] %v8594
      %8599 = vst [vmem:[#allocation2 + $0x128] sm:$0x3] %v8595
      %8600 = vst [vmem:[#allocation2 + $0x130] sm:$0x3] %v8596
      %8601 = vst [vmem:[#allocation2 + $0x138] sm:$0x3] %v8597
      %8602 = vrot.lane.b32.xlu0 %v8552, 16
      %v8603 = vpop.permute.xlu0 %8602
      %8604 = vrot.lane.b32.xlu0 %v8553, 16
      %v8605 = vpop.permute.xlu0 %8604
      %8606 = vrot.lane.b32.xlu0 %v8554, 16
      %v8607 = vpop.permute.xlu0 %8606
      %8608 = vrot.lane.b32.xlu0 %v8555, 16
      %v8609 = vpop.permute.xlu0 %8608
      %v8610 = vsel %vm264, %v8607, %v8609
      %v8611 = vsel %vm264, %v8605, %v8607
      %v8612 = vsel %vm264, %v8603, %v8605
      %v8613 = vsel %vm264, %v8609, %v8603
      %v8614 = vld [vmem:[%s269] ss:$8 sm:$0xf]
      %v8616 = vlaneseq
      %v8617 = vshrl.u32 %v8616, 7
      %v8618 = vsub.s32 0, %v8617
      %v8619 = vrot.slane %v8614, %v8618
      %v8620 = vlaneseq
      %v8621 = vshrl.u32 %v8620, 7
      %v8622 = vsub.s32 1, %v8621
      %v8623 = vrot.slane %v8614, %v8622
      %v8624 = vlaneseq
      %v8625 = vshrl.u32 %v8624, 7
      %v8626 = vsub.s32 2, %v8625
      %v8627 = vrot.slane %v8614, %v8626
      %v8628 = vlaneseq
      %v8629 = vshrl.u32 %v8628, 7
      %v8630 = vsub.s32 3, %v8629
      %v8631 = vrot.slane %v8614, %v8630
      %v8636 = vmul.f32 %v8613, %v8619
      %v8637 = vmul.f32 %v8612, %v8623
      %v8638 = vmul.f32 %v8611, %v8627
      %v8639 = vmul.f32 %v8610, %v8631
      %v8640 = vpack.c.bf16 %v8636, %v8636
      %v8641 = vpack.c.bf16 %v8637, %v8637
      %v8642 = vpack.c.bf16 %v8638, %v8638
      %v8643 = vpack.c.bf16 %v8639, %v8639
      %v8648 = vrot.slane %v8640, 6
      %v8649 = vrot.slane %v8641, 6
      %v8650 = vrot.slane %v8642, 6
      %v8651 = vrot.slane %v8643, 6
      %8656 = vst [vmem:[#allocation2 + $0x120] sm:$0xc] %v8648
      %8657 = vst [vmem:[#allocation2 + $0x128] sm:$0xc] %v8649
      %8658 = vst [vmem:[#allocation2 + $0x130] sm:$0xc] %v8650
      %8659 = vst [vmem:[#allocation2 + $0x138] sm:$0xc] %v8651
      %8660 = vrot.lane.b32.xlu0 %v8552, 15
      %v8661 = vpop.permute.xlu0 %8660
      %8662 = vrot.lane.b32.xlu0 %v8553, 15
      %v8663 = vpop.permute.xlu0 %8662
      %8664 = vrot.lane.b32.xlu0 %v8554, 15
      %v8665 = vpop.permute.xlu0 %8664
      %8666 = vrot.lane.b32.xlu0 %v8555, 15
      %v8667 = vpop.permute.xlu0 %8666
      %v8668 = vsel %vm324, %v8665, %v8667
      %v8669 = vsel %vm324, %v8663, %v8665
      %v8670 = vsel %vm324, %v8661, %v8663
      %v8671 = vsel %vm324, %v8667, %v8661
      %v8672 = vld [vmem:[%s329] ss:$8 sm:$0xf]
      %v8674 = vlaneseq
      %v8675 = vshrl.u32 %v8674, 7
      %v8676 = vsub.s32 0, %v8675
      %v8677 = vrot.slane %v8672, %v8676
      %v8678 = vlaneseq
      %v8679 = vshrl.u32 %v8678, 7
      %v8680 = vsub.s32 1, %v8679
      %v8681 = vrot.slane %v8672, %v8680
      %v8682 = vlaneseq
      %v8683 = vshrl.u32 %v8682, 7
      %v8684 = vsub.s32 2, %v8683
      %v8685 = vrot.slane %v8672, %v8684
      %v8686 = vlaneseq
      %v8687 = vshrl.u32 %v8686, 7
      %v8688 = vsub.s32 3, %v8687
      %v8689 = vrot.slane %v8672, %v8688
      %v8694 = vmul.f32 %v8671, %v8677
      %v8695 = vmul.f32 %v8670, %v8681
      %v8696 = vmul.f32 %v8669, %v8685
      %v8697 = vmul.f32 %v8668, %v8689
      %v8698 = vpack.c.bf16 %v8694, %v8694
      %v8699 = vpack.c.bf16 %v8695, %v8695
      %v8700 = vpack.c.bf16 %v8696, %v8696
      %v8701 = vpack.c.bf16 %v8697, %v8697
      %v8706 = vrot.slane %v8698, 4
      %v8707 = vrot.slane %v8699, 4
      %v8708 = vrot.slane %v8700, 4
      %v8709 = vrot.slane %v8701, 4
      %8714 = vst [vmem:[#allocation2 + $0x120] sm:$0x30] %v8706
      %8715 = vst [vmem:[#allocation2 + $0x128] sm:$0x30] %v8707
      %8716 = vst [vmem:[#allocation2 + $0x130] sm:$0x30] %v8708
      %8717 = vst [vmem:[#allocation2 + $0x138] sm:$0x30] %v8709
      %8718 = vrot.lane.b32.xlu0 %v8552, 1
      %v8719 = vpop.permute.xlu0 %8718
      %8720 = vrot.lane.b32.xlu0 %v8553, 1
      %v8721 = vpop.permute.xlu0 %8720
      %8722 = vrot.lane.b32.xlu0 %v8554, 1
      %v8723 = vpop.permute.xlu0 %8722
      %8724 = vrot.lane.b32.xlu0 %v8555, 1
      %v8725 = vpop.permute.xlu0 %8724
      %v8726 = vsel %vm384, %v8723, %v8725
      %v8727 = vsel %vm384, %v8721, %v8723
      %v8728 = vsel %vm384, %v8719, %v8721
      %v8729 = vsel %vm384, %v8725, %v8719
      %v8730 = vld [vmem:[%s389] ss:$8 sm:$0xf]
      %v8732 = vlaneseq
      %v8733 = vshrl.u32 %v8732, 7
      %v8734 = vsub.s32 0, %v8733
      %v8735 = vrot.slane %v8730, %v8734
      %v8736 = vlaneseq
      %v8737 = vshrl.u32 %v8736, 7
      %v8738 = vsub.s32 1, %v8737
      %v8739 = vrot.slane %v8730, %v8738
      %v8740 = vlaneseq
      %v8741 = vshrl.u32 %v8740, 7
      %v8742 = vsub.s32 2, %v8741
      %v8743 = vrot.slane %v8730, %v8742
      %v8744 = vlaneseq
      %v8745 = vshrl.u32 %v8744, 7
      %v8746 = vsub.s32 3, %v8745
      %v8747 = vrot.slane %v8730, %v8746
      %v8752 = vmul.f32 %v8729, %v8735
      %v8753 = vmul.f32 %v8728, %v8739
      %v8754 = vmul.f32 %v8727, %v8743
      %v8755 = vmul.f32 %v8726, %v8747
      %v8756 = vpack.c.bf16 %v8752, %v8752
      %v8757 = vpack.c.bf16 %v8753, %v8753
      %v8758 = vpack.c.bf16 %v8754, %v8754
      %v8759 = vpack.c.bf16 %v8755, %v8755
      %v8764 = vrot.slane %v8756, 2
      %v8765 = vrot.slane %v8757, 2
      %v8766 = vrot.slane %v8758, 2
      %v8767 = vrot.slane %v8759, 2
      %8772 = vst [vmem:[#allocation2 + $0x120] sm:$0xc0] %v8764
      %8773 = vst [vmem:[#allocation2 + $0x128] sm:$0xc0] %v8765
      %8774 = vst [vmem:[#allocation2 + $0x130] sm:$0xc0] %v8766
      %8775 = vst [vmem:[#allocation2 + $0x138] sm:$0xc0] %v8767
      %v8776 = vpack.c.bf16 %v8552, %v8552
      %v8777 = vpack.c.bf16 %v8553, %v8553
      %v8778 = vpack.c.bf16 %v8554, %v8554
      %v8779 = vpack.c.bf16 %v8555, %v8555
      %8780 = vst [vmem:[#allocation2 + $0x140] sm:$0x3] %v8776
      %8781 = vst [vmem:[#allocation2 + $0x148] sm:$0x3] %v8777
      %8782 = vst [vmem:[#allocation2 + $0x150] sm:$0x3] %v8778
      %8783 = vst [vmem:[#allocation2 + $0x158] sm:$0x3] %v8779
      %8784 = vrot.lane.b32.xlu0 %v8552, 127
      %v8785 = vpop.permute.xlu0 %8784
      %8786 = vrot.lane.b32.xlu0 %v8553, 127
      %v8787 = vpop.permute.xlu0 %8786
      %8788 = vrot.lane.b32.xlu0 %v8554, 127
      %v8789 = vpop.permute.xlu0 %8788
      %8790 = vrot.lane.b32.xlu0 %v8555, 127
      %v8791 = vpop.permute.xlu0 %8790
      %v8792 = vsel %vm452, %v8789, %v8791
      %v8793 = vsel %vm452, %v8787, %v8789
      %v8794 = vsel %vm452, %v8785, %v8787
      %v8795 = vsel %vm452, %v8791, %v8785
      %v8796 = vld [vmem:[%s457] ss:$8 sm:$0xf]
      %v8798 = vlaneseq
      %v8799 = vshrl.u32 %v8798, 7
      %v8800 = vsub.s32 0, %v8799
      %v8801 = vrot.slane %v8796, %v8800
      %v8802 = vlaneseq
      %v8803 = vshrl.u32 %v8802, 7
      %v8804 = vsub.s32 1, %v8803
      %v8805 = vrot.slane %v8796, %v8804
      %v8806 = vlaneseq
      %v8807 = vshrl.u32 %v8806, 7
      %v8808 = vsub.s32 2, %v8807
      %v8809 = vrot.slane %v8796, %v8808
      %v8810 = vlaneseq
      %v8811 = vshrl.u32 %v8810, 7
      %v8812 = vsub.s32 3, %v8811
      %v8813 = vrot.slane %v8796, %v8812
      %v8818 = vmul.f32 %v8794, %v8801
      %v8819 = vmul.f32 %v8793, %v8805
      %v8820 = vmul.f32 %v8792, %v8809
      %v8821 = vmul.f32 %v8795, %v8813
      %v8822 = vpack.c.bf16 %v8818, %v8818
      %v8823 = vpack.c.bf16 %v8819, %v8819
      %v8824 = vpack.c.bf16 %v8820, %v8820
      %v8825 = vpack.c.bf16 %v8821, %v8821
      %v8830 = vrot.slane %v8822, 6
      %v8831 = vrot.slane %v8823, 6
      %v8832 = vrot.slane %v8824, 6
      %v8833 = vrot.slane %v8825, 6
      %8838 = vst [vmem:[#allocation2 + $0x140] sm:$0xc] %v8830
      %8839 = vst [vmem:[#allocation2 + $0x148] sm:$0xc] %v8831
      %8840 = vst [vmem:[#allocation2 + $0x150] sm:$0xc] %v8832
      %8841 = vst [vmem:[#allocation2 + $0x158] sm:$0xc] %v8833
      %8842 = vrot.lane.b32.xlu0 %v8552, 113
      %v8843 = vpop.permute.xlu0 %8842
      %8844 = vrot.lane.b32.xlu0 %v8553, 113
      %v8845 = vpop.permute.xlu0 %8844
      %8846 = vrot.lane.b32.xlu0 %v8554, 113
      %v8847 = vpop.permute.xlu0 %8846
      %8848 = vrot.lane.b32.xlu0 %v8555, 113
      %v8849 = vpop.permute.xlu0 %8848
      %v8850 = vsel %vm512, %v8847, %v8849
      %v8851 = vsel %vm512, %v8845, %v8847
      %v8852 = vsel %vm512, %v8843, %v8845
      %v8853 = vsel %vm512, %v8849, %v8843
      %v8854 = vld [vmem:[%s517] ss:$8 sm:$0xf]
      %v8856 = vlaneseq
      %v8857 = vshrl.u32 %v8856, 7
      %v8858 = vsub.s32 0, %v8857
      %v8859 = vrot.slane %v8854, %v8858
      %v8860 = vlaneseq
      %v8861 = vshrl.u32 %v8860, 7
      %v8862 = vsub.s32 1, %v8861
      %v8863 = vrot.slane %v8854, %v8862
      %v8864 = vlaneseq
      %v8865 = vshrl.u32 %v8864, 7
      %v8866 = vsub.s32 2, %v8865
      %v8867 = vrot.slane %v8854, %v8866
      %v8868 = vlaneseq
      %v8869 = vshrl.u32 %v8868, 7
      %v8870 = vsub.s32 3, %v8869
      %v8871 = vrot.slane %v8854, %v8870
      %v8876 = vmul.f32 %v8852, %v8859
      %v8877 = vmul.f32 %v8851, %v8863
      %v8878 = vmul.f32 %v8850, %v8867
      %v8879 = vmul.f32 %v8853, %v8871
      %v8880 = vpack.c.bf16 %v8876, %v8876
      %v8881 = vpack.c.bf16 %v8877, %v8877
      %v8882 = vpack.c.bf16 %v8878, %v8878
      %v8883 = vpack.c.bf16 %v8879, %v8879
      %v8888 = vrot.slane %v8880, 4
      %v8889 = vrot.slane %v8881, 4
      %v8890 = vrot.slane %v8882, 4
      %v8891 = vrot.slane %v8883, 4
      %8896 = vst [vmem:[#allocation2 + $0x140] sm:$0x30] %v8888
      %8897 = vst [vmem:[#allocation2 + $0x148] sm:$0x30] %v8889
      %8898 = vst [vmem:[#allocation2 + $0x150] sm:$0x30] %v8890
      %8899 = vst [vmem:[#allocation2 + $0x158] sm:$0x30] %v8891
      %8900 = vrot.lane.b32.xlu0 %v8552, 112
      %v8901 = vpop.permute.xlu0 %8900
      %8902 = vrot.lane.b32.xlu0 %v8553, 112
      %v8903 = vpop.permute.xlu0 %8902
      %8904 = vrot.lane.b32.xlu0 %v8554, 112
      %v8905 = vpop.permute.xlu0 %8904
      %8906 = vrot.lane.b32.xlu0 %v8555, 112
      %v8907 = vpop.permute.xlu0 %8906
      %v8908 = vsel %vm572, %v8905, %v8907
      %v8909 = vsel %vm572, %v8903, %v8905
      %v8910 = vsel %vm572, %v8901, %v8903
      %v8911 = vsel %vm572, %v8907, %v8901
      %v8912 = vld [vmem:[%s577] ss:$8 sm:$0xf]
      %v8914 = vlaneseq
      %v8915 = vshrl.u32 %v8914, 7
      %v8916 = vsub.s32 0, %v8915
      %v8917 = vrot.slane %v8912, %v8916
      %v8918 = vlaneseq
      %v8919 = vshrl.u32 %v8918, 7
      %v8920 = vsub.s32 1, %v8919
      %v8921 = vrot.slane %v8912, %v8920
      %v8922 = vlaneseq
      %v8923 = vshrl.u32 %v8922, 7
      %v8924 = vsub.s32 2, %v8923
      %v8925 = vrot.slane %v8912, %v8924
      %v8926 = vlaneseq
      %v8927 = vshrl.u32 %v8926, 7
      %v8928 = vsub.s32 3, %v8927
      %v8929 = vrot.slane %v8912, %v8928
      %v8934 = vmul.f32 %v8910, %v8917
      %v8935 = vmul.f32 %v8909, %v8921
      %v8936 = vmul.f32 %v8908, %v8925
      %v8937 = vmul.f32 %v8911, %v8929
      %v8938 = vpack.c.bf16 %v8934, %v8934
      %v8939 = vpack.c.bf16 %v8935, %v8935
      %v8940 = vpack.c.bf16 %v8936, %v8936
      %v8941 = vpack.c.bf16 %v8937, %v8937
      %v8946 = vrot.slane %v8938, 2
      %v8947 = vrot.slane %v8939, 2
      %v8948 = vrot.slane %v8940, 2
      %v8949 = vrot.slane %v8941, 2
      %8954 = vst [vmem:[#allocation2 + $0x140] sm:$0xc0] %v8946
      %8955 = vst [vmem:[#allocation2 + $0x148] sm:$0xc0] %v8947
      %8956 = vst [vmem:[#allocation2 + $0x150] sm:$0xc0] %v8948
      %8957 = vst [vmem:[#allocation2 + $0x158] sm:$0xc0] %v8949
      %8958 = vrot.lane.b32.xlu0 %v8552, 111
      %v8959 = vpop.permute.xlu0 %8958
      %8960 = vrot.lane.b32.xlu0 %v8553, 111
      %v8961 = vpop.permute.xlu0 %8960
      %8962 = vrot.lane.b32.xlu0 %v8554, 111
      %v8963 = vpop.permute.xlu0 %8962
      %8964 = vrot.lane.b32.xlu0 %v8555, 111
      %v8965 = vpop.permute.xlu0 %8964
      %v8966 = vsel %vm632, %v8963, %v8965
      %v8967 = vsel %vm632, %v8961, %v8963
      %v8968 = vsel %vm632, %v8959, %v8961
      %v8969 = vsel %vm632, %v8965, %v8959
      %v8970 = vld [vmem:[%s637] ss:$8 sm:$0xf]
      %v8972 = vlaneseq
      %v8973 = vshrl.u32 %v8972, 7
      %v8974 = vsub.s32 0, %v8973
      %v8975 = vrot.slane %v8970, %v8974
      %v8976 = vlaneseq
      %v8977 = vshrl.u32 %v8976, 7
      %v8978 = vsub.s32 1, %v8977
      %v8979 = vrot.slane %v8970, %v8978
      %v8980 = vlaneseq
      %v8981 = vshrl.u32 %v8980, 7
      %v8982 = vsub.s32 2, %v8981
      %v8983 = vrot.slane %v8970, %v8982
      %v8984 = vlaneseq
      %v8985 = vshrl.u32 %v8984, 7
      %v8986 = vsub.s32 3, %v8985
      %v8987 = vrot.slane %v8970, %v8986
      %v8992 = vmul.f32 %v8968, %v8975
      %v8993 = vmul.f32 %v8967, %v8979
      %v8994 = vmul.f32 %v8966, %v8983
      %v8995 = vmul.f32 %v8969, %v8987
      %v8996 = vpack.c.bf16 %v8992, %v8992
      %v8997 = vpack.c.bf16 %v8993, %v8993
      %v8998 = vpack.c.bf16 %v8994, %v8994
      %v8999 = vpack.c.bf16 %v8995, %v8995
      %9000 = vst [vmem:[#allocation2 + $0x160] sm:$0x3] %v8996
      %9001 = vst [vmem:[#allocation2 + $0x168] sm:$0x3] %v8997
      %9002 = vst [vmem:[#allocation2 + $0x170] sm:$0x3] %v8998
      %9003 = vst [vmem:[#allocation2 + $0x178] sm:$0x3] %v8999
      %s9004 = scalar_lea.vmem %s1, 56
      %v9005 = vld [vmem:[%s9004] sm:$0xf]
      %v9006 = vld [vmem:[#allocation2] sm:$0xff]
      %v9007 = vld [vmem:[#allocation2 + $0x8] sm:$0xff]
      %v9008 = vld [vmem:[#allocation2 + $0x10] sm:$0xff]
      %v9009 = vld [vmem:[#allocation2 + $0x18] sm:$0xff]
      %v9010 = vld [vmem:[#allocation2 + $0x20] sm:$0xff]
      %v9011 = vld [vmem:[#allocation2 + $0x28] sm:$0xff]
      %v9012 = vld [vmem:[#allocation2 + $0x30] sm:$0xff]
      %v9013 = vld [vmem:[#allocation2 + $0x38] sm:$0xff]
      %v9014 = vld [vmem:[#allocation2 + $0x40] sm:$0xff]
      %v9015 = vld [vmem:[#allocation2 + $0x48] sm:$0xff]
      %v9016 = vld [vmem:[#allocation2 + $0x50] sm:$0xff]
      %v9017 = vld [vmem:[#allocation2 + $0x58] sm:$0xff]
      %v9018 = vld [vmem:[#allocation2 + $0x60] sm:$0xff]
      %v9019 = vld [vmem:[#allocation2 + $0x68] sm:$0xff]
      %v9020 = vld [vmem:[#allocation2 + $0x70] sm:$0xff]
      %v9021 = vld [vmem:[#allocation2 + $0x78] sm:$0xff]
      %v9022 = vld [vmem:[#allocation2 + $0x80] sm:$0xff]
      %v9023 = vld [vmem:[#allocation2 + $0x88] sm:$0xff]
      %v9024 = vld [vmem:[#allocation2 + $0x90] sm:$0xff]
      %v9025 = vld [vmem:[#allocation2 + $0x98] sm:$0xff]
      %v9026 = vld [vmem:[#allocation2 + $0xa0] sm:$0xff]
      %v9027 = vld [vmem:[#allocation2 + $0xa8] sm:$0xff]
      %v9028 = vld [vmem:[#allocation2 + $0xb0] sm:$0xff]
      %v9029 = vld [vmem:[#allocation2 + $0xb8] sm:$0xff]
      %v9030 = vld [vmem:[#allocation2 + $0xc0] sm:$0xff]
      %v9031 = vld [vmem:[#allocation2 + $0xc8] sm:$0xff]
      %v9032 = vld [vmem:[#allocation2 + $0xd0] sm:$0xff]
      %v9033 = vld [vmem:[#allocation2 + $0xd8] sm:$0xff]
      %v9034 = vld [vmem:[#allocation2 + $0xe0] sm:$0xff]
      %v9035 = vld [vmem:[#allocation2 + $0xe8] sm:$0xff]
      %v9036 = vld [vmem:[#allocation2 + $0xf0] sm:$0xff]
      %v9037 = vld [vmem:[#allocation2 + $0xf8] sm:$0xff]
      %v9038 = vld [vmem:[#allocation2 + $0x100] sm:$0xff]
      %v9039 = vld [vmem:[#allocation2 + $0x108] sm:$0xff]
      %v9040 = vld [vmem:[#allocation2 + $0x110] sm:$0xff]
      %v9041 = vld [vmem:[#allocation2 + $0x118] sm:$0xff]
      %v9042 = vld [vmem:[#allocation2 + $0x120] sm:$0xff]
      %v9043 = vld [vmem:[#allocation2 + $0x128] sm:$0xff]
      %v9044 = vld [vmem:[#allocation2 + $0x130] sm:$0xff]
      %v9045 = vld [vmem:[#allocation2 + $0x138] sm:$0xff]
      %v9046 = vld [vmem:[#allocation2 + $0x140] sm:$0xff]
      %v9047 = vld [vmem:[#allocation2 + $0x148] sm:$0xff]
      %v9048 = vld [vmem:[#allocation2 + $0x150] sm:$0xff]
      %v9049 = vld [vmem:[#allocation2 + $0x158] sm:$0xff]
      %v9050 = vld [vmem:[#allocation2 + $0x160] sm:$0x3]
      %v9051 = vld [vmem:[#allocation2 + $0x168] sm:$0x3]
      %v9052 = vld [vmem:[#allocation2 + $0x170] sm:$0x3]
      %v9053 = vld [vmem:[#allocation2 + $0x178] sm:$0x3]
      %s9054 = scalar_lea.vmem %s2, 56
      %v9055 = vld [vmem:[%s9054] sm:$0xf]
      %9057 = vset.pattern.permute.xlu0 0
      %9058 = vperm.xlu0 %9057, %v9055
      %v9059 = vpop.permute.xlu0 %9058
      %v9063 = vunpack.c.l.s4 1983009808
      %v9064 = vunpack.c.0.s8 %v9063
      %v9065 = vlaneseq
      %v9066 = vshrl.u32 %v9065, 7
      %v9067 = vsub.s32 %v9064, %v9066
      %v9068 = vrot.slane %v9005, %v9067
      %v9069 = vcombine.high %v9068, %v9068
      %v9072 = vsel %vm3106, %v9069, 0
      %v9075 = vsel %vm695, %v9050, 0
      %v9078 = vsel %vm695, %v9051, 0
      %v9081 = vsel %vm695, %v9052, 0
      %v9084 = vsel %vm695, %v9053, 0
      %9086 = vmatprep.subr.bf16.mxu0 %v9007
      %9087 = vmatpush1.bf16.msra.mxu0 %v9006
      %9088 = vmatprep.subr.bf16.mxu0 %v9011
      %9089 = vmatpush1.bf16.msra.mxu0 %v9010
      %9090 = vmatprep.subr.bf16.mxu0 %v9015
      %9091 = vmatpush1.bf16.msra.mxu0 %v9014
      %9092 = vmatprep.subr.bf16.mxu0 %v9019
      %9093 = vmatpush1.bf16.msra.mxu0 %v9018
      %9094 = vmatprep.subr.bf16.mxu0 %v9023
      %9095 = vmatpush1.bf16.msra.mxu0 %v9022
      %9096 = vmatprep.subr.bf16.mxu0 %v9027
      %9097 = vmatpush1.bf16.msra.mxu0 %v9026
      %9098 = vmatprep.subr.bf16.mxu0 %v9031
      %9099 = vmatpush1.bf16.msra.mxu0 %v9030
      %9100 = vmatprep.subr.bf16.mxu0 %v9035
      %9101 = vmatpush1.bf16.msra.mxu0 %v9034
      %9102 = vmatprep.subr.bf16.mxu0 %v9039
      %9103 = vmatpush1.bf16.msra.mxu0 %v9038
      %9104 = vmatprep.subr.bf16.mxu0 %v9043
      %9105 = vmatpush1.bf16.msra.mxu0 %v9042
      %9106 = vmatprep.subr.bf16.mxu0 %v9047
      %9107 = vmatpush1.bf16.msra.mxu0 %v9046
      %9108 = vmatprep.subr.bf16.mxu0 %v9078
      %9109 = vmatpush1.bf16.msra.mxu0 %v9075
      %9110 = vmatprep.subr.bf16.mxu0 0
      %9111 = vmatpush1.bf16.msra.mxu0 0
      %9112 = vmatprep.subr.bf16.mxu0 0
      %9113 = vmatpush1.bf16.msra.mxu0 0
      %9114 = vmatprep.subr.bf16.mxu0 0
      %9115 = vmatpush1.bf16.msra.mxu0 0
      %9116 = vmatprep.subr.bf16.mxu0 0
      %9117 = vmatpush1.bf16.msra.mxu0 0
      %9118 = vmatprep.mubr.bf16.mxu0 %v9072
      %9119 = vmatmul.mubr.bf16.gmra.mrb[0].mxu0 %v9068
      %v9120 = vpop.f32.mrb[0].mxu0
      %v9121 = vadd.f32 %v9059, %v9120
      %v9122 = vpop.f32.mrb[0].mxu0
      %v9123 = vadd.f32 %v9059, %v9122
      %v9124 = vpop.f32.mrb[0].mxu0
      %v9125 = vpop.f32.mrb[0].mxu0
      %9126 = vdwg.mxu0
      %9127 = vmatprep.subr.bf16.mxu0 %v9009
      %9128 = vmatpush1.bf16.msra.mxu0 %v9008
      %9129 = vmatprep.subr.bf16.mxu0 %v9013
      %9130 = vmatpush1.bf16.msra.mxu0 %v9012
      %9131 = vmatprep.subr.bf16.mxu0 %v9017
      %9132 = vmatpush1.bf16.msra.mxu0 %v9016
      %9133 = vmatprep.subr.bf16.mxu0 %v9021
      %9134 = vmatpush1.bf16.msra.mxu0 %v9020
      %9135 = vmatprep.subr.bf16.mxu0 %v9025
      %9136 = vmatpush1.bf16.msra.mxu0 %v9024
      %9137 = vmatprep.subr.bf16.mxu0 %v9029
      %9138 = vmatpush1.bf16.msra.mxu0 %v9028
      %9139 = vmatprep.subr.bf16.mxu0 %v9033
      %9140 = vmatpush1.bf16.msra.mxu0 %v9032
      %9141 = vmatprep.subr.bf16.mxu0 %v9037
      %9142 = vmatpush1.bf16.msra.mxu0 %v9036
      %9143 = vmatprep.subr.bf16.mxu0 %v9041
      %9144 = vmatpush1.bf16.msra.mxu0 %v9040
      %9145 = vmatprep.subr.bf16.mxu0 %v9045
      %9146 = vmatpush1.bf16.msra.mxu0 %v9044
      %9147 = vmatprep.subr.bf16.mxu0 %v9049
      %9148 = vmatpush1.bf16.msra.mxu0 %v9048
      %9149 = vmatprep.subr.bf16.mxu0 %v9084
      %9150 = vmatpush1.bf16.msra.mxu0 %v9081
      %9151 = vmatprep.subr.bf16.mxu0 0
      %9152 = vmatpush1.bf16.msra.mxu0 0
      %9153 = vmatprep.subr.bf16.mxu0 0
      %9154 = vmatpush1.bf16.msra.mxu0 0
      %9155 = vmatprep.subr.bf16.mxu0 0
      %9156 = vmatpush1.bf16.msra.mxu0 0
      %9157 = vmatprep.subr.bf16.mxu0 0
      %9158 = vmatpush1.bf16.msra.mxu0 0
      %9159 = vmatprep.mubr.bf16.mxu0 %v9072
      %9160 = vmatmul.mubr.bf16.gmra.mrb[0].mxu0 %v9068
      %v9161 = vpop.f32.mrb[0].mxu0
      %v9162 = vadd.f32 %v9059, %v9161
      %v9163 = vpop.f32.mrb[0].mxu0
      %v9164 = vadd.f32 %v9059, %v9163
      %v9165 = vpop.f32.mrb[0].mxu0
      %v9166 = vpop.f32.mrb[0].mxu0
      %9167 = vdwg.mxu0
      %v9168 = vmul.f32 %v9121, 0.2
      %v9169 = vmul.f32 %v9123, 0.2
      %v9170 = vmul.f32 %v9162, 0.2
      %v9171 = vmul.f32 %v9164, 0.2
      %v9172 = vadd.f32 %v9168, %v6190
      %v9173 = vadd.f32 %v9169, %v6191
      %v9174 = vadd.f32 %v9170, %v6192
      %v9175 = vadd.f32 %v9171, %v6193
      %v9176 = vmul.f32 %v9172, 0.2
      %v9177 = vmul.f32 %v9173, 0.2
      %v9178 = vmul.f32 %v9174, 0.2
      %v9179 = vmul.f32 %v9175, 0.2
      %v9180 = vadd.f32 %v9176, %v199
      %v9181 = vadd.f32 %v9177, %v203
      %v9182 = vadd.f32 %v9178, %v200
      %v9183 = vadd.f32 %v9179, %v204
      %v9188 = vcombine.low %v9180, %v9181
      %v9189 = vcombine.low %v9182, %v9183
      %9192 = vst [vmem:[%s197] sm:$0xff] %v9188
      %9193 = vst [vmem:[%s197 + $0x8] sm:$0xff] %v9189
      %p9194 = scmp.lt.s32.totalorder %s15, 1
      %s9195 = scalar_select %p9194, %s15, 1
      %s9196 = smul.addr %s9195, 4
      %s9197 = smul.addr %s9196, 4
      %s9198 = scalar_lea.vmem %s4, %s9197
      // Predicated region
      $region37: #{rrdb_pallas.1} parent=35 // pred_check
        %p9199 = pneg %p122
      $region38: #{rrdb_pallas.1} parent=35 // pred_check_branch
        %9201 = sbr.rel (%p9199) target = $region40
      $region39: #{rrdb_pallas.1} parent=35 // pred_region
        _
      $region40: #{rrdb_pallas.1} parent=35 // pred_fallthru
        _
    $region36: #{rrdb_pallas.1} parent=5 // pred_fallthru
      _
    %p9202 = scmp.le.s32.totalorder 2, %s10
    // Predicated region
    $region41: #{rrdb_pallas.1} parent=5 // pred_check
      %p9203 = pneg %p9202
    $region42: #{rrdb_pallas.1} parent=5 // pred_check_branch
      %9205 = sbr.rel (%p9203) target = $region44
    $region43: #{rrdb_pallas.1} parent=5 // pred_region
      %s9206 = ssub.s32 %s10, 2
      // Predicated region
      $region45: #{rrdb_pallas.1} parent=43 // pred_check
        %p9207 = pneg %p128
      $region46: #{rrdb_pallas.1} parent=43 // pred_check_branch
        %9209 = sbr.rel (%p9207) target = $region48
      $region47: #{rrdb_pallas.1} parent=43 // pred_region
        %p9210 = scmp.lt.s32.totalorder %s16, 1
        %s9211 = scalar_select %p9210, %s16, 1
        %s9212 = smul.addr %s9211, 4
        %s9213 = smul.addr %s9212, 4
        %s9214 = scalar_lea.vmem %s4, %s9213
      $region48: #{rrdb_pallas.1} parent=43 // pred_fallthru
        _
    $region44: #{rrdb_pallas.1} parent=5 // pred_fallthru
      _
  $region6: #{rrdb_pallas.1} parent=0 // loop_footer
    %s14 = sadd.s32 1, %s10
  $region7: #{rrdb_pallas.1} parent=0 // loop_footer_branch
    %9 = sbr.rel target = $region3
  $region8: #{rrdb_pallas.1} parent=0 // loop_exit
    _

</llo_original>
